<compile_context>
chip_gen: v7x
topology: tpu7x:2x2x1
jax: 0.10.0
libtpu: 0.0.40
codegen_flags: <defaults>
</compile_context>

<pallas_src>
import math

import jax
import jax.numpy as jnp
from jax.experimental import pallas as pl
from jax.experimental.pallas import tpu as pltpu

D_MODEL = 32
N_HEADS = 4
D_K = D_MODEL // N_HEADS
D_FF = 64
_OUT_LANES = 128          # lane-dense (unmasked) output store width

# Row indices inside the packed bias / LayerNorm slab.
_B_SA_QKV, _B_SA_O, _B_SA_G, _B_SA_B = 0, 1, 2, 3
_B_VA_Q, _B_VA_KV, _B_VA_O, _B_VA_G, _B_VA_B = 4, 5, 6, 7, 8
_B_FA, _B_FF1, _B_FF2, _B_FF_G, _B_FF_B = 9, 10, 11, 12, 13
_BIAS_ROWS = 16


def _layer_norm(x, g, b, eps=1e-5):
    mu = jnp.mean(x, axis=-1, keepdims=True)
    var = jnp.mean((x - mu) ** 2, axis=-1, keepdims=True)
    return (x - mu) * jax.lax.rsqrt(var + eps) * g + b


def _make_kernel(block_b, n_q, n_kv, matmul_dtype):
    """Builds the fused ParallelAttentionLayer kernel for one batch block."""
    D, H, dk, dff = D_MODEL, N_HEADS, D_K, D_FF
    mdt = matmul_dtype
    exact_recip = jnp.dtype(mdt) == jnp.dtype(jnp.float32)
    R = block_b * n_q

    def mm(a, w):
        # Batch-stacked projection: (rows, D) x (D, cols) on the MXU, f32 accum.
        return jnp.dot(a.astype(mdt), w, preferred_element_type=jnp.float32)

    def attention(q, k, v, abias, n_k):
        # q: (block_b*n_q, D); k, v: (block_b*n_k, D)
        # abias: (block_b, n_q, n_k) additive bias (0 keep / -1e9 masked).
        # 1/sqrt(dk) is folded into Wq/bq host-side.
        # NOTE: additive masking differs from the reference's hard where() only
        # on fully-masked rows (none exist here; padded query rows are zeroed
        # by mask_pad afterwards anyway).
        # Reshapes below split/merge only sublane groups (n_q, n_kv are
        # multiples of 8) -> pure layout reinterpretation, no data movement.
        qb = q.reshape(block_b, n_q, D).astype(mdt)
        kb = k.reshape(block_b, n_k, D).astype(mdt)
        vb = v.reshape(block_b, n_k, D).astype(mdt)
        heads = []
        for h in range(H):                              # static, H = 4
            sl = slice(h * dk, (h + 1) * dk)
            s = jnp.einsum('bqd,bkd->bqk', qb[..., sl], kb[..., sl],
                           preferred_element_type=jnp.float32) + abias
            s = s - jnp.max(s, axis=-1, keepdims=True)
            p = jnp.exp(s)
            denom = jnp.sum(p, axis=-1, keepdims=True)
            if exact_recip:
                p = p / denom                           # exact for f32 check path
            else:
                p = p * pl.reciprocal(denom, approx=True)   # EUP slot, nearly free
            heads.append(jnp.einsum('bqk,bkd->bqd', p.astype(mdt), vb[..., sl],
                                    preferred_element_type=jnp.float32))
        out = jnp.concatenate(heads, axis=-1)           # (block_b, n_q, D) f32
        return out.reshape(R, D)

    def kernel(xm_ref, y1_ref, mb_ref, w_wide_ref, w_nar_ref, bias_ref, out_ref):
        xm = xm_ref[...]                         # (R, D+1) f32: [x | mask_pad]
        xs = xm[:, :D]
        mp = xm[:, D:D + 1]                      # (R, 1): 1.0 keep / 0.0 pad
        y1s = y1_ref[...]                        # (block_b*n_kv, D) f32
        mbias = mb_ref[...].astype(jnp.float32)  # (block_b, n_q, n_q+n_kv) additive
        mx_bias = mbias[:, :, :n_q]
        my_bias = mbias[:, :, n_q:n_q + n_kv]

        w_wide = w_wide_ref[...]                 # (3D, wide_cols)  matmul dtype
        w_nar = w_nar_ref[...]                   # (5D + dff, D)    matmul dtype
        btbl = bias_ref[...]                     # (_BIAS_ROWS, 128) f32

        # --- unpack weight slabs (static sublane / prefix-lane slices) ----------
        w_sa_qkv = w_wide[0:D, :3 * D]
        w_va_kv = w_wide[D:2 * D, :2 * D]
        w_ff1 = w_wide[2 * D:3 * D, :dff]
        w_sa_o = w_nar[0:D]
        w_va_q = w_nar[D:2 * D]
        w_va_o = w_nar[2 * D:3 * D]
        w_fa = w_nar[3 * D:5 * D]                # fused fc_alpha1 weight [Wa; Wb]
        w_ff2 = w_nar[5 * D:5 * D + dff]

        def brow(r, width):
            return btbl[r:r + 1, :width]         # (1, width) f32

        # --- self attention + residual + LayerNorm + mask_pad -------------------
        qkv = mm(xs, w_sa_qkv) + brow(_B_SA_QKV, 3 * D)
        att = attention(qkv[:, :D], qkv[:, D:2 * D], qkv[:, 2 * D:3 * D],
                        mx_bias, n_q)
        att = mm(att, w_sa_o) + brow(_B_SA_O, D)
        sa = _layer_norm(xs + att, brow(_B_SA_G, D), brow(_B_SA_B, D)) * mp

        # --- cross attention over y1 + residual + LayerNorm ---------------------
        qc = mm(sa, w_va_q) + brow(_B_VA_Q, D)
        kv = mm(y1s, w_va_kv) + brow(_B_VA_KV, 2 * D)
        att2 = attention(qc, kv[:, :D], kv[:, D:2 * D], my_bias, n_kv)
        att2 = mm(att2, w_va_o) + brow(_B_VA_O, D)
        e1 = _layer_norm(sa + att2, brow(_B_VA_G, D), brow(_B_VA_B, D)) * mp

        # --- alpha1 = sigmoid(fc_alpha1(cat([sa, e1], -1))): one fused matmul ----
        alpha = jax.nn.sigmoid(mm(jnp.concatenate([sa, e1], axis=-1), w_fa)
                               + brow(_B_FA, D))
        enc = e1 * alpha * mp

        # --- position-wise FFN + residual + LayerNorm ----------------------------
        h1 = jnp.maximum(mm(enc, w_ff1) + brow(_B_FF1, dff), 0.0)
        o2 = mm(h1, w_ff2) + brow(_B_FF2, D)
        ff = _layer_norm(enc + o2, brow(_B_FF_G, D), brow(_B_FF_B, D)) * mp

        # Lane-dense unmasked store: zero-pad D=32 -> 128 lanes (wrapper slices).
        # TODO(synk): a fully packed (block_b, n_q*D) output would need a
        #             sublane->lane relayout (general reshape) that Mosaic is not
        #             guaranteed to lower; 128-lane padding already yields
        #             full-width vst instead of masked partial stores.
        pad = jnp.zeros((R, _OUT_LANES - D), jnp.float32)
        out_ref[...] = jnp.concatenate([ff, pad], axis=-1)

    return kernel


def pack_params(params, matmul_dtype):
    """Fuse per-head weights, fold the 1/sqrt(d_k) scale, and pack everything
    into 3 slabs (wide matrices, narrow matrices, biases/LayerNorm params)."""
    p = params
    D, H, dk, dff = D_MODEL, N_HEADS, D_K, D_FF
    scale = 1.0 / math.sqrt(dk)

    def fuse_in(w):    # (H, D, dk) -> (D, H*dk)
        return jnp.transpose(w, (1, 0, 2)).reshape(D, H * dk)

    def fuse_b(b):     # (H, 1, dk) -> (H*dk,)
        return b.reshape(H * dk)

    def fuse_out(w):   # (H, dk, D) -> (H*dk, D)
        return w.reshape(H * dk, D)

    sa_wqkv = jnp.concatenate(
        [fuse_in(p["sa_wq"]) * scale, fuse_in(p["sa_wk"]), fuse_in(p["sa_wv"])], axis=1)
    va_wq = fuse_in(p["va_wq"]) * scale
    va_wkv = jnp.concatenate([fuse_in(p["va_wk"]), fuse_in(p["va_wv"])], axis=1)

    # Wide slab: matrices whose output width exceeds D, sublane-stacked, lane-padded.
    wide_cols = max(3 * D, 2 * D, dff)

    def pad_c(w):
        return jnp.pad(w, ((0, 0), (0, wide_cols - w.shape[1])))

    w_wide = jnp.concatenate(
        [pad_c(sa_wqkv), pad_c(va_wkv), pad_c(p["ff_w1"])], axis=0).astype(matmul_dtype)

    # Narrow slab: all (., D) matrices sublane-stacked (fc_alpha rows contiguous).
    w_narrow = jnp.concatenate(
        [fuse_out(p["sa_wo"]), va_wq, fuse_out(p["va_wo"]),
         p["fa_wa"], p["fa_wb"], p["ff_w2"]], axis=0).astype(matmul_dtype)

    # Bias / LayerNorm slab (f32), one parameter vector per row, lane-padded.
    bias_cols = ((max(3 * D, dff, D) + 127) // 128) * 128

    def brow(v):
        v = jnp.asarray(v, jnp.float32).reshape(-1)
        return jnp.pad(v, (0, bias_cols - v.shape[0]))

    rows = [
        brow(jnp.concatenate([fuse_b(p["sa_bq"]) * scale,
                              fuse_b(p["sa_bk"]), fuse_b(p["sa_bv"])])),   # _B_SA_QKV
        brow(p["sa_bo"]), brow(p["sa_g"]), brow(p["sa_b"]),
        brow(fuse_b(p["va_bq"]) * scale),                                   # _B_VA_Q
        brow(jnp.concatenate([fuse_b(p["va_bk"]), fuse_b(p["va_bv"])])),    # _B_VA_KV
        brow(p["va_bo"]), brow(p["va_g"]), brow(p["va_b"]),
        brow(p["fa_b"]), brow(p["ff_b1"]), brow(p["ff_b2"]),
        brow(p["ff_g"]), brow(p["ff_b"]),
    ]
    while len(rows) < _BIAS_ROWS:
        rows.append(jnp.zeros((bias_cols,), jnp.float32))
    bias_slab = jnp.stack(rows, axis=0)

    return {"w_wide": w_wide, "w_narrow": w_narrow, "bias": bias_slab}


def _hw_defaults():
    """Per-generation policy: single-TC v5e/v6e prefer grid=1 with max block_b
    (128 MiB VMEM); dual-TC v7x prefers an even grid >= 2 sized against 64 MiB."""
    kind = ""
    try:
        kind = jax.devices()[0].device_kind.lower()
    except Exception:
        pass
    is_v7 = "v7" in kind
    vmem_phys = (64 if is_v7 else 128) << 20
    return {
        "two_cores": is_v7,
        "vmem_budget": int(vmem_phys * 0.6),
        "vmem_limit_bytes": int(vmem_phys * 0.75),
        # v5e has no native bf16 VPU: skip f32->bf16 pack cost there.
        "matmul_dtype": jnp.bfloat16 if ("v6" in kind or is_v7) else jnp.float32,
    }


def _vmem_bytes_estimate(block_b, n_q, n_kv):
    """Rough per-step VMEM footprint (double-buffered blocks + transients)."""
    d = D_MODEL
    r, rk = block_b * n_q, block_b * n_kv
    act = 2 * (r * (d + 1) + rk * d) * 4            # f32 activation slabs
    msk = 2 * r * (n_q + n_kv) * 2                  # bf16 additive mask bias
    out = 2 * r * _OUT_LANES * 4                    # lane-padded f32 output
    wts = 2 * (3 * d * max(3 * d, 2 * d, D_FF) + (5 * d + D_FF) * d) * 4 \
        + 2 * _BIAS_ROWS * 128 * 4
    live = 8 * block_b * n_q * 128 * 4              # scores / softmax transients
    return act + msk + out + wts + live


def _choose_block_b(batch, n_q, n_kv, *, two_cores, vmem_budget):
    best = 1
    for d in range(1, batch + 1):
        if batch % d:
            continue
        steps = batch // d
        if two_cores and (steps < 2 or steps % 2):
            continue                                # keep both v7x TCs evenly busy
        if _vmem_bytes_estimate(d, n_q, n_kv) > vmem_budget:
            continue
        best = max(best, d)
    return best


def parallel_attention_layer(params, x, y1, y2, mask_pad, mask_x, mask_y1, mask_y2,
                             *, matmul_dtype=None, block_b=None, hw=None):
    """Pallas implementation of ParallelAttentionLayer.forward (activation='sigmoid')."""
    del y2, mask_y2            # declared by the module but unused by forward()
    B, N, D = x.shape
    M = y1.shape[1]
    assert D == D_MODEL
    # seq lens must be sublane multiples so in-kernel 2D<->3D reshapes are free.
    assert N % 8 == 0 and M % 8 == 0, "N and M must be multiples of 8"

    hw = hw or _hw_defaults()
    if matmul_dtype is None:
        matmul_dtype = hw["matmul_dtype"]
    if block_b is None:
        block_b = _choose_block_b(B, N, M, two_cores=hw["two_cores"],
                                  vmem_budget=hw["vmem_budget"])
    assert B % block_b == 0
    grid_b = B // block_b
    R, RK = block_b * N, block_b * M

    packed = pack_params(params, matmul_dtype)

    # x slab with mask_pad as an extra lane column (one DMA instead of two).
    xm = jnp.concatenate(
        [x.reshape(B * N, D).astype(jnp.float32),
         mask_pad.reshape(B * N, 1).astype(jnp.float32)], axis=-1)     # (B*N, D+1)
    y1s = y1.reshape(B * M, D).astype(jnp.float32)                     # (B*M, D)
    # One additive attention-bias slab (0 keep / -1e9 masked), bf16.
    mbias = (jnp.concatenate([mask_x, mask_y1], axis=-1).astype(jnp.float32)
             * jnp.float32(-1e9)).astype(jnp.bfloat16)                 # (B, N, N+M)

    kernel = _make_kernel(block_b, N, M, matmul_dtype)

    out = pl.pallas_call(
        kernel,
        out_shape=jax.ShapeDtypeStruct((B * N, _OUT_LANES), jnp.float32),
        grid=(grid_b,),
        in_specs=[
            pl.BlockSpec((R, D + 1), lambda i: (i, 0)),            # x | mask_pad
            pl.BlockSpec((RK, D), lambda i: (i, 0)),               # y1
            pl.BlockSpec((block_b, N, N + M), lambda i: (i, 0, 0)),  # additive mask bias
            pl.BlockSpec(packed["w_wide"].shape, lambda i: (0, 0)),
            pl.BlockSpec(packed["w_narrow"].shape, lambda i: (0, 0)),
            pl.BlockSpec(packed["bias"].shape, lambda i: (0, 0)),
        ],
        out_specs=pl.BlockSpec((R, _OUT_LANES), lambda i: (i, 0)),
        compiler_params=pltpu.CompilerParams(
            dimension_semantics=("parallel",),
            vmem_limit_bytes=hw["vmem_limit_bytes"]),
    )(xm, y1s, mbias, packed["w_wide"], packed["w_narrow"], packed["bias"])

    return out[:, :D_MODEL].reshape(B, N, D_MODEL)


def init_params(key):
    """Deterministic synthetic parameters (vis_att2 / fc_alpha2 exist in __init__
    but are never used by forward(), so they are not materialized)."""
    keys = iter(jax.random.split(key, 24))

    def rnd(shape, scale):
        return jax.random.normal(next(keys), shape, jnp.float32) * scale

    p = {}
    for pre in ("sa", "va"):
        p[f"{pre}_wq"] = rnd((N_HEADS, D_MODEL, D_K), 0.1)
        p[f"{pre}_wk"] = rnd((N_HEADS, D_MODEL, D_K), 0.1)
        p[f"{pre}_wv"] = rnd((N_HEADS, D_MODEL, D_K), 0.1)
        p[f"{pre}_wo"] = rnd((N_HEADS, D_K, D_MODEL), 0.1)
        p[f"{pre}_bq"] = rnd((N_HEADS, 1, D_K), 0.01)
        p[f"{pre}_bk"] = rnd((N_HEADS, 1, D_K), 0.01)
        p[f"{pre}_bv"] = rnd((N_HEADS, 1, D_K), 0.01)
        p[f"{pre}_bo"] = rnd((1, D_MODEL), 0.01)
        p[f"{pre}_g"] = jnp.ones((1, D_MODEL), jnp.float32)
        p[f"{pre}_b"] = jnp.zeros((1, D_MODEL), jnp.float32)
    p["fa_wa"] = rnd((D_MODEL, D_MODEL), 0.1)
    p["fa_wb"] = rnd((D_MODEL, D_MODEL), 0.1)
    p["fa_b"] = jnp.zeros((1, D_MODEL), jnp.float32)     # nn.init.constant_(bias, 0)
    p["ff_w1"] = rnd((D_MODEL, D_FF), 0.1)
    p["ff_b1"] = rnd((1, D_FF), 0.01)
    p["ff_w2"] = rnd((D_FF, D_MODEL), 0.1)
    p["ff_b2"] = rnd((1, D_MODEL), 0.01)
    p["ff_g"] = jnp.ones((1, D_MODEL), jnp.float32)
    p["ff_b"] = jnp.zeros((1, D_MODEL), jnp.float32)
    return p


def reference_forward(params, x, y1, mask_pad, mask_x, mask_y1,
                      matmul_dtype=jnp.float32):
    """Independent pure-JAX/XLA reference mirroring the PyTorch forward.
    `matmul_dtype` controls the matmul operand dtype (to match the kernel's
    bf16 MXU path); statistics and accumulation stay f32."""
    p = params
    mdt = matmul_dtype
    scale = 1.0 / math.sqrt(D_K)
    hi = jax.lax.Precision.HIGHEST

    def dot(a, w):
        return jnp.dot(a.astype(mdt), w.astype(mdt),
                       preferred_element_type=jnp.float32, precision=hi)

    def ln(v, g, b, eps=1e-5):
        mu = jnp.mean(v, axis=-1, keepdims=True)
        var = jnp.mean((v - mu) ** 2, axis=-1, keepdims=True)
        return (v - mu) * jax.lax.rsqrt(var + eps) * g + b

    def mha(q_in, kv_in, mask, pre):
        out = jnp.zeros((q_in.shape[0], D_MODEL), jnp.float32)
        for h in range(N_HEADS):
            qh = dot(q_in, p[f"{pre}_wq"][h] * scale) + p[f"{pre}_bq"][h] * scale
            kh = dot(kv_in, p[f"{pre}_wk"][h]) + p[f"{pre}_bk"][h]
            vh = dot(kv_in, p[f"{pre}_wv"][h]) + p[f"{pre}_bv"][h]
            s = dot(qh, kh.T)
            s = jnp.where(mask > 0.0, -1e9, s)
            pr = jax.nn.softmax(s, axis=-1)
            oh = dot(pr, vh)
            out = out + dot(oh, p[f"{pre}_wo"][h])
        out = out + p[f"{pre}_bo"]
        return ln(q_in + out, p[f"{pre}_g"], p[f"{pre}_b"])

    def one(xb, y1b, mpb, mxb, myb):
        sa = mha(xb, xb, mxb, "sa") * mpb
        e1 = mha(sa, y1b, myb, "va") * mpb
        alpha = jax.nn.sigmoid(dot(sa, p["fa_wa"]) + dot(e1, p["fa_wb"]) + p["fa_b"])
        enc = e1 * alpha * mpb
        h1 = jnp.maximum(dot(enc, p["ff_w1"]) + p["ff_b1"], 0.0)
        o2 = dot(h1, p["ff_w2"]) + p["ff_b2"]
        return ln(enc + o2, p["ff_g"], p["ff_b"]) * mpb

    return jax.vmap(one)(
        x.astype(jnp.float32), y1.astype(jnp.float32),
        mask_pad.astype(jnp.float32), mask_x.astype(jnp.float32),
        mask_y1.astype(jnp.float32))


if __name__ == "__main__":
    B, N, M = 4, 8, 16

    key = jax.random.PRNGKey(0)
    kx, ky1, ky2, kp = jax.random.split(key, 4)
    x = jax.random.normal(kx, (B, N, D_MODEL), jnp.float32)
    y1 = jax.random.normal(ky1, (B, M, D_MODEL), jnp.float32)
    y2 = jax.random.normal(ky2, (B, M, D_MODEL), jnp.float32)   # unused by forward

    # padding mask: 1.0 keep, 0.0 pad (last two query positions are padding)
    mask_pad = jnp.ones((B, N, 1), jnp.float32).at[:, -2:, :].set(0.0)
    # causal self-attention mask (1.0 == masked)
    causal = (jnp.arange(N)[:, None] < jnp.arange(N)[None, :]).astype(jnp.float32)
    mask_x = jnp.broadcast_to(causal, (B, N, N))
    mask_y1 = jnp.zeros((B, N, M), jnp.float32)
    mask_y2 = jnp.zeros((B, N, M), jnp.float32)

    params = init_params(kp)

    fwd = jax.jit(parallel_attention_layer, static_argnames=("matmul_dtype", "block_b"))
    ref = jax.jit(reference_forward, static_argnames=("matmul_dtype",))

    # f32 MXU path (exact softmax divide) vs independent f32 reference.
    out_f32 = jax.block_until_ready(fwd(
        params, x, y1, y2, mask_pad, mask_x, mask_y1, mask_y2,
        matmul_dtype=jnp.float32))
    ref_f32 = jax.block_until_ready(ref(
        params, x, y1, mask_pad, mask_x, mask_y1, matmul_dtype=jnp.float32))
    err_f32 = float(jnp.max(jnp.abs(out_f32 - ref_f32)))

    # bf16 MXU path vs the same reference with matching bf16 matmul operands.
    out_bf16 = jax.block_until_ready(fwd(
        params, x, y1, y2, mask_pad, mask_x, mask_y1, mask_y2,
        matmul_dtype=jnp.bfloat16))
    ref_bf16 = jax.block_until_ready(ref(
        params, x, y1, mask_pad, mask_x, mask_y1, matmul_dtype=jnp.bfloat16))
    err_bf16 = float(jnp.max(jnp.abs(out_bf16 - ref_bf16)))

    assert out_f32.shape == (B, N, D_MODEL)
    assert err_f32 < 2e-2, f"f32 max abs error {err_f32}"
    assert err_bf16 < 8e-2, f"bf16 max abs error {err_bf16}"
    print("KERNEL_OK")
</pallas_src>

<mosaic_0001>
module attributes {stable_mosaic.version = 11 : i64} {
  func.func @kernel(%arg0: i32, %arg1: memref<32x33xf32, #tpu.memory_space<vmem>>, %arg2: memref<64x32xf32, #tpu.memory_space<vmem>>, %arg3: memref<4x8x24xbf16, #tpu.memory_space<vmem>>, %arg4: memref<96x96xf32, #tpu.memory_space<vmem>>, %arg5: memref<224x32xf32, #tpu.memory_space<vmem>>, %arg6: memref<16x128xf32, #tpu.memory_space<vmem>>, %arg7: memref<32x128xf32, #tpu.memory_space<vmem>>) attributes {dimension_semantics = [#tpu.dimension_semantics<parallel>], iteration_bounds = array<i64: 1>, scalar_prefetch = 0 : i64, scratch_operands = 0 : i64, tpu.core_type = #tpu.core_type<tc>, window_params = [{transform_indices = @transform_0, window_bounds = array<i64: 32, 33>}, {transform_indices = @transform_1, window_bounds = array<i64: 64, 32>}, {transform_indices = @transform_2, window_bounds = array<i64: 4, 8, 24>}, {pipeline_mode = #tpu.pipeline_mode<synchronous>, transform_indices = @transform_3, window_bounds = array<i64: 96, 96>}, {pipeline_mode = #tpu.pipeline_mode<synchronous>, transform_indices = @transform_4, window_bounds = array<i64: 224, 32>}, {pipeline_mode = #tpu.pipeline_mode<synchronous>, transform_indices = @transform_5, window_bounds = array<i64: 16, 128>}, {transform_indices = @transform_6, window_bounds = array<i64: 32, 128>}]} {
    %c0 = arith.constant 0 : index
    %c0_0 = arith.constant 0 : index
    %0 = vector.load %arg1[%c0, %c0_0] : memref<32x33xf32, #tpu.memory_space<vmem>>, vector<32x33xf32>
    %1 = vector.extract_strided_slice %0 {offsets = [0, 0], sizes = [32, 32], strides = [1, 1]} : vector<32x33xf32> to vector<32x32xf32>
    %2 = vector.extract_strided_slice %0 {offsets = [0, 32], sizes = [32, 1], strides = [1, 1]} : vector<32x33xf32> to vector<32x1xf32>
    %c0_1 = arith.constant 0 : index
    %c0_2 = arith.constant 0 : index
    %3 = vector.load %arg2[%c0_1, %c0_2] : memref<64x32xf32, #tpu.memory_space<vmem>>, vector<64x32xf32>
    %c0_3 = arith.constant 0 : index
    %c0_4 = arith.constant 0 : index
    %c0_5 = arith.constant 0 : index
    %4 = vector.load %arg3[%c0_3, %c0_4, %c0_5] : memref<4x8x24xbf16, #tpu.memory_space<vmem>>, vector<4x8x24xbf16>
    %5 = arith.extf %4 : vector<4x8x24xbf16> to vector<4x8x24xf32>
    %6 = vector.extract_strided_slice %5 {offsets = [0, 0, 0], sizes = [4, 8, 8], strides = [1, 1, 1]} : vector<4x8x24xf32> to vector<4x8x8xf32>
    %7 = vector.extract_strided_slice %5 {offsets = [0, 0, 8], sizes = [4, 8, 16], strides = [1, 1, 1]} : vector<4x8x24xf32> to vector<4x8x16xf32>
    %c0_6 = arith.constant 0 : index
    %c0_7 = arith.constant 0 : index
    %8 = vector.load %arg4[%c0_6, %c0_7] : memref<96x96xf32, #tpu.memory_space<vmem>>, vector<96x96xf32>
    %c0_8 = arith.constant 0 : index
    %c0_9 = arith.constant 0 : index
    %9 = vector.load %arg5[%c0_8, %c0_9] : memref<224x32xf32, #tpu.memory_space<vmem>>, vector<224x32xf32>
    %c0_10 = arith.constant 0 : index
    %c0_11 = arith.constant 0 : index
    %10 = vector.load %arg6[%c0_10, %c0_11] : memref<16x128xf32, #tpu.memory_space<vmem>>, vector<16x128xf32>
    %11 = vector.extract_strided_slice %8 {offsets = [0, 0], sizes = [32, 96], strides = [1, 1]} : vector<96x96xf32> to vector<32x96xf32>
    %12 = vector.extract_strided_slice %8 {offsets = [32, 0], sizes = [32, 64], strides = [1, 1]} : vector<96x96xf32> to vector<32x64xf32>
    %13 = vector.extract_strided_slice %8 {offsets = [64, 0], sizes = [32, 64], strides = [1, 1]} : vector<96x96xf32> to vector<32x64xf32>
    %14 = vector.extract_strided_slice %9 {offsets = [0, 0], sizes = [32, 32], strides = [1, 1]} : vector<224x32xf32> to vector<32x32xf32>
    %15 = vector.extract_strided_slice %9 {offsets = [32, 0], sizes = [32, 32], strides = [1, 1]} : vector<224x32xf32> to vector<32x32xf32>
    %16 = vector.extract_strided_slice %9 {offsets = [64, 0], sizes = [32, 32], strides = [1, 1]} : vector<224x32xf32> to vector<32x32xf32>
    %17 = vector.extract_strided_slice %9 {offsets = [96, 0], sizes = [64, 32], strides = [1, 1]} : vector<224x32xf32> to vector<64x32xf32>
    %18 = vector.extract_strided_slice %9 {offsets = [160, 0], sizes = [64, 32], strides = [1, 1]} : vector<224x32xf32> to vector<64x32xf32>
    %cst = arith.constant dense<0.000000e+00> : vector<32x96xf32>
    %19 = tpu.matmul %1, %11, %cst {dimension_numbers = #tpu.dot_dimension_numbers<[1], [0], [0], [1], [0, 0, 1, 1], [], []>} : vector<32x32xf32>, vector<32x96xf32>, vector<32x96xf32> -> vector<32x96xf32>
    %20 = vector.extract_strided_slice %10 {offsets = [0, 0], sizes = [1, 96], strides = [1, 1]} : vector<16x128xf32> to vector<1x96xf32>
    %21 = vector.broadcast %20 : vector<1x96xf32> to vector<32x96xf32>
    %22 = arith.addf %19, %21 : vector<32x96xf32>
    %23 = vector.extract_strided_slice %22 {offsets = [0, 0], sizes = [32, 32], strides = [1, 1]} : vector<32x96xf32> to vector<32x32xf32>
    %24 = vector.extract_strided_slice %22 {offsets = [0, 32], sizes = [32, 32], strides = [1, 1]} : vector<32x96xf32> to vector<32x32xf32>
    %25 = vector.extract_strided_slice %22 {offsets = [0, 64], sizes = [32, 32], strides = [1, 1]} : vector<32x96xf32> to vector<32x32xf32>
    %26 = vector.shape_cast %23 : vector<32x32xf32> to vector<4x8x32xf32>
    %27 = vector.shape_cast %24 : vector<32x32xf32> to vector<4x8x32xf32>
    %28 = vector.shape_cast %25 : vector<32x32xf32> to vector<4x8x32xf32>
    %29 = vector.extract_strided_slice %26 {offsets = [0, 0, 0], sizes = [4, 8, 8], strides = [1, 1, 1]} : vector<4x8x32xf32> to vector<4x8x8xf32>
    %30 = vector.extract_strided_slice %27 {offsets = [0, 0, 0], sizes = [4, 8, 8], strides = [1, 1, 1]} : vector<4x8x32xf32> to vector<4x8x8xf32>
    "tpu.trace_start"() <{level = 10 : i32, message = "bqd,bkd->bqk"}> : () -> ()
    %cst_12 = arith.constant dense<0.000000e+00> : vector<4x8x8xf32>
    %31 = tpu.matmul %29, %30, %cst_12 {dimension_numbers = #tpu.dot_dimension_numbers<[2], [2], [1], [1], [0, 0, 0, 1, 1, 1], [0], [0]>} : vector<4x8x8xf32>, vector<4x8x8xf32>, vector<4x8x8xf32> -> vector<4x8x8xf32>
    "tpu.trace_stop"() : () -> ()
    %32 = arith.addf %31, %6 : vector<4x8x8xf32>
    %cst_13 = arith.constant dense<0xFF800000> : vector<4x8xf32>
    %33 = vector.multi_reduction <maximumf>, %32, %cst_13 [2] : vector<4x8x8xf32> to vector<4x8xf32>
    %34 = vector.shape_cast %33 : vector<4x8xf32> to vector<4x8x1xf32>
    %35 = vector.broadcast %34 : vector<4x8x1xf32> to vector<4x8x8xf32>
    %36 = arith.subf %32, %35 : vector<4x8x8xf32>
    %37 = math.exp %36 : vector<4x8x8xf32>
    %cst_14 = arith.constant dense<0.000000e+00> : vector<4x8xf32>
    %38 = vector.multi_reduction <add>, %37, %cst_14 [2] : vector<4x8x8xf32> to vector<4x8xf32>
    %39 = vector.shape_cast %38 : vector<4x8xf32> to vector<4x8x1xf32>
    %40 = vector.broadcast %39 : vector<4x8x1xf32> to vector<4x8x8xf32>
    %41 = arith.divf %37, %40 : vector<4x8x8xf32>
    %42 = vector.extract_strided_slice %28 {offsets = [0, 0, 0], sizes = [4, 8, 8], strides = [1, 1, 1]} : vector<4x8x32xf32> to vector<4x8x8xf32>
    "tpu.trace_start"() <{level = 10 : i32, message = "bqk,bkd->bqd"}> : () -> ()
    %cst_15 = arith.constant dense<0.000000e+00> : vector<4x8x8xf32>
    %43 = tpu.matmul %41, %42, %cst_15 {dimension_numbers = #tpu.dot_dimension_numbers<[2], [1], [1], [2], [0, 0, 0, 1, 1, 2], [0], [0]>} : vector<4x8x8xf32>, vector<4x8x8xf32>, vector<4x8x8xf32> -> vector<4x8x8xf32>
    "tpu.trace_stop"() : () -> ()
    %44 = vector.extract_strided_slice %26 {offsets = [0, 0, 8], sizes = [4, 8, 8], strides = [1, 1, 1]} : vector<4x8x32xf32> to vector<4x8x8xf32>
    %45 = vector.extract_strided_slice %27 {offsets = [0, 0, 8], sizes = [4, 8, 8], strides = [1, 1, 1]} : vector<4x8x32xf32> to vector<4x8x8xf32>
    "tpu.trace_start"() <{level = 10 : i32, message = "bqd,bkd->bqk"}> : () -> ()
    %cst_16 = arith.constant dense<0.000000e+00> : vector<4x8x8xf32>
    %46 = tpu.matmul %44, %45, %cst_16 {dimension_numbers = #tpu.dot_dimension_numbers<[2], [2], [1], [1], [0, 0, 0, 1, 1, 1], [0], [0]>} : vector<4x8x8xf32>, vector<4x8x8xf32>, vector<4x8x8xf32> -> vector<4x8x8xf32>
    "tpu.trace_stop"() : () -> ()
    %47 = arith.addf %46, %6 : vector<4x8x8xf32>
    %cst_17 = arith.constant dense<0xFF800000> : vector<4x8xf32>
    %48 = vector.multi_reduction <maximumf>, %47, %cst_17 [2] : vector<4x8x8xf32> to vector<4x8xf32>
    %49 = vector.shape_cast %48 : vector<4x8xf32> to vector<4x8x1xf32>
    %50 = vector.broadcast %49 : vector<4x8x1xf32> to vector<4x8x8xf32>
    %51 = arith.subf %47, %50 : vector<4x8x8xf32>
    %52 = math.exp %51 : vector<4x8x8xf32>
    %cst_18 = arith.constant dense<0.000000e+00> : vector<4x8xf32>
    %53 = vector.multi_reduction <add>, %52, %cst_18 [2] : vector<4x8x8xf32> to vector<4x8xf32>
    %54 = vector.shape_cast %53 : vector<4x8xf32> to vector<4x8x1xf32>
    %55 = vector.broadcast %54 : vector<4x8x1xf32> to vector<4x8x8xf32>
    %56 = arith.divf %52, %55 : vector<4x8x8xf32>
    %57 = vector.extract_strided_slice %28 {offsets = [0, 0, 8], sizes = [4, 8, 8], strides = [1, 1, 1]} : vector<4x8x32xf32> to vector<4x8x8xf32>
    "tpu.trace_start"() <{level = 10 : i32, message = "bqk,bkd->bqd"}> : () -> ()
    %cst_19 = arith.constant dense<0.000000e+00> : vector<4x8x8xf32>
    %58 = tpu.matmul %56, %57, %cst_19 {dimension_numbers = #tpu.dot_dimension_numbers<[2], [1], [1], [2], [0, 0, 0, 1, 1, 2], [0], [0]>} : vector<4x8x8xf32>, vector<4x8x8xf32>, vector<4x8x8xf32> -> vector<4x8x8xf32>
    "tpu.trace_stop"() : () -> ()
    %59 = vector.extract_strided_slice %26 {offsets = [0, 0, 16], sizes = [4, 8, 8], strides = [1, 1, 1]} : vector<4x8x32xf32> to vector<4x8x8xf32>
    %60 = vector.extract_strided_slice %27 {offsets = [0, 0, 16], sizes = [4, 8, 8], strides = [1, 1, 1]} : vector<4x8x32xf32> to vector<4x8x8xf32>
    "tpu.trace_start"() <{level = 10 : i32, message = "bqd,bkd->bqk"}> : () -> ()
    %cst_20 = arith.constant dense<0.000000e+00> : vector<4x8x8xf32>
    %61 = tpu.matmul %59, %60, %cst_20 {dimension_numbers = #tpu.dot_dimension_numbers<[2], [2], [1], [1], [0, 0, 0, 1, 1, 1], [0], [0]>} : vector<4x8x8xf32>, vector<4x8x8xf32>, vector<4x8x8xf32> -> vector<4x8x8xf32>
    "tpu.trace_stop"() : () -> ()
    %62 = arith.addf %61, %6 : vector<4x8x8xf32>
    %cst_21 = arith.constant dense<0xFF800000> : vector<4x8xf32>
    %63 = vector.multi_reduction <maximumf>, %62, %cst_21 [2] : vector<4x8x8xf32> to vector<4x8xf32>
    %64 = vector.shape_cast %63 : vector<4x8xf32> to vector<4x8x1xf32>
    %65 = vector.broadcast %64 : vector<4x8x1xf32> to vector<4x8x8xf32>
    %66 = arith.subf %62, %65 : vector<4x8x8xf32>
    %67 = math.exp %66 : vector<4x8x8xf32>
    %cst_22 = arith.constant dense<0.000000e+00> : vector<4x8xf32>
    %68 = vector.multi_reduction <add>, %67, %cst_22 [2] : vector<4x8x8xf32> to vector<4x8xf32>
    %69 = vector.shape_cast %68 : vector<4x8xf32> to vector<4x8x1xf32>
    %70 = vector.broadcast %69 : vector<4x8x1xf32> to vector<4x8x8xf32>
    %71 = arith.divf %67, %70 : vector<4x8x8xf32>
    %72 = vector.extract_strided_slice %28 {offsets = [0, 0, 16], sizes = [4, 8, 8], strides = [1, 1, 1]} : vector<4x8x32xf32> to vector<4x8x8xf32>
    "tpu.trace_start"() <{level = 10 : i32, message = "bqk,bkd->bqd"}> : () -> ()
    %cst_23 = arith.constant dense<0.000000e+00> : vector<4x8x8xf32>
    %73 = tpu.matmul %71, %72, %cst_23 {dimension_numbers = #tpu.dot_dimension_numbers<[2], [1], [1], [2], [0, 0, 0, 1, 1, 2], [0], [0]>} : vector<4x8x8xf32>, vector<4x8x8xf32>, vector<4x8x8xf32> -> vector<4x8x8xf32>
    "tpu.trace_stop"() : () -> ()
    %74 = vector.extract_strided_slice %26 {offsets = [0, 0, 24], sizes = [4, 8, 8], strides = [1, 1, 1]} : vector<4x8x32xf32> to vector<4x8x8xf32>
    %75 = vector.extract_strided_slice %27 {offsets = [0, 0, 24], sizes = [4, 8, 8], strides = [1, 1, 1]} : vector<4x8x32xf32> to vector<4x8x8xf32>
    "tpu.trace_start"() <{level = 10 : i32, message = "bqd,bkd->bqk"}> : () -> ()
    %cst_24 = arith.constant dense<0.000000e+00> : vector<4x8x8xf32>
    %76 = tpu.matmul %74, %75, %cst_24 {dimension_numbers = #tpu.dot_dimension_numbers<[2], [2], [1], [1], [0, 0, 0, 1, 1, 1], [0], [0]>} : vector<4x8x8xf32>, vector<4x8x8xf32>, vector<4x8x8xf32> -> vector<4x8x8xf32>
    "tpu.trace_stop"() : () -> ()
    %77 = arith.addf %76, %6 : vector<4x8x8xf32>
    %cst_25 = arith.constant dense<0xFF800000> : vector<4x8xf32>
    %78 = vector.multi_reduction <maximumf>, %77, %cst_25 [2] : vector<4x8x8xf32> to vector<4x8xf32>
    %79 = vector.shape_cast %78 : vector<4x8xf32> to vector<4x8x1xf32>
    %80 = vector.broadcast %79 : vector<4x8x1xf32> to vector<4x8x8xf32>
    %81 = arith.subf %77, %80 : vector<4x8x8xf32>
    %82 = math.exp %81 : vector<4x8x8xf32>
    %cst_26 = arith.constant dense<0.000000e+00> : vector<4x8xf32>
    %83 = vector.multi_reduction <add>, %82, %cst_26 [2] : vector<4x8x8xf32> to vector<4x8xf32>
    %84 = vector.shape_cast %83 : vector<4x8xf32> to vector<4x8x1xf32>
    %85 = vector.broadcast %84 : vector<4x8x1xf32> to vector<4x8x8xf32>
    %86 = arith.divf %82, %85 : vector<4x8x8xf32>
    %87 = vector.extract_strided_slice %28 {offsets = [0, 0, 24], sizes = [4, 8, 8], strides = [1, 1, 1]} : vector<4x8x32xf32> to vector<4x8x8xf32>
    "tpu.trace_start"() <{level = 10 : i32, message = "bqk,bkd->bqd"}> : () -> ()
    %cst_27 = arith.constant dense<0.000000e+00> : vector<4x8x8xf32>
    %88 = tpu.matmul %86, %87, %cst_27 {dimension_numbers = #tpu.dot_dimension_numbers<[2], [1], [1], [2], [0, 0, 0, 1, 1, 2], [0], [0]>} : vector<4x8x8xf32>, vector<4x8x8xf32>, vector<4x8x8xf32> -> vector<4x8x8xf32>
    "tpu.trace_stop"() : () -> ()
    %89 = tpu.concatenate %43, %58, %73, %88 in 2 : vector<4x8x8xf32>, vector<4x8x8xf32>, vector<4x8x8xf32>, vector<4x8x8xf32> -> vector<4x8x32xf32>
    %90 = vector.shape_cast %89 : vector<4x8x32xf32> to vector<32x32xf32>
    %cst_28 = arith.constant dense<0.000000e+00> : vector<32x32xf32>
    %91 = tpu.matmul %90, %14, %cst_28 {dimension_numbers = #tpu.dot_dimension_numbers<[1], [0], [0], [1], [0, 0, 1, 1], [], []>} : vector<32x32xf32>, vector<32x32xf32>, vector<32x32xf32> -> vector<32x32xf32>
    %92 = vector.extract_strided_slice %10 {offsets = [1, 0], sizes = [1, 32], strides = [1, 1]} : vector<16x128xf32> to vector<1x32xf32>
    %93 = vector.broadcast %92 : vector<1x32xf32> to vector<32x32xf32>
    %94 = arith.addf %91, %93 : vector<32x32xf32>
    %95 = arith.addf %1, %94 : vector<32x32xf32>
    %96 = vector.extract_strided_slice %10 {offsets = [2, 0], sizes = [1, 32], strides = [1, 1]} : vector<16x128xf32> to vector<1x32xf32>
    %97 = vector.extract_strided_slice %10 {offsets = [3, 0], sizes = [1, 32], strides = [1, 1]} : vector<16x128xf32> to vector<1x32xf32>
    %cst_29 = arith.constant dense<0.000000e+00> : vector<32xf32>
    %98 = vector.multi_reduction <add>, %95, %cst_29 [1] : vector<32x32xf32> to vector<32xf32>
    %99 = vector.shape_cast %98 : vector<32xf32> to vector<32x1xf32>
    %cst_30 = arith.constant 3.200000e+01 : f32
    %100 = vector.broadcast %cst_30 : f32 to vector<32x1xf32>
    %101 = arith.divf %99, %100 : vector<32x1xf32>
    %102 = vector.broadcast %101 : vector<32x1xf32> to vector<32x32xf32>
    %103 = arith.subf %95, %102 : vector<32x32xf32>
    %104 = arith.mulf %103, %103 : vector<32x32xf32>
    %cst_31 = arith.constant dense<0.000000e+00> : vector<32xf32>
    %105 = vector.multi_reduction <add>, %104, %cst_31 [1] : vector<32x32xf32> to vector<32xf32>
    %106 = vector.shape_cast %105 : vector<32xf32> to vector<32x1xf32>
    %cst_32 = arith.constant 3.200000e+01 : f32
    %107 = vector.broadcast %cst_32 : f32 to vector<32x1xf32>
    %108 = arith.divf %106, %107 : vector<32x1xf32>
    %109 = vector.broadcast %101 : vector<32x1xf32> to vector<32x32xf32>
    %110 = arith.subf %95, %109 : vector<32x32xf32>
    %cst_33 = arith.constant 9.99999974E-6 : f32
    %111 = vector.broadcast %cst_33 : f32 to vector<32x1xf32>
    %112 = arith.addf %108, %111 : vector<32x1xf32>
    %113 = math.rsqrt %112 : vector<32x1xf32>
    %114 = vector.broadcast %113 : vector<32x1xf32> to vector<32x32xf32>
    %115 = arith.mulf %110, %114 : vector<32x32xf32>
    %116 = vector.broadcast %96 : vector<1x32xf32> to vector<32x32xf32>
    %117 = arith.mulf %115, %116 : vector<32x32xf32>
    %118 = vector.broadcast %97 : vector<1x32xf32> to vector<32x32xf32>
    %119 = arith.addf %117, %118 : vector<32x32xf32>
    %120 = vector.broadcast %2 : vector<32x1xf32> to vector<32x32xf32>
    %121 = arith.mulf %119, %120 : vector<32x32xf32>
    %cst_34 = arith.constant dense<0.000000e+00> : vector<32x32xf32>
    %122 = tpu.matmul %121, %15, %cst_34 {dimension_numbers = #tpu.dot_dimension_numbers<[1], [0], [0], [1], [0, 0, 1, 1], [], []>} : vector<32x32xf32>, vector<32x32xf32>, vector<32x32xf32> -> vector<32x32xf32>
    %123 = vector.extract_strided_slice %10 {offsets = [4, 0], sizes = [1, 32], strides = [1, 1]} : vector<16x128xf32> to vector<1x32xf32>
    %124 = vector.broadcast %123 : vector<1x32xf32> to vector<32x32xf32>
    %125 = arith.addf %122, %124 : vector<32x32xf32>
    %cst_35 = arith.constant dense<0.000000e+00> : vector<64x64xf32>
    %126 = tpu.matmul %3, %12, %cst_35 {dimension_numbers = #tpu.dot_dimension_numbers<[1], [0], [0], [1], [0, 0, 1, 1], [], []>} : vector<64x32xf32>, vector<32x64xf32>, vector<64x64xf32> -> vector<64x64xf32>
    %127 = vector.extract_strided_slice %10 {offsets = [5, 0], sizes = [1, 64], strides = [1, 1]} : vector<16x128xf32> to vector<1x64xf32>
    %128 = vector.broadcast %127 : vector<1x64xf32> to vector<64x64xf32>
    %129 = arith.addf %126, %128 : vector<64x64xf32>
    %130 = vector.extract_strided_slice %129 {offsets = [0, 0], sizes = [64, 32], strides = [1, 1]} : vector<64x64xf32> to vector<64x32xf32>
    %131 = vector.extract_strided_slice %129 {offsets = [0, 32], sizes = [64, 32], strides = [1, 1]} : vector<64x64xf32> to vector<64x32xf32>
    %132 = vector.shape_cast %125 : vector<32x32xf32> to vector<4x8x32xf32>
    %133 = vector.shape_cast %130 : vector<64x32xf32> to vector<4x16x32xf32>
    %134 = vector.shape_cast %131 : vector<64x32xf32> to vector<4x16x32xf32>
    %135 = vector.extract_strided_slice %132 {offsets = [0, 0, 0], sizes = [4, 8, 8], strides = [1, 1, 1]} : vector<4x8x32xf32> to vector<4x8x8xf32>
    %136 = vector.extract_strided_slice %133 {offsets = [0, 0, 0], sizes = [4, 16, 8], strides = [1, 1, 1]} : vector<4x16x32xf32> to vector<4x16x8xf32>
    "tpu.trace_start"() <{level = 10 : i32, message = "bqd,bkd->bqk"}> : () -> ()
    %cst_36 = arith.constant dense<0.000000e+00> : vector<4x8x16xf32>
    %137 = tpu.matmul %135, %136, %cst_36 {dimension_numbers = #tpu.dot_dimension_numbers<[2], [2], [1], [1], [0, 0, 0, 1, 1, 1], [0], [0]>} : vector<4x8x8xf32>, vector<4x16x8xf32>, vector<4x8x16xf32> -> vector<4x8x16xf32>
    "tpu.trace_stop"() : () -> ()
    %138 = arith.addf %137, %7 : vector<4x8x16xf32>
    %cst_37 = arith.constant dense<0xFF800000> : vector<4x8xf32>
    %139 = vector.multi_reduction <maximumf>, %138, %cst_37 [2] : vector<4x8x16xf32> to vector<4x8xf32>
    %140 = vector.shape_cast %139 : vector<4x8xf32> to vector<4x8x1xf32>
    %141 = vector.broadcast %140 : vector<4x8x1xf32> to vector<4x8x16xf32>
    %142 = arith.subf %138, %141 : vector<4x8x16xf32>
    %143 = math.exp %142 : vector<4x8x16xf32>
    %cst_38 = arith.constant dense<0.000000e+00> : vector<4x8xf32>
    %144 = vector.multi_reduction <add>, %143, %cst_38 [2] : vector<4x8x16xf32> to vector<4x8xf32>
    %145 = vector.shape_cast %144 : vector<4x8xf32> to vector<4x8x1xf32>
    %146 = vector.broadcast %145 : vector<4x8x1xf32> to vector<4x8x16xf32>
    %147 = arith.divf %143, %146 : vector<4x8x16xf32>
    %148 = vector.extract_strided_slice %134 {offsets = [0, 0, 0], sizes = [4, 16, 8], strides = [1, 1, 1]} : vector<4x16x32xf32> to vector<4x16x8xf32>
    "tpu.trace_start"() <{level = 10 : i32, message = "bqk,bkd->bqd"}> : () -> ()
    %cst_39 = arith.constant dense<0.000000e+00> : vector<4x8x8xf32>
    %149 = tpu.matmul %147, %148, %cst_39 {dimension_numbers = #tpu.dot_dimension_numbers<[2], [1], [1], [2], [0, 0, 0, 1, 1, 2], [0], [0]>} : vector<4x8x16xf32>, vector<4x16x8xf32>, vector<4x8x8xf32> -> vector<4x8x8xf32>
    "tpu.trace_stop"() : () -> ()
    %150 = vector.extract_strided_slice %132 {offsets = [0, 0, 8], sizes = [4, 8, 8], strides = [1, 1, 1]} : vector<4x8x32xf32> to vector<4x8x8xf32>
    %151 = vector.extract_strided_slice %133 {offsets = [0, 0, 8], sizes = [4, 16, 8], strides = [1, 1, 1]} : vector<4x16x32xf32> to vector<4x16x8xf32>
    "tpu.trace_start"() <{level = 10 : i32, message = "bqd,bkd->bqk"}> : () -> ()
    %cst_40 = arith.constant dense<0.000000e+00> : vector<4x8x16xf32>
    %152 = tpu.matmul %150, %151, %cst_40 {dimension_numbers = #tpu.dot_dimension_numbers<[2], [2], [1], [1], [0, 0, 0, 1, 1, 1], [0], [0]>} : vector<4x8x8xf32>, vector<4x16x8xf32>, vector<4x8x16xf32> -> vector<4x8x16xf32>
    "tpu.trace_stop"() : () -> ()
    %153 = arith.addf %152, %7 : vector<4x8x16xf32>
    %cst_41 = arith.constant dense<0xFF800000> : vector<4x8xf32>
    %154 = vector.multi_reduction <maximumf>, %153, %cst_41 [2] : vector<4x8x16xf32> to vector<4x8xf32>
    %155 = vector.shape_cast %154 : vector<4x8xf32> to vector<4x8x1xf32>
    %156 = vector.broadcast %155 : vector<4x8x1xf32> to vector<4x8x16xf32>
    %157 = arith.subf %153, %156 : vector<4x8x16xf32>
    %158 = math.exp %157 : vector<4x8x16xf32>
    %cst_42 = arith.constant dense<0.000000e+00> : vector<4x8xf32>
    %159 = vector.multi_reduction <add>, %158, %cst_42 [2] : vector<4x8x16xf32> to vector<4x8xf32>
    %160 = vector.shape_cast %159 : vector<4x8xf32> to vector<4x8x1xf32>
    %161 = vector.broadcast %160 : vector<4x8x1xf32> to vector<4x8x16xf32>
    %162 = arith.divf %158, %161 : vector<4x8x16xf32>
    %163 = vector.extract_strided_slice %134 {offsets = [0, 0, 8], sizes = [4, 16, 8], strides = [1, 1, 1]} : vector<4x16x32xf32> to vector<4x16x8xf32>
    "tpu.trace_start"() <{level = 10 : i32, message = "bqk,bkd->bqd"}> : () -> ()
    %cst_43 = arith.constant dense<0.000000e+00> : vector<4x8x8xf32>
    %164 = tpu.matmul %162, %163, %cst_43 {dimension_numbers = #tpu.dot_dimension_numbers<[2], [1], [1], [2], [0, 0, 0, 1, 1, 2], [0], [0]>} : vector<4x8x16xf32>, vector<4x16x8xf32>, vector<4x8x8xf32> -> vector<4x8x8xf32>
    "tpu.trace_stop"() : () -> ()
    %165 = vector.extract_strided_slice %132 {offsets = [0, 0, 16], sizes = [4, 8, 8], strides = [1, 1, 1]} : vector<4x8x32xf32> to vector<4x8x8xf32>
    %166 = vector.extract_strided_slice %133 {offsets = [0, 0, 16], sizes = [4, 16, 8], strides = [1, 1, 1]} : vector<4x16x32xf32> to vector<4x16x8xf32>
    "tpu.trace_start"() <{level = 10 : i32, message = "bqd,bkd->bqk"}> : () -> ()
    %cst_44 = arith.constant dense<0.000000e+00> : vector<4x8x16xf32>
    %167 = tpu.matmul %165, %166, %cst_44 {dimension_numbers = #tpu.dot_dimension_numbers<[2], [2], [1], [1], [0, 0, 0, 1, 1, 1], [0], [0]>} : vector<4x8x8xf32>, vector<4x16x8xf32>, vector<4x8x16xf32> -> vector<4x8x16xf32>
    "tpu.trace_stop"() : () -> ()
    %168 = arith.addf %167, %7 : vector<4x8x16xf32>
    %cst_45 = arith.constant dense<0xFF800000> : vector<4x8xf32>
    %169 = vector.multi_reduction <maximumf>, %168, %cst_45 [2] : vector<4x8x16xf32> to vector<4x8xf32>
    %170 = vector.shape_cast %169 : vector<4x8xf32> to vector<4x8x1xf32>
    %171 = vector.broadcast %170 : vector<4x8x1xf32> to vector<4x8x16xf32>
    %172 = arith.subf %168, %171 : vector<4x8x16xf32>
    %173 = math.exp %172 : vector<4x8x16xf32>
    %cst_46 = arith.constant dense<0.000000e+00> : vector<4x8xf32>
    %174 = vector.multi_reduction <add>, %173, %cst_46 [2] : vector<4x8x16xf32> to vector<4x8xf32>
    %175 = vector.shape_cast %174 : vector<4x8xf32> to vector<4x8x1xf32>
    %176 = vector.broadcast %175 : vector<4x8x1xf32> to vector<4x8x16xf32>
    %177 = arith.divf %173, %176 : vector<4x8x16xf32>
    %178 = vector.extract_strided_slice %134 {offsets = [0, 0, 16], sizes = [4, 16, 8], strides = [1, 1, 1]} : vector<4x16x32xf32> to vector<4x16x8xf32>
    "tpu.trace_start"() <{level = 10 : i32, message = "bqk,bkd->bqd"}> : () -> ()
    %cst_47 = arith.constant dense<0.000000e+00> : vector<4x8x8xf32>
    %179 = tpu.matmul %177, %178, %cst_47 {dimension_numbers = #tpu.dot_dimension_numbers<[2], [1], [1], [2], [0, 0, 0, 1, 1, 2], [0], [0]>} : vector<4x8x16xf32>, vector<4x16x8xf32>, vector<4x8x8xf32> -> vector<4x8x8xf32>
    "tpu.trace_stop"() : () -> ()
    %180 = vector.extract_strided_slice %132 {offsets = [0, 0, 24], sizes = [4, 8, 8], strides = [1, 1, 1]} : vector<4x8x32xf32> to vector<4x8x8xf32>
    %181 = vector.extract_strided_slice %133 {offsets = [0, 0, 24], sizes = [4, 16, 8], strides = [1, 1, 1]} : vector<4x16x32xf32> to vector<4x16x8xf32>
    "tpu.trace_start"() <{level = 10 : i32, message = "bqd,bkd->bqk"}> : () -> ()
    %cst_48 = arith.constant dense<0.000000e+00> : vector<4x8x16xf32>
    %182 = tpu.matmul %180, %181, %cst_48 {dimension_numbers = #tpu.dot_dimension_numbers<[2], [2], [1], [1], [0, 0, 0, 1, 1, 1], [0], [0]>} : vector<4x8x8xf32>, vector<4x16x8xf32>, vector<4x8x16xf32> -> vector<4x8x16xf32>
    "tpu.trace_stop"() : () -> ()
    %183 = arith.addf %182, %7 : vector<4x8x16xf32>
    %cst_49 = arith.constant dense<0xFF800000> : vector<4x8xf32>
    %184 = vector.multi_reduction <maximumf>, %183, %cst_49 [2] : vector<4x8x16xf32> to vector<4x8xf32>
    %185 = vector.shape_cast %184 : vector<4x8xf32> to vector<4x8x1xf32>
    %186 = vector.broadcast %185 : vector<4x8x1xf32> to vector<4x8x16xf32>
    %187 = arith.subf %183, %186 : vector<4x8x16xf32>
    %188 = math.exp %187 : vector<4x8x16xf32>
    %cst_50 = arith.constant dense<0.000000e+00> : vector<4x8xf32>
    %189 = vector.multi_reduction <add>, %188, %cst_50 [2] : vector<4x8x16xf32> to vector<4x8xf32>
    %190 = vector.shape_cast %189 : vector<4x8xf32> to vector<4x8x1xf32>
    %191 = vector.broadcast %190 : vector<4x8x1xf32> to vector<4x8x16xf32>
    %192 = arith.divf %188, %191 : vector<4x8x16xf32>
    %193 = vector.extract_strided_slice %134 {offsets = [0, 0, 24], sizes = [4, 16, 8], strides = [1, 1, 1]} : vector<4x16x32xf32> to vector<4x16x8xf32>
    "tpu.trace_start"() <{level = 10 : i32, message = "bqk,bkd->bqd"}> : () -> ()
    %cst_51 = arith.constant dense<0.000000e+00> : vector<4x8x8xf32>
    %194 = tpu.matmul %192, %193, %cst_51 {dimension_numbers = #tpu.dot_dimension_numbers<[2], [1], [1], [2], [0, 0, 0, 1, 1, 2], [0], [0]>} : vector<4x8x16xf32>, vector<4x16x8xf32>, vector<4x8x8xf32> -> vector<4x8x8xf32>
    "tpu.trace_stop"() : () -> ()
    %195 = tpu.concatenate %149, %164, %179, %194 in 2 : vector<4x8x8xf32>, vector<4x8x8xf32>, vector<4x8x8xf32>, vector<4x8x8xf32> -> vector<4x8x32xf32>
    %196 = vector.shape_cast %195 : vector<4x8x32xf32> to vector<32x32xf32>
    %cst_52 = arith.constant dense<0.000000e+00> : vector<32x32xf32>
    %197 = tpu.matmul %196, %16, %cst_52 {dimension_numbers = #tpu.dot_dimension_numbers<[1], [0], [0], [1], [0, 0, 1, 1], [], []>} : vector<32x32xf32>, vector<32x32xf32>, vector<32x32xf32> -> vector<32x32xf32>
    %198 = vector.extract_strided_slice %10 {offsets = [6, 0], sizes = [1, 32], strides = [1, 1]} : vector<16x128xf32> to vector<1x32xf32>
    %199 = vector.broadcast %198 : vector<1x32xf32> to vector<32x32xf32>
    %200 = arith.addf %197, %199 : vector<32x32xf32>
    %201 = arith.addf %121, %200 : vector<32x32xf32>
    %202 = vector.extract_strided_slice %10 {offsets = [7, 0], sizes = [1, 32], strides = [1, 1]} : vector<16x128xf32> to vector<1x32xf32>
    %203 = vector.extract_strided_slice %10 {offsets = [8, 0], sizes = [1, 32], strides = [1, 1]} : vector<16x128xf32> to vector<1x32xf32>
    %cst_53 = arith.constant dense<0.000000e+00> : vector<32xf32>
    %204 = vector.multi_reduction <add>, %201, %cst_53 [1] : vector<32x32xf32> to vector<32xf32>
    %205 = vector.shape_cast %204 : vector<32xf32> to vector<32x1xf32>
    %cst_54 = arith.constant 3.200000e+01 : f32
    %206 = vector.broadcast %cst_54 : f32 to vector<32x1xf32>
    %207 = arith.divf %205, %206 : vector<32x1xf32>
    %208 = vector.broadcast %207 : vector<32x1xf32> to vector<32x32xf32>
    %209 = arith.subf %201, %208 : vector<32x32xf32>
    %210 = arith.mulf %209, %209 : vector<32x32xf32>
    %cst_55 = arith.constant dense<0.000000e+00> : vector<32xf32>
    %211 = vector.multi_reduction <add>, %210, %cst_55 [1] : vector<32x32xf32> to vector<32xf32>
    %212 = vector.shape_cast %211 : vector<32xf32> to vector<32x1xf32>
    %cst_56 = arith.constant 3.200000e+01 : f32
    %213 = vector.broadcast %cst_56 : f32 to vector<32x1xf32>
    %214 = arith.divf %212, %213 : vector<32x1xf32>
    %215 = vector.broadcast %207 : vector<32x1xf32> to vector<32x32xf32>
    %216 = arith.subf %201, %215 : vector<32x32xf32>
    %cst_57 = arith.constant 9.99999974E-6 : f32
    %217 = vector.broadcast %cst_57 : f32 to vector<32x1xf32>
    %218 = arith.addf %214, %217 : vector<32x1xf32>
    %219 = math.rsqrt %218 : vector<32x1xf32>
    %220 = vector.broadcast %219 : vector<32x1xf32> to vector<32x32xf32>
    %221 = arith.mulf %216, %220 : vector<32x32xf32>
    %222 = vector.broadcast %202 : vector<1x32xf32> to vector<32x32xf32>
    %223 = arith.mulf %221, %222 : vector<32x32xf32>
    %224 = vector.broadcast %203 : vector<1x32xf32> to vector<32x32xf32>
    %225 = arith.addf %223, %224 : vector<32x32xf32>
    %226 = vector.broadcast %2 : vector<32x1xf32> to vector<32x32xf32>
    %227 = arith.mulf %225, %226 : vector<32x32xf32>
    %228 = tpu.concatenate %121, %227 in 1 : vector<32x32xf32>, vector<32x32xf32> -> vector<32x64xf32>
    %cst_58 = arith.constant dense<0.000000e+00> : vector<32x32xf32>
    %229 = tpu.matmul %228, %17, %cst_58 {dimension_numbers = #tpu.dot_dimension_numbers<[1], [0], [0], [1], [0, 0, 1, 1], [], []>} : vector<32x64xf32>, vector<64x32xf32>, vector<32x32xf32> -> vector<32x32xf32>
    %230 = vector.extract_strided_slice %10 {offsets = [9, 0], sizes = [1, 32], strides = [1, 1]} : vector<16x128xf32> to vector<1x32xf32>
    %231 = vector.broadcast %230 : vector<1x32xf32> to vector<32x32xf32>
    %232 = arith.addf %229, %231 : vector<32x32xf32>
    %233 = arith.negf %232 : vector<32x32xf32>
    %234 = math.exp %233 : vector<32x32xf32>
    %cst_59 = arith.constant 1.000000e+00 : f32
    %235 = vector.broadcast %cst_59 : f32 to vector<32x32xf32>
    %236 = arith.addf %235, %234 : vector<32x32xf32>
    %237 = arith.divf %235, %236 : vector<32x32xf32>
    %238 = arith.mulf %227, %237 : vector<32x32xf32>
    %239 = vector.broadcast %2 : vector<32x1xf32> to vector<32x32xf32>
    %240 = arith.mulf %238, %239 : vector<32x32xf32>
    %cst_60 = arith.constant dense<0.000000e+00> : vector<32x64xf32>
    %241 = tpu.matmul %240, %13, %cst_60 {dimension_numbers = #tpu.dot_dimension_numbers<[1], [0], [0], [1], [0, 0, 1, 1], [], []>} : vector<32x32xf32>, vector<32x64xf32>, vector<32x64xf32> -> vector<32x64xf32>
    %242 = vector.extract_strided_slice %10 {offsets = [10, 0], sizes = [1, 64], strides = [1, 1]} : vector<16x128xf32> to vector<1x64xf32>
    %243 = vector.broadcast %242 : vector<1x64xf32> to vector<32x64xf32>
    %244 = arith.addf %241, %243 : vector<32x64xf32>
    %cst_61 = arith.constant 0.000000e+00 : f32
    %245 = vector.broadcast %cst_61 : f32 to vector<32x64xf32>
    %246 = arith.maximumf %244, %245 : vector<32x64xf32>
    %cst_62 = arith.constant dense<0.000000e+00> : vector<32x32xf32>
    %247 = tpu.matmul %246, %18, %cst_62 {dimension_numbers = #tpu.dot_dimension_numbers<[1], [0], [0], [1], [0, 0, 1, 1], [], []>} : vector<32x64xf32>, vector<64x32xf32>, vector<32x32xf32> -> vector<32x32xf32>
    %248 = vector.extract_strided_slice %10 {offsets = [11, 0], sizes = [1, 32], strides = [1, 1]} : vector<16x128xf32> to vector<1x32xf32>
    %249 = vector.broadcast %248 : vector<1x32xf32> to vector<32x32xf32>
    %250 = arith.addf %247, %249 : vector<32x32xf32>
    %251 = arith.addf %240, %250 : vector<32x32xf32>
    %252 = vector.extract_strided_slice %10 {offsets = [12, 0], sizes = [1, 32], strides = [1, 1]} : vector<16x128xf32> to vector<1x32xf32>
    %253 = vector.extract_strided_slice %10 {offsets = [13, 0], sizes = [1, 32], strides = [1, 1]} : vector<16x128xf32> to vector<1x32xf32>
    %cst_63 = arith.constant dense<0.000000e+00> : vector<32xf32>
    %254 = vector.multi_reduction <add>, %251, %cst_63 [1] : vector<32x32xf32> to vector<32xf32>
    %255 = vector.shape_cast %254 : vector<32xf32> to vector<32x1xf32>
    %cst_64 = arith.constant 3.200000e+01 : f32
    %256 = vector.broadcast %cst_64 : f32 to vector<32x1xf32>
    %257 = arith.divf %255, %256 : vector<32x1xf32>
    %258 = vector.broadcast %257 : vector<32x1xf32> to vector<32x32xf32>
    %259 = arith.subf %251, %258 : vector<32x32xf32>
    %260 = arith.mulf %259, %259 : vector<32x32xf32>
    %cst_65 = arith.constant dense<0.000000e+00> : vector<32xf32>
    %261 = vector.multi_reduction <add>, %260, %cst_65 [1] : vector<32x32xf32> to vector<32xf32>
    %262 = vector.shape_cast %261 : vector<32xf32> to vector<32x1xf32>
    %cst_66 = arith.constant 3.200000e+01 : f32
    %263 = vector.broadcast %cst_66 : f32 to vector<32x1xf32>
    %264 = arith.divf %262, %263 : vector<32x1xf32>
    %265 = vector.broadcast %257 : vector<32x1xf32> to vector<32x32xf32>
    %266 = arith.subf %251, %265 : vector<32x32xf32>
    %cst_67 = arith.constant 9.99999974E-6 : f32
    %267 = vector.broadcast %cst_67 : f32 to vector<32x1xf32>
    %268 = arith.addf %264, %267 : vector<32x1xf32>
    %269 = math.rsqrt %268 : vector<32x1xf32>
    %270 = vector.broadcast %269 : vector<32x1xf32> to vector<32x32xf32>
    %271 = arith.mulf %266, %270 : vector<32x32xf32>
    %272 = vector.broadcast %252 : vector<1x32xf32> to vector<32x32xf32>
    %273 = arith.mulf %271, %272 : vector<32x32xf32>
    %274 = vector.broadcast %253 : vector<1x32xf32> to vector<32x32xf32>
    %275 = arith.addf %273, %274 : vector<32x32xf32>
    %276 = vector.broadcast %2 : vector<32x1xf32> to vector<32x32xf32>
    %277 = arith.mulf %275, %276 : vector<32x32xf32>
    %cst_68 = arith.constant 0.000000e+00 : f32
    %278 = vector.broadcast %cst_68 : f32 to vector<32x96xf32>
    %279 = tpu.concatenate %277, %278 in 1 : vector<32x32xf32>, vector<32x96xf32> -> vector<32x128xf32>
    %c0_69 = arith.constant 0 : index
    %c0_70 = arith.constant 0 : index
    %280 = vector.load %arg7[%c0_69, %c0_70] : memref<32x128xf32, #tpu.memory_space<vmem>>, vector<32x128xf32>
    tpu.vector_store %arg7[%c0_69, %c0_70], %279 {strides = array<i32>} : memref<32x128xf32, #tpu.memory_space<vmem>>, vector<32x128xf32>,
    return
  }
  func.func @transform_0(%arg0: i32) -> (i32, i32) {
    %c0_i32 = arith.constant 0 : i32
    %c0_i32_0 = arith.constant 0 : i32
    return %arg0, %c0_i32 : i32, i32
  }
  func.func @transform_1(%arg0: i32) -> (i32, i32) {
    %c0_i32 = arith.constant 0 : i32
    %c0_i32_0 = arith.constant 0 : i32
    return %arg0, %c0_i32 : i32, i32
  }
  func.func @transform_2(%arg0: i32) -> (i32, i32, i32) {
    %c0_i32 = arith.constant 0 : i32
    %c0_i32_0 = arith.constant 0 : i32
    %c0_i32_1 = arith.constant 0 : i32
    return %arg0, %c0_i32, %c0_i32_0 : i32, i32, i32
  }
  func.func @transform_3(%arg0: i32) -> (i32, i32) {
    %c0_i32 = arith.constant 0 : i32
    %c0_i32_0 = arith.constant 0 : i32
    %c0_i32_1 = arith.constant 0 : i32
    return %c0_i32, %c0_i32_0 : i32, i32
  }
  func.func @transform_4(%arg0: i32) -> (i32, i32) {
    %c0_i32 = arith.constant 0 : i32
    %c0_i32_0 = arith.constant 0 : i32
    %c0_i32_1 = arith.constant 0 : i32
    return %c0_i32, %c0_i32_0 : i32, i32
  }
  func.func @transform_5(%arg0: i32) -> (i32, i32) {
    %c0_i32 = arith.constant 0 : i32
    %c0_i32_0 = arith.constant 0 : i32
    %c0_i32_1 = arith.constant 0 : i32
    return %c0_i32, %c0_i32_0 : i32, i32
  }
  func.func @transform_6(%arg0: i32) -> (i32, i32) {
    %c0_i32 = arith.constant 0 : i32
    %c0_i32_0 = arith.constant 0 : i32
    return %arg0, %c0_i32 : i32, i32
  }
}

</mosaic_0001>

<llo_original>
// kernel: parallel_attention_layer.1
$region0: #{parallel_attention_layer.1}
  #allocation0 [shape = 'u32[]', space=smem, size = 0x4, offset = 0x4, fixed_abs, tag = 'smem constant byte address 0x4 - core index']
  #allocation1 [shape = 'u32[144,128]{1,0:T(1,128)}', space=vmem, size = 0x12000, scoped, tag = 'internal scratch']
  %s0 = inlined_call_operand.hbm [shape: f32[32,33], index: 0, kind: input, shape index: {}]
  %s1 = inlined_call_operand.hbm [shape: f32[64,32], index: 1, kind: input, shape index: {}]
  %s2 = inlined_call_operand.hbm [shape: bf16[4,8,24], index: 2, kind: input, shape index: {}]
  %s3 = inlined_call_operand.hbm [shape: f32[96,96], index: 3, kind: input, shape index: {}]
  %s4 = inlined_call_operand.hbm [shape: f32[224,32], index: 4, kind: input, shape index: {}]
  %s5 = inlined_call_operand.hbm [shape: f32[16,128], index: 5, kind: input, shape index: {}]
  %s6 = inlined_call_operand.hbm [shape: f32[32,128], index: 6, kind: output, shape index: {}]
  %s7 = sld [smem:[#allocation0]]
  $region58: #{parallel_attention_layer.1} parent=0
    _
  %s9 = ssub.s32 1, %s7
  %s10 = scalar_select 0, %s9, %s7
  $region1: #{parallel_attention_layer.1} parent=0
    #allocation2 [shape = 'u8[16384]{0}', space=vmem, size = 0x4000, scoped, tag = 'input window, operand 0, single buffered']
    #allocation3 [shape = 's32[1]{0}', space=sflag, size = 0x4, scoped, tag = 'scoped memory for parallel_attention_layer.1']
    #allocation4 [shape = 's32[1]{0}', space=sflag, size = 0x4, scoped, tag = 'scoped memory for parallel_attention_layer.1']
    #allocation5 [shape = 'u8[32768]{0}', space=vmem, size = 0x8000, scoped, tag = 'input window, operand 1, single buffered']
    #allocation6 [shape = 's32[1]{0}', space=sflag, size = 0x4, scoped, tag = 'scoped memory for parallel_attention_layer.1']
    #allocation7 [shape = 'u8[8192]{0}', space=vmem, size = 0x2000, scoped, tag = 'input window, operand 2, single buffered']
    #allocation8 [shape = 'u8[49152]{0}', space=vmem, size = 0xc000, scoped, tag = 'input window, operand 3, single buffered']
    #allocation9 [shape = 's32[1]{0}', space=sflag, size = 0x4, scoped, tag = 'scoped memory for parallel_attention_layer.1']
    #allocation10 [shape = 'u8[114688]{0}', space=vmem, size = 0x1c000, scoped, tag = 'input window, operand 4, single buffered']
    #allocation11 [shape = 'u8[8192]{0}', space=vmem, size = 0x2000, scoped, tag = 'input window, operand 5, single buffered']
    #allocation12 [shape = 's32[1]{0}', space=sflag, size = 0x4, scoped, tag = 'scoped memory for parallel_attention_layer.1']
    #allocation13 [shape = 'u8[16384]{0}', space=vmem, size = 0x4000, scoped, tag = 'output window, operand 0, single buffered']
    %11 = vsyncpa [#allocation3], 0
    %12 = vsyncpa [#allocation6], 0
    %13 = vsyncpa [#allocation9], 0
    %14 = vsyncpa [#allocation12], 0
    %15 = vsyncpa [#allocation4], 0
    // Predicated region
    $region2: #{parallel_attention_layer.1} parent=1 // pred_check
      _
    $region3: #{parallel_attention_layer.1} parent=1 // pred_check_branch
      %17 = sbr.rel (0) target = $region5
    $region4: #{parallel_attention_layer.1} parent=1 // pred_region
      %s19 = ssub.s32 512, 512
      %20 = vsyncadd [#allocation3], %s19
      %s21 = sshll.u32 [#allocation2], 4
      %s22 = int_to_ptr.vmem [resolvable:$true] %s21
      %27 = dma.hbm_to_vmem [thread:$0]  %s0, 512, %s22, [#allocation3], 128, 128, 8
    $region5: #{parallel_attention_layer.1} parent=1 // pred_fallthru
      _
    // Predicated region
    $region6: #{parallel_attention_layer.1} parent=1 // pred_check
      _
    $region7: #{parallel_attention_layer.1} parent=1 // pred_check_branch
      %29 = sbr.rel (0) target = $region9
    $region8: #{parallel_attention_layer.1} parent=1 // pred_region
      %s31 = ssub.s32 1024, 1024
      %32 = vsyncadd [#allocation6], %s31
      %s33 = sshll.u32 [#allocation5], 4
      %s34 = int_to_ptr.vmem [resolvable:$true] %s33
      %39 = dma.hbm_to_vmem [thread:$0]  %s1, 1024, %s34, [#allocation6], 128, 128, 8
    $region9: #{parallel_attention_layer.1} parent=1 // pred_fallthru
      _
    // Predicated region
    $region10: #{parallel_attention_layer.1} parent=1 // pred_check
      _
    $region11: #{parallel_attention_layer.1} parent=1 // pred_check_branch
      %41 = sbr.rel (0) target = $region13
    $region12: #{parallel_attention_layer.1} parent=1 // pred_region
      %s43 = ssub.s32 256, 256
      %44 = vsyncadd [#allocation6], %s43
      %s45 = sshll.u32 [#allocation7], 4
      %s46 = int_to_ptr.vmem [resolvable:$true] %s45
      %51 = dma.hbm_to_vmem [thread:$0]  %s2, 256, %s46, [#allocation6], 64, 64, 4
    $region13: #{parallel_attention_layer.1} parent=1 // pred_fallthru
      _
    // Predicated region
    $region14: #{parallel_attention_layer.1} parent=1 // pred_check
      _
    $region15: #{parallel_attention_layer.1} parent=1 // pred_check_branch
      %53 = sbr.rel (0) target = $region17
    $region16: #{parallel_attention_layer.1} parent=1 // pred_region
      %s55 = ssub.s32 1536, 1536
      %56 = vsyncadd [#allocation9], %s55
      %s57 = sshll.u32 [#allocation8], 4
      %s58 = int_to_ptr.vmem [resolvable:$true] %s57
      %63 = dma.hbm_to_vmem [thread:$0]  %s3, 1536, %s58, [#allocation9], 128, 128, 8
    $region17: #{parallel_attention_layer.1} parent=1 // pred_fallthru
      _
    // Predicated region
    $region18: #{parallel_attention_layer.1} parent=1 // pred_check
      _
    $region19: #{parallel_attention_layer.1} parent=1 // pred_check_branch
      %65 = sbr.rel (0) target = $region21
    $region20: #{parallel_attention_layer.1} parent=1 // pred_region
      %s67 = ssub.s32 3584, 3584
      %68 = vsyncadd [#allocation9], %s67
      %s69 = sshll.u32 [#allocation10], 4
      %s70 = int_to_ptr.vmem [resolvable:$true] %s69
      %75 = dma.hbm_to_vmem [thread:$0]  %s4, 3584, %s70, [#allocation9], 128, 128, 8
    $region21: #{parallel_attention_layer.1} parent=1 // pred_fallthru
      _
    // Predicated region
    $region22: #{parallel_attention_layer.1} parent=1 // pred_check
      _
    $region23: #{parallel_attention_layer.1} parent=1 // pred_check_branch
      %77 = sbr.rel (0) target = $region25
    $region24: #{parallel_attention_layer.1} parent=1 // pred_region
      %s79 = ssub.s32 256, 256
      %80 = vsyncadd [#allocation12], %s79
      %s81 = sshll.u32 [#allocation11], 4
      %s82 = int_to_ptr.vmem [resolvable:$true] %s81
      %87 = dma.hbm_to_vmem [thread:$0]  %s5, 256, %s82, [#allocation12], 128, 128, 8
    $region25: #{parallel_attention_layer.1} parent=1 // pred_fallthru
      _
    // Predicated region
    $region26: #{parallel_attention_layer.1} parent=1 // pred_check
      _
    $region27: #{parallel_attention_layer.1} parent=1 // pred_check_branch
      %89 = sbr.rel (0) target = $region29
    $region28: #{parallel_attention_layer.1} parent=1 // pred_region
      %90 = dma.done [#allocation3], 512
    $region29: #{parallel_attention_layer.1} parent=1 // pred_fallthru
      _
    // Predicated region
    $region30: #{parallel_attention_layer.1} parent=1 // pred_check
      _
    $region31: #{parallel_attention_layer.1} parent=1 // pred_check_branch
      %92 = sbr.rel (0) target = $region33
    $region32: #{parallel_attention_layer.1} parent=1 // pred_region
      %93 = dma.done [#allocation6], 1024
    $region33: #{parallel_attention_layer.1} parent=1 // pred_fallthru
      _
    // Predicated region
    $region34: #{parallel_attention_layer.1} parent=1 // pred_check
      _
    $region35: #{parallel_attention_layer.1} parent=1 // pred_check_branch
      %95 = sbr.rel (0) target = $region37
    $region36: #{parallel_attention_layer.1} parent=1 // pred_region
      %96 = dma.done [#allocation6], 256
    $region37: #{parallel_attention_layer.1} parent=1 // pred_fallthru
      _
    // Predicated region
    $region38: #{parallel_attention_layer.1} parent=1 // pred_check
      _
    $region39: #{parallel_attention_layer.1} parent=1 // pred_check_branch
      %98 = sbr.rel (0) target = $region41
    $region40: #{parallel_attention_layer.1} parent=1 // pred_region
      %99 = dma.done [#allocation9], 1536
    $region41: #{parallel_attention_layer.1} parent=1 // pred_fallthru
      _
    // Predicated region
    $region42: #{parallel_attention_layer.1} parent=1 // pred_check
      _
    $region43: #{parallel_attention_layer.1} parent=1 // pred_check_branch
      %101 = sbr.rel (0) target = $region45
    $region44: #{parallel_attention_layer.1} parent=1 // pred_region
      %102 = dma.done [#allocation9], 3584
    $region45: #{parallel_attention_layer.1} parent=1 // pred_fallthru
      _
    // Predicated region
    $region46: #{parallel_attention_layer.1} parent=1 // pred_check
      _
    $region47: #{parallel_attention_layer.1} parent=1 // pred_check_branch
      %104 = sbr.rel (0) target = $region49
    $region48: #{parallel_attention_layer.1} parent=1 // pred_region
      %105 = dma.done [#allocation12], 256
    $region49: #{parallel_attention_layer.1} parent=1 // pred_fallthru
      _
    %v106 = vld [vmem:[#allocation2] sm:$0xff]
    %v107 = vld [vmem:[#allocation2 + $0x8] sm:$0xff]
    %v108 = vld [vmem:[#allocation2 + $0x10] sm:$0xff]
    %v109 = vld [vmem:[#allocation2 + $0x18] sm:$0xff]
    %v110 = vld [vmem:[#allocation5] sm:$0xff]
    %v111 = vld [vmem:[#allocation5 + $0x8] sm:$0xff]
    %v112 = vld [vmem:[#allocation5 + $0x10] sm:$0xff]
    %v113 = vld [vmem:[#allocation5 + $0x18] sm:$0xff]
    %v114 = vld [vmem:[#allocation5 + $0x20] sm:$0xff]
    %v115 = vld [vmem:[#allocation5 + $0x28] sm:$0xff]
    %v116 = vld [vmem:[#allocation5 + $0x30] sm:$0xff]
    %v117 = vld [vmem:[#allocation5 + $0x38] sm:$0xff]
    %v118 = vld [vmem:[#allocation7] sm:$0xf]
    %v119 = vld [vmem:[#allocation7 + $0x4] sm:$0xf]
    %v120 = vld [vmem:[#allocation7 + $0x8] sm:$0xf]
    %v121 = vld [vmem:[#allocation7 + $0xc] sm:$0xf]
    %v122 = vunpack.c.l.bf16 %v118
    %v123 = vunpack.c.l.bf16 %v119
    %v124 = vunpack.c.l.bf16 %v120
    %v125 = vunpack.c.l.bf16 %v121
    %v126 = vld [vmem:[#allocation8] sm:$0xff]
    %v127 = vld [vmem:[#allocation8 + $0x8] sm:$0xff]
    %v128 = vld [vmem:[#allocation8 + $0x10] sm:$0xff]
    %v129 = vld [vmem:[#allocation8 + $0x18] sm:$0xff]
    %v130 = vld [vmem:[#allocation8 + $0x20] sm:$0xff]
    %v131 = vld [vmem:[#allocation8 + $0x28] sm:$0xff]
    %v132 = vld [vmem:[#allocation8 + $0x30] sm:$0xff]
    %v133 = vld [vmem:[#allocation8 + $0x38] sm:$0xff]
    %v134 = vld [vmem:[#allocation8 + $0x40] sm:$0xff]
    %v135 = vld [vmem:[#allocation8 + $0x48] sm:$0xff]
    %v136 = vld [vmem:[#allocation8 + $0x50] sm:$0xff]
    %v137 = vld [vmem:[#allocation8 + $0x58] sm:$0xff]
    %v138 = vld [vmem:[#allocation10] sm:$0xff]
    %v139 = vld [vmem:[#allocation10 + $0x8] sm:$0xff]
    %v140 = vld [vmem:[#allocation10 + $0x10] sm:$0xff]
    %v141 = vld [vmem:[#allocation10 + $0x18] sm:$0xff]
    %v142 = vld [vmem:[#allocation10 + $0x20] sm:$0xff]
    %v143 = vld [vmem:[#allocation10 + $0x28] sm:$0xff]
    %v144 = vld [vmem:[#allocation10 + $0x30] sm:$0xff]
    %v145 = vld [vmem:[#allocation10 + $0x38] sm:$0xff]
    %v146 = vld [vmem:[#allocation10 + $0x40] sm:$0xff]
    %v147 = vld [vmem:[#allocation10 + $0x48] sm:$0xff]
    %v148 = vld [vmem:[#allocation10 + $0x50] sm:$0xff]
    %v149 = vld [vmem:[#allocation10 + $0x58] sm:$0xff]
    %v150 = vld [vmem:[#allocation10 + $0x60] sm:$0xff]
    %v151 = vld [vmem:[#allocation10 + $0x68] sm:$0xff]
    %v152 = vld [vmem:[#allocation10 + $0x70] sm:$0xff]
    %v153 = vld [vmem:[#allocation10 + $0x78] sm:$0xff]
    %v154 = vld [vmem:[#allocation10 + $0x80] sm:$0xff]
    %v155 = vld [vmem:[#allocation10 + $0x88] sm:$0xff]
    %v156 = vld [vmem:[#allocation10 + $0x90] sm:$0xff]
    %v157 = vld [vmem:[#allocation10 + $0x98] sm:$0xff]
    %v158 = vld [vmem:[#allocation10 + $0xa0] sm:$0xff]
    %v159 = vld [vmem:[#allocation10 + $0xa8] sm:$0xff]
    %v160 = vld [vmem:[#allocation10 + $0xb0] sm:$0xff]
    %v161 = vld [vmem:[#allocation10 + $0xb8] sm:$0xff]
    %v162 = vld [vmem:[#allocation10 + $0xc0] sm:$0xff]
    %v163 = vld [vmem:[#allocation10 + $0xc8] sm:$0xff]
    %v164 = vld [vmem:[#allocation10 + $0xd0] sm:$0xff]
    %v165 = vld [vmem:[#allocation10 + $0xd8] sm:$0xff]
    %v166 = vld [vmem:[#allocation11] sm:$0xff]
    %v167 = vld [vmem:[#allocation11 + $0x8] sm:$0xff]
    %v168 = vlaneseq
    %v169 = vshrl.u32 %v168, 7
    %v170 = vsub.s32 0, %v169
    %v171 = vrot.slane %v166, %v170
    %vm172 = vcmask 261120
    %v174 = vsel %vm172, %v106, 0
    %v177 = vsel %vm172, %v107, 0
    %v180 = vsel %vm172, %v108, 0
    %v183 = vsel %vm172, %v109, 0
    %185 = vmatprep.subr.mxu0 0.0
    %186 = vmatpush1.msra.mxu0 %v126
    %187 = vmatprep.subr.mxu0 0.0
    %188 = vmatpush1.msra.mxu0 %v127
    %189 = vmatprep.subr.mxu0 0.0
    %190 = vmatpush1.msra.mxu0 %v128
    %191 = vmatprep.subr.mxu0 0.0
    %192 = vmatpush1.msra.mxu0 %v129
    %193 = vmatprep.subr.mxu0 0.0
    %194 = vmatpush1.msra.mxu0 0.0
    %195 = vmatprep.subr.mxu0 0.0
    %196 = vmatpush1.msra.mxu0 0.0
    %197 = vmatprep.subr.mxu0 0.0
    %198 = vmatpush1.msra.mxu0 0.0
    %199 = vmatprep.subr.mxu0 0.0
    %200 = vmatpush1.msra.mxu0 0.0
    %201 = vmatprep.subr.mxu0 0.0
    %202 = vmatpush1.msra.mxu0 0.0
    %203 = vmatprep.subr.mxu0 0.0
    %204 = vmatpush1.msra.mxu0 0.0
    %205 = vmatprep.subr.mxu0 0.0
    %206 = vmatpush1.msra.mxu0 0.0
    %207 = vmatprep.subr.mxu0 0.0
    %208 = vmatpush1.msra.mxu0 0.0
    %209 = vmatprep.subr.mxu0 0.0
    %210 = vmatpush1.msra.mxu0 0.0
    %211 = vmatprep.subr.mxu0 0.0
    %212 = vmatpush1.msra.mxu0 0.0
    %213 = vmatprep.subr.mxu0 0.0
    %214 = vmatpush1.msra.mxu0 0.0
    %215 = vmatprep.subr.mxu0 0.0
    %216 = vmatpush1.msra.mxu0 0.0
    %217 = vmatprep.subr.mxu0 0.0
    %218 = vmatpush1.msra.mxu0 0.0
    %219 = vmatprep.subr.mxu0 0.0
    %220 = vmatpush1.msra.mxu0 0.0
    %221 = vmatprep.subr.mxu0 0.0
    %222 = vmatpush1.msra.mxu0 0.0
    %223 = vmatprep.subr.mxu0 0.0
    %224 = vmatpush1.msra.mxu0 0.0
    %225 = vmatprep.subr.mxu0 0.0
    %226 = vmatpush1.msra.mxu0 0.0
    %227 = vmatprep.subr.mxu0 0.0
    %228 = vmatpush1.msra.mxu0 0.0
    %229 = vmatprep.subr.mxu0 0.0
    %230 = vmatpush1.msra.mxu0 0.0
    %231 = vmatprep.subr.mxu0 0.0
    %232 = vmatpush1.msra.mxu0 0.0
    %233 = vmatprep.subr.mxu0 0.0
    %234 = vmatpush1.msra.mxu0 0.0
    %235 = vmatprep.subr.mxu0 0.0
    %236 = vmatpush1.msra.mxu0 0.0
    %237 = vmatprep.subr.mxu0 0.0
    %238 = vmatpush1.msra.mxu0 0.0
    %239 = vmatprep.subr.mxu0 0.0
    %240 = vmatpush1.msra.mxu0 0.0
    %241 = vmatprep.subr.mxu0 0.0
    %242 = vmatpush1.msra.mxu0 0.0
    %243 = vmatprep.subr.mxu0 0.0
    %244 = vmatpush1.msra.mxu0 0.0
    %245 = vmatprep.subr.mxu0 0.0
    %246 = vmatpush1.msra.mxu0 0.0
    %247 = vmatprep.subr.mxu0 0.0
    %248 = vmatpush1.msra.mxu0 0.0
    %249 = vmatprep.mubr.f32.mxu0 0.0
    %250 = vmatmul.mubr.f32.gmra.mrb[0].mxu0 %v174
    %v251 = vpop.f32.mrb[0].mxu0
    %v252 = vadd.f32 %v171, %v251
    %v253 = vpop.f32.mrb[0].mxu0
    %254 = vmatprep.mubr.f32.mxu0 0.0
    %255 = vmatmul.mubr.f32.gmra.mrb[0].mxu0 %v177
    %v256 = vpop.f32.mrb[0].mxu0
    %v257 = vadd.f32 %v171, %v256
    %v258 = vpop.f32.mrb[0].mxu0
    %259 = vmatprep.mubr.f32.mxu0 0.0
    %260 = vmatmul.mubr.f32.gmra.mrb[0].mxu0 %v180
    %v261 = vpop.f32.mrb[0].mxu0
    %v262 = vadd.f32 %v171, %v261
    %v263 = vpop.f32.mrb[0].mxu0
    %264 = vmatprep.mubr.f32.mxu0 0.0
    %265 = vmatmul.mubr.f32.gmra.mrb[0].mxu0 %v183
    %v266 = vpop.f32.mrb[0].mxu0
    %v267 = vadd.f32 %v171, %v266
    %v268 = vpop.f32.mrb[0].mxu0
    %269 = vdwg.mxu0
    %271 = vrot.lane.b32.xlu0 %v252, 96
    %v272 = vpop.permute.xlu0 %271
    %vm273 = vcmask 64512
    %v274 = vsel %vm273, %v252, 0
    %v276 = vsel %vm273, %v272, 0
    %278 = vmatprep.subr.mxu0 0.0
    %279 = vmatpush1.xpose.msra.mxu0 %v276
    %280 = vmatprep.subr.mxu0 0.0
    %281 = vmatpush1.xpose.msra.mxu0 0.0
    %282 = vmatprep.subr.mxu0 0.0
    %283 = vmatpush1.xpose.msra.mxu0 0.0
    %284 = vmatprep.subr.mxu0 0.0
    %285 = vmatpush1.xpose.msra.mxu0 0.0
    %286 = vmatprep.subr.mxu0 0.0
    %287 = vmatpush1.xpose.msra.mxu0 0.0
    %288 = vmatprep.subr.mxu0 0.0
    %289 = vmatpush1.xpose.msra.mxu0 0.0
    %290 = vmatprep.subr.mxu0 0.0
    %291 = vmatpush1.xpose.msra.mxu0 0.0
    %292 = vmatprep.subr.mxu0 0.0
    %293 = vmatpush1.xpose.msra.mxu0 0.0
    %294 = vmatprep.subr.mxu0 0.0
    %295 = vmatpush1.xpose.msra.mxu0 0.0
    %296 = vmatprep.subr.mxu0 0.0
    %297 = vmatpush1.xpose.msra.mxu0 0.0
    %298 = vmatprep.subr.mxu0 0.0
    %299 = vmatpush1.xpose.msra.mxu0 0.0
    %300 = vmatprep.subr.mxu0 0.0
    %301 = vmatpush1.xpose.msra.mxu0 0.0
    %302 = vmatprep.subr.mxu0 0.0
    %303 = vmatpush1.xpose.msra.mxu0 0.0
    %304 = vmatprep.subr.mxu0 0.0
    %305 = vmatpush1.xpose.msra.mxu0 0.0
    %306 = vmatprep.subr.mxu0 0.0
    %307 = vmatpush1.xpose.msra.mxu0 0.0
    %308 = vmatprep.subr.mxu0 0.0
    %309 = vmatpush1.xpose.msra.mxu0 0.0
    %310 = vmatprep.subr.mxu0 0.0
    %311 = vmatpush1.xpose.msra.mxu0 0.0
    %312 = vmatprep.subr.mxu0 0.0
    %313 = vmatpush1.xpose.msra.mxu0 0.0
    %314 = vmatprep.subr.mxu0 0.0
    %315 = vmatpush1.xpose.msra.mxu0 0.0
    %316 = vmatprep.subr.mxu0 0.0
    %317 = vmatpush1.xpose.msra.mxu0 0.0
    %318 = vmatprep.subr.mxu0 0.0
    %319 = vmatpush1.xpose.msra.mxu0 0.0
    %320 = vmatprep.subr.mxu0 0.0
    %321 = vmatpush1.xpose.msra.mxu0 0.0
    %322 = vmatprep.subr.mxu0 0.0
    %323 = vmatpush1.xpose.msra.mxu0 0.0
    %324 = vmatprep.subr.mxu0 0.0
    %325 = vmatpush1.xpose.msra.mxu0 0.0
    %326 = vmatprep.subr.mxu0 0.0
    %327 = vmatpush1.xpose.msra.mxu0 0.0
    %328 = vmatprep.subr.mxu0 0.0
    %329 = vmatpush1.xpose.msra.mxu0 0.0
    %330 = vmatprep.subr.mxu0 0.0
    %331 = vmatpush1.xpose.msra.mxu0 0.0
    %332 = vmatprep.subr.mxu0 0.0
    %333 = vmatpush1.xpose.msra.mxu0 0.0
    %334 = vmatprep.subr.mxu0 0.0
    %335 = vmatpush1.xpose.msra.mxu0 0.0
    %336 = vmatprep.subr.mxu0 0.0
    %337 = vmatpush1.xpose.msra.mxu0 0.0
    %338 = vmatprep.subr.mxu0 0.0
    %339 = vmatpush1.xpose.msra.mxu0 0.0
    %340 = vmatprep.subr.mxu0 0.0
    %341 = vmatpush1.xpose.msra.mxu0 0.0
    %342 = vmatprep.mubr.f32.mxu0 0.0
    %343 = vmatmul.mubr.f32.gmra.mrb[0].mxu0 %v274
    %v344 = vpop.f32.mrb[0].mxu0
    %v345 = vadd.f32 %v122, %v344
    %v346 = vpop.f32.mrb[0].mxu0
    %347 = vdwg.mxu0
    %349 = vrot.lane.b32.xlu0 %v257, 96
    %v350 = vpop.permute.xlu0 %349
    %v351 = vsel %vm273, %v257, 0
    %v353 = vsel %vm273, %v350, 0
    %355 = vmatprep.subr.mxu0 0.0
    %356 = vmatpush1.xpose.msra.mxu0 %v353
    %357 = vmatprep.subr.mxu0 0.0
    %358 = vmatpush1.xpose.msra.mxu0 0.0
    %359 = vmatprep.subr.mxu0 0.0
    %360 = vmatpush1.xpose.msra.mxu0 0.0
    %361 = vmatprep.subr.mxu0 0.0
    %362 = vmatpush1.xpose.msra.mxu0 0.0
    %363 = vmatprep.subr.mxu0 0.0
    %364 = vmatpush1.xpose.msra.mxu0 0.0
    %365 = vmatprep.subr.mxu0 0.0
    %366 = vmatpush1.xpose.msra.mxu0 0.0
    %367 = vmatprep.subr.mxu0 0.0
    %368 = vmatpush1.xpose.msra.mxu0 0.0
    %369 = vmatprep.subr.mxu0 0.0
    %370 = vmatpush1.xpose.msra.mxu0 0.0
    %371 = vmatprep.subr.mxu0 0.0
    %372 = vmatpush1.xpose.msra.mxu0 0.0
    %373 = vmatprep.subr.mxu0 0.0
    %374 = vmatpush1.xpose.msra.mxu0 0.0
    %375 = vmatprep.subr.mxu0 0.0
    %376 = vmatpush1.xpose.msra.mxu0 0.0
    %377 = vmatprep.subr.mxu0 0.0
    %378 = vmatpush1.xpose.msra.mxu0 0.0
    %379 = vmatprep.subr.mxu0 0.0
    %380 = vmatpush1.xpose.msra.mxu0 0.0
    %381 = vmatprep.subr.mxu0 0.0
    %382 = vmatpush1.xpose.msra.mxu0 0.0
    %383 = vmatprep.subr.mxu0 0.0
    %384 = vmatpush1.xpose.msra.mxu0 0.0
    %385 = vmatprep.subr.mxu0 0.0
    %386 = vmatpush1.xpose.msra.mxu0 0.0
    %387 = vmatprep.subr.mxu0 0.0
    %388 = vmatpush1.xpose.msra.mxu0 0.0
    %389 = vmatprep.subr.mxu0 0.0
    %390 = vmatpush1.xpose.msra.mxu0 0.0
    %391 = vmatprep.subr.mxu0 0.0
    %392 = vmatpush1.xpose.msra.mxu0 0.0
    %393 = vmatprep.subr.mxu0 0.0
    %394 = vmatpush1.xpose.msra.mxu0 0.0
    %395 = vmatprep.subr.mxu0 0.0
    %396 = vmatpush1.xpose.msra.mxu0 0.0
    %397 = vmatprep.subr.mxu0 0.0
    %398 = vmatpush1.xpose.msra.mxu0 0.0
    %399 = vmatprep.subr.mxu0 0.0
    %400 = vmatpush1.xpose.msra.mxu0 0.0
    %401 = vmatprep.subr.mxu0 0.0
    %402 = vmatpush1.xpose.msra.mxu0 0.0
    %403 = vmatprep.subr.mxu0 0.0
    %404 = vmatpush1.xpose.msra.mxu0 0.0
    %405 = vmatprep.subr.mxu0 0.0
    %406 = vmatpush1.xpose.msra.mxu0 0.0
    %407 = vmatprep.subr.mxu0 0.0
    %408 = vmatpush1.xpose.msra.mxu0 0.0
    %409 = vmatprep.subr.mxu0 0.0
    %410 = vmatpush1.xpose.msra.mxu0 0.0
    %411 = vmatprep.subr.mxu0 0.0
    %412 = vmatpush1.xpose.msra.mxu0 0.0
    %413 = vmatprep.subr.mxu0 0.0
    %414 = vmatpush1.xpose.msra.mxu0 0.0
    %415 = vmatprep.subr.mxu0 0.0
    %416 = vmatpush1.xpose.msra.mxu0 0.0
    %417 = vmatprep.subr.mxu0 0.0
    %418 = vmatpush1.xpose.msra.mxu0 0.0
    %419 = vmatprep.mubr.f32.mxu0 0.0
    %420 = vmatmul.mubr.f32.gmra.mrb[0].mxu0 %v351
    %v421 = vpop.f32.mrb[0].mxu0
    %v422 = vadd.f32 %v123, %v421
    %v423 = vpop.f32.mrb[0].mxu0
    %424 = vdwg.mxu0
    %426 = vrot.lane.b32.xlu0 %v262, 96
    %v427 = vpop.permute.xlu0 %426
    %v428 = vsel %vm273, %v262, 0
    %v430 = vsel %vm273, %v427, 0
    %432 = vmatprep.subr.mxu0 0.0
    %433 = vmatpush1.xpose.msra.mxu0 %v430
    %434 = vmatprep.subr.mxu0 0.0
    %435 = vmatpush1.xpose.msra.mxu0 0.0
    %436 = vmatprep.subr.mxu0 0.0
    %437 = vmatpush1.xpose.msra.mxu0 0.0
    %438 = vmatprep.subr.mxu0 0.0
    %439 = vmatpush1.xpose.msra.mxu0 0.0
    %440 = vmatprep.subr.mxu0 0.0
    %441 = vmatpush1.xpose.msra.mxu0 0.0
    %442 = vmatprep.subr.mxu0 0.0
    %443 = vmatpush1.xpose.msra.mxu0 0.0
    %444 = vmatprep.subr.mxu0 0.0
    %445 = vmatpush1.xpose.msra.mxu0 0.0
    %446 = vmatprep.subr.mxu0 0.0
    %447 = vmatpush1.xpose.msra.mxu0 0.0
    %448 = vmatprep.subr.mxu0 0.0
    %449 = vmatpush1.xpose.msra.mxu0 0.0
    %450 = vmatprep.subr.mxu0 0.0
    %451 = vmatpush1.xpose.msra.mxu0 0.0
    %452 = vmatprep.subr.mxu0 0.0
    %453 = vmatpush1.xpose.msra.mxu0 0.0
    %454 = vmatprep.subr.mxu0 0.0
    %455 = vmatpush1.xpose.msra.mxu0 0.0
    %456 = vmatprep.subr.mxu0 0.0
    %457 = vmatpush1.xpose.msra.mxu0 0.0
    %458 = vmatprep.subr.mxu0 0.0
    %459 = vmatpush1.xpose.msra.mxu0 0.0
    %460 = vmatprep.subr.mxu0 0.0
    %461 = vmatpush1.xpose.msra.mxu0 0.0
    %462 = vmatprep.subr.mxu0 0.0
    %463 = vmatpush1.xpose.msra.mxu0 0.0
    %464 = vmatprep.subr.mxu0 0.0
    %465 = vmatpush1.xpose.msra.mxu0 0.0
    %466 = vmatprep.subr.mxu0 0.0
    %467 = vmatpush1.xpose.msra.mxu0 0.0
    %468 = vmatprep.subr.mxu0 0.0
    %469 = vmatpush1.xpose.msra.mxu0 0.0
    %470 = vmatprep.subr.mxu0 0.0
    %471 = vmatpush1.xpose.msra.mxu0 0.0
    %472 = vmatprep.subr.mxu0 0.0
    %473 = vmatpush1.xpose.msra.mxu0 0.0
    %474 = vmatprep.subr.mxu0 0.0
    %475 = vmatpush1.xpose.msra.mxu0 0.0
    %476 = vmatprep.subr.mxu0 0.0
    %477 = vmatpush1.xpose.msra.mxu0 0.0
    %478 = vmatprep.subr.mxu0 0.0
    %479 = vmatpush1.xpose.msra.mxu0 0.0
    %480 = vmatprep.subr.mxu0 0.0
    %481 = vmatpush1.xpose.msra.mxu0 0.0
    %482 = vmatprep.subr.mxu0 0.0
    %483 = vmatpush1.xpose.msra.mxu0 0.0
    %484 = vmatprep.subr.mxu0 0.0
    %485 = vmatpush1.xpose.msra.mxu0 0.0
    %486 = vmatprep.subr.mxu0 0.0
    %487 = vmatpush1.xpose.msra.mxu0 0.0
    %488 = vmatprep.subr.mxu0 0.0
    %489 = vmatpush1.xpose.msra.mxu0 0.0
    %490 = vmatprep.subr.mxu0 0.0
    %491 = vmatpush1.xpose.msra.mxu0 0.0
    %492 = vmatprep.subr.mxu0 0.0
    %493 = vmatpush1.xpose.msra.mxu0 0.0
    %494 = vmatprep.subr.mxu0 0.0
    %495 = vmatpush1.xpose.msra.mxu0 0.0
    %496 = vmatprep.mubr.f32.mxu0 0.0
    %497 = vmatmul.mubr.f32.gmra.mrb[0].mxu0 %v428
    %v498 = vpop.f32.mrb[0].mxu0
    %v499 = vadd.f32 %v124, %v498
    %v500 = vpop.f32.mrb[0].mxu0
    %501 = vdwg.mxu0
    %503 = vrot.lane.b32.xlu0 %v267, 96
    %v504 = vpop.permute.xlu0 %503
    %v505 = vsel %vm273, %v267, 0
    %v507 = vsel %vm273, %v504, 0
    %509 = vmatprep.subr.mxu0 0.0
    %510 = vmatpush1.xpose.msra.mxu0 %v507
    %511 = vmatprep.subr.mxu0 0.0
    %512 = vmatpush1.xpose.msra.mxu0 0.0
    %513 = vmatprep.subr.mxu0 0.0
    %514 = vmatpush1.xpose.msra.mxu0 0.0
    %515 = vmatprep.subr.mxu0 0.0
    %516 = vmatpush1.xpose.msra.mxu0 0.0
    %517 = vmatprep.subr.mxu0 0.0
    %518 = vmatpush1.xpose.msra.mxu0 0.0
    %519 = vmatprep.subr.mxu0 0.0
    %520 = vmatpush1.xpose.msra.mxu0 0.0
    %521 = vmatprep.subr.mxu0 0.0
    %522 = vmatpush1.xpose.msra.mxu0 0.0
    %523 = vmatprep.subr.mxu0 0.0
    %524 = vmatpush1.xpose.msra.mxu0 0.0
    %525 = vmatprep.subr.mxu0 0.0
    %526 = vmatpush1.xpose.msra.mxu0 0.0
    %527 = vmatprep.subr.mxu0 0.0
    %528 = vmatpush1.xpose.msra.mxu0 0.0
    %529 = vmatprep.subr.mxu0 0.0
    %530 = vmatpush1.xpose.msra.mxu0 0.0
    %531 = vmatprep.subr.mxu0 0.0
    %532 = vmatpush1.xpose.msra.mxu0 0.0
    %533 = vmatprep.subr.mxu0 0.0
    %534 = vmatpush1.xpose.msra.mxu0 0.0
    %535 = vmatprep.subr.mxu0 0.0
    %536 = vmatpush1.xpose.msra.mxu0 0.0
    %537 = vmatprep.subr.mxu0 0.0
    %538 = vmatpush1.xpose.msra.mxu0 0.0
    %539 = vmatprep.subr.mxu0 0.0
    %540 = vmatpush1.xpose.msra.mxu0 0.0
    %541 = vmatprep.subr.mxu0 0.0
    %542 = vmatpush1.xpose.msra.mxu0 0.0
    %543 = vmatprep.subr.mxu0 0.0
    %544 = vmatpush1.xpose.msra.mxu0 0.0
    %545 = vmatprep.subr.mxu0 0.0
    %546 = vmatpush1.xpose.msra.mxu0 0.0
    %547 = vmatprep.subr.mxu0 0.0
    %548 = vmatpush1.xpose.msra.mxu0 0.0
    %549 = vmatprep.subr.mxu0 0.0
    %550 = vmatpush1.xpose.msra.mxu0 0.0
    %551 = vmatprep.subr.mxu0 0.0
    %552 = vmatpush1.xpose.msra.mxu0 0.0
    %553 = vmatprep.subr.mxu0 0.0
    %554 = vmatpush1.xpose.msra.mxu0 0.0
    %555 = vmatprep.subr.mxu0 0.0
    %556 = vmatpush1.xpose.msra.mxu0 0.0
    %557 = vmatprep.subr.mxu0 0.0
    %558 = vmatpush1.xpose.msra.mxu0 0.0
    %559 = vmatprep.subr.mxu0 0.0
    %560 = vmatpush1.xpose.msra.mxu0 0.0
    %561 = vmatprep.subr.mxu0 0.0
    %562 = vmatpush1.xpose.msra.mxu0 0.0
    %563 = vmatprep.subr.mxu0 0.0
    %564 = vmatpush1.xpose.msra.mxu0 0.0
    %565 = vmatprep.subr.mxu0 0.0
    %566 = vmatpush1.xpose.msra.mxu0 0.0
    %567 = vmatprep.subr.mxu0 0.0
    %568 = vmatpush1.xpose.msra.mxu0 0.0
    %569 = vmatprep.subr.mxu0 0.0
    %570 = vmatpush1.xpose.msra.mxu0 0.0
    %571 = vmatprep.subr.mxu0 0.0
    %572 = vmatpush1.xpose.msra.mxu0 0.0
    %573 = vmatprep.mubr.f32.mxu0 0.0
    %574 = vmatmul.mubr.f32.gmra.mrb[0].mxu0 %v505
    %v575 = vpop.f32.mrb[0].mxu0
    %v576 = vadd.f32 %v125, %v575
    %v577 = vpop.f32.mrb[0].mxu0
    %578 = vdwg.mxu0
    %v579 = vsel %vm273, %v345, -inf
    %580 = vmax.xlane.f32.xlu0 %v579
    %v581 = vpop.xlane.xlu0 %580
    %v582 = vsel %vm273, %v422, -inf
    %583 = vmax.xlane.f32.xlu0 %v582
    %v584 = vpop.xlane.xlu0 %583
    %v585 = vsel %vm273, %v499, -inf
    %586 = vmax.xlane.f32.xlu0 %v585
    %v587 = vpop.xlane.xlu0 %586
    %v588 = vsel %vm273, %v576, -inf
    %589 = vmax.xlane.f32.xlu0 %v588
    %v590 = vpop.xlane.xlu0 %589
    %v591 = vsub.f32 %v345, %v581
    %v592 = vsub.f32 %v422, %v584
    %v593 = vsub.f32 %v499, %v587
    %v594 = vsub.f32 %v576, %v590
    %v595 = vmul.f32 %v591, 1.442695
    %v596 = vpow.pop %v595
    %v597 = vmul.f32 %v592, 1.442695
    %v598 = vpow.pop %v597
    %v599 = vmul.f32 %v593, 1.442695
    %v600 = vpow.pop %v599
    %v601 = vmul.f32 %v594, 1.442695
    %v602 = vpow.pop %v601
    %v603 = vsel %vm273, %v596, 0.0
    %604 = vadd.xlane.f32.xlu0 %v603
    %v605 = vpop.xlane.xlu0 %604
    %v606 = vsel %vm273, %v598, 0.0
    %607 = vadd.xlane.f32.xlu0 %v606
    %v608 = vpop.xlane.xlu0 %607
    %v609 = vsel %vm273, %v600, 0.0
    %610 = vadd.xlane.f32.xlu0 %v609
    %v611 = vpop.xlane.xlu0 %610
    %v612 = vsel %vm273, %v602, 0.0
    %613 = vadd.xlane.f32.xlu0 %v612
    %v614 = vpop.xlane.xlu0 %613
    %v615 = vrcp.pop %v605
    %v616 = vmul.f32 %v596, %v615
    %v617 = vrcp.pop %v608
    %v618 = vmul.f32 %v598, %v617
    %v619 = vrcp.pop %v611
    %v620 = vmul.f32 %v600, %v619
    %v621 = vrcp.pop %v614
    %v622 = vmul.f32 %v602, %v621
    %623 = vrot.lane.b32.xlu0 %v252, 64
    %v624 = vpop.permute.xlu0 %623
    %v627 = vsel %vm273, %v616, 0
    %629 = vmatprep.subr.mxu0 0.0
    %630 = vmatpush1.msra.mxu0 %v624
    %631 = vmatprep.subr.mxu0 0.0
    %632 = vmatpush1.msra.mxu0 0.0
    %633 = vmatprep.subr.mxu0 0.0
    %634 = vmatpush1.msra.mxu0 0.0
    %635 = vmatprep.subr.mxu0 0.0
    %636 = vmatpush1.msra.mxu0 0.0
    %637 = vmatprep.subr.mxu0 0.0
    %638 = vmatpush1.msra.mxu0 0.0
    %639 = vmatprep.subr.mxu0 0.0
    %640 = vmatpush1.msra.mxu0 0.0
    %641 = vmatprep.subr.mxu0 0.0
    %642 = vmatpush1.msra.mxu0 0.0
    %643 = vmatprep.subr.mxu0 0.0
    %644 = vmatpush1.msra.mxu0 0.0
    %645 = vmatprep.subr.mxu0 0.0
    %646 = vmatpush1.msra.mxu0 0.0
    %647 = vmatprep.subr.mxu0 0.0
    %648 = vmatpush1.msra.mxu0 0.0
    %649 = vmatprep.subr.mxu0 0.0
    %650 = vmatpush1.msra.mxu0 0.0
    %651 = vmatprep.subr.mxu0 0.0
    %652 = vmatpush1.msra.mxu0 0.0
    %653 = vmatprep.subr.mxu0 0.0
    %654 = vmatpush1.msra.mxu0 0.0
    %655 = vmatprep.subr.mxu0 0.0
    %656 = vmatpush1.msra.mxu0 0.0
    %657 = vmatprep.subr.mxu0 0.0
    %658 = vmatpush1.msra.mxu0 0.0
    %659 = vmatprep.subr.mxu0 0.0
    %660 = vmatpush1.msra.mxu0 0.0
    %661 = vmatprep.subr.mxu0 0.0
    %662 = vmatpush1.msra.mxu0 0.0
    %663 = vmatprep.subr.mxu0 0.0
    %664 = vmatpush1.msra.mxu0 0.0
    %665 = vmatprep.subr.mxu0 0.0
    %666 = vmatpush1.msra.mxu0 0.0
    %667 = vmatprep.subr.mxu0 0.0
    %668 = vmatpush1.msra.mxu0 0.0
    %669 = vmatprep.subr.mxu0 0.0
    %670 = vmatpush1.msra.mxu0 0.0
    %671 = vmatprep.subr.mxu0 0.0
    %672 = vmatpush1.msra.mxu0 0.0
    %673 = vmatprep.subr.mxu0 0.0
    %674 = vmatpush1.msra.mxu0 0.0
    %675 = vmatprep.subr.mxu0 0.0
    %676 = vmatpush1.msra.mxu0 0.0
    %677 = vmatprep.subr.mxu0 0.0
    %678 = vmatpush1.msra.mxu0 0.0
    %679 = vmatprep.subr.mxu0 0.0
    %680 = vmatpush1.msra.mxu0 0.0
    %681 = vmatprep.subr.mxu0 0.0
    %682 = vmatpush1.msra.mxu0 0.0
    %683 = vmatprep.subr.mxu0 0.0
    %684 = vmatpush1.msra.mxu0 0.0
    %685 = vmatprep.subr.mxu0 0.0
    %686 = vmatpush1.msra.mxu0 0.0
    %687 = vmatprep.subr.mxu0 0.0
    %688 = vmatpush1.msra.mxu0 0.0
    %689 = vmatprep.subr.mxu0 0.0
    %690 = vmatpush1.msra.mxu0 0.0
    %691 = vmatprep.subr.mxu0 0.0
    %692 = vmatpush1.msra.mxu0 0.0
    %693 = vmatprep.mubr.f32.mxu0 0.0
    %694 = vmatmul.mubr.f32.gmra.mrb[0].mxu0 %v627
    %v695 = vpop.f32.mrb[0].mxu0
    %v696 = vadd.f32 0.0, %v695
    %v697 = vpop.f32.mrb[0].mxu0
    %698 = vdwg.mxu0
    %699 = vrot.lane.b32.xlu0 %v257, 64
    %v700 = vpop.permute.xlu0 %699
    %v703 = vsel %vm273, %v618, 0
    %705 = vmatprep.subr.mxu0 0.0
    %706 = vmatpush1.msra.mxu0 %v700
    %707 = vmatprep.subr.mxu0 0.0
    %708 = vmatpush1.msra.mxu0 0.0
    %709 = vmatprep.subr.mxu0 0.0
    %710 = vmatpush1.msra.mxu0 0.0
    %711 = vmatprep.subr.mxu0 0.0
    %712 = vmatpush1.msra.mxu0 0.0
    %713 = vmatprep.subr.mxu0 0.0
    %714 = vmatpush1.msra.mxu0 0.0
    %715 = vmatprep.subr.mxu0 0.0
    %716 = vmatpush1.msra.mxu0 0.0
    %717 = vmatprep.subr.mxu0 0.0
    %718 = vmatpush1.msra.mxu0 0.0
    %719 = vmatprep.subr.mxu0 0.0
    %720 = vmatpush1.msra.mxu0 0.0
    %721 = vmatprep.subr.mxu0 0.0
    %722 = vmatpush1.msra.mxu0 0.0
    %723 = vmatprep.subr.mxu0 0.0
    %724 = vmatpush1.msra.mxu0 0.0
    %725 = vmatprep.subr.mxu0 0.0
    %726 = vmatpush1.msra.mxu0 0.0
    %727 = vmatprep.subr.mxu0 0.0
    %728 = vmatpush1.msra.mxu0 0.0
    %729 = vmatprep.subr.mxu0 0.0
    %730 = vmatpush1.msra.mxu0 0.0
    %731 = vmatprep.subr.mxu0 0.0
    %732 = vmatpush1.msra.mxu0 0.0
    %733 = vmatprep.subr.mxu0 0.0
    %734 = vmatpush1.msra.mxu0 0.0
    %735 = vmatprep.subr.mxu0 0.0
    %736 = vmatpush1.msra.mxu0 0.0
    %737 = vmatprep.subr.mxu0 0.0
    %738 = vmatpush1.msra.mxu0 0.0
    %739 = vmatprep.subr.mxu0 0.0
    %740 = vmatpush1.msra.mxu0 0.0
    %741 = vmatprep.subr.mxu0 0.0
    %742 = vmatpush1.msra.mxu0 0.0
    %743 = vmatprep.subr.mxu0 0.0
    %744 = vmatpush1.msra.mxu0 0.0
    %745 = vmatprep.subr.mxu0 0.0
    %746 = vmatpush1.msra.mxu0 0.0
    %747 = vmatprep.subr.mxu0 0.0
    %748 = vmatpush1.msra.mxu0 0.0
    %749 = vmatprep.subr.mxu0 0.0
    %750 = vmatpush1.msra.mxu0 0.0
    %751 = vmatprep.subr.mxu0 0.0
    %752 = vmatpush1.msra.mxu0 0.0
    %753 = vmatprep.subr.mxu0 0.0
    %754 = vmatpush1.msra.mxu0 0.0
    %755 = vmatprep.subr.mxu0 0.0
    %756 = vmatpush1.msra.mxu0 0.0
    %757 = vmatprep.subr.mxu0 0.0
    %758 = vmatpush1.msra.mxu0 0.0
    %759 = vmatprep.subr.mxu0 0.0
    %760 = vmatpush1.msra.mxu0 0.0
    %761 = vmatprep.subr.mxu0 0.0
    %762 = vmatpush1.msra.mxu0 0.0
    %763 = vmatprep.subr.mxu0 0.0
    %764 = vmatpush1.msra.mxu0 0.0
    %765 = vmatprep.subr.mxu0 0.0
    %766 = vmatpush1.msra.mxu0 0.0
    %767 = vmatprep.subr.mxu0 0.0
    %768 = vmatpush1.msra.mxu0 0.0
    %769 = vmatprep.mubr.f32.mxu0 0.0
    %770 = vmatmul.mubr.f32.gmra.mrb[0].mxu0 %v703
    %v771 = vpop.f32.mrb[0].mxu0
    %v772 = vadd.f32 0.0, %v771
    %v773 = vpop.f32.mrb[0].mxu0
    %774 = vdwg.mxu0
    %775 = vrot.lane.b32.xlu0 %v262, 64
    %v776 = vpop.permute.xlu0 %775
    %v779 = vsel %vm273, %v620, 0
    %781 = vmatprep.subr.mxu0 0.0
    %782 = vmatpush1.msra.mxu0 %v776
    %783 = vmatprep.subr.mxu0 0.0
    %784 = vmatpush1.msra.mxu0 0.0
    %785 = vmatprep.subr.mxu0 0.0
    %786 = vmatpush1.msra.mxu0 0.0
    %787 = vmatprep.subr.mxu0 0.0
    %788 = vmatpush1.msra.mxu0 0.0
    %789 = vmatprep.subr.mxu0 0.0
    %790 = vmatpush1.msra.mxu0 0.0
    %791 = vmatprep.subr.mxu0 0.0
    %792 = vmatpush1.msra.mxu0 0.0
    %793 = vmatprep.subr.mxu0 0.0
    %794 = vmatpush1.msra.mxu0 0.0
    %795 = vmatprep.subr.mxu0 0.0
    %796 = vmatpush1.msra.mxu0 0.0
    %797 = vmatprep.subr.mxu0 0.0
    %798 = vmatpush1.msra.mxu0 0.0
    %799 = vmatprep.subr.mxu0 0.0
    %800 = vmatpush1.msra.mxu0 0.0
    %801 = vmatprep.subr.mxu0 0.0
    %802 = vmatpush1.msra.mxu0 0.0
    %803 = vmatprep.subr.mxu0 0.0
    %804 = vmatpush1.msra.mxu0 0.0
    %805 = vmatprep.subr.mxu0 0.0
    %806 = vmatpush1.msra.mxu0 0.0
    %807 = vmatprep.subr.mxu0 0.0
    %808 = vmatpush1.msra.mxu0 0.0
    %809 = vmatprep.subr.mxu0 0.0
    %810 = vmatpush1.msra.mxu0 0.0
    %811 = vmatprep.subr.mxu0 0.0
    %812 = vmatpush1.msra.mxu0 0.0
    %813 = vmatprep.subr.mxu0 0.0
    %814 = vmatpush1.msra.mxu0 0.0
    %815 = vmatprep.subr.mxu0 0.0
    %816 = vmatpush1.msra.mxu0 0.0
    %817 = vmatprep.subr.mxu0 0.0
    %818 = vmatpush1.msra.mxu0 0.0
    %819 = vmatprep.subr.mxu0 0.0
    %820 = vmatpush1.msra.mxu0 0.0
    %821 = vmatprep.subr.mxu0 0.0
    %822 = vmatpush1.msra.mxu0 0.0
    %823 = vmatprep.subr.mxu0 0.0
    %824 = vmatpush1.msra.mxu0 0.0
    %825 = vmatprep.subr.mxu0 0.0
    %826 = vmatpush1.msra.mxu0 0.0
    %827 = vmatprep.subr.mxu0 0.0
    %828 = vmatpush1.msra.mxu0 0.0
    %829 = vmatprep.subr.mxu0 0.0
    %830 = vmatpush1.msra.mxu0 0.0
    %831 = vmatprep.subr.mxu0 0.0
    %832 = vmatpush1.msra.mxu0 0.0
    %833 = vmatprep.subr.mxu0 0.0
    %834 = vmatpush1.msra.mxu0 0.0
    %835 = vmatprep.subr.mxu0 0.0
    %836 = vmatpush1.msra.mxu0 0.0
    %837 = vmatprep.subr.mxu0 0.0
    %838 = vmatpush1.msra.mxu0 0.0
    %839 = vmatprep.subr.mxu0 0.0
    %840 = vmatpush1.msra.mxu0 0.0
    %841 = vmatprep.subr.mxu0 0.0
    %842 = vmatpush1.msra.mxu0 0.0
    %843 = vmatprep.subr.mxu0 0.0
    %844 = vmatpush1.msra.mxu0 0.0
    %845 = vmatprep.mubr.f32.mxu0 0.0
    %846 = vmatmul.mubr.f32.gmra.mrb[0].mxu0 %v779
    %v847 = vpop.f32.mrb[0].mxu0
    %v848 = vadd.f32 0.0, %v847
    %v849 = vpop.f32.mrb[0].mxu0
    %850 = vdwg.mxu0
    %851 = vrot.lane.b32.xlu0 %v267, 64
    %v852 = vpop.permute.xlu0 %851
    %v855 = vsel %vm273, %v622, 0
    %857 = vmatprep.subr.mxu0 0.0
    %858 = vmatpush1.msra.mxu0 %v852
    %859 = vmatprep.subr.mxu0 0.0
    %860 = vmatpush1.msra.mxu0 0.0
    %861 = vmatprep.subr.mxu0 0.0
    %862 = vmatpush1.msra.mxu0 0.0
    %863 = vmatprep.subr.mxu0 0.0
    %864 = vmatpush1.msra.mxu0 0.0
    %865 = vmatprep.subr.mxu0 0.0
    %866 = vmatpush1.msra.mxu0 0.0
    %867 = vmatprep.subr.mxu0 0.0
    %868 = vmatpush1.msra.mxu0 0.0
    %869 = vmatprep.subr.mxu0 0.0
    %870 = vmatpush1.msra.mxu0 0.0
    %871 = vmatprep.subr.mxu0 0.0
    %872 = vmatpush1.msra.mxu0 0.0
    %873 = vmatprep.subr.mxu0 0.0
    %874 = vmatpush1.msra.mxu0 0.0
    %875 = vmatprep.subr.mxu0 0.0
    %876 = vmatpush1.msra.mxu0 0.0
    %877 = vmatprep.subr.mxu0 0.0
    %878 = vmatpush1.msra.mxu0 0.0
    %879 = vmatprep.subr.mxu0 0.0
    %880 = vmatpush1.msra.mxu0 0.0
    %881 = vmatprep.subr.mxu0 0.0
    %882 = vmatpush1.msra.mxu0 0.0
    %883 = vmatprep.subr.mxu0 0.0
    %884 = vmatpush1.msra.mxu0 0.0
    %885 = vmatprep.subr.mxu0 0.0
    %886 = vmatpush1.msra.mxu0 0.0
    %887 = vmatprep.subr.mxu0 0.0
    %888 = vmatpush1.msra.mxu0 0.0
    %889 = vmatprep.subr.mxu0 0.0
    %890 = vmatpush1.msra.mxu0 0.0
    %891 = vmatprep.subr.mxu0 0.0
    %892 = vmatpush1.msra.mxu0 0.0
    %893 = vmatprep.subr.mxu0 0.0
    %894 = vmatpush1.msra.mxu0 0.0
    %895 = vmatprep.subr.mxu0 0.0
    %896 = vmatpush1.msra.mxu0 0.0
    %897 = vmatprep.subr.mxu0 0.0
    %898 = vmatpush1.msra.mxu0 0.0
    %899 = vmatprep.subr.mxu0 0.0
    %900 = vmatpush1.msra.mxu0 0.0
    %901 = vmatprep.subr.mxu0 0.0
    %902 = vmatpush1.msra.mxu0 0.0
    %903 = vmatprep.subr.mxu0 0.0
    %904 = vmatpush1.msra.mxu0 0.0
    %905 = vmatprep.subr.mxu0 0.0
    %906 = vmatpush1.msra.mxu0 0.0
    %907 = vmatprep.subr.mxu0 0.0
    %908 = vmatpush1.msra.mxu0 0.0
    %909 = vmatprep.subr.mxu0 0.0
    %910 = vmatpush1.msra.mxu0 0.0
    %911 = vmatprep.subr.mxu0 0.0
    %912 = vmatpush1.msra.mxu0 0.0
    %913 = vmatprep.subr.mxu0 0.0
    %914 = vmatpush1.msra.mxu0 0.0
    %915 = vmatprep.subr.mxu0 0.0
    %916 = vmatpush1.msra.mxu0 0.0
    %917 = vmatprep.subr.mxu0 0.0
    %918 = vmatpush1.msra.mxu0 0.0
    %919 = vmatprep.subr.mxu0 0.0
    %920 = vmatpush1.msra.mxu0 0.0
    %921 = vmatprep.mubr.f32.mxu0 0.0
    %922 = vmatmul.mubr.f32.gmra.mrb[0].mxu0 %v855
    %v923 = vpop.f32.mrb[0].mxu0
    %v924 = vadd.f32 0.0, %v923
    %v925 = vpop.f32.mrb[0].mxu0
    %926 = vdwg.mxu0
    %927 = vrot.lane.b32.xlu0 %v252, 120
    %v928 = vpop.permute.xlu0 %927
    %929 = vrot.lane.b32.xlu0 %v252, 88
    %v930 = vpop.permute.xlu0 %929
    %v931 = vsel %vm273, %v928, 0
    %v933 = vsel %vm273, %v930, 0
    %935 = vmatprep.subr.mxu0 0.0
    %936 = vmatpush1.xpose.msra.mxu0 %v933
    %937 = vmatprep.subr.mxu0 0.0
    %938 = vmatpush1.xpose.msra.mxu0 0.0
    %939 = vmatprep.subr.mxu0 0.0
    %940 = vmatpush1.xpose.msra.mxu0 0.0
    %941 = vmatprep.subr.mxu0 0.0
    %942 = vmatpush1.xpose.msra.mxu0 0.0
    %943 = vmatprep.subr.mxu0 0.0
    %944 = vmatpush1.xpose.msra.mxu0 0.0
    %945 = vmatprep.subr.mxu0 0.0
    %946 = vmatpush1.xpose.msra.mxu0 0.0
    %947 = vmatprep.subr.mxu0 0.0
    %948 = vmatpush1.xpose.msra.mxu0 0.0
    %949 = vmatprep.subr.mxu0 0.0
    %950 = vmatpush1.xpose.msra.mxu0 0.0
    %951 = vmatprep.subr.mxu0 0.0
    %952 = vmatpush1.xpose.msra.mxu0 0.0
    %953 = vmatprep.subr.mxu0 0.0
    %954 = vmatpush1.xpose.msra.mxu0 0.0
    %955 = vmatprep.subr.mxu0 0.0
    %956 = vmatpush1.xpose.msra.mxu0 0.0
    %957 = vmatprep.subr.mxu0 0.0
    %958 = vmatpush1.xpose.msra.mxu0 0.0
    %959 = vmatprep.subr.mxu0 0.0
    %960 = vmatpush1.xpose.msra.mxu0 0.0
    %961 = vmatprep.subr.mxu0 0.0
    %962 = vmatpush1.xpose.msra.mxu0 0.0
    %963 = vmatprep.subr.mxu0 0.0
    %964 = vmatpush1.xpose.msra.mxu0 0.0
    %965 = vmatprep.subr.mxu0 0.0
    %966 = vmatpush1.xpose.msra.mxu0 0.0
    %967 = vmatprep.subr.mxu0 0.0
    %968 = vmatpush1.xpose.msra.mxu0 0.0
    %969 = vmatprep.subr.mxu0 0.0
    %970 = vmatpush1.xpose.msra.mxu0 0.0
    %971 = vmatprep.subr.mxu0 0.0
    %972 = vmatpush1.xpose.msra.mxu0 0.0
    %973 = vmatprep.subr.mxu0 0.0
    %974 = vmatpush1.xpose.msra.mxu0 0.0
    %975 = vmatprep.subr.mxu0 0.0
    %976 = vmatpush1.xpose.msra.mxu0 0.0
    %977 = vmatprep.subr.mxu0 0.0
    %978 = vmatpush1.xpose.msra.mxu0 0.0
    %979 = vmatprep.subr.mxu0 0.0
    %980 = vmatpush1.xpose.msra.mxu0 0.0
    %981 = vmatprep.subr.mxu0 0.0
    %982 = vmatpush1.xpose.msra.mxu0 0.0
    %983 = vmatprep.subr.mxu0 0.0
    %984 = vmatpush1.xpose.msra.mxu0 0.0
    %985 = vmatprep.subr.mxu0 0.0
    %986 = vmatpush1.xpose.msra.mxu0 0.0
    %987 = vmatprep.subr.mxu0 0.0
    %988 = vmatpush1.xpose.msra.mxu0 0.0
    %989 = vmatprep.subr.mxu0 0.0
    %990 = vmatpush1.xpose.msra.mxu0 0.0
    %991 = vmatprep.subr.mxu0 0.0
    %992 = vmatpush1.xpose.msra.mxu0 0.0
    %993 = vmatprep.subr.mxu0 0.0
    %994 = vmatpush1.xpose.msra.mxu0 0.0
    %995 = vmatprep.subr.mxu0 0.0
    %996 = vmatpush1.xpose.msra.mxu0 0.0
    %997 = vmatprep.subr.mxu0 0.0
    %998 = vmatpush1.xpose.msra.mxu0 0.0
    %999 = vmatprep.mubr.f32.mxu0 0.0
    %1000 = vmatmul.mubr.f32.gmra.mrb[0].mxu0 %v931
    %v1001 = vpop.f32.mrb[0].mxu0
    %v1002 = vadd.f32 %v122, %v1001
    %v1003 = vpop.f32.mrb[0].mxu0
    %1004 = vdwg.mxu0
    %1005 = vrot.lane.b32.xlu0 %v257, 120
    %v1006 = vpop.permute.xlu0 %1005
    %1007 = vrot.lane.b32.xlu0 %v257, 88
    %v1008 = vpop.permute.xlu0 %1007
    %v1009 = vsel %vm273, %v1006, 0
    %v1011 = vsel %vm273, %v1008, 0
    %1013 = vmatprep.subr.mxu0 0.0
    %1014 = vmatpush1.xpose.msra.mxu0 %v1011
    %1015 = vmatprep.subr.mxu0 0.0
    %1016 = vmatpush1.xpose.msra.mxu0 0.0
    %1017 = vmatprep.subr.mxu0 0.0
    %1018 = vmatpush1.xpose.msra.mxu0 0.0
    %1019 = vmatprep.subr.mxu0 0.0
    %1020 = vmatpush1.xpose.msra.mxu0 0.0
    %1021 = vmatprep.subr.mxu0 0.0
    %1022 = vmatpush1.xpose.msra.mxu0 0.0
    %1023 = vmatprep.subr.mxu0 0.0
    %1024 = vmatpush1.xpose.msra.mxu0 0.0
    %1025 = vmatprep.subr.mxu0 0.0
    %1026 = vmatpush1.xpose.msra.mxu0 0.0
    %1027 = vmatprep.subr.mxu0 0.0
    %1028 = vmatpush1.xpose.msra.mxu0 0.0
    %1029 = vmatprep.subr.mxu0 0.0
    %1030 = vmatpush1.xpose.msra.mxu0 0.0
    %1031 = vmatprep.subr.mxu0 0.0
    %1032 = vmatpush1.xpose.msra.mxu0 0.0
    %1033 = vmatprep.subr.mxu0 0.0
    %1034 = vmatpush1.xpose.msra.mxu0 0.0
    %1035 = vmatprep.subr.mxu0 0.0
    %1036 = vmatpush1.xpose.msra.mxu0 0.0
    %1037 = vmatprep.subr.mxu0 0.0
    %1038 = vmatpush1.xpose.msra.mxu0 0.0
    %1039 = vmatprep.subr.mxu0 0.0
    %1040 = vmatpush1.xpose.msra.mxu0 0.0
    %1041 = vmatprep.subr.mxu0 0.0
    %1042 = vmatpush1.xpose.msra.mxu0 0.0
    %1043 = vmatprep.subr.mxu0 0.0
    %1044 = vmatpush1.xpose.msra.mxu0 0.0
    %1045 = vmatprep.subr.mxu0 0.0
    %1046 = vmatpush1.xpose.msra.mxu0 0.0
    %1047 = vmatprep.subr.mxu0 0.0
    %1048 = vmatpush1.xpose.msra.mxu0 0.0
    %1049 = vmatprep.subr.mxu0 0.0
    %1050 = vmatpush1.xpose.msra.mxu0 0.0
    %1051 = vmatprep.subr.mxu0 0.0
    %1052 = vmatpush1.xpose.msra.mxu0 0.0
    %1053 = vmatprep.subr.mxu0 0.0
    %1054 = vmatpush1.xpose.msra.mxu0 0.0
    %1055 = vmatprep.subr.mxu0 0.0
    %1056 = vmatpush1.xpose.msra.mxu0 0.0
    %1057 = vmatprep.subr.mxu0 0.0
    %1058 = vmatpush1.xpose.msra.mxu0 0.0
    %1059 = vmatprep.subr.mxu0 0.0
    %1060 = vmatpush1.xpose.msra.mxu0 0.0
    %1061 = vmatprep.subr.mxu0 0.0
    %1062 = vmatpush1.xpose.msra.mxu0 0.0
    %1063 = vmatprep.subr.mxu0 0.0
    %1064 = vmatpush1.xpose.msra.mxu0 0.0
    %1065 = vmatprep.subr.mxu0 0.0
    %1066 = vmatpush1.xpose.msra.mxu0 0.0
    %1067 = vmatprep.subr.mxu0 0.0
    %1068 = vmatpush1.xpose.msra.mxu0 0.0
    %1069 = vmatprep.subr.mxu0 0.0
    %1070 = vmatpush1.xpose.msra.mxu0 0.0
    %1071 = vmatprep.subr.mxu0 0.0
    %1072 = vmatpush1.xpose.msra.mxu0 0.0
    %1073 = vmatprep.subr.mxu0 0.0
    %1074 = vmatpush1.xpose.msra.mxu0 0.0
    %1075 = vmatprep.subr.mxu0 0.0
    %1076 = vmatpush1.xpose.msra.mxu0 0.0
    %1077 = vmatprep.mubr.f32.mxu0 0.0
    %1078 = vmatmul.mubr.f32.gmra.mrb[0].mxu0 %v1009
    %v1079 = vpop.f32.mrb[0].mxu0
    %v1080 = vadd.f32 %v123, %v1079
    %v1081 = vpop.f32.mrb[0].mxu0
    %1082 = vdwg.mxu0
    %1083 = vrot.lane.b32.xlu0 %v262, 120
    %v1084 = vpop.permute.xlu0 %1083
    %1085 = vrot.lane.b32.xlu0 %v262, 88
    %v1086 = vpop.permute.xlu0 %1085
    %v1087 = vsel %vm273, %v1084, 0
    %v1089 = vsel %vm273, %v1086, 0
    %1091 = vmatprep.subr.mxu0 0.0
    %1092 = vmatpush1.xpose.msra.mxu0 %v1089
    %1093 = vmatprep.subr.mxu0 0.0
    %1094 = vmatpush1.xpose.msra.mxu0 0.0
    %1095 = vmatprep.subr.mxu0 0.0
    %1096 = vmatpush1.xpose.msra.mxu0 0.0
    %1097 = vmatprep.subr.mxu0 0.0
    %1098 = vmatpush1.xpose.msra.mxu0 0.0
    %1099 = vmatprep.subr.mxu0 0.0
    %1100 = vmatpush1.xpose.msra.mxu0 0.0
    %1101 = vmatprep.subr.mxu0 0.0
    %1102 = vmatpush1.xpose.msra.mxu0 0.0
    %1103 = vmatprep.subr.mxu0 0.0
    %1104 = vmatpush1.xpose.msra.mxu0 0.0
    %1105 = vmatprep.subr.mxu0 0.0
    %1106 = vmatpush1.xpose.msra.mxu0 0.0
    %1107 = vmatprep.subr.mxu0 0.0
    %1108 = vmatpush1.xpose.msra.mxu0 0.0
    %1109 = vmatprep.subr.mxu0 0.0
    %1110 = vmatpush1.xpose.msra.mxu0 0.0
    %1111 = vmatprep.subr.mxu0 0.0
    %1112 = vmatpush1.xpose.msra.mxu0 0.0
    %1113 = vmatprep.subr.mxu0 0.0
    %1114 = vmatpush1.xpose.msra.mxu0 0.0
    %1115 = vmatprep.subr.mxu0 0.0
    %1116 = vmatpush1.xpose.msra.mxu0 0.0
    %1117 = vmatprep.subr.mxu0 0.0
    %1118 = vmatpush1.xpose.msra.mxu0 0.0
    %1119 = vmatprep.subr.mxu0 0.0
    %1120 = vmatpush1.xpose.msra.mxu0 0.0
    %1121 = vmatprep.subr.mxu0 0.0
    %1122 = vmatpush1.xpose.msra.mxu0 0.0
    %1123 = vmatprep.subr.mxu0 0.0
    %1124 = vmatpush1.xpose.msra.mxu0 0.0
    %1125 = vmatprep.subr.mxu0 0.0
    %1126 = vmatpush1.xpose.msra.mxu0 0.0
    %1127 = vmatprep.subr.mxu0 0.0
    %1128 = vmatpush1.xpose.msra.mxu0 0.0
    %1129 = vmatprep.subr.mxu0 0.0
    %1130 = vmatpush1.xpose.msra.mxu0 0.0
    %1131 = vmatprep.subr.mxu0 0.0
    %1132 = vmatpush1.xpose.msra.mxu0 0.0
    %1133 = vmatprep.subr.mxu0 0.0
    %1134 = vmatpush1.xpose.msra.mxu0 0.0
    %1135 = vmatprep.subr.mxu0 0.0
    %1136 = vmatpush1.xpose.msra.mxu0 0.0
    %1137 = vmatprep.subr.mxu0 0.0
    %1138 = vmatpush1.xpose.msra.mxu0 0.0
    %1139 = vmatprep.subr.mxu0 0.0
    %1140 = vmatpush1.xpose.msra.mxu0 0.0
    %1141 = vmatprep.subr.mxu0 0.0
    %1142 = vmatpush1.xpose.msra.mxu0 0.0
    %1143 = vmatprep.subr.mxu0 0.0
    %1144 = vmatpush1.xpose.msra.mxu0 0.0
    %1145 = vmatprep.subr.mxu0 0.0
    %1146 = vmatpush1.xpose.msra.mxu0 0.0
    %1147 = vmatprep.subr.mxu0 0.0
    %1148 = vmatpush1.xpose.msra.mxu0 0.0
    %1149 = vmatprep.subr.mxu0 0.0
    %1150 = vmatpush1.xpose.msra.mxu0 0.0
    %1151 = vmatprep.subr.mxu0 0.0
    %1152 = vmatpush1.xpose.msra.mxu0 0.0
    %1153 = vmatprep.subr.mxu0 0.0
    %1154 = vmatpush1.xpose.msra.mxu0 0.0
    %1155 = vmatprep.mubr.f32.mxu0 0.0
    %1156 = vmatmul.mubr.f32.gmra.mrb[0].mxu0 %v1087
    %v1157 = vpop.f32.mrb[0].mxu0
    %v1158 = vadd.f32 %v124, %v1157
    %v1159 = vpop.f32.mrb[0].mxu0
    %1160 = vdwg.mxu0
    %1161 = vrot.lane.b32.xlu0 %v267, 120
    %v1162 = vpop.permute.xlu0 %1161
    %1163 = vrot.lane.b32.xlu0 %v267, 88
    %v1164 = vpop.permute.xlu0 %1163
    %v1165 = vsel %vm273, %v1162, 0
    %v1167 = vsel %vm273, %v1164, 0
    %1169 = vmatprep.subr.mxu0 0.0
    %1170 = vmatpush1.xpose.msra.mxu0 %v1167
    %1171 = vmatprep.subr.mxu0 0.0
    %1172 = vmatpush1.xpose.msra.mxu0 0.0
    %1173 = vmatprep.subr.mxu0 0.0
    %1174 = vmatpush1.xpose.msra.mxu0 0.0
    %1175 = vmatprep.subr.mxu0 0.0
    %1176 = vmatpush1.xpose.msra.mxu0 0.0
    %1177 = vmatprep.subr.mxu0 0.0
    %1178 = vmatpush1.xpose.msra.mxu0 0.0
    %1179 = vmatprep.subr.mxu0 0.0
    %1180 = vmatpush1.xpose.msra.mxu0 0.0
    %1181 = vmatprep.subr.mxu0 0.0
    %1182 = vmatpush1.xpose.msra.mxu0 0.0
    %1183 = vmatprep.subr.mxu0 0.0
    %1184 = vmatpush1.xpose.msra.mxu0 0.0
    %1185 = vmatprep.subr.mxu0 0.0
    %1186 = vmatpush1.xpose.msra.mxu0 0.0
    %1187 = vmatprep.subr.mxu0 0.0
    %1188 = vmatpush1.xpose.msra.mxu0 0.0
    %1189 = vmatprep.subr.mxu0 0.0
    %1190 = vmatpush1.xpose.msra.mxu0 0.0
    %1191 = vmatprep.subr.mxu0 0.0
    %1192 = vmatpush1.xpose.msra.mxu0 0.0
    %1193 = vmatprep.subr.mxu0 0.0
    %1194 = vmatpush1.xpose.msra.mxu0 0.0
    %1195 = vmatprep.subr.mxu0 0.0
    %1196 = vmatpush1.xpose.msra.mxu0 0.0
    %1197 = vmatprep.subr.mxu0 0.0
    %1198 = vmatpush1.xpose.msra.mxu0 0.0
    %1199 = vmatprep.subr.mxu0 0.0
    %1200 = vmatpush1.xpose.msra.mxu0 0.0
    %1201 = vmatprep.subr.mxu0 0.0
    %1202 = vmatpush1.xpose.msra.mxu0 0.0
    %1203 = vmatprep.subr.mxu0 0.0
    %1204 = vmatpush1.xpose.msra.mxu0 0.0
    %1205 = vmatprep.subr.mxu0 0.0
    %1206 = vmatpush1.xpose.msra.mxu0 0.0
    %1207 = vmatprep.subr.mxu0 0.0
    %1208 = vmatpush1.xpose.msra.mxu0 0.0
    %1209 = vmatprep.subr.mxu0 0.0
    %1210 = vmatpush1.xpose.msra.mxu0 0.0
    %1211 = vmatprep.subr.mxu0 0.0
    %1212 = vmatpush1.xpose.msra.mxu0 0.0
    %1213 = vmatprep.subr.mxu0 0.0
    %1214 = vmatpush1.xpose.msra.mxu0 0.0
    %1215 = vmatprep.subr.mxu0 0.0
    %1216 = vmatpush1.xpose.msra.mxu0 0.0
    %1217 = vmatprep.subr.mxu0 0.0
    %1218 = vmatpush1.xpose.msra.mxu0 0.0
    %1219 = vmatprep.subr.mxu0 0.0
    %1220 = vmatpush1.xpose.msra.mxu0 0.0
    %1221 = vmatprep.subr.mxu0 0.0
    %1222 = vmatpush1.xpose.msra.mxu0 0.0
    %1223 = vmatprep.subr.mxu0 0.0
    %1224 = vmatpush1.xpose.msra.mxu0 0.0
    %1225 = vmatprep.subr.mxu0 0.0
    %1226 = vmatpush1.xpose.msra.mxu0 0.0
    %1227 = vmatprep.subr.mxu0 0.0
    %1228 = vmatpush1.xpose.msra.mxu0 0.0
    %1229 = vmatprep.subr.mxu0 0.0
    %1230 = vmatpush1.xpose.msra.mxu0 0.0
    %1231 = vmatprep.subr.mxu0 0.0
    %1232 = vmatpush1.xpose.msra.mxu0 0.0
    %1233 = vmatprep.mubr.f32.mxu0 0.0
    %1234 = vmatmul.mubr.f32.gmra.mrb[0].mxu0 %v1165
    %v1235 = vpop.f32.mrb[0].mxu0
    %v1236 = vadd.f32 %v125, %v1235
    %v1237 = vpop.f32.mrb[0].mxu0
    %1238 = vdwg.mxu0
    %v1239 = vsel %vm273, %v1002, -inf
    %1240 = vmax.xlane.f32.xlu0 %v1239
    %v1241 = vpop.xlane.xlu0 %1240
    %v1242 = vsel %vm273, %v1080, -inf
    %1243 = vmax.xlane.f32.xlu0 %v1242
    %v1244 = vpop.xlane.xlu0 %1243
    %v1245 = vsel %vm273, %v1158, -inf
    %1246 = vmax.xlane.f32.xlu0 %v1245
    %v1247 = vpop.xlane.xlu0 %1246
    %v1248 = vsel %vm273, %v1236, -inf
    %1249 = vmax.xlane.f32.xlu0 %v1248
    %v1250 = vpop.xlane.xlu0 %1249
    %v1251 = vsub.f32 %v1002, %v1241
    %v1252 = vsub.f32 %v1080, %v1244
    %v1253 = vsub.f32 %v1158, %v1247
    %v1254 = vsub.f32 %v1236, %v1250
    %v1255 = vmul.f32 %v1251, 1.442695
    %v1256 = vpow.pop %v1255
    %v1257 = vmul.f32 %v1252, 1.442695
    %v1258 = vpow.pop %v1257
    %v1259 = vmul.f32 %v1253, 1.442695
    %v1260 = vpow.pop %v1259
    %v1261 = vmul.f32 %v1254, 1.442695
    %v1262 = vpow.pop %v1261
    %v1263 = vsel %vm273, %v1256, 0.0
    %1264 = vadd.xlane.f32.xlu0 %v1263
    %v1265 = vpop.xlane.xlu0 %1264
    %v1266 = vsel %vm273, %v1258, 0.0
    %1267 = vadd.xlane.f32.xlu0 %v1266
    %v1268 = vpop.xlane.xlu0 %1267
    %v1269 = vsel %vm273, %v1260, 0.0
    %1270 = vadd.xlane.f32.xlu0 %v1269
    %v1271 = vpop.xlane.xlu0 %1270
    %v1272 = vsel %vm273, %v1262, 0.0
    %1273 = vadd.xlane.f32.xlu0 %v1272
    %v1274 = vpop.xlane.xlu0 %1273
    %v1275 = vrcp.pop %v1265
    %v1276 = vmul.f32 %v1256, %v1275
    %v1277 = vrcp.pop %v1268
    %v1278 = vmul.f32 %v1258, %v1277
    %v1279 = vrcp.pop %v1271
    %v1280 = vmul.f32 %v1260, %v1279
    %v1281 = vrcp.pop %v1274
    %v1282 = vmul.f32 %v1262, %v1281
    %1283 = vrot.lane.b32.xlu0 %v252, 56
    %v1284 = vpop.permute.xlu0 %1283
    %v1287 = vsel %vm273, %v1276, 0
    %1289 = vmatprep.subr.mxu0 0.0
    %1290 = vmatpush1.msra.mxu0 %v1284
    %1291 = vmatprep.subr.mxu0 0.0
    %1292 = vmatpush1.msra.mxu0 0.0
    %1293 = vmatprep.subr.mxu0 0.0
    %1294 = vmatpush1.msra.mxu0 0.0
    %1295 = vmatprep.subr.mxu0 0.0
    %1296 = vmatpush1.msra.mxu0 0.0
    %1297 = vmatprep.subr.mxu0 0.0
    %1298 = vmatpush1.msra.mxu0 0.0
    %1299 = vmatprep.subr.mxu0 0.0
    %1300 = vmatpush1.msra.mxu0 0.0
    %1301 = vmatprep.subr.mxu0 0.0
    %1302 = vmatpush1.msra.mxu0 0.0
    %1303 = vmatprep.subr.mxu0 0.0
    %1304 = vmatpush1.msra.mxu0 0.0
    %1305 = vmatprep.subr.mxu0 0.0
    %1306 = vmatpush1.msra.mxu0 0.0
    %1307 = vmatprep.subr.mxu0 0.0
    %1308 = vmatpush1.msra.mxu0 0.0
    %1309 = vmatprep.subr.mxu0 0.0
    %1310 = vmatpush1.msra.mxu0 0.0
    %1311 = vmatprep.subr.mxu0 0.0
    %1312 = vmatpush1.msra.mxu0 0.0
    %1313 = vmatprep.subr.mxu0 0.0
    %1314 = vmatpush1.msra.mxu0 0.0
    %1315 = vmatprep.subr.mxu0 0.0
    %1316 = vmatpush1.msra.mxu0 0.0
    %1317 = vmatprep.subr.mxu0 0.0
    %1318 = vmatpush1.msra.mxu0 0.0
    %1319 = vmatprep.subr.mxu0 0.0
    %1320 = vmatpush1.msra.mxu0 0.0
    %1321 = vmatprep.subr.mxu0 0.0
    %1322 = vmatpush1.msra.mxu0 0.0
    %1323 = vmatprep.subr.mxu0 0.0
    %1324 = vmatpush1.msra.mxu0 0.0
    %1325 = vmatprep.subr.mxu0 0.0
    %1326 = vmatpush1.msra.mxu0 0.0
    %1327 = vmatprep.subr.mxu0 0.0
    %1328 = vmatpush1.msra.mxu0 0.0
    %1329 = vmatprep.subr.mxu0 0.0
    %1330 = vmatpush1.msra.mxu0 0.0
    %1331 = vmatprep.subr.mxu0 0.0
    %1332 = vmatpush1.msra.mxu0 0.0
    %1333 = vmatprep.subr.mxu0 0.0
    %1334 = vmatpush1.msra.mxu0 0.0
    %1335 = vmatprep.subr.mxu0 0.0
    %1336 = vmatpush1.msra.mxu0 0.0
    %1337 = vmatprep.subr.mxu0 0.0
    %1338 = vmatpush1.msra.mxu0 0.0
    %1339 = vmatprep.subr.mxu0 0.0
    %1340 = vmatpush1.msra.mxu0 0.0
    %1341 = vmatprep.subr.mxu0 0.0
    %1342 = vmatpush1.msra.mxu0 0.0
    %1343 = vmatprep.subr.mxu0 0.0
    %1344 = vmatpush1.msra.mxu0 0.0
    %1345 = vmatprep.subr.mxu0 0.0
    %1346 = vmatpush1.msra.mxu0 0.0
    %1347 = vmatprep.subr.mxu0 0.0
    %1348 = vmatpush1.msra.mxu0 0.0
    %1349 = vmatprep.subr.mxu0 0.0
    %1350 = vmatpush1.msra.mxu0 0.0
    %1351 = vmatprep.subr.mxu0 0.0
    %1352 = vmatpush1.msra.mxu0 0.0
    %1353 = vmatprep.mubr.f32.mxu0 0.0
    %1354 = vmatmul.mubr.f32.gmra.mrb[0].mxu0 %v1287
    %v1355 = vpop.f32.mrb[0].mxu0
    %v1356 = vadd.f32 0.0, %v1355
    %v1357 = vpop.f32.mrb[0].mxu0
    %1358 = vdwg.mxu0
    %1359 = vrot.lane.b32.xlu0 %v257, 56
    %v1360 = vpop.permute.xlu0 %1359
    %v1363 = vsel %vm273, %v1278, 0
    %1365 = vmatprep.subr.mxu0 0.0
    %1366 = vmatpush1.msra.mxu0 %v1360
    %1367 = vmatprep.subr.mxu0 0.0
    %1368 = vmatpush1.msra.mxu0 0.0
    %1369 = vmatprep.subr.mxu0 0.0
    %1370 = vmatpush1.msra.mxu0 0.0
    %1371 = vmatprep.subr.mxu0 0.0
    %1372 = vmatpush1.msra.mxu0 0.0
    %1373 = vmatprep.subr.mxu0 0.0
    %1374 = vmatpush1.msra.mxu0 0.0
    %1375 = vmatprep.subr.mxu0 0.0
    %1376 = vmatpush1.msra.mxu0 0.0
    %1377 = vmatprep.subr.mxu0 0.0
    %1378 = vmatpush1.msra.mxu0 0.0
    %1379 = vmatprep.subr.mxu0 0.0
    %1380 = vmatpush1.msra.mxu0 0.0
    %1381 = vmatprep.subr.mxu0 0.0
    %1382 = vmatpush1.msra.mxu0 0.0
    %1383 = vmatprep.subr.mxu0 0.0
    %1384 = vmatpush1.msra.mxu0 0.0
    %1385 = vmatprep.subr.mxu0 0.0
    %1386 = vmatpush1.msra.mxu0 0.0
    %1387 = vmatprep.subr.mxu0 0.0
    %1388 = vmatpush1.msra.mxu0 0.0
    %1389 = vmatprep.subr.mxu0 0.0
    %1390 = vmatpush1.msra.mxu0 0.0
    %1391 = vmatprep.subr.mxu0 0.0
    %1392 = vmatpush1.msra.mxu0 0.0
    %1393 = vmatprep.subr.mxu0 0.0
    %1394 = vmatpush1.msra.mxu0 0.0
    %1395 = vmatprep.subr.mxu0 0.0
    %1396 = vmatpush1.msra.mxu0 0.0
    %1397 = vmatprep.subr.mxu0 0.0
    %1398 = vmatpush1.msra.mxu0 0.0
    %1399 = vmatprep.subr.mxu0 0.0
    %1400 = vmatpush1.msra.mxu0 0.0
    %1401 = vmatprep.subr.mxu0 0.0
    %1402 = vmatpush1.msra.mxu0 0.0
    %1403 = vmatprep.subr.mxu0 0.0
    %1404 = vmatpush1.msra.mxu0 0.0
    %1405 = vmatprep.subr.mxu0 0.0
    %1406 = vmatpush1.msra.mxu0 0.0
    %1407 = vmatprep.subr.mxu0 0.0
    %1408 = vmatpush1.msra.mxu0 0.0
    %1409 = vmatprep.subr.mxu0 0.0
    %1410 = vmatpush1.msra.mxu0 0.0
    %1411 = vmatprep.subr.mxu0 0.0
    %1412 = vmatpush1.msra.mxu0 0.0
    %1413 = vmatprep.subr.mxu0 0.0
    %1414 = vmatpush1.msra.mxu0 0.0
    %1415 = vmatprep.subr.mxu0 0.0
    %1416 = vmatpush1.msra.mxu0 0.0
    %1417 = vmatprep.subr.mxu0 0.0
    %1418 = vmatpush1.msra.mxu0 0.0
    %1419 = vmatprep.subr.mxu0 0.0
    %1420 = vmatpush1.msra.mxu0 0.0
    %1421 = vmatprep.subr.mxu0 0.0
    %1422 = vmatpush1.msra.mxu0 0.0
    %1423 = vmatprep.subr.mxu0 0.0
    %1424 = vmatpush1.msra.mxu0 0.0
    %1425 = vmatprep.subr.mxu0 0.0
    %1426 = vmatpush1.msra.mxu0 0.0
    %1427 = vmatprep.subr.mxu0 0.0
    %1428 = vmatpush1.msra.mxu0 0.0
    %1429 = vmatprep.mubr.f32.mxu0 0.0
    %1430 = vmatmul.mubr.f32.gmra.mrb[0].mxu0 %v1363
    %v1431 = vpop.f32.mrb[0].mxu0
    %v1432 = vadd.f32 0.0, %v1431
    %v1433 = vpop.f32.mrb[0].mxu0
    %1434 = vdwg.mxu0
    %1435 = vrot.lane.b32.xlu0 %v262, 56
    %v1436 = vpop.permute.xlu0 %1435
    %v1439 = vsel %vm273, %v1280, 0
    %1441 = vmatprep.subr.mxu0 0.0
    %1442 = vmatpush1.msra.mxu0 %v1436
    %1443 = vmatprep.subr.mxu0 0.0
    %1444 = vmatpush1.msra.mxu0 0.0
    %1445 = vmatprep.subr.mxu0 0.0
    %1446 = vmatpush1.msra.mxu0 0.0
    %1447 = vmatprep.subr.mxu0 0.0
    %1448 = vmatpush1.msra.mxu0 0.0
    %1449 = vmatprep.subr.mxu0 0.0
    %1450 = vmatpush1.msra.mxu0 0.0
    %1451 = vmatprep.subr.mxu0 0.0
    %1452 = vmatpush1.msra.mxu0 0.0
    %1453 = vmatprep.subr.mxu0 0.0
    %1454 = vmatpush1.msra.mxu0 0.0
    %1455 = vmatprep.subr.mxu0 0.0
    %1456 = vmatpush1.msra.mxu0 0.0
    %1457 = vmatprep.subr.mxu0 0.0
    %1458 = vmatpush1.msra.mxu0 0.0
    %1459 = vmatprep.subr.mxu0 0.0
    %1460 = vmatpush1.msra.mxu0 0.0
    %1461 = vmatprep.subr.mxu0 0.0
    %1462 = vmatpush1.msra.mxu0 0.0
    %1463 = vmatprep.subr.mxu0 0.0
    %1464 = vmatpush1.msra.mxu0 0.0
    %1465 = vmatprep.subr.mxu0 0.0
    %1466 = vmatpush1.msra.mxu0 0.0
    %1467 = vmatprep.subr.mxu0 0.0
    %1468 = vmatpush1.msra.mxu0 0.0
    %1469 = vmatprep.subr.mxu0 0.0
    %1470 = vmatpush1.msra.mxu0 0.0
    %1471 = vmatprep.subr.mxu0 0.0
    %1472 = vmatpush1.msra.mxu0 0.0
    %1473 = vmatprep.subr.mxu0 0.0
    %1474 = vmatpush1.msra.mxu0 0.0
    %1475 = vmatprep.subr.mxu0 0.0
    %1476 = vmatpush1.msra.mxu0 0.0
    %1477 = vmatprep.subr.mxu0 0.0
    %1478 = vmatpush1.msra.mxu0 0.0
    %1479 = vmatprep.subr.mxu0 0.0
    %1480 = vmatpush1.msra.mxu0 0.0
    %1481 = vmatprep.subr.mxu0 0.0
    %1482 = vmatpush1.msra.mxu0 0.0
    %1483 = vmatprep.subr.mxu0 0.0
    %1484 = vmatpush1.msra.mxu0 0.0
    %1485 = vmatprep.subr.mxu0 0.0
    %1486 = vmatpush1.msra.mxu0 0.0
    %1487 = vmatprep.subr.mxu0 0.0
    %1488 = vmatpush1.msra.mxu0 0.0
    %1489 = vmatprep.subr.mxu0 0.0
    %1490 = vmatpush1.msra.mxu0 0.0
    %1491 = vmatprep.subr.mxu0 0.0
    %1492 = vmatpush1.msra.mxu0 0.0
    %1493 = vmatprep.subr.mxu0 0.0
    %1494 = vmatpush1.msra.mxu0 0.0
    %1495 = vmatprep.subr.mxu0 0.0
    %1496 = vmatpush1.msra.mxu0 0.0
    %1497 = vmatprep.subr.mxu0 0.0
    %1498 = vmatpush1.msra.mxu0 0.0
    %1499 = vmatprep.subr.mxu0 0.0
    %1500 = vmatpush1.msra.mxu0 0.0
    %1501 = vmatprep.subr.mxu0 0.0
    %1502 = vmatpush1.msra.mxu0 0.0
    %1503 = vmatprep.subr.mxu0 0.0
    %1504 = vmatpush1.msra.mxu0 0.0
    %1505 = vmatprep.mubr.f32.mxu0 0.0
    %1506 = vmatmul.mubr.f32.gmra.mrb[0].mxu0 %v1439
    %v1507 = vpop.f32.mrb[0].mxu0
    %v1508 = vadd.f32 0.0, %v1507
    %v1509 = vpop.f32.mrb[0].mxu0
    %1510 = vdwg.mxu0
    %1511 = vrot.lane.b32.xlu0 %v267, 56
    %v1512 = vpop.permute.xlu0 %1511
    %v1515 = vsel %vm273, %v1282, 0
    %1517 = vmatprep.subr.mxu0 0.0
    %1518 = vmatpush1.msra.mxu0 %v1512
    %1519 = vmatprep.subr.mxu0 0.0
    %1520 = vmatpush1.msra.mxu0 0.0
    %1521 = vmatprep.subr.mxu0 0.0
    %1522 = vmatpush1.msra.mxu0 0.0
    %1523 = vmatprep.subr.mxu0 0.0
    %1524 = vmatpush1.msra.mxu0 0.0
    %1525 = vmatprep.subr.mxu0 0.0
    %1526 = vmatpush1.msra.mxu0 0.0
    %1527 = vmatprep.subr.mxu0 0.0
    %1528 = vmatpush1.msra.mxu0 0.0
    %1529 = vmatprep.subr.mxu0 0.0
    %1530 = vmatpush1.msra.mxu0 0.0
    %1531 = vmatprep.subr.mxu0 0.0
    %1532 = vmatpush1.msra.mxu0 0.0
    %1533 = vmatprep.subr.mxu0 0.0
    %1534 = vmatpush1.msra.mxu0 0.0
    %1535 = vmatprep.subr.mxu0 0.0
    %1536 = vmatpush1.msra.mxu0 0.0
    %1537 = vmatprep.subr.mxu0 0.0
    %1538 = vmatpush1.msra.mxu0 0.0
    %1539 = vmatprep.subr.mxu0 0.0
    %1540 = vmatpush1.msra.mxu0 0.0
    %1541 = vmatprep.subr.mxu0 0.0
    %1542 = vmatpush1.msra.mxu0 0.0
    %1543 = vmatprep.subr.mxu0 0.0
    %1544 = vmatpush1.msra.mxu0 0.0
    %1545 = vmatprep.subr.mxu0 0.0
    %1546 = vmatpush1.msra.mxu0 0.0
    %1547 = vmatprep.subr.mxu0 0.0
    %1548 = vmatpush1.msra.mxu0 0.0
    %1549 = vmatprep.subr.mxu0 0.0
    %1550 = vmatpush1.msra.mxu0 0.0
    %1551 = vmatprep.subr.mxu0 0.0
    %1552 = vmatpush1.msra.mxu0 0.0
    %1553 = vmatprep.subr.mxu0 0.0
    %1554 = vmatpush1.msra.mxu0 0.0
    %1555 = vmatprep.subr.mxu0 0.0
    %1556 = vmatpush1.msra.mxu0 0.0
    %1557 = vmatprep.subr.mxu0 0.0
    %1558 = vmatpush1.msra.mxu0 0.0
    %1559 = vmatprep.subr.mxu0 0.0
    %1560 = vmatpush1.msra.mxu0 0.0
    %1561 = vmatprep.subr.mxu0 0.0
    %1562 = vmatpush1.msra.mxu0 0.0
    %1563 = vmatprep.subr.mxu0 0.0
    %1564 = vmatpush1.msra.mxu0 0.0
    %1565 = vmatprep.subr.mxu0 0.0
    %1566 = vmatpush1.msra.mxu0 0.0
    %1567 = vmatprep.subr.mxu0 0.0
    %1568 = vmatpush1.msra.mxu0 0.0
    %1569 = vmatprep.subr.mxu0 0.0
    %1570 = vmatpush1.msra.mxu0 0.0
    %1571 = vmatprep.subr.mxu0 0.0
    %1572 = vmatpush1.msra.mxu0 0.0
    %1573 = vmatprep.subr.mxu0 0.0
    %1574 = vmatpush1.msra.mxu0 0.0
    %1575 = vmatprep.subr.mxu0 0.0
    %1576 = vmatpush1.msra.mxu0 0.0
    %1577 = vmatprep.subr.mxu0 0.0
    %1578 = vmatpush1.msra.mxu0 0.0
    %1579 = vmatprep.subr.mxu0 0.0
    %1580 = vmatpush1.msra.mxu0 0.0
    %1581 = vmatprep.mubr.f32.mxu0 0.0
    %1582 = vmatmul.mubr.f32.gmra.mrb[0].mxu0 %v1515
    %v1583 = vpop.f32.mrb[0].mxu0
    %v1584 = vadd.f32 0.0, %v1583
    %v1585 = vpop.f32.mrb[0].mxu0
    %1586 = vdwg.mxu0
    %1587 = vrot.lane.b32.xlu0 %v252, 112
    %v1588 = vpop.permute.xlu0 %1587
    %1589 = vrot.lane.b32.xlu0 %v252, 80
    %v1590 = vpop.permute.xlu0 %1589
    %v1591 = vsel %vm273, %v1588, 0
    %v1593 = vsel %vm273, %v1590, 0
    %1595 = vmatprep.subr.mxu0 0.0
    %1596 = vmatpush1.xpose.msra.mxu0 %v1593
    %1597 = vmatprep.subr.mxu0 0.0
    %1598 = vmatpush1.xpose.msra.mxu0 0.0
    %1599 = vmatprep.subr.mxu0 0.0
    %1600 = vmatpush1.xpose.msra.mxu0 0.0
    %1601 = vmatprep.subr.mxu0 0.0
    %1602 = vmatpush1.xpose.msra.mxu0 0.0
    %1603 = vmatprep.subr.mxu0 0.0
    %1604 = vmatpush1.xpose.msra.mxu0 0.0
    %1605 = vmatprep.subr.mxu0 0.0
    %1606 = vmatpush1.xpose.msra.mxu0 0.0
    %1607 = vmatprep.subr.mxu0 0.0
    %1608 = vmatpush1.xpose.msra.mxu0 0.0
    %1609 = vmatprep.subr.mxu0 0.0
    %1610 = vmatpush1.xpose.msra.mxu0 0.0
    %1611 = vmatprep.subr.mxu0 0.0
    %1612 = vmatpush1.xpose.msra.mxu0 0.0
    %1613 = vmatprep.subr.mxu0 0.0
    %1614 = vmatpush1.xpose.msra.mxu0 0.0
    %1615 = vmatprep.subr.mxu0 0.0
    %1616 = vmatpush1.xpose.msra.mxu0 0.0
    %1617 = vmatprep.subr.mxu0 0.0
    %1618 = vmatpush1.xpose.msra.mxu0 0.0
    %1619 = vmatprep.subr.mxu0 0.0
    %1620 = vmatpush1.xpose.msra.mxu0 0.0
    %1621 = vmatprep.subr.mxu0 0.0
    %1622 = vmatpush1.xpose.msra.mxu0 0.0
    %1623 = vmatprep.subr.mxu0 0.0
    %1624 = vmatpush1.xpose.msra.mxu0 0.0
    %1625 = vmatprep.subr.mxu0 0.0
    %1626 = vmatpush1.xpose.msra.mxu0 0.0
    %1627 = vmatprep.subr.mxu0 0.0
    %1628 = vmatpush1.xpose.msra.mxu0 0.0
    %1629 = vmatprep.subr.mxu0 0.0
    %1630 = vmatpush1.xpose.msra.mxu0 0.0
    %1631 = vmatprep.subr.mxu0 0.0
    %1632 = vmatpush1.xpose.msra.mxu0 0.0
    %1633 = vmatprep.subr.mxu0 0.0
    %1634 = vmatpush1.xpose.msra.mxu0 0.0
    %1635 = vmatprep.subr.mxu0 0.0
    %1636 = vmatpush1.xpose.msra.mxu0 0.0
    %1637 = vmatprep.subr.mxu0 0.0
    %1638 = vmatpush1.xpose.msra.mxu0 0.0
    %1639 = vmatprep.subr.mxu0 0.0
    %1640 = vmatpush1.xpose.msra.mxu0 0.0
    %1641 = vmatprep.subr.mxu0 0.0
    %1642 = vmatpush1.xpose.msra.mxu0 0.0
    %1643 = vmatprep.subr.mxu0 0.0
    %1644 = vmatpush1.xpose.msra.mxu0 0.0
    %1645 = vmatprep.subr.mxu0 0.0
    %1646 = vmatpush1.xpose.msra.mxu0 0.0
    %1647 = vmatprep.subr.mxu0 0.0
    %1648 = vmatpush1.xpose.msra.mxu0 0.0
    %1649 = vmatprep.subr.mxu0 0.0
    %1650 = vmatpush1.xpose.msra.mxu0 0.0
    %1651 = vmatprep.subr.mxu0 0.0
    %1652 = vmatpush1.xpose.msra.mxu0 0.0
    %1653 = vmatprep.subr.mxu0 0.0
    %1654 = vmatpush1.xpose.msra.mxu0 0.0
    %1655 = vmatprep.subr.mxu0 0.0
    %1656 = vmatpush1.xpose.msra.mxu0 0.0
    %1657 = vmatprep.subr.mxu0 0.0
    %1658 = vmatpush1.xpose.msra.mxu0 0.0
    %1659 = vmatprep.mubr.f32.mxu0 0.0
    %1660 = vmatmul.mubr.f32.gmra.mrb[0].mxu0 %v1591
    %v1661 = vpop.f32.mrb[0].mxu0
    %v1662 = vadd.f32 %v122, %v1661
    %v1663 = vpop.f32.mrb[0].mxu0
    %1664 = vdwg.mxu0
    %1665 = vrot.lane.b32.xlu0 %v257, 112
    %v1666 = vpop.permute.xlu0 %1665
    %1667 = vrot.lane.b32.xlu0 %v257, 80
    %v1668 = vpop.permute.xlu0 %1667
    %v1669 = vsel %vm273, %v1666, 0
    %v1671 = vsel %vm273, %v1668, 0
    %1673 = vmatprep.subr.mxu0 0.0
    %1674 = vmatpush1.xpose.msra.mxu0 %v1671
    %1675 = vmatprep.subr.mxu0 0.0
    %1676 = vmatpush1.xpose.msra.mxu0 0.0
    %1677 = vmatprep.subr.mxu0 0.0
    %1678 = vmatpush1.xpose.msra.mxu0 0.0
    %1679 = vmatprep.subr.mxu0 0.0
    %1680 = vmatpush1.xpose.msra.mxu0 0.0
    %1681 = vmatprep.subr.mxu0 0.0
    %1682 = vmatpush1.xpose.msra.mxu0 0.0
    %1683 = vmatprep.subr.mxu0 0.0
    %1684 = vmatpush1.xpose.msra.mxu0 0.0
    %1685 = vmatprep.subr.mxu0 0.0
    %1686 = vmatpush1.xpose.msra.mxu0 0.0
    %1687 = vmatprep.subr.mxu0 0.0
    %1688 = vmatpush1.xpose.msra.mxu0 0.0
    %1689 = vmatprep.subr.mxu0 0.0
    %1690 = vmatpush1.xpose.msra.mxu0 0.0
    %1691 = vmatprep.subr.mxu0 0.0
    %1692 = vmatpush1.xpose.msra.mxu0 0.0
    %1693 = vmatprep.subr.mxu0 0.0
    %1694 = vmatpush1.xpose.msra.mxu0 0.0
    %1695 = vmatprep.subr.mxu0 0.0
    %1696 = vmatpush1.xpose.msra.mxu0 0.0
    %1697 = vmatprep.subr.mxu0 0.0
    %1698 = vmatpush1.xpose.msra.mxu0 0.0
    %1699 = vmatprep.subr.mxu0 0.0
    %1700 = vmatpush1.xpose.msra.mxu0 0.0
    %1701 = vmatprep.subr.mxu0 0.0
    %1702 = vmatpush1.xpose.msra.mxu0 0.0
    %1703 = vmatprep.subr.mxu0 0.0
    %1704 = vmatpush1.xpose.msra.mxu0 0.0
    %1705 = vmatprep.subr.mxu0 0.0
    %1706 = vmatpush1.xpose.msra.mxu0 0.0
    %1707 = vmatprep.subr.mxu0 0.0
    %1708 = vmatpush1.xpose.msra.mxu0 0.0
    %1709 = vmatprep.subr.mxu0 0.0
    %1710 = vmatpush1.xpose.msra.mxu0 0.0
    %1711 = vmatprep.subr.mxu0 0.0
    %1712 = vmatpush1.xpose.msra.mxu0 0.0
    %1713 = vmatprep.subr.mxu0 0.0
    %1714 = vmatpush1.xpose.msra.mxu0 0.0
    %1715 = vmatprep.subr.mxu0 0.0
    %1716 = vmatpush1.xpose.msra.mxu0 0.0
    %1717 = vmatprep.subr.mxu0 0.0
    %1718 = vmatpush1.xpose.msra.mxu0 0.0
    %1719 = vmatprep.subr.mxu0 0.0
    %1720 = vmatpush1.xpose.msra.mxu0 0.0
    %1721 = vmatprep.subr.mxu0 0.0
    %1722 = vmatpush1.xpose.msra.mxu0 0.0
    %1723 = vmatprep.subr.mxu0 0.0
    %1724 = vmatpush1.xpose.msra.mxu0 0.0
    %1725 = vmatprep.subr.mxu0 0.0
    %1726 = vmatpush1.xpose.msra.mxu0 0.0
    %1727 = vmatprep.subr.mxu0 0.0
    %1728 = vmatpush1.xpose.msra.mxu0 0.0
    %1729 = vmatprep.subr.mxu0 0.0
    %1730 = vmatpush1.xpose.msra.mxu0 0.0
    %1731 = vmatprep.subr.mxu0 0.0
    %1732 = vmatpush1.xpose.msra.mxu0 0.0
    %1733 = vmatprep.subr.mxu0 0.0
    %1734 = vmatpush1.xpose.msra.mxu0 0.0
    %1735 = vmatprep.subr.mxu0 0.0
    %1736 = vmatpush1.xpose.msra.mxu0 0.0
    %1737 = vmatprep.mubr.f32.mxu0 0.0
    %1738 = vmatmul.mubr.f32.gmra.mrb[0].mxu0 %v1669
    %v1739 = vpop.f32.mrb[0].mxu0
    %v1740 = vadd.f32 %v123, %v1739
    %v1741 = vpop.f32.mrb[0].mxu0
    %1742 = vdwg.mxu0
    %1743 = vrot.lane.b32.xlu0 %v262, 112
    %v1744 = vpop.permute.xlu0 %1743
    %1745 = vrot.lane.b32.xlu0 %v262, 80
    %v1746 = vpop.permute.xlu0 %1745
    %v1747 = vsel %vm273, %v1744, 0
    %v1749 = vsel %vm273, %v1746, 0
    %1751 = vmatprep.subr.mxu0 0.0
    %1752 = vmatpush1.xpose.msra.mxu0 %v1749
    %1753 = vmatprep.subr.mxu0 0.0
    %1754 = vmatpush1.xpose.msra.mxu0 0.0
    %1755 = vmatprep.subr.mxu0 0.0
    %1756 = vmatpush1.xpose.msra.mxu0 0.0
    %1757 = vmatprep.subr.mxu0 0.0
    %1758 = vmatpush1.xpose.msra.mxu0 0.0
    %1759 = vmatprep.subr.mxu0 0.0
    %1760 = vmatpush1.xpose.msra.mxu0 0.0
    %1761 = vmatprep.subr.mxu0 0.0
    %1762 = vmatpush1.xpose.msra.mxu0 0.0
    %1763 = vmatprep.subr.mxu0 0.0
    %1764 = vmatpush1.xpose.msra.mxu0 0.0
    %1765 = vmatprep.subr.mxu0 0.0
    %1766 = vmatpush1.xpose.msra.mxu0 0.0
    %1767 = vmatprep.subr.mxu0 0.0
    %1768 = vmatpush1.xpose.msra.mxu0 0.0
    %1769 = vmatprep.subr.mxu0 0.0
    %1770 = vmatpush1.xpose.msra.mxu0 0.0
    %1771 = vmatprep.subr.mxu0 0.0
    %1772 = vmatpush1.xpose.msra.mxu0 0.0
    %1773 = vmatprep.subr.mxu0 0.0
    %1774 = vmatpush1.xpose.msra.mxu0 0.0
    %1775 = vmatprep.subr.mxu0 0.0
    %1776 = vmatpush1.xpose.msra.mxu0 0.0
    %1777 = vmatprep.subr.mxu0 0.0
    %1778 = vmatpush1.xpose.msra.mxu0 0.0
    %1779 = vmatprep.subr.mxu0 0.0
    %1780 = vmatpush1.xpose.msra.mxu0 0.0
    %1781 = vmatprep.subr.mxu0 0.0
    %1782 = vmatpush1.xpose.msra.mxu0 0.0
    %1783 = vmatprep.subr.mxu0 0.0
    %1784 = vmatpush1.xpose.msra.mxu0 0.0
    %1785 = vmatprep.subr.mxu0 0.0
    %1786 = vmatpush1.xpose.msra.mxu0 0.0
    %1787 = vmatprep.subr.mxu0 0.0
    %1788 = vmatpush1.xpose.msra.mxu0 0.0
    %1789 = vmatprep.subr.mxu0 0.0
    %1790 = vmatpush1.xpose.msra.mxu0 0.0
    %1791 = vmatprep.subr.mxu0 0.0
    %1792 = vmatpush1.xpose.msra.mxu0 0.0
    %1793 = vmatprep.subr.mxu0 0.0
    %1794 = vmatpush1.xpose.msra.mxu0 0.0
    %1795 = vmatprep.subr.mxu0 0.0
    %1796 = vmatpush1.xpose.msra.mxu0 0.0
    %1797 = vmatprep.subr.mxu0 0.0
    %1798 = vmatpush1.xpose.msra.mxu0 0.0
    %1799 = vmatprep.subr.mxu0 0.0
    %1800 = vmatpush1.xpose.msra.mxu0 0.0
    %1801 = vmatprep.subr.mxu0 0.0
    %1802 = vmatpush1.xpose.msra.mxu0 0.0
    %1803 = vmatprep.subr.mxu0 0.0
    %1804 = vmatpush1.xpose.msra.mxu0 0.0
    %1805 = vmatprep.subr.mxu0 0.0
    %1806 = vmatpush1.xpose.msra.mxu0 0.0
    %1807 = vmatprep.subr.mxu0 0.0
    %1808 = vmatpush1.xpose.msra.mxu0 0.0
    %1809 = vmatprep.subr.mxu0 0.0
    %1810 = vmatpush1.xpose.msra.mxu0 0.0
    %1811 = vmatprep.subr.mxu0 0.0
    %1812 = vmatpush1.xpose.msra.mxu0 0.0
    %1813 = vmatprep.subr.mxu0 0.0
    %1814 = vmatpush1.xpose.msra.mxu0 0.0
    %1815 = vmatprep.mubr.f32.mxu0 0.0
    %1816 = vmatmul.mubr.f32.gmra.mrb[0].mxu0 %v1747
    %v1817 = vpop.f32.mrb[0].mxu0
    %v1818 = vadd.f32 %v124, %v1817
    %v1819 = vpop.f32.mrb[0].mxu0
    %1820 = vdwg.mxu0
    %1821 = vrot.lane.b32.xlu0 %v267, 112
    %v1822 = vpop.permute.xlu0 %1821
    %1823 = vrot.lane.b32.xlu0 %v267, 80
    %v1824 = vpop.permute.xlu0 %1823
    %v1825 = vsel %vm273, %v1822, 0
    %v1827 = vsel %vm273, %v1824, 0
    %1829 = vmatprep.subr.mxu0 0.0
    %1830 = vmatpush1.xpose.msra.mxu0 %v1827
    %1831 = vmatprep.subr.mxu0 0.0
    %1832 = vmatpush1.xpose.msra.mxu0 0.0
    %1833 = vmatprep.subr.mxu0 0.0
    %1834 = vmatpush1.xpose.msra.mxu0 0.0
    %1835 = vmatprep.subr.mxu0 0.0
    %1836 = vmatpush1.xpose.msra.mxu0 0.0
    %1837 = vmatprep.subr.mxu0 0.0
    %1838 = vmatpush1.xpose.msra.mxu0 0.0
    %1839 = vmatprep.subr.mxu0 0.0
    %1840 = vmatpush1.xpose.msra.mxu0 0.0
    %1841 = vmatprep.subr.mxu0 0.0
    %1842 = vmatpush1.xpose.msra.mxu0 0.0
    %1843 = vmatprep.subr.mxu0 0.0
    %1844 = vmatpush1.xpose.msra.mxu0 0.0
    %1845 = vmatprep.subr.mxu0 0.0
    %1846 = vmatpush1.xpose.msra.mxu0 0.0
    %1847 = vmatprep.subr.mxu0 0.0
    %1848 = vmatpush1.xpose.msra.mxu0 0.0
    %1849 = vmatprep.subr.mxu0 0.0
    %1850 = vmatpush1.xpose.msra.mxu0 0.0
    %1851 = vmatprep.subr.mxu0 0.0
    %1852 = vmatpush1.xpose.msra.mxu0 0.0
    %1853 = vmatprep.subr.mxu0 0.0
    %1854 = vmatpush1.xpose.msra.mxu0 0.0
    %1855 = vmatprep.subr.mxu0 0.0
    %1856 = vmatpush1.xpose.msra.mxu0 0.0
    %1857 = vmatprep.subr.mxu0 0.0
    %1858 = vmatpush1.xpose.msra.mxu0 0.0
    %1859 = vmatprep.subr.mxu0 0.0
    %1860 = vmatpush1.xpose.msra.mxu0 0.0
    %1861 = vmatprep.subr.mxu0 0.0
    %1862 = vmatpush1.xpose.msra.mxu0 0.0
    %1863 = vmatprep.subr.mxu0 0.0
    %1864 = vmatpush1.xpose.msra.mxu0 0.0
    %1865 = vmatprep.subr.mxu0 0.0
    %1866 = vmatpush1.xpose.msra.mxu0 0.0
    %1867 = vmatprep.subr.mxu0 0.0
    %1868 = vmatpush1.xpose.msra.mxu0 0.0
    %1869 = vmatprep.subr.mxu0 0.0
    %1870 = vmatpush1.xpose.msra.mxu0 0.0
    %1871 = vmatprep.subr.mxu0 0.0
    %1872 = vmatpush1.xpose.msra.mxu0 0.0
    %1873 = vmatprep.subr.mxu0 0.0
    %1874 = vmatpush1.xpose.msra.mxu0 0.0
    %1875 = vmatprep.subr.mxu0 0.0
    %1876 = vmatpush1.xpose.msra.mxu0 0.0
    %1877 = vmatprep.subr.mxu0 0.0
    %1878 = vmatpush1.xpose.msra.mxu0 0.0
    %1879 = vmatprep.subr.mxu0 0.0
    %1880 = vmatpush1.xpose.msra.mxu0 0.0
    %1881 = vmatprep.subr.mxu0 0.0
    %1882 = vmatpush1.xpose.msra.mxu0 0.0
    %1883 = vmatprep.subr.mxu0 0.0
    %1884 = vmatpush1.xpose.msra.mxu0 0.0
    %1885 = vmatprep.subr.mxu0 0.0
    %1886 = vmatpush1.xpose.msra.mxu0 0.0
    %1887 = vmatprep.subr.mxu0 0.0
    %1888 = vmatpush1.xpose.msra.mxu0 0.0
    %1889 = vmatprep.subr.mxu0 0.0
    %1890 = vmatpush1.xpose.msra.mxu0 0.0
    %1891 = vmatprep.subr.mxu0 0.0
    %1892 = vmatpush1.xpose.msra.mxu0 0.0
    %1893 = vmatprep.mubr.f32.mxu0 0.0
    %1894 = vmatmul.mubr.f32.gmra.mrb[0].mxu0 %v1825
    %v1895 = vpop.f32.mrb[0].mxu0
    %v1896 = vadd.f32 %v125, %v1895
    %v1897 = vpop.f32.mrb[0].mxu0
    %1898 = vdwg.mxu0
    %v1899 = vsel %vm273, %v1662, -inf
    %1900 = vmax.xlane.f32.xlu0 %v1899
    %v1901 = vpop.xlane.xlu0 %1900
    %v1902 = vsel %vm273, %v1740, -inf
    %1903 = vmax.xlane.f32.xlu0 %v1902
    %v1904 = vpop.xlane.xlu0 %1903
    %v1905 = vsel %vm273, %v1818, -inf
    %1906 = vmax.xlane.f32.xlu0 %v1905
    %v1907 = vpop.xlane.xlu0 %1906
    %v1908 = vsel %vm273, %v1896, -inf
    %1909 = vmax.xlane.f32.xlu0 %v1908
    %v1910 = vpop.xlane.xlu0 %1909
    %v1911 = vsub.f32 %v1662, %v1901
    %v1912 = vsub.f32 %v1740, %v1904
    %v1913 = vsub.f32 %v1818, %v1907
    %v1914 = vsub.f32 %v1896, %v1910
    %v1915 = vmul.f32 %v1911, 1.442695
    %v1916 = vpow.pop %v1915
    %v1917 = vmul.f32 %v1912, 1.442695
    %v1918 = vpow.pop %v1917
    %v1919 = vmul.f32 %v1913, 1.442695
    %v1920 = vpow.pop %v1919
    %v1921 = vmul.f32 %v1914, 1.442695
    %v1922 = vpow.pop %v1921
    %v1923 = vsel %vm273, %v1916, 0.0
    %1924 = vadd.xlane.f32.xlu0 %v1923
    %v1925 = vpop.xlane.xlu0 %1924
    %v1926 = vsel %vm273, %v1918, 0.0
    %1927 = vadd.xlane.f32.xlu0 %v1926
    %v1928 = vpop.xlane.xlu0 %1927
    %v1929 = vsel %vm273, %v1920, 0.0
    %1930 = vadd.xlane.f32.xlu0 %v1929
    %v1931 = vpop.xlane.xlu0 %1930
    %v1932 = vsel %vm273, %v1922, 0.0
    %1933 = vadd.xlane.f32.xlu0 %v1932
    %v1934 = vpop.xlane.xlu0 %1933
    %v1935 = vrcp.pop %v1925
    %v1936 = vmul.f32 %v1916, %v1935
    %v1937 = vrcp.pop %v1928
    %v1938 = vmul.f32 %v1918, %v1937
    %v1939 = vrcp.pop %v1931
    %v1940 = vmul.f32 %v1920, %v1939
    %v1941 = vrcp.pop %v1934
    %v1942 = vmul.f32 %v1922, %v1941
    %1943 = vrot.lane.b32.xlu0 %v252, 48
    %v1944 = vpop.permute.xlu0 %1943
    %v1947 = vsel %vm273, %v1936, 0
    %1949 = vmatprep.subr.mxu0 0.0
    %1950 = vmatpush1.msra.mxu0 %v1944
    %1951 = vmatprep.subr.mxu0 0.0
    %1952 = vmatpush1.msra.mxu0 0.0
    %1953 = vmatprep.subr.mxu0 0.0
    %1954 = vmatpush1.msra.mxu0 0.0
    %1955 = vmatprep.subr.mxu0 0.0
    %1956 = vmatpush1.msra.mxu0 0.0
    %1957 = vmatprep.subr.mxu0 0.0
    %1958 = vmatpush1.msra.mxu0 0.0
    %1959 = vmatprep.subr.mxu0 0.0
    %1960 = vmatpush1.msra.mxu0 0.0
    %1961 = vmatprep.subr.mxu0 0.0
    %1962 = vmatpush1.msra.mxu0 0.0
    %1963 = vmatprep.subr.mxu0 0.0
    %1964 = vmatpush1.msra.mxu0 0.0
    %1965 = vmatprep.subr.mxu0 0.0
    %1966 = vmatpush1.msra.mxu0 0.0
    %1967 = vmatprep.subr.mxu0 0.0
    %1968 = vmatpush1.msra.mxu0 0.0
    %1969 = vmatprep.subr.mxu0 0.0
    %1970 = vmatpush1.msra.mxu0 0.0
    %1971 = vmatprep.subr.mxu0 0.0
    %1972 = vmatpush1.msra.mxu0 0.0
    %1973 = vmatprep.subr.mxu0 0.0
    %1974 = vmatpush1.msra.mxu0 0.0
    %1975 = vmatprep.subr.mxu0 0.0
    %1976 = vmatpush1.msra.mxu0 0.0
    %1977 = vmatprep.subr.mxu0 0.0
    %1978 = vmatpush1.msra.mxu0 0.0
    %1979 = vmatprep.subr.mxu0 0.0
    %1980 = vmatpush1.msra.mxu0 0.0
    %1981 = vmatprep.subr.mxu0 0.0
    %1982 = vmatpush1.msra.mxu0 0.0
    %1983 = vmatprep.subr.mxu0 0.0
    %1984 = vmatpush1.msra.mxu0 0.0
    %1985 = vmatprep.subr.mxu0 0.0
    %1986 = vmatpush1.msra.mxu0 0.0
    %1987 = vmatprep.subr.mxu0 0.0
    %1988 = vmatpush1.msra.mxu0 0.0
    %1989 = vmatprep.subr.mxu0 0.0
    %1990 = vmatpush1.msra.mxu0 0.0
    %1991 = vmatprep.subr.mxu0 0.0
    %1992 = vmatpush1.msra.mxu0 0.0
    %1993 = vmatprep.subr.mxu0 0.0
    %1994 = vmatpush1.msra.mxu0 0.0
    %1995 = vmatprep.subr.mxu0 0.0
    %1996 = vmatpush1.msra.mxu0 0.0
    %1997 = vmatprep.subr.mxu0 0.0
    %1998 = vmatpush1.msra.mxu0 0.0
    %1999 = vmatprep.subr.mxu0 0.0
    %2000 = vmatpush1.msra.mxu0 0.0
    %2001 = vmatprep.subr.mxu0 0.0
    %2002 = vmatpush1.msra.mxu0 0.0
    %2003 = vmatprep.subr.mxu0 0.0
    %2004 = vmatpush1.msra.mxu0 0.0
    %2005 = vmatprep.subr.mxu0 0.0
    %2006 = vmatpush1.msra.mxu0 0.0
    %2007 = vmatprep.subr.mxu0 0.0
    %2008 = vmatpush1.msra.mxu0 0.0
    %2009 = vmatprep.subr.mxu0 0.0
    %2010 = vmatpush1.msra.mxu0 0.0
    %2011 = vmatprep.subr.mxu0 0.0
    %2012 = vmatpush1.msra.mxu0 0.0
    %2013 = vmatprep.mubr.f32.mxu0 0.0
    %2014 = vmatmul.mubr.f32.gmra.mrb[0].mxu0 %v1947
    %v2015 = vpop.f32.mrb[0].mxu0
    %v2016 = vadd.f32 0.0, %v2015
    %v2017 = vpop.f32.mrb[0].mxu0
    %2018 = vdwg.mxu0
    %2019 = vrot.lane.b32.xlu0 %v257, 48
    %v2020 = vpop.permute.xlu0 %2019
    %v2023 = vsel %vm273, %v1938, 0
    %2025 = vmatprep.subr.mxu0 0.0
    %2026 = vmatpush1.msra.mxu0 %v2020
    %2027 = vmatprep.subr.mxu0 0.0
    %2028 = vmatpush1.msra.mxu0 0.0
    %2029 = vmatprep.subr.mxu0 0.0
    %2030 = vmatpush1.msra.mxu0 0.0
    %2031 = vmatprep.subr.mxu0 0.0
    %2032 = vmatpush1.msra.mxu0 0.0
    %2033 = vmatprep.subr.mxu0 0.0
    %2034 = vmatpush1.msra.mxu0 0.0
    %2035 = vmatprep.subr.mxu0 0.0
    %2036 = vmatpush1.msra.mxu0 0.0
    %2037 = vmatprep.subr.mxu0 0.0
    %2038 = vmatpush1.msra.mxu0 0.0
    %2039 = vmatprep.subr.mxu0 0.0
    %2040 = vmatpush1.msra.mxu0 0.0
    %2041 = vmatprep.subr.mxu0 0.0
    %2042 = vmatpush1.msra.mxu0 0.0
    %2043 = vmatprep.subr.mxu0 0.0
    %2044 = vmatpush1.msra.mxu0 0.0
    %2045 = vmatprep.subr.mxu0 0.0
    %2046 = vmatpush1.msra.mxu0 0.0
    %2047 = vmatprep.subr.mxu0 0.0
    %2048 = vmatpush1.msra.mxu0 0.0
    %2049 = vmatprep.subr.mxu0 0.0
    %2050 = vmatpush1.msra.mxu0 0.0
    %2051 = vmatprep.subr.mxu0 0.0
    %2052 = vmatpush1.msra.mxu0 0.0
    %2053 = vmatprep.subr.mxu0 0.0
    %2054 = vmatpush1.msra.mxu0 0.0
    %2055 = vmatprep.subr.mxu0 0.0
    %2056 = vmatpush1.msra.mxu0 0.0
    %2057 = vmatprep.subr.mxu0 0.0
    %2058 = vmatpush1.msra.mxu0 0.0
    %2059 = vmatprep.subr.mxu0 0.0
    %2060 = vmatpush1.msra.mxu0 0.0
    %2061 = vmatprep.subr.mxu0 0.0
    %2062 = vmatpush1.msra.mxu0 0.0
    %2063 = vmatprep.subr.mxu0 0.0
    %2064 = vmatpush1.msra.mxu0 0.0
    %2065 = vmatprep.subr.mxu0 0.0
    %2066 = vmatpush1.msra.mxu0 0.0
    %2067 = vmatprep.subr.mxu0 0.0
    %2068 = vmatpush1.msra.mxu0 0.0
    %2069 = vmatprep.subr.mxu0 0.0
    %2070 = vmatpush1.msra.mxu0 0.0
    %2071 = vmatprep.subr.mxu0 0.0
    %2072 = vmatpush1.msra.mxu0 0.0
    %2073 = vmatprep.subr.mxu0 0.0
    %2074 = vmatpush1.msra.mxu0 0.0
    %2075 = vmatprep.subr.mxu0 0.0
    %2076 = vmatpush1.msra.mxu0 0.0
    %2077 = vmatprep.subr.mxu0 0.0
    %2078 = vmatpush1.msra.mxu0 0.0
    %2079 = vmatprep.subr.mxu0 0.0
    %2080 = vmatpush1.msra.mxu0 0.0
    %2081 = vmatprep.subr.mxu0 0.0
    %2082 = vmatpush1.msra.mxu0 0.0
    %2083 = vmatprep.subr.mxu0 0.0
    %2084 = vmatpush1.msra.mxu0 0.0
    %2085 = vmatprep.subr.mxu0 0.0
    %2086 = vmatpush1.msra.mxu0 0.0
    %2087 = vmatprep.subr.mxu0 0.0
    %2088 = vmatpush1.msra.mxu0 0.0
    %2089 = vmatprep.mubr.f32.mxu0 0.0
    %2090 = vmatmul.mubr.f32.gmra.mrb[0].mxu0 %v2023
    %v2091 = vpop.f32.mrb[0].mxu0
    %v2092 = vadd.f32 0.0, %v2091
    %v2093 = vpop.f32.mrb[0].mxu0
    %2094 = vdwg.mxu0
    %2095 = vrot.lane.b32.xlu0 %v262, 48
    %v2096 = vpop.permute.xlu0 %2095
    %v2099 = vsel %vm273, %v1940, 0
    %2101 = vmatprep.subr.mxu0 0.0
    %2102 = vmatpush1.msra.mxu0 %v2096
    %2103 = vmatprep.subr.mxu0 0.0
    %2104 = vmatpush1.msra.mxu0 0.0
    %2105 = vmatprep.subr.mxu0 0.0
    %2106 = vmatpush1.msra.mxu0 0.0
    %2107 = vmatprep.subr.mxu0 0.0
    %2108 = vmatpush1.msra.mxu0 0.0
    %2109 = vmatprep.subr.mxu0 0.0
    %2110 = vmatpush1.msra.mxu0 0.0
    %2111 = vmatprep.subr.mxu0 0.0
    %2112 = vmatpush1.msra.mxu0 0.0
    %2113 = vmatprep.subr.mxu0 0.0
    %2114 = vmatpush1.msra.mxu0 0.0
    %2115 = vmatprep.subr.mxu0 0.0
    %2116 = vmatpush1.msra.mxu0 0.0
    %2117 = vmatprep.subr.mxu0 0.0
    %2118 = vmatpush1.msra.mxu0 0.0
    %2119 = vmatprep.subr.mxu0 0.0
    %2120 = vmatpush1.msra.mxu0 0.0
    %2121 = vmatprep.subr.mxu0 0.0
    %2122 = vmatpush1.msra.mxu0 0.0
    %2123 = vmatprep.subr.mxu0 0.0
    %2124 = vmatpush1.msra.mxu0 0.0
    %2125 = vmatprep.subr.mxu0 0.0
    %2126 = vmatpush1.msra.mxu0 0.0
    %2127 = vmatprep.subr.mxu0 0.0
    %2128 = vmatpush1.msra.mxu0 0.0
    %2129 = vmatprep.subr.mxu0 0.0
    %2130 = vmatpush1.msra.mxu0 0.0
    %2131 = vmatprep.subr.mxu0 0.0
    %2132 = vmatpush1.msra.mxu0 0.0
    %2133 = vmatprep.subr.mxu0 0.0
    %2134 = vmatpush1.msra.mxu0 0.0
    %2135 = vmatprep.subr.mxu0 0.0
    %2136 = vmatpush1.msra.mxu0 0.0
    %2137 = vmatprep.subr.mxu0 0.0
    %2138 = vmatpush1.msra.mxu0 0.0
    %2139 = vmatprep.subr.mxu0 0.0
    %2140 = vmatpush1.msra.mxu0 0.0
    %2141 = vmatprep.subr.mxu0 0.0
    %2142 = vmatpush1.msra.mxu0 0.0
    %2143 = vmatprep.subr.mxu0 0.0
    %2144 = vmatpush1.msra.mxu0 0.0
    %2145 = vmatprep.subr.mxu0 0.0
    %2146 = vmatpush1.msra.mxu0 0.0
    %2147 = vmatprep.subr.mxu0 0.0
    %2148 = vmatpush1.msra.mxu0 0.0
    %2149 = vmatprep.subr.mxu0 0.0
    %2150 = vmatpush1.msra.mxu0 0.0
    %2151 = vmatprep.subr.mxu0 0.0
    %2152 = vmatpush1.msra.mxu0 0.0
    %2153 = vmatprep.subr.mxu0 0.0
    %2154 = vmatpush1.msra.mxu0 0.0
    %2155 = vmatprep.subr.mxu0 0.0
    %2156 = vmatpush1.msra.mxu0 0.0
    %2157 = vmatprep.subr.mxu0 0.0
    %2158 = vmatpush1.msra.mxu0 0.0
    %2159 = vmatprep.subr.mxu0 0.0
    %2160 = vmatpush1.msra.mxu0 0.0
    %2161 = vmatprep.subr.mxu0 0.0
    %2162 = vmatpush1.msra.mxu0 0.0
    %2163 = vmatprep.subr.mxu0 0.0
    %2164 = vmatpush1.msra.mxu0 0.0
    %2165 = vmatprep.mubr.f32.mxu0 0.0
    %2166 = vmatmul.mubr.f32.gmra.mrb[0].mxu0 %v2099
    %v2167 = vpop.f32.mrb[0].mxu0
    %v2168 = vadd.f32 0.0, %v2167
    %v2169 = vpop.f32.mrb[0].mxu0
    %2170 = vdwg.mxu0
    %2171 = vrot.lane.b32.xlu0 %v267, 48
    %v2172 = vpop.permute.xlu0 %2171
    %v2175 = vsel %vm273, %v1942, 0
    %2177 = vmatprep.subr.mxu0 0.0
    %2178 = vmatpush1.msra.mxu0 %v2172
    %2179 = vmatprep.subr.mxu0 0.0
    %2180 = vmatpush1.msra.mxu0 0.0
    %2181 = vmatprep.subr.mxu0 0.0
    %2182 = vmatpush1.msra.mxu0 0.0
    %2183 = vmatprep.subr.mxu0 0.0
    %2184 = vmatpush1.msra.mxu0 0.0
    %2185 = vmatprep.subr.mxu0 0.0
    %2186 = vmatpush1.msra.mxu0 0.0
    %2187 = vmatprep.subr.mxu0 0.0
    %2188 = vmatpush1.msra.mxu0 0.0
    %2189 = vmatprep.subr.mxu0 0.0
    %2190 = vmatpush1.msra.mxu0 0.0
    %2191 = vmatprep.subr.mxu0 0.0
    %2192 = vmatpush1.msra.mxu0 0.0
    %2193 = vmatprep.subr.mxu0 0.0
    %2194 = vmatpush1.msra.mxu0 0.0
    %2195 = vmatprep.subr.mxu0 0.0
    %2196 = vmatpush1.msra.mxu0 0.0
    %2197 = vmatprep.subr.mxu0 0.0
    %2198 = vmatpush1.msra.mxu0 0.0
    %2199 = vmatprep.subr.mxu0 0.0
    %2200 = vmatpush1.msra.mxu0 0.0
    %2201 = vmatprep.subr.mxu0 0.0
    %2202 = vmatpush1.msra.mxu0 0.0
    %2203 = vmatprep.subr.mxu0 0.0
    %2204 = vmatpush1.msra.mxu0 0.0
    %2205 = vmatprep.subr.mxu0 0.0
    %2206 = vmatpush1.msra.mxu0 0.0
    %2207 = vmatprep.subr.mxu0 0.0
    %2208 = vmatpush1.msra.mxu0 0.0
    %2209 = vmatprep.subr.mxu0 0.0
    %2210 = vmatpush1.msra.mxu0 0.0
    %2211 = vmatprep.subr.mxu0 0.0
    %2212 = vmatpush1.msra.mxu0 0.0
    %2213 = vmatprep.subr.mxu0 0.0
    %2214 = vmatpush1.msra.mxu0 0.0
    %2215 = vmatprep.subr.mxu0 0.0
    %2216 = vmatpush1.msra.mxu0 0.0
    %2217 = vmatprep.subr.mxu0 0.0
    %2218 = vmatpush1.msra.mxu0 0.0
    %2219 = vmatprep.subr.mxu0 0.0
    %2220 = vmatpush1.msra.mxu0 0.0
    %2221 = vmatprep.subr.mxu0 0.0
    %2222 = vmatpush1.msra.mxu0 0.0
    %2223 = vmatprep.subr.mxu0 0.0
    %2224 = vmatpush1.msra.mxu0 0.0
    %2225 = vmatprep.subr.mxu0 0.0
    %2226 = vmatpush1.msra.mxu0 0.0
    %2227 = vmatprep.subr.mxu0 0.0
    %2228 = vmatpush1.msra.mxu0 0.0
    %2229 = vmatprep.subr.mxu0 0.0
    %2230 = vmatpush1.msra.mxu0 0.0
    %2231 = vmatprep.subr.mxu0 0.0
    %2232 = vmatpush1.msra.mxu0 0.0
    %2233 = vmatprep.subr.mxu0 0.0
    %2234 = vmatpush1.msra.mxu0 0.0
    %2235 = vmatprep.subr.mxu0 0.0
    %2236 = vmatpush1.msra.mxu0 0.0
    %2237 = vmatprep.subr.mxu0 0.0
    %2238 = vmatpush1.msra.mxu0 0.0
    %2239 = vmatprep.subr.mxu0 0.0
    %2240 = vmatpush1.msra.mxu0 0.0
    %2241 = vmatprep.mubr.f32.mxu0 0.0
    %2242 = vmatmul.mubr.f32.gmra.mrb[0].mxu0 %v2175
    %v2243 = vpop.f32.mrb[0].mxu0
    %v2244 = vadd.f32 0.0, %v2243
    %v2245 = vpop.f32.mrb[0].mxu0
    %2246 = vdwg.mxu0
    %2247 = vrot.lane.b32.xlu0 %v252, 104
    %v2248 = vpop.permute.xlu0 %2247
    %2249 = vrot.lane.b32.xlu0 %v252, 72
    %v2250 = vpop.permute.xlu0 %2249
    %v2251 = vsel %vm273, %v2248, 0
    %v2253 = vsel %vm273, %v2250, 0
    %2255 = vmatprep.subr.mxu0 0.0
    %2256 = vmatpush1.xpose.msra.mxu0 %v2253
    %2257 = vmatprep.subr.mxu0 0.0
    %2258 = vmatpush1.xpose.msra.mxu0 0.0
    %2259 = vmatprep.subr.mxu0 0.0
    %2260 = vmatpush1.xpose.msra.mxu0 0.0
    %2261 = vmatprep.subr.mxu0 0.0
    %2262 = vmatpush1.xpose.msra.mxu0 0.0
    %2263 = vmatprep.subr.mxu0 0.0
    %2264 = vmatpush1.xpose.msra.mxu0 0.0
    %2265 = vmatprep.subr.mxu0 0.0
    %2266 = vmatpush1.xpose.msra.mxu0 0.0
    %2267 = vmatprep.subr.mxu0 0.0
    %2268 = vmatpush1.xpose.msra.mxu0 0.0
    %2269 = vmatprep.subr.mxu0 0.0
    %2270 = vmatpush1.xpose.msra.mxu0 0.0
    %2271 = vmatprep.subr.mxu0 0.0
    %2272 = vmatpush1.xpose.msra.mxu0 0.0
    %2273 = vmatprep.subr.mxu0 0.0
    %2274 = vmatpush1.xpose.msra.mxu0 0.0
    %2275 = vmatprep.subr.mxu0 0.0
    %2276 = vmatpush1.xpose.msra.mxu0 0.0
    %2277 = vmatprep.subr.mxu0 0.0
    %2278 = vmatpush1.xpose.msra.mxu0 0.0
    %2279 = vmatprep.subr.mxu0 0.0
    %2280 = vmatpush1.xpose.msra.mxu0 0.0
    %2281 = vmatprep.subr.mxu0 0.0
    %2282 = vmatpush1.xpose.msra.mxu0 0.0
    %2283 = vmatprep.subr.mxu0 0.0
    %2284 = vmatpush1.xpose.msra.mxu0 0.0
    %2285 = vmatprep.subr.mxu0 0.0
    %2286 = vmatpush1.xpose.msra.mxu0 0.0
    %2287 = vmatprep.subr.mxu0 0.0
    %2288 = vmatpush1.xpose.msra.mxu0 0.0
    %2289 = vmatprep.subr.mxu0 0.0
    %2290 = vmatpush1.xpose.msra.mxu0 0.0
    %2291 = vmatprep.subr.mxu0 0.0
    %2292 = vmatpush1.xpose.msra.mxu0 0.0
    %2293 = vmatprep.subr.mxu0 0.0
    %2294 = vmatpush1.xpose.msra.mxu0 0.0
    %2295 = vmatprep.subr.mxu0 0.0
    %2296 = vmatpush1.xpose.msra.mxu0 0.0
    %2297 = vmatprep.subr.mxu0 0.0
    %2298 = vmatpush1.xpose.msra.mxu0 0.0
    %2299 = vmatprep.subr.mxu0 0.0
    %2300 = vmatpush1.xpose.msra.mxu0 0.0
    %2301 = vmatprep.subr.mxu0 0.0
    %2302 = vmatpush1.xpose.msra.mxu0 0.0
    %2303 = vmatprep.subr.mxu0 0.0
    %2304 = vmatpush1.xpose.msra.mxu0 0.0
    %2305 = vmatprep.subr.mxu0 0.0
    %2306 = vmatpush1.xpose.msra.mxu0 0.0
    %2307 = vmatprep.subr.mxu0 0.0
    %2308 = vmatpush1.xpose.msra.mxu0 0.0
    %2309 = vmatprep.subr.mxu0 0.0
    %2310 = vmatpush1.xpose.msra.mxu0 0.0
    %2311 = vmatprep.subr.mxu0 0.0
    %2312 = vmatpush1.xpose.msra.mxu0 0.0
    %2313 = vmatprep.subr.mxu0 0.0
    %2314 = vmatpush1.xpose.msra.mxu0 0.0
    %2315 = vmatprep.subr.mxu0 0.0
    %2316 = vmatpush1.xpose.msra.mxu0 0.0
    %2317 = vmatprep.subr.mxu0 0.0
    %2318 = vmatpush1.xpose.msra.mxu0 0.0
    %2319 = vmatprep.mubr.f32.mxu0 0.0
    %2320 = vmatmul.mubr.f32.gmra.mrb[0].mxu0 %v2251
    %v2321 = vpop.f32.mrb[0].mxu0
    %v2322 = vadd.f32 %v122, %v2321
    %v2323 = vpop.f32.mrb[0].mxu0
    %2324 = vdwg.mxu0
    %2325 = vrot.lane.b32.xlu0 %v257, 104
    %v2326 = vpop.permute.xlu0 %2325
    %2327 = vrot.lane.b32.xlu0 %v257, 72
    %v2328 = vpop.permute.xlu0 %2327
    %v2329 = vsel %vm273, %v2326, 0
    %v2331 = vsel %vm273, %v2328, 0
    %2333 = vmatprep.subr.mxu0 0.0
    %2334 = vmatpush1.xpose.msra.mxu0 %v2331
    %2335 = vmatprep.subr.mxu0 0.0
    %2336 = vmatpush1.xpose.msra.mxu0 0.0
    %2337 = vmatprep.subr.mxu0 0.0
    %2338 = vmatpush1.xpose.msra.mxu0 0.0
    %2339 = vmatprep.subr.mxu0 0.0
    %2340 = vmatpush1.xpose.msra.mxu0 0.0
    %2341 = vmatprep.subr.mxu0 0.0
    %2342 = vmatpush1.xpose.msra.mxu0 0.0
    %2343 = vmatprep.subr.mxu0 0.0
    %2344 = vmatpush1.xpose.msra.mxu0 0.0
    %2345 = vmatprep.subr.mxu0 0.0
    %2346 = vmatpush1.xpose.msra.mxu0 0.0
    %2347 = vmatprep.subr.mxu0 0.0
    %2348 = vmatpush1.xpose.msra.mxu0 0.0
    %2349 = vmatprep.subr.mxu0 0.0
    %2350 = vmatpush1.xpose.msra.mxu0 0.0
    %2351 = vmatprep.subr.mxu0 0.0
    %2352 = vmatpush1.xpose.msra.mxu0 0.0
    %2353 = vmatprep.subr.mxu0 0.0
    %2354 = vmatpush1.xpose.msra.mxu0 0.0
    %2355 = vmatprep.subr.mxu0 0.0
    %2356 = vmatpush1.xpose.msra.mxu0 0.0
    %2357 = vmatprep.subr.mxu0 0.0
    %2358 = vmatpush1.xpose.msra.mxu0 0.0
    %2359 = vmatprep.subr.mxu0 0.0
    %2360 = vmatpush1.xpose.msra.mxu0 0.0
    %2361 = vmatprep.subr.mxu0 0.0
    %2362 = vmatpush1.xpose.msra.mxu0 0.0
    %2363 = vmatprep.subr.mxu0 0.0
    %2364 = vmatpush1.xpose.msra.mxu0 0.0
    %2365 = vmatprep.subr.mxu0 0.0
    %2366 = vmatpush1.xpose.msra.mxu0 0.0
    %2367 = vmatprep.subr.mxu0 0.0
    %2368 = vmatpush1.xpose.msra.mxu0 0.0
    %2369 = vmatprep.subr.mxu0 0.0
    %2370 = vmatpush1.xpose.msra.mxu0 0.0
    %2371 = vmatprep.subr.mxu0 0.0
    %2372 = vmatpush1.xpose.msra.mxu0 0.0
    %2373 = vmatprep.subr.mxu0 0.0
    %2374 = vmatpush1.xpose.msra.mxu0 0.0
    %2375 = vmatprep.subr.mxu0 0.0
    %2376 = vmatpush1.xpose.msra.mxu0 0.0
    %2377 = vmatprep.subr.mxu0 0.0
    %2378 = vmatpush1.xpose.msra.mxu0 0.0
    %2379 = vmatprep.subr.mxu0 0.0
    %2380 = vmatpush1.xpose.msra.mxu0 0.0
    %2381 = vmatprep.subr.mxu0 0.0
    %2382 = vmatpush1.xpose.msra.mxu0 0.0
    %2383 = vmatprep.subr.mxu0 0.0
    %2384 = vmatpush1.xpose.msra.mxu0 0.0
    %2385 = vmatprep.subr.mxu0 0.0
    %2386 = vmatpush1.xpose.msra.mxu0 0.0
    %2387 = vmatprep.subr.mxu0 0.0
    %2388 = vmatpush1.xpose.msra.mxu0 0.0
    %2389 = vmatprep.subr.mxu0 0.0
    %2390 = vmatpush1.xpose.msra.mxu0 0.0
    %2391 = vmatprep.subr.mxu0 0.0
    %2392 = vmatpush1.xpose.msra.mxu0 0.0
    %2393 = vmatprep.subr.mxu0 0.0
    %2394 = vmatpush1.xpose.msra.mxu0 0.0
    %2395 = vmatprep.subr.mxu0 0.0
    %2396 = vmatpush1.xpose.msra.mxu0 0.0
    %2397 = vmatprep.mubr.f32.mxu0 0.0
    %2398 = vmatmul.mubr.f32.gmra.mrb[0].mxu0 %v2329
    %v2399 = vpop.f32.mrb[0].mxu0
    %v2400 = vadd.f32 %v123, %v2399
    %v2401 = vpop.f32.mrb[0].mxu0
    %2402 = vdwg.mxu0
    %2403 = vrot.lane.b32.xlu0 %v262, 104
    %v2404 = vpop.permute.xlu0 %2403
    %2405 = vrot.lane.b32.xlu0 %v262, 72
    %v2406 = vpop.permute.xlu0 %2405
    %v2407 = vsel %vm273, %v2404, 0
    %v2409 = vsel %vm273, %v2406, 0
    %2411 = vmatprep.subr.mxu0 0.0
    %2412 = vmatpush1.xpose.msra.mxu0 %v2409
    %2413 = vmatprep.subr.mxu0 0.0
    %2414 = vmatpush1.xpose.msra.mxu0 0.0
    %2415 = vmatprep.subr.mxu0 0.0
    %2416 = vmatpush1.xpose.msra.mxu0 0.0
    %2417 = vmatprep.subr.mxu0 0.0
    %2418 = vmatpush1.xpose.msra.mxu0 0.0
    %2419 = vmatprep.subr.mxu0 0.0
    %2420 = vmatpush1.xpose.msra.mxu0 0.0
    %2421 = vmatprep.subr.mxu0 0.0
    %2422 = vmatpush1.xpose.msra.mxu0 0.0
    %2423 = vmatprep.subr.mxu0 0.0
    %2424 = vmatpush1.xpose.msra.mxu0 0.0
    %2425 = vmatprep.subr.mxu0 0.0
    %2426 = vmatpush1.xpose.msra.mxu0 0.0
    %2427 = vmatprep.subr.mxu0 0.0
    %2428 = vmatpush1.xpose.msra.mxu0 0.0
    %2429 = vmatprep.subr.mxu0 0.0
    %2430 = vmatpush1.xpose.msra.mxu0 0.0
    %2431 = vmatprep.subr.mxu0 0.0
    %2432 = vmatpush1.xpose.msra.mxu0 0.0
    %2433 = vmatprep.subr.mxu0 0.0
    %2434 = vmatpush1.xpose.msra.mxu0 0.0
    %2435 = vmatprep.subr.mxu0 0.0
    %2436 = vmatpush1.xpose.msra.mxu0 0.0
    %2437 = vmatprep.subr.mxu0 0.0
    %2438 = vmatpush1.xpose.msra.mxu0 0.0
    %2439 = vmatprep.subr.mxu0 0.0
    %2440 = vmatpush1.xpose.msra.mxu0 0.0
    %2441 = vmatprep.subr.mxu0 0.0
    %2442 = vmatpush1.xpose.msra.mxu0 0.0
    %2443 = vmatprep.subr.mxu0 0.0
    %2444 = vmatpush1.xpose.msra.mxu0 0.0
    %2445 = vmatprep.subr.mxu0 0.0
    %2446 = vmatpush1.xpose.msra.mxu0 0.0
    %2447 = vmatprep.subr.mxu0 0.0
    %2448 = vmatpush1.xpose.msra.mxu0 0.0
    %2449 = vmatprep.subr.mxu0 0.0
    %2450 = vmatpush1.xpose.msra.mxu0 0.0
    %2451 = vmatprep.subr.mxu0 0.0
    %2452 = vmatpush1.xpose.msra.mxu0 0.0
    %2453 = vmatprep.subr.mxu0 0.0
    %2454 = vmatpush1.xpose.msra.mxu0 0.0
    %2455 = vmatprep.subr.mxu0 0.0
    %2456 = vmatpush1.xpose.msra.mxu0 0.0
    %2457 = vmatprep.subr.mxu0 0.0
    %2458 = vmatpush1.xpose.msra.mxu0 0.0
    %2459 = vmatprep.subr.mxu0 0.0
    %2460 = vmatpush1.xpose.msra.mxu0 0.0
    %2461 = vmatprep.subr.mxu0 0.0
    %2462 = vmatpush1.xpose.msra.mxu0 0.0
    %2463 = vmatprep.subr.mxu0 0.0
    %2464 = vmatpush1.xpose.msra.mxu0 0.0
    %2465 = vmatprep.subr.mxu0 0.0
    %2466 = vmatpush1.xpose.msra.mxu0 0.0
    %2467 = vmatprep.subr.mxu0 0.0
    %2468 = vmatpush1.xpose.msra.mxu0 0.0
    %2469 = vmatprep.subr.mxu0 0.0
    %2470 = vmatpush1.xpose.msra.mxu0 0.0
    %2471 = vmatprep.subr.mxu0 0.0
    %2472 = vmatpush1.xpose.msra.mxu0 0.0
    %2473 = vmatprep.subr.mxu0 0.0
    %2474 = vmatpush1.xpose.msra.mxu0 0.0
    %2475 = vmatprep.mubr.f32.mxu0 0.0
    %2476 = vmatmul.mubr.f32.gmra.mrb[0].mxu0 %v2407
    %v2477 = vpop.f32.mrb[0].mxu0
    %v2478 = vadd.f32 %v124, %v2477
    %v2479 = vpop.f32.mrb[0].mxu0
    %2480 = vdwg.mxu0
    %2481 = vrot.lane.b32.xlu0 %v267, 104
    %v2482 = vpop.permute.xlu0 %2481
    %2483 = vrot.lane.b32.xlu0 %v267, 72
    %v2484 = vpop.permute.xlu0 %2483
    %v2485 = vsel %vm273, %v2482, 0
    %v2487 = vsel %vm273, %v2484, 0
    %2489 = vmatprep.subr.mxu0 0.0
    %2490 = vmatpush1.xpose.msra.mxu0 %v2487
    %2491 = vmatprep.subr.mxu0 0.0
    %2492 = vmatpush1.xpose.msra.mxu0 0.0
    %2493 = vmatprep.subr.mxu0 0.0
    %2494 = vmatpush1.xpose.msra.mxu0 0.0
    %2495 = vmatprep.subr.mxu0 0.0
    %2496 = vmatpush1.xpose.msra.mxu0 0.0
    %2497 = vmatprep.subr.mxu0 0.0
    %2498 = vmatpush1.xpose.msra.mxu0 0.0
    %2499 = vmatprep.subr.mxu0 0.0
    %2500 = vmatpush1.xpose.msra.mxu0 0.0
    %2501 = vmatprep.subr.mxu0 0.0
    %2502 = vmatpush1.xpose.msra.mxu0 0.0
    %2503 = vmatprep.subr.mxu0 0.0
    %2504 = vmatpush1.xpose.msra.mxu0 0.0
    %2505 = vmatprep.subr.mxu0 0.0
    %2506 = vmatpush1.xpose.msra.mxu0 0.0
    %2507 = vmatprep.subr.mxu0 0.0
    %2508 = vmatpush1.xpose.msra.mxu0 0.0
    %2509 = vmatprep.subr.mxu0 0.0
    %2510 = vmatpush1.xpose.msra.mxu0 0.0
    %2511 = vmatprep.subr.mxu0 0.0
    %2512 = vmatpush1.xpose.msra.mxu0 0.0
    %2513 = vmatprep.subr.mxu0 0.0
    %2514 = vmatpush1.xpose.msra.mxu0 0.0
    %2515 = vmatprep.subr.mxu0 0.0
    %2516 = vmatpush1.xpose.msra.mxu0 0.0
    %2517 = vmatprep.subr.mxu0 0.0
    %2518 = vmatpush1.xpose.msra.mxu0 0.0
    %2519 = vmatprep.subr.mxu0 0.0
    %2520 = vmatpush1.xpose.msra.mxu0 0.0
    %2521 = vmatprep.subr.mxu0 0.0
    %2522 = vmatpush1.xpose.msra.mxu0 0.0
    %2523 = vmatprep.subr.mxu0 0.0
    %2524 = vmatpush1.xpose.msra.mxu0 0.0
    %2525 = vmatprep.subr.mxu0 0.0
    %2526 = vmatpush1.xpose.msra.mxu0 0.0
    %2527 = vmatprep.subr.mxu0 0.0
    %2528 = vmatpush1.xpose.msra.mxu0 0.0
    %2529 = vmatprep.subr.mxu0 0.0
    %2530 = vmatpush1.xpose.msra.mxu0 0.0
    %2531 = vmatprep.subr.mxu0 0.0
    %2532 = vmatpush1.xpose.msra.mxu0 0.0
    %2533 = vmatprep.subr.mxu0 0.0
    %2534 = vmatpush1.xpose.msra.mxu0 0.0
    %2535 = vmatprep.subr.mxu0 0.0
    %2536 = vmatpush1.xpose.msra.mxu0 0.0
    %2537 = vmatprep.subr.mxu0 0.0
    %2538 = vmatpush1.xpose.msra.mxu0 0.0
    %2539 = vmatprep.subr.mxu0 0.0
    %2540 = vmatpush1.xpose.msra.mxu0 0.0
    %2541 = vmatprep.subr.mxu0 0.0
    %2542 = vmatpush1.xpose.msra.mxu0 0.0
    %2543 = vmatprep.subr.mxu0 0.0
    %2544 = vmatpush1.xpose.msra.mxu0 0.0
    %2545 = vmatprep.subr.mxu0 0.0
    %2546 = vmatpush1.xpose.msra.mxu0 0.0
    %2547 = vmatprep.subr.mxu0 0.0
    %2548 = vmatpush1.xpose.msra.mxu0 0.0
    %2549 = vmatprep.subr.mxu0 0.0
    %2550 = vmatpush1.xpose.msra.mxu0 0.0
    %2551 = vmatprep.subr.mxu0 0.0
    %2552 = vmatpush1.xpose.msra.mxu0 0.0
    %2553 = vmatprep.mubr.f32.mxu0 0.0
    %2554 = vmatmul.mubr.f32.gmra.mrb[0].mxu0 %v2485
    %v2555 = vpop.f32.mrb[0].mxu0
    %v2556 = vadd.f32 %v125, %v2555
    %v2557 = vpop.f32.mrb[0].mxu0
    %2558 = vdwg.mxu0
    %v2559 = vsel %vm273, %v2322, -inf
    %2560 = vmax.xlane.f32.xlu0 %v2559
    %v2561 = vpop.xlane.xlu0 %2560
    %v2562 = vsel %vm273, %v2400, -inf
    %2563 = vmax.xlane.f32.xlu0 %v2562
    %v2564 = vpop.xlane.xlu0 %2563
    %v2565 = vsel %vm273, %v2478, -inf
    %2566 = vmax.xlane.f32.xlu0 %v2565
    %v2567 = vpop.xlane.xlu0 %2566
    %v2568 = vsel %vm273, %v2556, -inf
    %2569 = vmax.xlane.f32.xlu0 %v2568
    %v2570 = vpop.xlane.xlu0 %2569
    %v2571 = vsub.f32 %v2322, %v2561
    %v2572 = vsub.f32 %v2400, %v2564
    %v2573 = vsub.f32 %v2478, %v2567
    %v2574 = vsub.f32 %v2556, %v2570
    %v2575 = vmul.f32 %v2571, 1.442695
    %v2576 = vpow.pop %v2575
    %v2577 = vmul.f32 %v2572, 1.442695
    %v2578 = vpow.pop %v2577
    %v2579 = vmul.f32 %v2573, 1.442695
    %v2580 = vpow.pop %v2579
    %v2581 = vmul.f32 %v2574, 1.442695
    %v2582 = vpow.pop %v2581
    %v2583 = vsel %vm273, %v2576, 0.0
    %2584 = vadd.xlane.f32.xlu0 %v2583
    %v2585 = vpop.xlane.xlu0 %2584
    %v2586 = vsel %vm273, %v2578, 0.0
    %2587 = vadd.xlane.f32.xlu0 %v2586
    %v2588 = vpop.xlane.xlu0 %2587
    %v2589 = vsel %vm273, %v2580, 0.0
    %2590 = vadd.xlane.f32.xlu0 %v2589
    %v2591 = vpop.xlane.xlu0 %2590
    %v2592 = vsel %vm273, %v2582, 0.0
    %2593 = vadd.xlane.f32.xlu0 %v2592
    %v2594 = vpop.xlane.xlu0 %2593
    %v2595 = vrcp.pop %v2585
    %v2596 = vmul.f32 %v2576, %v2595
    %v2597 = vrcp.pop %v2588
    %v2598 = vmul.f32 %v2578, %v2597
    %v2599 = vrcp.pop %v2591
    %v2600 = vmul.f32 %v2580, %v2599
    %v2601 = vrcp.pop %v2594
    %v2602 = vmul.f32 %v2582, %v2601
    %2603 = vrot.lane.b32.xlu0 %v252, 40
    %v2604 = vpop.permute.xlu0 %2603
    %v2607 = vsel %vm273, %v2596, 0
    %2609 = vmatprep.subr.mxu0 0.0
    %2610 = vmatpush1.msra.mxu0 %v2604
    %2611 = vmatprep.subr.mxu0 0.0
    %2612 = vmatpush1.msra.mxu0 0.0
    %2613 = vmatprep.subr.mxu0 0.0
    %2614 = vmatpush1.msra.mxu0 0.0
    %2615 = vmatprep.subr.mxu0 0.0
    %2616 = vmatpush1.msra.mxu0 0.0
    %2617 = vmatprep.subr.mxu0 0.0
    %2618 = vmatpush1.msra.mxu0 0.0
    %2619 = vmatprep.subr.mxu0 0.0
    %2620 = vmatpush1.msra.mxu0 0.0
    %2621 = vmatprep.subr.mxu0 0.0
    %2622 = vmatpush1.msra.mxu0 0.0
    %2623 = vmatprep.subr.mxu0 0.0
    %2624 = vmatpush1.msra.mxu0 0.0
    %2625 = vmatprep.subr.mxu0 0.0
    %2626 = vmatpush1.msra.mxu0 0.0
    %2627 = vmatprep.subr.mxu0 0.0
    %2628 = vmatpush1.msra.mxu0 0.0
    %2629 = vmatprep.subr.mxu0 0.0
    %2630 = vmatpush1.msra.mxu0 0.0
    %2631 = vmatprep.subr.mxu0 0.0
    %2632 = vmatpush1.msra.mxu0 0.0
    %2633 = vmatprep.subr.mxu0 0.0
    %2634 = vmatpush1.msra.mxu0 0.0
    %2635 = vmatprep.subr.mxu0 0.0
    %2636 = vmatpush1.msra.mxu0 0.0
    %2637 = vmatprep.subr.mxu0 0.0
    %2638 = vmatpush1.msra.mxu0 0.0
    %2639 = vmatprep.subr.mxu0 0.0
    %2640 = vmatpush1.msra.mxu0 0.0
    %2641 = vmatprep.subr.mxu0 0.0
    %2642 = vmatpush1.msra.mxu0 0.0
    %2643 = vmatprep.subr.mxu0 0.0
    %2644 = vmatpush1.msra.mxu0 0.0
    %2645 = vmatprep.subr.mxu0 0.0
    %2646 = vmatpush1.msra.mxu0 0.0
    %2647 = vmatprep.subr.mxu0 0.0
    %2648 = vmatpush1.msra.mxu0 0.0
    %2649 = vmatprep.subr.mxu0 0.0
    %2650 = vmatpush1.msra.mxu0 0.0
    %2651 = vmatprep.subr.mxu0 0.0
    %2652 = vmatpush1.msra.mxu0 0.0
    %2653 = vmatprep.subr.mxu0 0.0
    %2654 = vmatpush1.msra.mxu0 0.0
    %2655 = vmatprep.subr.mxu0 0.0
    %2656 = vmatpush1.msra.mxu0 0.0
    %2657 = vmatprep.subr.mxu0 0.0
    %2658 = vmatpush1.msra.mxu0 0.0
    %2659 = vmatprep.subr.mxu0 0.0
    %2660 = vmatpush1.msra.mxu0 0.0
    %2661 = vmatprep.subr.mxu0 0.0
    %2662 = vmatpush1.msra.mxu0 0.0
    %2663 = vmatprep.subr.mxu0 0.0
    %2664 = vmatpush1.msra.mxu0 0.0
    %2665 = vmatprep.subr.mxu0 0.0
    %2666 = vmatpush1.msra.mxu0 0.0
    %2667 = vmatprep.subr.mxu0 0.0
    %2668 = vmatpush1.msra.mxu0 0.0
    %2669 = vmatprep.subr.mxu0 0.0
    %2670 = vmatpush1.msra.mxu0 0.0
    %2671 = vmatprep.subr.mxu0 0.0
    %2672 = vmatpush1.msra.mxu0 0.0
    %2673 = vmatprep.mubr.f32.mxu0 0.0
    %2674 = vmatmul.mubr.f32.gmra.mrb[0].mxu0 %v2607
    %v2675 = vpop.f32.mrb[0].mxu0
    %v2676 = vadd.f32 0.0, %v2675
    %v2677 = vpop.f32.mrb[0].mxu0
    %2678 = vdwg.mxu0
    %2679 = vrot.lane.b32.xlu0 %v257, 40
    %v2680 = vpop.permute.xlu0 %2679
    %v2683 = vsel %vm273, %v2598, 0
    %2685 = vmatprep.subr.mxu0 0.0
    %2686 = vmatpush1.msra.mxu0 %v2680
    %2687 = vmatprep.subr.mxu0 0.0
    %2688 = vmatpush1.msra.mxu0 0.0
    %2689 = vmatprep.subr.mxu0 0.0
    %2690 = vmatpush1.msra.mxu0 0.0
    %2691 = vmatprep.subr.mxu0 0.0
    %2692 = vmatpush1.msra.mxu0 0.0
    %2693 = vmatprep.subr.mxu0 0.0
    %2694 = vmatpush1.msra.mxu0 0.0
    %2695 = vmatprep.subr.mxu0 0.0
    %2696 = vmatpush1.msra.mxu0 0.0
    %2697 = vmatprep.subr.mxu0 0.0
    %2698 = vmatpush1.msra.mxu0 0.0
    %2699 = vmatprep.subr.mxu0 0.0
    %2700 = vmatpush1.msra.mxu0 0.0
    %2701 = vmatprep.subr.mxu0 0.0
    %2702 = vmatpush1.msra.mxu0 0.0
    %2703 = vmatprep.subr.mxu0 0.0
    %2704 = vmatpush1.msra.mxu0 0.0
    %2705 = vmatprep.subr.mxu0 0.0
    %2706 = vmatpush1.msra.mxu0 0.0
    %2707 = vmatprep.subr.mxu0 0.0
    %2708 = vmatpush1.msra.mxu0 0.0
    %2709 = vmatprep.subr.mxu0 0.0
    %2710 = vmatpush1.msra.mxu0 0.0
    %2711 = vmatprep.subr.mxu0 0.0
    %2712 = vmatpush1.msra.mxu0 0.0
    %2713 = vmatprep.subr.mxu0 0.0
    %2714 = vmatpush1.msra.mxu0 0.0
    %2715 = vmatprep.subr.mxu0 0.0
    %2716 = vmatpush1.msra.mxu0 0.0
    %2717 = vmatprep.subr.mxu0 0.0
    %2718 = vmatpush1.msra.mxu0 0.0
    %2719 = vmatprep.subr.mxu0 0.0
    %2720 = vmatpush1.msra.mxu0 0.0
    %2721 = vmatprep.subr.mxu0 0.0
    %2722 = vmatpush1.msra.mxu0 0.0
    %2723 = vmatprep.subr.mxu0 0.0
    %2724 = vmatpush1.msra.mxu0 0.0
    %2725 = vmatprep.subr.mxu0 0.0
    %2726 = vmatpush1.msra.mxu0 0.0
    %2727 = vmatprep.subr.mxu0 0.0
    %2728 = vmatpush1.msra.mxu0 0.0
    %2729 = vmatprep.subr.mxu0 0.0
    %2730 = vmatpush1.msra.mxu0 0.0
    %2731 = vmatprep.subr.mxu0 0.0
    %2732 = vmatpush1.msra.mxu0 0.0
    %2733 = vmatprep.subr.mxu0 0.0
    %2734 = vmatpush1.msra.mxu0 0.0
    %2735 = vmatprep.subr.mxu0 0.0
    %2736 = vmatpush1.msra.mxu0 0.0
    %2737 = vmatprep.subr.mxu0 0.0
    %2738 = vmatpush1.msra.mxu0 0.0
    %2739 = vmatprep.subr.mxu0 0.0
    %2740 = vmatpush1.msra.mxu0 0.0
    %2741 = vmatprep.subr.mxu0 0.0
    %2742 = vmatpush1.msra.mxu0 0.0
    %2743 = vmatprep.subr.mxu0 0.0
    %2744 = vmatpush1.msra.mxu0 0.0
    %2745 = vmatprep.subr.mxu0 0.0
    %2746 = vmatpush1.msra.mxu0 0.0
    %2747 = vmatprep.subr.mxu0 0.0
    %2748 = vmatpush1.msra.mxu0 0.0
    %2749 = vmatprep.mubr.f32.mxu0 0.0
    %2750 = vmatmul.mubr.f32.gmra.mrb[0].mxu0 %v2683
    %v2751 = vpop.f32.mrb[0].mxu0
    %v2752 = vadd.f32 0.0, %v2751
    %v2753 = vpop.f32.mrb[0].mxu0
    %2754 = vdwg.mxu0
    %2755 = vrot.lane.b32.xlu0 %v262, 40
    %v2756 = vpop.permute.xlu0 %2755
    %v2759 = vsel %vm273, %v2600, 0
    %2761 = vmatprep.subr.mxu0 0.0
    %2762 = vmatpush1.msra.mxu0 %v2756
    %2763 = vmatprep.subr.mxu0 0.0
    %2764 = vmatpush1.msra.mxu0 0.0
    %2765 = vmatprep.subr.mxu0 0.0
    %2766 = vmatpush1.msra.mxu0 0.0
    %2767 = vmatprep.subr.mxu0 0.0
    %2768 = vmatpush1.msra.mxu0 0.0
    %2769 = vmatprep.subr.mxu0 0.0
    %2770 = vmatpush1.msra.mxu0 0.0
    %2771 = vmatprep.subr.mxu0 0.0
    %2772 = vmatpush1.msra.mxu0 0.0
    %2773 = vmatprep.subr.mxu0 0.0
    %2774 = vmatpush1.msra.mxu0 0.0
    %2775 = vmatprep.subr.mxu0 0.0
    %2776 = vmatpush1.msra.mxu0 0.0
    %2777 = vmatprep.subr.mxu0 0.0
    %2778 = vmatpush1.msra.mxu0 0.0
    %2779 = vmatprep.subr.mxu0 0.0
    %2780 = vmatpush1.msra.mxu0 0.0
    %2781 = vmatprep.subr.mxu0 0.0
    %2782 = vmatpush1.msra.mxu0 0.0
    %2783 = vmatprep.subr.mxu0 0.0
    %2784 = vmatpush1.msra.mxu0 0.0
    %2785 = vmatprep.subr.mxu0 0.0
    %2786 = vmatpush1.msra.mxu0 0.0
    %2787 = vmatprep.subr.mxu0 0.0
    %2788 = vmatpush1.msra.mxu0 0.0
    %2789 = vmatprep.subr.mxu0 0.0
    %2790 = vmatpush1.msra.mxu0 0.0
    %2791 = vmatprep.subr.mxu0 0.0
    %2792 = vmatpush1.msra.mxu0 0.0
    %2793 = vmatprep.subr.mxu0 0.0
    %2794 = vmatpush1.msra.mxu0 0.0
    %2795 = vmatprep.subr.mxu0 0.0
    %2796 = vmatpush1.msra.mxu0 0.0
    %2797 = vmatprep.subr.mxu0 0.0
    %2798 = vmatpush1.msra.mxu0 0.0
    %2799 = vmatprep.subr.mxu0 0.0
    %2800 = vmatpush1.msra.mxu0 0.0
    %2801 = vmatprep.subr.mxu0 0.0
    %2802 = vmatpush1.msra.mxu0 0.0
    %2803 = vmatprep.subr.mxu0 0.0
    %2804 = vmatpush1.msra.mxu0 0.0
    %2805 = vmatprep.subr.mxu0 0.0
    %2806 = vmatpush1.msra.mxu0 0.0
    %2807 = vmatprep.subr.mxu0 0.0
    %2808 = vmatpush1.msra.mxu0 0.0
    %2809 = vmatprep.subr.mxu0 0.0
    %2810 = vmatpush1.msra.mxu0 0.0
    %2811 = vmatprep.subr.mxu0 0.0
    %2812 = vmatpush1.msra.mxu0 0.0
    %2813 = vmatprep.subr.mxu0 0.0
    %2814 = vmatpush1.msra.mxu0 0.0
    %2815 = vmatprep.subr.mxu0 0.0
    %2816 = vmatpush1.msra.mxu0 0.0
    %2817 = vmatprep.subr.mxu0 0.0
    %2818 = vmatpush1.msra.mxu0 0.0
    %2819 = vmatprep.subr.mxu0 0.0
    %2820 = vmatpush1.msra.mxu0 0.0
    %2821 = vmatprep.subr.mxu0 0.0
    %2822 = vmatpush1.msra.mxu0 0.0
    %2823 = vmatprep.subr.mxu0 0.0
    %2824 = vmatpush1.msra.mxu0 0.0
    %2825 = vmatprep.mubr.f32.mxu0 0.0
    %2826 = vmatmul.mubr.f32.gmra.mrb[0].mxu0 %v2759
    %v2827 = vpop.f32.mrb[0].mxu0
    %v2828 = vadd.f32 0.0, %v2827
    %v2829 = vpop.f32.mrb[0].mxu0
    %2830 = vdwg.mxu0
    %2831 = vrot.lane.b32.xlu0 %v267, 40
    %v2832 = vpop.permute.xlu0 %2831
    %v2835 = vsel %vm273, %v2602, 0
    %2837 = vmatprep.subr.mxu0 0.0
    %2838 = vmatpush1.msra.mxu0 %v2832
    %2839 = vmatprep.subr.mxu0 0.0
    %2840 = vmatpush1.msra.mxu0 0.0
    %2841 = vmatprep.subr.mxu0 0.0
    %2842 = vmatpush1.msra.mxu0 0.0
    %2843 = vmatprep.subr.mxu0 0.0
    %2844 = vmatpush1.msra.mxu0 0.0
    %2845 = vmatprep.subr.mxu0 0.0
    %2846 = vmatpush1.msra.mxu0 0.0
    %2847 = vmatprep.subr.mxu0 0.0
    %2848 = vmatpush1.msra.mxu0 0.0
    %2849 = vmatprep.subr.mxu0 0.0
    %2850 = vmatpush1.msra.mxu0 0.0
    %2851 = vmatprep.subr.mxu0 0.0
    %2852 = vmatpush1.msra.mxu0 0.0
    %2853 = vmatprep.subr.mxu0 0.0
    %2854 = vmatpush1.msra.mxu0 0.0
    %2855 = vmatprep.subr.mxu0 0.0
    %2856 = vmatpush1.msra.mxu0 0.0
    %2857 = vmatprep.subr.mxu0 0.0
    %2858 = vmatpush1.msra.mxu0 0.0
    %2859 = vmatprep.subr.mxu0 0.0
    %2860 = vmatpush1.msra.mxu0 0.0
    %2861 = vmatprep.subr.mxu0 0.0
    %2862 = vmatpush1.msra.mxu0 0.0
    %2863 = vmatprep.subr.mxu0 0.0
    %2864 = vmatpush1.msra.mxu0 0.0
    %2865 = vmatprep.subr.mxu0 0.0
    %2866 = vmatpush1.msra.mxu0 0.0
    %2867 = vmatprep.subr.mxu0 0.0
    %2868 = vmatpush1.msra.mxu0 0.0
    %2869 = vmatprep.subr.mxu0 0.0
    %2870 = vmatpush1.msra.mxu0 0.0
    %2871 = vmatprep.subr.mxu0 0.0
    %2872 = vmatpush1.msra.mxu0 0.0
    %2873 = vmatprep.subr.mxu0 0.0
    %2874 = vmatpush1.msra.mxu0 0.0
    %2875 = vmatprep.subr.mxu0 0.0
    %2876 = vmatpush1.msra.mxu0 0.0
    %2877 = vmatprep.subr.mxu0 0.0
    %2878 = vmatpush1.msra.mxu0 0.0
    %2879 = vmatprep.subr.mxu0 0.0
    %2880 = vmatpush1.msra.mxu0 0.0
    %2881 = vmatprep.subr.mxu0 0.0
    %2882 = vmatpush1.msra.mxu0 0.0
    %2883 = vmatprep.subr.mxu0 0.0
    %2884 = vmatpush1.msra.mxu0 0.0
    %2885 = vmatprep.subr.mxu0 0.0
    %2886 = vmatpush1.msra.mxu0 0.0
    %2887 = vmatprep.subr.mxu0 0.0
    %2888 = vmatpush1.msra.mxu0 0.0
    %2889 = vmatprep.subr.mxu0 0.0
    %2890 = vmatpush1.msra.mxu0 0.0
    %2891 = vmatprep.subr.mxu0 0.0
    %2892 = vmatpush1.msra.mxu0 0.0
    %2893 = vmatprep.subr.mxu0 0.0
    %2894 = vmatpush1.msra.mxu0 0.0
    %2895 = vmatprep.subr.mxu0 0.0
    %2896 = vmatpush1.msra.mxu0 0.0
    %2897 = vmatprep.subr.mxu0 0.0
    %2898 = vmatpush1.msra.mxu0 0.0
    %2899 = vmatprep.subr.mxu0 0.0
    %2900 = vmatpush1.msra.mxu0 0.0
    %2901 = vmatprep.mubr.f32.mxu0 0.0
    %2902 = vmatmul.mubr.f32.gmra.mrb[0].mxu0 %v2835
    %v2903 = vpop.f32.mrb[0].mxu0
    %v2904 = vadd.f32 0.0, %v2903
    %v2905 = vpop.f32.mrb[0].mxu0
    %2906 = vdwg.mxu0
    %2911 = vrot.lane.b32.xlu0 %v1356, 8
    %v2912 = vpop.permute.xlu0 %2911
    %2913 = vrot.lane.b32.xlu0 %v1432, 8
    %v2914 = vpop.permute.xlu0 %2913
    %2915 = vrot.lane.b32.xlu0 %v1508, 8
    %v2916 = vpop.permute.xlu0 %2915
    %2917 = vrot.lane.b32.xlu0 %v1584, 8
    %v2918 = vpop.permute.xlu0 %2917
    %2927 = vrot.lane.b32.xlu0 %v2016, 16
    %v2928 = vpop.permute.xlu0 %2927
    %2929 = vrot.lane.b32.xlu0 %v2092, 16
    %v2930 = vpop.permute.xlu0 %2929
    %2931 = vrot.lane.b32.xlu0 %v2168, 16
    %v2932 = vpop.permute.xlu0 %2931
    %2933 = vrot.lane.b32.xlu0 %v2244, 16
    %v2934 = vpop.permute.xlu0 %2933
    %2943 = vrot.lane.b32.xlu0 %v2676, 24
    %v2944 = vpop.permute.xlu0 %2943
    %2945 = vrot.lane.b32.xlu0 %v2752, 24
    %v2946 = vpop.permute.xlu0 %2945
    %2947 = vrot.lane.b32.xlu0 %v2828, 24
    %v2948 = vpop.permute.xlu0 %2947
    %2949 = vrot.lane.b32.xlu0 %v2904, 24
    %v2950 = vpop.permute.xlu0 %2949
    %v2955 = vsel %vm273, %v696, %v2912
    %v2956 = vsel %vm273, %v772, %v2914
    %v2957 = vsel %vm273, %v848, %v2916
    %v2958 = vsel %vm273, %v924, %v2918
    %vm2959 = vcmask 130048
    %v2960 = vsel %vm2959, %v2955, %v2928
    %v2961 = vsel %vm2959, %v2956, %v2930
    %v2962 = vsel %vm2959, %v2957, %v2932
    %v2963 = vsel %vm2959, %v2958, %v2934
    %vm2964 = vcmask 195584
    %v2965 = vsel %vm2964, %v2960, %v2944
    %v2966 = vsel %vm2964, %v2961, %v2946
    %v2967 = vsel %vm2964, %v2962, %v2948
    %v2968 = vsel %vm2964, %v2963, %v2950
    %v2969 = vlaneseq
    %v2970 = vshrl.u32 %v2969, 7
    %v2971 = vsub.s32 1, %v2970
    %v2972 = vrot.slane %v166, %v2971
    %v2974 = vsel %vm172, %v2965, 0
    %v2977 = vsel %vm172, %v2966, 0
    %v2980 = vsel %vm172, %v2967, 0
    %v2983 = vsel %vm172, %v2968, 0
    %2985 = vmatprep.subr.mxu0 0.0
    %2986 = vmatpush1.msra.mxu0 %v138
    %2987 = vmatprep.subr.mxu0 0.0
    %2988 = vmatpush1.msra.mxu0 %v139
    %2989 = vmatprep.subr.mxu0 0.0
    %2990 = vmatpush1.msra.mxu0 %v140
    %2991 = vmatprep.subr.mxu0 0.0
    %2992 = vmatpush1.msra.mxu0 %v141
    %2993 = vmatprep.subr.mxu0 0.0
    %2994 = vmatpush1.msra.mxu0 0.0
    %2995 = vmatprep.subr.mxu0 0.0
    %2996 = vmatpush1.msra.mxu0 0.0
    %2997 = vmatprep.subr.mxu0 0.0
    %2998 = vmatpush1.msra.mxu0 0.0
    %2999 = vmatprep.subr.mxu0 0.0
    %3000 = vmatpush1.msra.mxu0 0.0
    %3001 = vmatprep.subr.mxu0 0.0
    %3002 = vmatpush1.msra.mxu0 0.0
    %3003 = vmatprep.subr.mxu0 0.0
    %3004 = vmatpush1.msra.mxu0 0.0
    %3005 = vmatprep.subr.mxu0 0.0
    %3006 = vmatpush1.msra.mxu0 0.0
    %3007 = vmatprep.subr.mxu0 0.0
    %3008 = vmatpush1.msra.mxu0 0.0
    %3009 = vmatprep.subr.mxu0 0.0
    %3010 = vmatpush1.msra.mxu0 0.0
    %3011 = vmatprep.subr.mxu0 0.0
    %3012 = vmatpush1.msra.mxu0 0.0
    %3013 = vmatprep.subr.mxu0 0.0
    %3014 = vmatpush1.msra.mxu0 0.0
    %3015 = vmatprep.subr.mxu0 0.0
    %3016 = vmatpush1.msra.mxu0 0.0
    %3017 = vmatprep.subr.mxu0 0.0
    %3018 = vmatpush1.msra.mxu0 0.0
    %3019 = vmatprep.subr.mxu0 0.0
    %3020 = vmatpush1.msra.mxu0 0.0
    %3021 = vmatprep.subr.mxu0 0.0
    %3022 = vmatpush1.msra.mxu0 0.0
    %3023 = vmatprep.subr.mxu0 0.0
    %3024 = vmatpush1.msra.mxu0 0.0
    %3025 = vmatprep.subr.mxu0 0.0
    %3026 = vmatpush1.msra.mxu0 0.0
    %3027 = vmatprep.subr.mxu0 0.0
    %3028 = vmatpush1.msra.mxu0 0.0
    %3029 = vmatprep.subr.mxu0 0.0
    %3030 = vmatpush1.msra.mxu0 0.0
    %3031 = vmatprep.subr.mxu0 0.0
    %3032 = vmatpush1.msra.mxu0 0.0
    %3033 = vmatprep.subr.mxu0 0.0
    %3034 = vmatpush1.msra.mxu0 0.0
    %3035 = vmatprep.subr.mxu0 0.0
    %3036 = vmatpush1.msra.mxu0 0.0
    %3037 = vmatprep.subr.mxu0 0.0
    %3038 = vmatpush1.msra.mxu0 0.0
    %3039 = vmatprep.subr.mxu0 0.0
    %3040 = vmatpush1.msra.mxu0 0.0
    %3041 = vmatprep.subr.mxu0 0.0
    %3042 = vmatpush1.msra.mxu0 0.0
    %3043 = vmatprep.subr.mxu0 0.0
    %3044 = vmatpush1.msra.mxu0 0.0
    %3045 = vmatprep.subr.mxu0 0.0
    %3046 = vmatpush1.msra.mxu0 0.0
    %3047 = vmatprep.subr.mxu0 0.0
    %3048 = vmatpush1.msra.mxu0 0.0
    %3049 = vmatprep.mubr.f32.mxu0 0.0
    %3050 = vmatmul.mubr.f32.gmra.mrb[0].mxu0 %v2974
    %v3051 = vpop.f32.mrb[0].mxu0
    %v3052 = vadd.f32 %v2972, %v3051
    %v3053 = vpop.f32.mrb[0].mxu0
    %3054 = vmatprep.mubr.f32.mxu0 0.0
    %3055 = vmatmul.mubr.f32.gmra.mrb[0].mxu0 %v2977
    %v3056 = vpop.f32.mrb[0].mxu0
    %v3057 = vadd.f32 %v2972, %v3056
    %v3058 = vpop.f32.mrb[0].mxu0
    %3059 = vmatprep.mubr.f32.mxu0 0.0
    %3060 = vmatmul.mubr.f32.gmra.mrb[0].mxu0 %v2980
    %v3061 = vpop.f32.mrb[0].mxu0
    %v3062 = vadd.f32 %v2972, %v3061
    %v3063 = vpop.f32.mrb[0].mxu0
    %3064 = vmatprep.mubr.f32.mxu0 0.0
    %3065 = vmatmul.mubr.f32.gmra.mrb[0].mxu0 %v2983
    %v3066 = vpop.f32.mrb[0].mxu0
    %v3067 = vadd.f32 %v2972, %v3066
    %v3068 = vpop.f32.mrb[0].mxu0
    %3069 = vdwg.mxu0
    %v3070 = vadd.f32 %v106, %v3052
    %v3071 = vadd.f32 %v107, %v3057
    %v3072 = vadd.f32 %v108, %v3062
    %v3073 = vadd.f32 %v109, %v3067
    %v3074 = vsel %vm172, %v3070, 0.0
    %3075 = vadd.xlane.f32.xlu0 %v3074
    %v3076 = vpop.xlane.xlu0 %3075
    %v3077 = vsel %vm172, %v3071, 0.0
    %3078 = vadd.xlane.f32.xlu0 %v3077
    %v3079 = vpop.xlane.xlu0 %3078
    %v3080 = vsel %vm172, %v3072, 0.0
    %3081 = vadd.xlane.f32.xlu0 %v3080
    %v3082 = vpop.xlane.xlu0 %3081
    %v3083 = vsel %vm172, %v3073, 0.0
    %3084 = vadd.xlane.f32.xlu0 %v3083
    %v3085 = vpop.xlane.xlu0 %3084
    %v3086 = vrcp.pop 32.0
    %v3087 = vmul.f32 %v3076, %v3086
    %v3088 = vmul.f32 %v3079, %v3086
    %v3089 = vmul.f32 %v3082, %v3086
    %v3090 = vmul.f32 %v3085, %v3086
    %v3091 = vsub.f32 %v3070, %v3087
    %v3092 = vsub.f32 %v3071, %v3088
    %v3093 = vsub.f32 %v3072, %v3089
    %v3094 = vsub.f32 %v3073, %v3090
    %v3095 = vmul.f32 %v3091, %v3091
    %v3096 = vmul.f32 %v3092, %v3092
    %v3097 = vmul.f32 %v3093, %v3093
    %v3098 = vmul.f32 %v3094, %v3094
    %v3099 = vsel %vm172, %v3095, 0.0
    %3100 = vadd.xlane.f32.xlu0 %v3099
    %v3101 = vpop.xlane.xlu0 %3100
    %v3102 = vsel %vm172, %v3096, 0.0
    %3103 = vadd.xlane.f32.xlu0 %v3102
    %v3104 = vpop.xlane.xlu0 %3103
    %v3105 = vsel %vm172, %v3097, 0.0
    %3106 = vadd.xlane.f32.xlu0 %v3105
    %v3107 = vpop.xlane.xlu0 %3106
    %v3108 = vsel %vm172, %v3098, 0.0
    %3109 = vadd.xlane.f32.xlu0 %v3108
    %v3110 = vpop.xlane.xlu0 %3109
    %v3111 = vmul.f32 %v3101, %v3086
    %v3112 = vmul.f32 %v3104, %v3086
    %v3113 = vmul.f32 %v3107, %v3086
    %v3114 = vmul.f32 %v3110, %v3086
    %v3115 = vadd.f32 %v3111, 1e-05
    %v3116 = vadd.f32 %v3112, 1e-05
    %v3117 = vadd.f32 %v3113, 1e-05
    %v3118 = vadd.f32 %v3114, 1e-05
    %v3119 = vrsqrt.pop %v3115
    %v3120 = vrsqrt.pop %v3116
    %v3121 = vrsqrt.pop %v3117
    %v3122 = vrsqrt.pop %v3118
    %v3123 = vmul.f32 %v3091, %v3119
    %v3124 = vmul.f32 %v3092, %v3120
    %v3125 = vmul.f32 %v3093, %v3121
    %v3126 = vmul.f32 %v3094, %v3122
    %v3127 = vlaneseq
    %v3128 = vshrl.u32 %v3127, 7
    %v3129 = vsub.s32 2, %v3128
    %v3130 = vrot.slane %v166, %v3129
    %v3131 = vmul.f32 %v3123, %v3130
    %v3132 = vmul.f32 %v3124, %v3130
    %v3133 = vmul.f32 %v3125, %v3130
    %v3134 = vmul.f32 %v3126, %v3130
    %v3135 = vlaneseq
    %v3136 = vshrl.u32 %v3135, 7
    %v3137 = vsub.s32 3, %v3136
    %v3138 = vrot.slane %v166, %v3137
    %v3139 = vadd.f32 %v3131, %v3138
    %v3140 = vadd.f32 %v3132, %v3138
    %v3141 = vadd.f32 %v3133, %v3138
    %v3142 = vadd.f32 %v3134, %v3138
    %3143 = vset.pattern.permute.xlu0 32
    %3144 = vperm.xlu0 %3143, %v106
    %v3145 = vpop.permute.xlu0 %3144
    %3147 = vset.pattern.permute.xlu0 32
    %3148 = vperm.xlu0 %3147, %v107
    %v3149 = vpop.permute.xlu0 %3148
    %3151 = vset.pattern.permute.xlu0 32
    %3152 = vperm.xlu0 %3151, %v108
    %v3153 = vpop.permute.xlu0 %3152
    %3155 = vset.pattern.permute.xlu0 32
    %3156 = vperm.xlu0 %3155, %v109
    %v3157 = vpop.permute.xlu0 %3156
    %v3159 = vmul.f32 %v3139, %v3145
    %v3160 = vmul.f32 %v3140, %v3149
    %v3161 = vmul.f32 %v3141, %v3153
    %v3162 = vmul.f32 %v3142, %v3157
    %v3163 = vlaneseq
    %v3164 = vshrl.u32 %v3163, 7
    %v3165 = vsub.s32 4, %v3164
    %v3166 = vrot.slane %v166, %v3165
    %v3168 = vsel %vm172, %v3159, 0
    %v3171 = vsel %vm172, %v3160, 0
    %v3174 = vsel %vm172, %v3161, 0
    %v3177 = vsel %vm172, %v3162, 0
    %3179 = vmatprep.subr.mxu0 0.0
    %3180 = vmatpush1.msra.mxu0 %v142
    %3181 = vmatprep.subr.mxu0 0.0
    %3182 = vmatpush1.msra.mxu0 %v143
    %3183 = vmatprep.subr.mxu0 0.0
    %3184 = vmatpush1.msra.mxu0 %v144
    %3185 = vmatprep.subr.mxu0 0.0
    %3186 = vmatpush1.msra.mxu0 %v145
    %3187 = vmatprep.subr.mxu0 0.0
    %3188 = vmatpush1.msra.mxu0 0.0
    %3189 = vmatprep.subr.mxu0 0.0
    %3190 = vmatpush1.msra.mxu0 0.0
    %3191 = vmatprep.subr.mxu0 0.0
    %3192 = vmatpush1.msra.mxu0 0.0
    %3193 = vmatprep.subr.mxu0 0.0
    %3194 = vmatpush1.msra.mxu0 0.0
    %3195 = vmatprep.subr.mxu0 0.0
    %3196 = vmatpush1.msra.mxu0 0.0
    %3197 = vmatprep.subr.mxu0 0.0
    %3198 = vmatpush1.msra.mxu0 0.0
    %3199 = vmatprep.subr.mxu0 0.0
    %3200 = vmatpush1.msra.mxu0 0.0
    %3201 = vmatprep.subr.mxu0 0.0
    %3202 = vmatpush1.msra.mxu0 0.0
    %3203 = vmatprep.subr.mxu0 0.0
    %3204 = vmatpush1.msra.mxu0 0.0
    %3205 = vmatprep.subr.mxu0 0.0
    %3206 = vmatpush1.msra.mxu0 0.0
    %3207 = vmatprep.subr.mxu0 0.0
    %3208 = vmatpush1.msra.mxu0 0.0
    %3209 = vmatprep.subr.mxu0 0.0
    %3210 = vmatpush1.msra.mxu0 0.0
    %3211 = vmatprep.subr.mxu0 0.0
    %3212 = vmatpush1.msra.mxu0 0.0
    %3213 = vmatprep.subr.mxu0 0.0
    %3214 = vmatpush1.msra.mxu0 0.0
    %3215 = vmatprep.subr.mxu0 0.0
    %3216 = vmatpush1.msra.mxu0 0.0
    %3217 = vmatprep.subr.mxu0 0.0
    %3218 = vmatpush1.msra.mxu0 0.0
    %3219 = vmatprep.subr.mxu0 0.0
    %3220 = vmatpush1.msra.mxu0 0.0
    %3221 = vmatprep.subr.mxu0 0.0
    %3222 = vmatpush1.msra.mxu0 0.0
    %3223 = vmatprep.subr.mxu0 0.0
    %3224 = vmatpush1.msra.mxu0 0.0
    %3225 = vmatprep.subr.mxu0 0.0
    %3226 = vmatpush1.msra.mxu0 0.0
    %3227 = vmatprep.subr.mxu0 0.0
    %3228 = vmatpush1.msra.mxu0 0.0
    %3229 = vmatprep.subr.mxu0 0.0
    %3230 = vmatpush1.msra.mxu0 0.0
    %3231 = vmatprep.subr.mxu0 0.0
    %3232 = vmatpush1.msra.mxu0 0.0
    %3233 = vmatprep.subr.mxu0 0.0
    %3234 = vmatpush1.msra.mxu0 0.0
    %3235 = vmatprep.subr.mxu0 0.0
    %3236 = vmatpush1.msra.mxu0 0.0
    %3237 = vmatprep.subr.mxu0 0.0
    %3238 = vmatpush1.msra.mxu0 0.0
    %3239 = vmatprep.subr.mxu0 0.0
    %3240 = vmatpush1.msra.mxu0 0.0
    %3241 = vmatprep.subr.mxu0 0.0
    %3242 = vmatpush1.msra.mxu0 0.0
    %3243 = vmatprep.mubr.f32.mxu0 0.0
    %3244 = vmatmul.mubr.f32.gmra.mrb[0].mxu0 %v3168
    %v3245 = vpop.f32.mrb[0].mxu0
    %v3246 = vadd.f32 %v3166, %v3245
    %v3247 = vpop.f32.mrb[0].mxu0
    %3248 = vmatprep.mubr.f32.mxu0 0.0
    %3249 = vmatmul.mubr.f32.gmra.mrb[0].mxu0 %v3171
    %v3250 = vpop.f32.mrb[0].mxu0
    %v3251 = vadd.f32 %v3166, %v3250
    %v3252 = vpop.f32.mrb[0].mxu0
    %3253 = vmatprep.mubr.f32.mxu0 0.0
    %3254 = vmatmul.mubr.f32.gmra.mrb[0].mxu0 %v3174
    %v3255 = vpop.f32.mrb[0].mxu0
    %v3256 = vadd.f32 %v3166, %v3255
    %v3257 = vpop.f32.mrb[0].mxu0
    %3258 = vmatprep.mubr.f32.mxu0 0.0
    %3259 = vmatmul.mubr.f32.gmra.mrb[0].mxu0 %v3177
    %v3260 = vpop.f32.mrb[0].mxu0
    %v3261 = vadd.f32 %v3166, %v3260
    %v3262 = vpop.f32.mrb[0].mxu0
    %3263 = vdwg.mxu0
    %v3264 = vlaneseq
    %v3265 = vshrl.u32 %v3264, 7
    %v3266 = vsub.s32 5, %v3265
    %v3267 = vrot.slane %v166, %v3266
    %v3269 = vsel %vm172, %v110, 0
    %v3272 = vsel %vm172, %v111, 0
    %v3275 = vsel %vm172, %v112, 0
    %v3278 = vsel %vm172, %v113, 0
    %v3281 = vsel %vm172, %v114, 0
    %v3284 = vsel %vm172, %v115, 0
    %v3287 = vsel %vm172, %v116, 0
    %v3290 = vsel %vm172, %v117, 0
    %3292 = vmatprep.subr.mxu0 0.0
    %3293 = vmatpush1.msra.mxu0 %v130
    %3294 = vmatprep.subr.mxu0 0.0
    %3295 = vmatpush1.msra.mxu0 %v131
    %3296 = vmatprep.subr.mxu0 0.0
    %3297 = vmatpush1.msra.mxu0 %v132
    %3298 = vmatprep.subr.mxu0 0.0
    %3299 = vmatpush1.msra.mxu0 %v133
    %3300 = vmatprep.subr.mxu0 0.0
    %3301 = vmatpush1.msra.mxu0 0.0
    %3302 = vmatprep.subr.mxu0 0.0
    %3303 = vmatpush1.msra.mxu0 0.0
    %3304 = vmatprep.subr.mxu0 0.0
    %3305 = vmatpush1.msra.mxu0 0.0
    %3306 = vmatprep.subr.mxu0 0.0
    %3307 = vmatpush1.msra.mxu0 0.0
    %3308 = vmatprep.subr.mxu0 0.0
    %3309 = vmatpush1.msra.mxu0 0.0
    %3310 = vmatprep.subr.mxu0 0.0
    %3311 = vmatpush1.msra.mxu0 0.0
    %3312 = vmatprep.subr.mxu0 0.0
    %3313 = vmatpush1.msra.mxu0 0.0
    %3314 = vmatprep.subr.mxu0 0.0
    %3315 = vmatpush1.msra.mxu0 0.0
    %3316 = vmatprep.subr.mxu0 0.0
    %3317 = vmatpush1.msra.mxu0 0.0
    %3318 = vmatprep.subr.mxu0 0.0
    %3319 = vmatpush1.msra.mxu0 0.0
    %3320 = vmatprep.subr.mxu0 0.0
    %3321 = vmatpush1.msra.mxu0 0.0
    %3322 = vmatprep.subr.mxu0 0.0
    %3323 = vmatpush1.msra.mxu0 0.0
    %3324 = vmatprep.subr.mxu0 0.0
    %3325 = vmatpush1.msra.mxu0 0.0
    %3326 = vmatprep.subr.mxu0 0.0
    %3327 = vmatpush1.msra.mxu0 0.0
    %3328 = vmatprep.subr.mxu0 0.0
    %3329 = vmatpush1.msra.mxu0 0.0
    %3330 = vmatprep.subr.mxu0 0.0
    %3331 = vmatpush1.msra.mxu0 0.0
    %3332 = vmatprep.subr.mxu0 0.0
    %3333 = vmatpush1.msra.mxu0 0.0
    %3334 = vmatprep.subr.mxu0 0.0
    %3335 = vmatpush1.msra.mxu0 0.0
    %3336 = vmatprep.subr.mxu0 0.0
    %3337 = vmatpush1.msra.mxu0 0.0
    %3338 = vmatprep.subr.mxu0 0.0
    %3339 = vmatpush1.msra.mxu0 0.0
    %3340 = vmatprep.subr.mxu0 0.0
    %3341 = vmatpush1.msra.mxu0 0.0
    %3342 = vmatprep.subr.mxu0 0.0
    %3343 = vmatpush1.msra.mxu0 0.0
    %3344 = vmatprep.subr.mxu0 0.0
    %3345 = vmatpush1.msra.mxu0 0.0
    %3346 = vmatprep.subr.mxu0 0.0
    %3347 = vmatpush1.msra.mxu0 0.0
    %3348 = vmatprep.subr.mxu0 0.0
    %3349 = vmatpush1.msra.mxu0 0.0
    %3350 = vmatprep.subr.mxu0 0.0
    %3351 = vmatpush1.msra.mxu0 0.0
    %3352 = vmatprep.subr.mxu0 0.0
    %3353 = vmatpush1.msra.mxu0 0.0
    %3354 = vmatprep.subr.mxu0 0.0
    %3355 = vmatpush1.msra.mxu0 0.0
    %3356 = vmatprep.mubr.f32.mxu0 0.0
    %3357 = vmatmul.mubr.f32.gmra.mrb[0].mxu0 %v3269
    %v3358 = vpop.f32.mrb[0].mxu0
    %v3359 = vadd.f32 %v3267, %v3358
    %v3360 = vpop.f32.mrb[0].mxu0
    %3361 = vmatprep.mubr.f32.mxu0 0.0
    %3362 = vmatmul.mubr.f32.gmra.mrb[0].mxu0 %v3272
    %v3363 = vpop.f32.mrb[0].mxu0
    %v3364 = vadd.f32 %v3267, %v3363
    %v3365 = vpop.f32.mrb[0].mxu0
    %3366 = vmatprep.mubr.f32.mxu0 0.0
    %3367 = vmatmul.mubr.f32.gmra.mrb[0].mxu0 %v3275
    %v3368 = vpop.f32.mrb[0].mxu0
    %v3369 = vadd.f32 %v3267, %v3368
    %v3370 = vpop.f32.mrb[0].mxu0
    %3371 = vmatprep.mubr.f32.mxu0 0.0
    %3372 = vmatmul.mubr.f32.gmra.mrb[0].mxu0 %v3278
    %v3373 = vpop.f32.mrb[0].mxu0
    %v3374 = vadd.f32 %v3267, %v3373
    %v3375 = vpop.f32.mrb[0].mxu0
    %3376 = vmatprep.mubr.f32.mxu0 0.0
    %3377 = vmatmul.mubr.f32.gmra.mrb[0].mxu0 %v3281
    %v3378 = vpop.f32.mrb[0].mxu0
    %v3379 = vadd.f32 %v3267, %v3378
    %v3380 = vpop.f32.mrb[0].mxu0
    %3381 = vmatprep.mubr.f32.mxu0 0.0
    %3382 = vmatmul.mubr.f32.gmra.mrb[0].mxu0 %v3284
    %v3383 = vpop.f32.mrb[0].mxu0
    %v3384 = vadd.f32 %v3267, %v3383
    %v3385 = vpop.f32.mrb[0].mxu0
    %3386 = vmatprep.mubr.f32.mxu0 0.0
    %3387 = vmatmul.mubr.f32.gmra.mrb[0].mxu0 %v3287
    %v3388 = vpop.f32.mrb[0].mxu0
    %v3389 = vadd.f32 %v3267, %v3388
    %v3390 = vpop.f32.mrb[0].mxu0
    %3391 = vmatprep.mubr.f32.mxu0 0.0
    %3392 = vmatmul.mubr.f32.gmra.mrb[0].mxu0 %v3290
    %v3393 = vpop.f32.mrb[0].mxu0
    %v3394 = vadd.f32 %v3267, %v3393
    %v3395 = vpop.f32.mrb[0].mxu0
    %3396 = vdwg.mxu0
    %3398 = vrot.lane.b32.xlu0 %v122, 120
    %v3399 = vpop.permute.xlu0 %3398
    %v3402 = vsel %vm273, %v3246, 0
    %v3405 = vsel %vm273, %v3359, 0
    %v3408 = vsel %vm273, %v3364, 0
    %3410 = vmatprep.subr.mxu0 0.0
    %3411 = vmatpush1.xpose.msra.mxu0 %v3405
    %3412 = vmatprep.subr.mxu0 0.0
    %3413 = vmatpush1.xpose.msra.mxu0 %v3408
    %3414 = vmatprep.subr.mxu0 0.0
    %3415 = vmatpush1.xpose.msra.mxu0 0.0
    %3416 = vmatprep.subr.mxu0 0.0
    %3417 = vmatpush1.xpose.msra.mxu0 0.0
    %3418 = vmatprep.subr.mxu0 0.0
    %3419 = vmatpush1.xpose.msra.mxu0 0.0
    %3420 = vmatprep.subr.mxu0 0.0
    %3421 = vmatpush1.xpose.msra.mxu0 0.0
    %3422 = vmatprep.subr.mxu0 0.0
    %3423 = vmatpush1.xpose.msra.mxu0 0.0
    %3424 = vmatprep.subr.mxu0 0.0
    %3425 = vmatpush1.xpose.msra.mxu0 0.0
    %3426 = vmatprep.subr.mxu0 0.0
    %3427 = vmatpush1.xpose.msra.mxu0 0.0
    %3428 = vmatprep.subr.mxu0 0.0
    %3429 = vmatpush1.xpose.msra.mxu0 0.0
    %3430 = vmatprep.subr.mxu0 0.0
    %3431 = vmatpush1.xpose.msra.mxu0 0.0
    %3432 = vmatprep.subr.mxu0 0.0
    %3433 = vmatpush1.xpose.msra.mxu0 0.0
    %3434 = vmatprep.subr.mxu0 0.0
    %3435 = vmatpush1.xpose.msra.mxu0 0.0
    %3436 = vmatprep.subr.mxu0 0.0
    %3437 = vmatpush1.xpose.msra.mxu0 0.0
    %3438 = vmatprep.subr.mxu0 0.0
    %3439 = vmatpush1.xpose.msra.mxu0 0.0
    %3440 = vmatprep.subr.mxu0 0.0
    %3441 = vmatpush1.xpose.msra.mxu0 0.0
    %3442 = vmatprep.subr.mxu0 0.0
    %3443 = vmatpush1.xpose.msra.mxu0 0.0
    %3444 = vmatprep.subr.mxu0 0.0
    %3445 = vmatpush1.xpose.msra.mxu0 0.0
    %3446 = vmatprep.subr.mxu0 0.0
    %3447 = vmatpush1.xpose.msra.mxu0 0.0
    %3448 = vmatprep.subr.mxu0 0.0
    %3449 = vmatpush1.xpose.msra.mxu0 0.0
    %3450 = vmatprep.subr.mxu0 0.0
    %3451 = vmatpush1.xpose.msra.mxu0 0.0
    %3452 = vmatprep.subr.mxu0 0.0
    %3453 = vmatpush1.xpose.msra.mxu0 0.0
    %3454 = vmatprep.subr.mxu0 0.0
    %3455 = vmatpush1.xpose.msra.mxu0 0.0
    %3456 = vmatprep.subr.mxu0 0.0
    %3457 = vmatpush1.xpose.msra.mxu0 0.0
    %3458 = vmatprep.subr.mxu0 0.0
    %3459 = vmatpush1.xpose.msra.mxu0 0.0
    %3460 = vmatprep.subr.mxu0 0.0
    %3461 = vmatpush1.xpose.msra.mxu0 0.0
    %3462 = vmatprep.subr.mxu0 0.0
    %3463 = vmatpush1.xpose.msra.mxu0 0.0
    %3464 = vmatprep.subr.mxu0 0.0
    %3465 = vmatpush1.xpose.msra.mxu0 0.0
    %3466 = vmatprep.subr.mxu0 0.0
    %3467 = vmatpush1.xpose.msra.mxu0 0.0
    %3468 = vmatprep.subr.mxu0 0.0
    %3469 = vmatpush1.xpose.msra.mxu0 0.0
    %3470 = vmatprep.subr.mxu0 0.0
    %3471 = vmatpush1.xpose.msra.mxu0 0.0
    %3472 = vmatprep.subr.mxu0 0.0
    %3473 = vmatpush1.xpose.msra.mxu0 0.0
    %3474 = vmatprep.mubr.f32.mxu0 0.0
    %3475 = vmatmul.mubr.f32.gmra.mrb[0].mxu0 %v3402
    %v3476 = vpop.f32.mrb[0].mxu0
    %v3477 = vadd.f32 %v3399, %v3476
    %v3478 = vpop.f32.mrb[0].mxu0
    %3479 = vdwg.mxu0
    %3481 = vrot.lane.b32.xlu0 %v123, 120
    %v3482 = vpop.permute.xlu0 %3481
    %v3485 = vsel %vm273, %v3251, 0
    %v3488 = vsel %vm273, %v3369, 0
    %v3491 = vsel %vm273, %v3374, 0
    %3493 = vmatprep.subr.mxu0 0.0
    %3494 = vmatpush1.xpose.msra.mxu0 %v3488
    %3495 = vmatprep.subr.mxu0 0.0
    %3496 = vmatpush1.xpose.msra.mxu0 %v3491
    %3497 = vmatprep.subr.mxu0 0.0
    %3498 = vmatpush1.xpose.msra.mxu0 0.0
    %3499 = vmatprep.subr.mxu0 0.0
    %3500 = vmatpush1.xpose.msra.mxu0 0.0
    %3501 = vmatprep.subr.mxu0 0.0
    %3502 = vmatpush1.xpose.msra.mxu0 0.0
    %3503 = vmatprep.subr.mxu0 0.0
    %3504 = vmatpush1.xpose.msra.mxu0 0.0
    %3505 = vmatprep.subr.mxu0 0.0
    %3506 = vmatpush1.xpose.msra.mxu0 0.0
    %3507 = vmatprep.subr.mxu0 0.0
    %3508 = vmatpush1.xpose.msra.mxu0 0.0
    %3509 = vmatprep.subr.mxu0 0.0
    %3510 = vmatpush1.xpose.msra.mxu0 0.0
    %3511 = vmatprep.subr.mxu0 0.0
    %3512 = vmatpush1.xpose.msra.mxu0 0.0
    %3513 = vmatprep.subr.mxu0 0.0
    %3514 = vmatpush1.xpose.msra.mxu0 0.0
    %3515 = vmatprep.subr.mxu0 0.0
    %3516 = vmatpush1.xpose.msra.mxu0 0.0
    %3517 = vmatprep.subr.mxu0 0.0
    %3518 = vmatpush1.xpose.msra.mxu0 0.0
    %3519 = vmatprep.subr.mxu0 0.0
    %3520 = vmatpush1.xpose.msra.mxu0 0.0
    %3521 = vmatprep.subr.mxu0 0.0
    %3522 = vmatpush1.xpose.msra.mxu0 0.0
    %3523 = vmatprep.subr.mxu0 0.0
    %3524 = vmatpush1.xpose.msra.mxu0 0.0
    %3525 = vmatprep.subr.mxu0 0.0
    %3526 = vmatpush1.xpose.msra.mxu0 0.0
    %3527 = vmatprep.subr.mxu0 0.0
    %3528 = vmatpush1.xpose.msra.mxu0 0.0
    %3529 = vmatprep.subr.mxu0 0.0
    %3530 = vmatpush1.xpose.msra.mxu0 0.0
    %3531 = vmatprep.subr.mxu0 0.0
    %3532 = vmatpush1.xpose.msra.mxu0 0.0
    %3533 = vmatprep.subr.mxu0 0.0
    %3534 = vmatpush1.xpose.msra.mxu0 0.0
    %3535 = vmatprep.subr.mxu0 0.0
    %3536 = vmatpush1.xpose.msra.mxu0 0.0
    %3537 = vmatprep.subr.mxu0 0.0
    %3538 = vmatpush1.xpose.msra.mxu0 0.0
    %3539 = vmatprep.subr.mxu0 0.0
    %3540 = vmatpush1.xpose.msra.mxu0 0.0
    %3541 = vmatprep.subr.mxu0 0.0
    %3542 = vmatpush1.xpose.msra.mxu0 0.0
    %3543 = vmatprep.subr.mxu0 0.0
    %3544 = vmatpush1.xpose.msra.mxu0 0.0
    %3545 = vmatprep.subr.mxu0 0.0
    %3546 = vmatpush1.xpose.msra.mxu0 0.0
    %3547 = vmatprep.subr.mxu0 0.0
    %3548 = vmatpush1.xpose.msra.mxu0 0.0
    %3549 = vmatprep.subr.mxu0 0.0
    %3550 = vmatpush1.xpose.msra.mxu0 0.0
    %3551 = vmatprep.subr.mxu0 0.0
    %3552 = vmatpush1.xpose.msra.mxu0 0.0
    %3553 = vmatprep.subr.mxu0 0.0
    %3554 = vmatpush1.xpose.msra.mxu0 0.0
    %3555 = vmatprep.subr.mxu0 0.0
    %3556 = vmatpush1.xpose.msra.mxu0 0.0
    %3557 = vmatprep.mubr.f32.mxu0 0.0
    %3558 = vmatmul.mubr.f32.gmra.mrb[0].mxu0 %v3485
    %v3559 = vpop.f32.mrb[0].mxu0
    %v3560 = vadd.f32 %v3482, %v3559
    %v3561 = vpop.f32.mrb[0].mxu0
    %3562 = vdwg.mxu0
    %3564 = vrot.lane.b32.xlu0 %v124, 120
    %v3565 = vpop.permute.xlu0 %3564
    %v3568 = vsel %vm273, %v3256, 0
    %v3571 = vsel %vm273, %v3379, 0
    %v3574 = vsel %vm273, %v3384, 0
    %3576 = vmatprep.subr.mxu0 0.0
    %3577 = vmatpush1.xpose.msra.mxu0 %v3571
    %3578 = vmatprep.subr.mxu0 0.0
    %3579 = vmatpush1.xpose.msra.mxu0 %v3574
    %3580 = vmatprep.subr.mxu0 0.0
    %3581 = vmatpush1.xpose.msra.mxu0 0.0
    %3582 = vmatprep.subr.mxu0 0.0
    %3583 = vmatpush1.xpose.msra.mxu0 0.0
    %3584 = vmatprep.subr.mxu0 0.0
    %3585 = vmatpush1.xpose.msra.mxu0 0.0
    %3586 = vmatprep.subr.mxu0 0.0
    %3587 = vmatpush1.xpose.msra.mxu0 0.0
    %3588 = vmatprep.subr.mxu0 0.0
    %3589 = vmatpush1.xpose.msra.mxu0 0.0
    %3590 = vmatprep.subr.mxu0 0.0
    %3591 = vmatpush1.xpose.msra.mxu0 0.0
    %3592 = vmatprep.subr.mxu0 0.0
    %3593 = vmatpush1.xpose.msra.mxu0 0.0
    %3594 = vmatprep.subr.mxu0 0.0
    %3595 = vmatpush1.xpose.msra.mxu0 0.0
    %3596 = vmatprep.subr.mxu0 0.0
    %3597 = vmatpush1.xpose.msra.mxu0 0.0
    %3598 = vmatprep.subr.mxu0 0.0
    %3599 = vmatpush1.xpose.msra.mxu0 0.0
    %3600 = vmatprep.subr.mxu0 0.0
    %3601 = vmatpush1.xpose.msra.mxu0 0.0
    %3602 = vmatprep.subr.mxu0 0.0
    %3603 = vmatpush1.xpose.msra.mxu0 0.0
    %3604 = vmatprep.subr.mxu0 0.0
    %3605 = vmatpush1.xpose.msra.mxu0 0.0
    %3606 = vmatprep.subr.mxu0 0.0
    %3607 = vmatpush1.xpose.msra.mxu0 0.0
    %3608 = vmatprep.subr.mxu0 0.0
    %3609 = vmatpush1.xpose.msra.mxu0 0.0
    %3610 = vmatprep.subr.mxu0 0.0
    %3611 = vmatpush1.xpose.msra.mxu0 0.0
    %3612 = vmatprep.subr.mxu0 0.0
    %3613 = vmatpush1.xpose.msra.mxu0 0.0
    %3614 = vmatprep.subr.mxu0 0.0
    %3615 = vmatpush1.xpose.msra.mxu0 0.0
    %3616 = vmatprep.subr.mxu0 0.0
    %3617 = vmatpush1.xpose.msra.mxu0 0.0
    %3618 = vmatprep.subr.mxu0 0.0
    %3619 = vmatpush1.xpose.msra.mxu0 0.0
    %3620 = vmatprep.subr.mxu0 0.0
    %3621 = vmatpush1.xpose.msra.mxu0 0.0
    %3622 = vmatprep.subr.mxu0 0.0
    %3623 = vmatpush1.xpose.msra.mxu0 0.0
    %3624 = vmatprep.subr.mxu0 0.0
    %3625 = vmatpush1.xpose.msra.mxu0 0.0
    %3626 = vmatprep.subr.mxu0 0.0
    %3627 = vmatpush1.xpose.msra.mxu0 0.0
    %3628 = vmatprep.subr.mxu0 0.0
    %3629 = vmatpush1.xpose.msra.mxu0 0.0
    %3630 = vmatprep.subr.mxu0 0.0
    %3631 = vmatpush1.xpose.msra.mxu0 0.0
    %3632 = vmatprep.subr.mxu0 0.0
    %3633 = vmatpush1.xpose.msra.mxu0 0.0
    %3634 = vmatprep.subr.mxu0 0.0
    %3635 = vmatpush1.xpose.msra.mxu0 0.0
    %3636 = vmatprep.subr.mxu0 0.0
    %3637 = vmatpush1.xpose.msra.mxu0 0.0
    %3638 = vmatprep.subr.mxu0 0.0
    %3639 = vmatpush1.xpose.msra.mxu0 0.0
    %3640 = vmatprep.mubr.f32.mxu0 0.0
    %3641 = vmatmul.mubr.f32.gmra.mrb[0].mxu0 %v3568
    %v3642 = vpop.f32.mrb[0].mxu0
    %v3643 = vadd.f32 %v3565, %v3642
    %v3644 = vpop.f32.mrb[0].mxu0
    %3645 = vdwg.mxu0
    %3647 = vrot.lane.b32.xlu0 %v125, 120
    %v3648 = vpop.permute.xlu0 %3647
    %v3651 = vsel %vm273, %v3261, 0
    %v3654 = vsel %vm273, %v3389, 0
    %v3657 = vsel %vm273, %v3394, 0
    %3659 = vmatprep.subr.mxu0 0.0
    %3660 = vmatpush1.xpose.msra.mxu0 %v3654
    %3661 = vmatprep.subr.mxu0 0.0
    %3662 = vmatpush1.xpose.msra.mxu0 %v3657
    %3663 = vmatprep.subr.mxu0 0.0
    %3664 = vmatpush1.xpose.msra.mxu0 0.0
    %3665 = vmatprep.subr.mxu0 0.0
    %3666 = vmatpush1.xpose.msra.mxu0 0.0
    %3667 = vmatprep.subr.mxu0 0.0
    %3668 = vmatpush1.xpose.msra.mxu0 0.0
    %3669 = vmatprep.subr.mxu0 0.0
    %3670 = vmatpush1.xpose.msra.mxu0 0.0
    %3671 = vmatprep.subr.mxu0 0.0
    %3672 = vmatpush1.xpose.msra.mxu0 0.0
    %3673 = vmatprep.subr.mxu0 0.0
    %3674 = vmatpush1.xpose.msra.mxu0 0.0
    %3675 = vmatprep.subr.mxu0 0.0
    %3676 = vmatpush1.xpose.msra.mxu0 0.0
    %3677 = vmatprep.subr.mxu0 0.0
    %3678 = vmatpush1.xpose.msra.mxu0 0.0
    %3679 = vmatprep.subr.mxu0 0.0
    %3680 = vmatpush1.xpose.msra.mxu0 0.0
    %3681 = vmatprep.subr.mxu0 0.0
    %3682 = vmatpush1.xpose.msra.mxu0 0.0
    %3683 = vmatprep.subr.mxu0 0.0
    %3684 = vmatpush1.xpose.msra.mxu0 0.0
    %3685 = vmatprep.subr.mxu0 0.0
    %3686 = vmatpush1.xpose.msra.mxu0 0.0
    %3687 = vmatprep.subr.mxu0 0.0
    %3688 = vmatpush1.xpose.msra.mxu0 0.0
    %3689 = vmatprep.subr.mxu0 0.0
    %3690 = vmatpush1.xpose.msra.mxu0 0.0
    %3691 = vmatprep.subr.mxu0 0.0
    %3692 = vmatpush1.xpose.msra.mxu0 0.0
    %3693 = vmatprep.subr.mxu0 0.0
    %3694 = vmatpush1.xpose.msra.mxu0 0.0
    %3695 = vmatprep.subr.mxu0 0.0
    %3696 = vmatpush1.xpose.msra.mxu0 0.0
    %3697 = vmatprep.subr.mxu0 0.0
    %3698 = vmatpush1.xpose.msra.mxu0 0.0
    %3699 = vmatprep.subr.mxu0 0.0
    %3700 = vmatpush1.xpose.msra.mxu0 0.0
    %3701 = vmatprep.subr.mxu0 0.0
    %3702 = vmatpush1.xpose.msra.mxu0 0.0
    %3703 = vmatprep.subr.mxu0 0.0
    %3704 = vmatpush1.xpose.msra.mxu0 0.0
    %3705 = vmatprep.subr.mxu0 0.0
    %3706 = vmatpush1.xpose.msra.mxu0 0.0
    %3707 = vmatprep.subr.mxu0 0.0
    %3708 = vmatpush1.xpose.msra.mxu0 0.0
    %3709 = vmatprep.subr.mxu0 0.0
    %3710 = vmatpush1.xpose.msra.mxu0 0.0
    %3711 = vmatprep.subr.mxu0 0.0
    %3712 = vmatpush1.xpose.msra.mxu0 0.0
    %3713 = vmatprep.subr.mxu0 0.0
    %3714 = vmatpush1.xpose.msra.mxu0 0.0
    %3715 = vmatprep.subr.mxu0 0.0
    %3716 = vmatpush1.xpose.msra.mxu0 0.0
    %3717 = vmatprep.subr.mxu0 0.0
    %3718 = vmatpush1.xpose.msra.mxu0 0.0
    %3719 = vmatprep.subr.mxu0 0.0
    %3720 = vmatpush1.xpose.msra.mxu0 0.0
    %3721 = vmatprep.subr.mxu0 0.0
    %3722 = vmatpush1.xpose.msra.mxu0 0.0
    %3723 = vmatprep.mubr.f32.mxu0 0.0
    %3724 = vmatmul.mubr.f32.gmra.mrb[0].mxu0 %v3651
    %v3725 = vpop.f32.mrb[0].mxu0
    %v3726 = vadd.f32 %v3648, %v3725
    %v3727 = vpop.f32.mrb[0].mxu0
    %3728 = vdwg.mxu0
    %v3729 = vsel %vm2959, %v3477, -inf
    %3730 = vmax.xlane.f32.xlu0 %v3729
    %v3731 = vpop.xlane.xlu0 %3730
    %v3732 = vsel %vm2959, %v3560, -inf
    %3733 = vmax.xlane.f32.xlu0 %v3732
    %v3734 = vpop.xlane.xlu0 %3733
    %v3735 = vsel %vm2959, %v3643, -inf
    %3736 = vmax.xlane.f32.xlu0 %v3735
    %v3737 = vpop.xlane.xlu0 %3736
    %v3738 = vsel %vm2959, %v3726, -inf
    %3739 = vmax.xlane.f32.xlu0 %v3738
    %v3740 = vpop.xlane.xlu0 %3739
    %v3741 = vsub.f32 %v3477, %v3731
    %v3742 = vsub.f32 %v3560, %v3734
    %v3743 = vsub.f32 %v3643, %v3737
    %v3744 = vsub.f32 %v3726, %v3740
    %v3745 = vmul.f32 %v3741, 1.442695
    %v3746 = vpow.pop %v3745
    %v3747 = vmul.f32 %v3742, 1.442695
    %v3748 = vpow.pop %v3747
    %v3749 = vmul.f32 %v3743, 1.442695
    %v3750 = vpow.pop %v3749
    %v3751 = vmul.f32 %v3744, 1.442695
    %v3752 = vpow.pop %v3751
    %v3753 = vsel %vm2959, %v3746, 0.0
    %3754 = vadd.xlane.f32.xlu0 %v3753
    %v3755 = vpop.xlane.xlu0 %3754
    %v3756 = vsel %vm2959, %v3748, 0.0
    %3757 = vadd.xlane.f32.xlu0 %v3756
    %v3758 = vpop.xlane.xlu0 %3757
    %v3759 = vsel %vm2959, %v3750, 0.0
    %3760 = vadd.xlane.f32.xlu0 %v3759
    %v3761 = vpop.xlane.xlu0 %3760
    %v3762 = vsel %vm2959, %v3752, 0.0
    %3763 = vadd.xlane.f32.xlu0 %v3762
    %v3764 = vpop.xlane.xlu0 %3763
    %v3765 = vrcp.pop %v3755
    %v3766 = vmul.f32 %v3746, %v3765
    %v3767 = vrcp.pop %v3758
    %v3768 = vmul.f32 %v3748, %v3767
    %v3769 = vrcp.pop %v3761
    %v3770 = vmul.f32 %v3750, %v3769
    %v3771 = vrcp.pop %v3764
    %v3772 = vmul.f32 %v3752, %v3771
    %3773 = vrot.lane.b32.xlu0 %v3359, 96
    %v3774 = vpop.permute.xlu0 %3773
    %3775 = vrot.lane.b32.xlu0 %v3364, 96
    %v3776 = vpop.permute.xlu0 %3775
    %v3780 = vsel %vm2959, %v3766, 0
    %3782 = vmatprep.subr.mxu0 0.0
    %3783 = vmatpush1.msra.mxu0 %v3774
    %3784 = vmatprep.subr.mxu0 0.0
    %3785 = vmatpush1.msra.mxu0 %v3776
    %3786 = vmatprep.subr.mxu0 0.0
    %3787 = vmatpush1.msra.mxu0 0.0
    %3788 = vmatprep.subr.mxu0 0.0
    %3789 = vmatpush1.msra.mxu0 0.0
    %3790 = vmatprep.subr.mxu0 0.0
    %3791 = vmatpush1.msra.mxu0 0.0
    %3792 = vmatprep.subr.mxu0 0.0
    %3793 = vmatpush1.msra.mxu0 0.0
    %3794 = vmatprep.subr.mxu0 0.0
    %3795 = vmatpush1.msra.mxu0 0.0
    %3796 = vmatprep.subr.mxu0 0.0
    %3797 = vmatpush1.msra.mxu0 0.0
    %3798 = vmatprep.subr.mxu0 0.0
    %3799 = vmatpush1.msra.mxu0 0.0
    %3800 = vmatprep.subr.mxu0 0.0
    %3801 = vmatpush1.msra.mxu0 0.0
    %3802 = vmatprep.subr.mxu0 0.0
    %3803 = vmatpush1.msra.mxu0 0.0
    %3804 = vmatprep.subr.mxu0 0.0
    %3805 = vmatpush1.msra.mxu0 0.0
    %3806 = vmatprep.subr.mxu0 0.0
    %3807 = vmatpush1.msra.mxu0 0.0
    %3808 = vmatprep.subr.mxu0 0.0
    %3809 = vmatpush1.msra.mxu0 0.0
    %3810 = vmatprep.subr.mxu0 0.0
    %3811 = vmatpush1.msra.mxu0 0.0
    %3812 = vmatprep.subr.mxu0 0.0
    %3813 = vmatpush1.msra.mxu0 0.0
    %3814 = vmatprep.subr.mxu0 0.0
    %3815 = vmatpush1.msra.mxu0 0.0
    %3816 = vmatprep.subr.mxu0 0.0
    %3817 = vmatpush1.msra.mxu0 0.0
    %3818 = vmatprep.subr.mxu0 0.0
    %3819 = vmatpush1.msra.mxu0 0.0
    %3820 = vmatprep.subr.mxu0 0.0
    %3821 = vmatpush1.msra.mxu0 0.0
    %3822 = vmatprep.subr.mxu0 0.0
    %3823 = vmatpush1.msra.mxu0 0.0
    %3824 = vmatprep.subr.mxu0 0.0
    %3825 = vmatpush1.msra.mxu0 0.0
    %3826 = vmatprep.subr.mxu0 0.0
    %3827 = vmatpush1.msra.mxu0 0.0
    %3828 = vmatprep.subr.mxu0 0.0
    %3829 = vmatpush1.msra.mxu0 0.0
    %3830 = vmatprep.subr.mxu0 0.0
    %3831 = vmatpush1.msra.mxu0 0.0
    %3832 = vmatprep.subr.mxu0 0.0
    %3833 = vmatpush1.msra.mxu0 0.0
    %3834 = vmatprep.subr.mxu0 0.0
    %3835 = vmatpush1.msra.mxu0 0.0
    %3836 = vmatprep.subr.mxu0 0.0
    %3837 = vmatpush1.msra.mxu0 0.0
    %3838 = vmatprep.subr.mxu0 0.0
    %3839 = vmatpush1.msra.mxu0 0.0
    %3840 = vmatprep.subr.mxu0 0.0
    %3841 = vmatpush1.msra.mxu0 0.0
    %3842 = vmatprep.subr.mxu0 0.0
    %3843 = vmatpush1.msra.mxu0 0.0
    %3844 = vmatprep.subr.mxu0 0.0
    %3845 = vmatpush1.msra.mxu0 0.0
    %3846 = vmatprep.mubr.f32.mxu0 0.0
    %3847 = vmatmul.mubr.f32.gmra.mrb[0].mxu0 %v3780
    %v3848 = vpop.f32.mrb[0].mxu0
    %v3849 = vadd.f32 0.0, %v3848
    %v3850 = vpop.f32.mrb[0].mxu0
    %3851 = vdwg.mxu0
    %3852 = vrot.lane.b32.xlu0 %v3369, 96
    %v3853 = vpop.permute.xlu0 %3852
    %3854 = vrot.lane.b32.xlu0 %v3374, 96
    %v3855 = vpop.permute.xlu0 %3854
    %v3859 = vsel %vm2959, %v3768, 0
    %3861 = vmatprep.subr.mxu0 0.0
    %3862 = vmatpush1.msra.mxu0 %v3853
    %3863 = vmatprep.subr.mxu0 0.0
    %3864 = vmatpush1.msra.mxu0 %v3855
    %3865 = vmatprep.subr.mxu0 0.0
    %3866 = vmatpush1.msra.mxu0 0.0
    %3867 = vmatprep.subr.mxu0 0.0
    %3868 = vmatpush1.msra.mxu0 0.0
    %3869 = vmatprep.subr.mxu0 0.0
    %3870 = vmatpush1.msra.mxu0 0.0
    %3871 = vmatprep.subr.mxu0 0.0
    %3872 = vmatpush1.msra.mxu0 0.0
    %3873 = vmatprep.subr.mxu0 0.0
    %3874 = vmatpush1.msra.mxu0 0.0
    %3875 = vmatprep.subr.mxu0 0.0
    %3876 = vmatpush1.msra.mxu0 0.0
    %3877 = vmatprep.subr.mxu0 0.0
    %3878 = vmatpush1.msra.mxu0 0.0
    %3879 = vmatprep.subr.mxu0 0.0
    %3880 = vmatpush1.msra.mxu0 0.0
    %3881 = vmatprep.subr.mxu0 0.0
    %3882 = vmatpush1.msra.mxu0 0.0
    %3883 = vmatprep.subr.mxu0 0.0
    %3884 = vmatpush1.msra.mxu0 0.0
    %3885 = vmatprep.subr.mxu0 0.0
    %3886 = vmatpush1.msra.mxu0 0.0
    %3887 = vmatprep.subr.mxu0 0.0
    %3888 = vmatpush1.msra.mxu0 0.0
    %3889 = vmatprep.subr.mxu0 0.0
    %3890 = vmatpush1.msra.mxu0 0.0
    %3891 = vmatprep.subr.mxu0 0.0
    %3892 = vmatpush1.msra.mxu0 0.0
    %3893 = vmatprep.subr.mxu0 0.0
    %3894 = vmatpush1.msra.mxu0 0.0
    %3895 = vmatprep.subr.mxu0 0.0
    %3896 = vmatpush1.msra.mxu0 0.0
    %3897 = vmatprep.subr.mxu0 0.0
    %3898 = vmatpush1.msra.mxu0 0.0
    %3899 = vmatprep.subr.mxu0 0.0
    %3900 = vmatpush1.msra.mxu0 0.0
    %3901 = vmatprep.subr.mxu0 0.0
    %3902 = vmatpush1.msra.mxu0 0.0
    %3903 = vmatprep.subr.mxu0 0.0
    %3904 = vmatpush1.msra.mxu0 0.0
    %3905 = vmatprep.subr.mxu0 0.0
    %3906 = vmatpush1.msra.mxu0 0.0
    %3907 = vmatprep.subr.mxu0 0.0
    %3908 = vmatpush1.msra.mxu0 0.0
    %3909 = vmatprep.subr.mxu0 0.0
    %3910 = vmatpush1.msra.mxu0 0.0
    %3911 = vmatprep.subr.mxu0 0.0
    %3912 = vmatpush1.msra.mxu0 0.0
    %3913 = vmatprep.subr.mxu0 0.0
    %3914 = vmatpush1.msra.mxu0 0.0
    %3915 = vmatprep.subr.mxu0 0.0
    %3916 = vmatpush1.msra.mxu0 0.0
    %3917 = vmatprep.subr.mxu0 0.0
    %3918 = vmatpush1.msra.mxu0 0.0
    %3919 = vmatprep.subr.mxu0 0.0
    %3920 = vmatpush1.msra.mxu0 0.0
    %3921 = vmatprep.subr.mxu0 0.0
    %3922 = vmatpush1.msra.mxu0 0.0
    %3923 = vmatprep.subr.mxu0 0.0
    %3924 = vmatpush1.msra.mxu0 0.0
    %3925 = vmatprep.mubr.f32.mxu0 0.0
    %3926 = vmatmul.mubr.f32.gmra.mrb[0].mxu0 %v3859
    %v3927 = vpop.f32.mrb[0].mxu0
    %v3928 = vadd.f32 0.0, %v3927
    %v3929 = vpop.f32.mrb[0].mxu0
    %3930 = vdwg.mxu0
    %3931 = vrot.lane.b32.xlu0 %v3379, 96
    %v3932 = vpop.permute.xlu0 %3931
    %3933 = vrot.lane.b32.xlu0 %v3384, 96
    %v3934 = vpop.permute.xlu0 %3933
    %v3938 = vsel %vm2959, %v3770, 0
    %3940 = vmatprep.subr.mxu0 0.0
    %3941 = vmatpush1.msra.mxu0 %v3932
    %3942 = vmatprep.subr.mxu0 0.0
    %3943 = vmatpush1.msra.mxu0 %v3934
    %3944 = vmatprep.subr.mxu0 0.0
    %3945 = vmatpush1.msra.mxu0 0.0
    %3946 = vmatprep.subr.mxu0 0.0
    %3947 = vmatpush1.msra.mxu0 0.0
    %3948 = vmatprep.subr.mxu0 0.0
    %3949 = vmatpush1.msra.mxu0 0.0
    %3950 = vmatprep.subr.mxu0 0.0
    %3951 = vmatpush1.msra.mxu0 0.0
    %3952 = vmatprep.subr.mxu0 0.0
    %3953 = vmatpush1.msra.mxu0 0.0
    %3954 = vmatprep.subr.mxu0 0.0
    %3955 = vmatpush1.msra.mxu0 0.0
    %3956 = vmatprep.subr.mxu0 0.0
    %3957 = vmatpush1.msra.mxu0 0.0
    %3958 = vmatprep.subr.mxu0 0.0
    %3959 = vmatpush1.msra.mxu0 0.0
    %3960 = vmatprep.subr.mxu0 0.0
    %3961 = vmatpush1.msra.mxu0 0.0
    %3962 = vmatprep.subr.mxu0 0.0
    %3963 = vmatpush1.msra.mxu0 0.0
    %3964 = vmatprep.subr.mxu0 0.0
    %3965 = vmatpush1.msra.mxu0 0.0
    %3966 = vmatprep.subr.mxu0 0.0
    %3967 = vmatpush1.msra.mxu0 0.0
    %3968 = vmatprep.subr.mxu0 0.0
    %3969 = vmatpush1.msra.mxu0 0.0
    %3970 = vmatprep.subr.mxu0 0.0
    %3971 = vmatpush1.msra.mxu0 0.0
    %3972 = vmatprep.subr.mxu0 0.0
    %3973 = vmatpush1.msra.mxu0 0.0
    %3974 = vmatprep.subr.mxu0 0.0
    %3975 = vmatpush1.msra.mxu0 0.0
    %3976 = vmatprep.subr.mxu0 0.0
    %3977 = vmatpush1.msra.mxu0 0.0
    %3978 = vmatprep.subr.mxu0 0.0
    %3979 = vmatpush1.msra.mxu0 0.0
    %3980 = vmatprep.subr.mxu0 0.0
    %3981 = vmatpush1.msra.mxu0 0.0
    %3982 = vmatprep.subr.mxu0 0.0
    %3983 = vmatpush1.msra.mxu0 0.0
    %3984 = vmatprep.subr.mxu0 0.0
    %3985 = vmatpush1.msra.mxu0 0.0
    %3986 = vmatprep.subr.mxu0 0.0
    %3987 = vmatpush1.msra.mxu0 0.0
    %3988 = vmatprep.subr.mxu0 0.0
    %3989 = vmatpush1.msra.mxu0 0.0
    %3990 = vmatprep.subr.mxu0 0.0
    %3991 = vmatpush1.msra.mxu0 0.0
    %3992 = vmatprep.subr.mxu0 0.0
    %3993 = vmatpush1.msra.mxu0 0.0
    %3994 = vmatprep.subr.mxu0 0.0
    %3995 = vmatpush1.msra.mxu0 0.0
    %3996 = vmatprep.subr.mxu0 0.0
    %3997 = vmatpush1.msra.mxu0 0.0
    %3998 = vmatprep.subr.mxu0 0.0
    %3999 = vmatpush1.msra.mxu0 0.0
    %4000 = vmatprep.subr.mxu0 0.0
    %4001 = vmatpush1.msra.mxu0 0.0
    %4002 = vmatprep.subr.mxu0 0.0
    %4003 = vmatpush1.msra.mxu0 0.0
    %4004 = vmatprep.mubr.f32.mxu0 0.0
    %4005 = vmatmul.mubr.f32.gmra.mrb[0].mxu0 %v3938
    %v4006 = vpop.f32.mrb[0].mxu0
    %v4007 = vadd.f32 0.0, %v4006
    %v4008 = vpop.f32.mrb[0].mxu0
    %4009 = vdwg.mxu0
    %4010 = vrot.lane.b32.xlu0 %v3389, 96
    %v4011 = vpop.permute.xlu0 %4010
    %4012 = vrot.lane.b32.xlu0 %v3394, 96
    %v4013 = vpop.permute.xlu0 %4012
    %v4017 = vsel %vm2959, %v3772, 0
    %4019 = vmatprep.subr.mxu0 0.0
    %4020 = vmatpush1.msra.mxu0 %v4011
    %4021 = vmatprep.subr.mxu0 0.0
    %4022 = vmatpush1.msra.mxu0 %v4013
    %4023 = vmatprep.subr.mxu0 0.0
    %4024 = vmatpush1.msra.mxu0 0.0
    %4025 = vmatprep.subr.mxu0 0.0
    %4026 = vmatpush1.msra.mxu0 0.0
    %4027 = vmatprep.subr.mxu0 0.0
    %4028 = vmatpush1.msra.mxu0 0.0
    %4029 = vmatprep.subr.mxu0 0.0
    %4030 = vmatpush1.msra.mxu0 0.0
    %4031 = vmatprep.subr.mxu0 0.0
    %4032 = vmatpush1.msra.mxu0 0.0
    %4033 = vmatprep.subr.mxu0 0.0
    %4034 = vmatpush1.msra.mxu0 0.0
    %4035 = vmatprep.subr.mxu0 0.0
    %4036 = vmatpush1.msra.mxu0 0.0
    %4037 = vmatprep.subr.mxu0 0.0
    %4038 = vmatpush1.msra.mxu0 0.0
    %4039 = vmatprep.subr.mxu0 0.0
    %4040 = vmatpush1.msra.mxu0 0.0
    %4041 = vmatprep.subr.mxu0 0.0
    %4042 = vmatpush1.msra.mxu0 0.0
    %4043 = vmatprep.subr.mxu0 0.0
    %4044 = vmatpush1.msra.mxu0 0.0
    %4045 = vmatprep.subr.mxu0 0.0
    %4046 = vmatpush1.msra.mxu0 0.0
    %4047 = vmatprep.subr.mxu0 0.0
    %4048 = vmatpush1.msra.mxu0 0.0
    %4049 = vmatprep.subr.mxu0 0.0
    %4050 = vmatpush1.msra.mxu0 0.0
    %4051 = vmatprep.subr.mxu0 0.0
    %4052 = vmatpush1.msra.mxu0 0.0
    %4053 = vmatprep.subr.mxu0 0.0
    %4054 = vmatpush1.msra.mxu0 0.0
    %4055 = vmatprep.subr.mxu0 0.0
    %4056 = vmatpush1.msra.mxu0 0.0
    %4057 = vmatprep.subr.mxu0 0.0
    %4058 = vmatpush1.msra.mxu0 0.0
    %4059 = vmatprep.subr.mxu0 0.0
    %4060 = vmatpush1.msra.mxu0 0.0
    %4061 = vmatprep.subr.mxu0 0.0
    %4062 = vmatpush1.msra.mxu0 0.0
    %4063 = vmatprep.subr.mxu0 0.0
    %4064 = vmatpush1.msra.mxu0 0.0
    %4065 = vmatprep.subr.mxu0 0.0
    %4066 = vmatpush1.msra.mxu0 0.0
    %4067 = vmatprep.subr.mxu0 0.0
    %4068 = vmatpush1.msra.mxu0 0.0
    %4069 = vmatprep.subr.mxu0 0.0
    %4070 = vmatpush1.msra.mxu0 0.0
    %4071 = vmatprep.subr.mxu0 0.0
    %4072 = vmatpush1.msra.mxu0 0.0
    %4073 = vmatprep.subr.mxu0 0.0
    %4074 = vmatpush1.msra.mxu0 0.0
    %4075 = vmatprep.subr.mxu0 0.0
    %4076 = vmatpush1.msra.mxu0 0.0
    %4077 = vmatprep.subr.mxu0 0.0
    %4078 = vmatpush1.msra.mxu0 0.0
    %4079 = vmatprep.subr.mxu0 0.0
    %4080 = vmatpush1.msra.mxu0 0.0
    %4081 = vmatprep.subr.mxu0 0.0
    %4082 = vmatpush1.msra.mxu0 0.0
    %4083 = vmatprep.mubr.f32.mxu0 0.0
    %4084 = vmatmul.mubr.f32.gmra.mrb[0].mxu0 %v4017
    %v4085 = vpop.f32.mrb[0].mxu0
    %v4086 = vadd.f32 0.0, %v4085
    %v4087 = vpop.f32.mrb[0].mxu0
    %4088 = vdwg.mxu0
    %4089 = vrot.lane.b32.xlu0 %v3246, 120
    %v4090 = vpop.permute.xlu0 %4089
    %4091 = vrot.lane.b32.xlu0 %v3359, 120
    %v4092 = vpop.permute.xlu0 %4091
    %4093 = vrot.lane.b32.xlu0 %v3364, 120
    %v4094 = vpop.permute.xlu0 %4093
    %v4095 = vsel %vm273, %v4090, 0
    %v4097 = vsel %vm273, %v4092, 0
    %v4099 = vsel %vm273, %v4094, 0
    %4101 = vmatprep.subr.mxu0 0.0
    %4102 = vmatpush1.xpose.msra.mxu0 %v4097
    %4103 = vmatprep.subr.mxu0 0.0
    %4104 = vmatpush1.xpose.msra.mxu0 %v4099
    %4105 = vmatprep.subr.mxu0 0.0
    %4106 = vmatpush1.xpose.msra.mxu0 0.0
    %4107 = vmatprep.subr.mxu0 0.0
    %4108 = vmatpush1.xpose.msra.mxu0 0.0
    %4109 = vmatprep.subr.mxu0 0.0
    %4110 = vmatpush1.xpose.msra.mxu0 0.0
    %4111 = vmatprep.subr.mxu0 0.0
    %4112 = vmatpush1.xpose.msra.mxu0 0.0
    %4113 = vmatprep.subr.mxu0 0.0
    %4114 = vmatpush1.xpose.msra.mxu0 0.0
    %4115 = vmatprep.subr.mxu0 0.0
    %4116 = vmatpush1.xpose.msra.mxu0 0.0
    %4117 = vmatprep.subr.mxu0 0.0
    %4118 = vmatpush1.xpose.msra.mxu0 0.0
    %4119 = vmatprep.subr.mxu0 0.0
    %4120 = vmatpush1.xpose.msra.mxu0 0.0
    %4121 = vmatprep.subr.mxu0 0.0
    %4122 = vmatpush1.xpose.msra.mxu0 0.0
    %4123 = vmatprep.subr.mxu0 0.0
    %4124 = vmatpush1.xpose.msra.mxu0 0.0
    %4125 = vmatprep.subr.mxu0 0.0
    %4126 = vmatpush1.xpose.msra.mxu0 0.0
    %4127 = vmatprep.subr.mxu0 0.0
    %4128 = vmatpush1.xpose.msra.mxu0 0.0
    %4129 = vmatprep.subr.mxu0 0.0
    %4130 = vmatpush1.xpose.msra.mxu0 0.0
    %4131 = vmatprep.subr.mxu0 0.0
    %4132 = vmatpush1.xpose.msra.mxu0 0.0
    %4133 = vmatprep.subr.mxu0 0.0
    %4134 = vmatpush1.xpose.msra.mxu0 0.0
    %4135 = vmatprep.subr.mxu0 0.0
    %4136 = vmatpush1.xpose.msra.mxu0 0.0
    %4137 = vmatprep.subr.mxu0 0.0
    %4138 = vmatpush1.xpose.msra.mxu0 0.0
    %4139 = vmatprep.subr.mxu0 0.0
    %4140 = vmatpush1.xpose.msra.mxu0 0.0
    %4141 = vmatprep.subr.mxu0 0.0
    %4142 = vmatpush1.xpose.msra.mxu0 0.0
    %4143 = vmatprep.subr.mxu0 0.0
    %4144 = vmatpush1.xpose.msra.mxu0 0.0
    %4145 = vmatprep.subr.mxu0 0.0
    %4146 = vmatpush1.xpose.msra.mxu0 0.0
    %4147 = vmatprep.subr.mxu0 0.0
    %4148 = vmatpush1.xpose.msra.mxu0 0.0
    %4149 = vmatprep.subr.mxu0 0.0
    %4150 = vmatpush1.xpose.msra.mxu0 0.0
    %4151 = vmatprep.subr.mxu0 0.0
    %4152 = vmatpush1.xpose.msra.mxu0 0.0
    %4153 = vmatprep.subr.mxu0 0.0
    %4154 = vmatpush1.xpose.msra.mxu0 0.0
    %4155 = vmatprep.subr.mxu0 0.0
    %4156 = vmatpush1.xpose.msra.mxu0 0.0
    %4157 = vmatprep.subr.mxu0 0.0
    %4158 = vmatpush1.xpose.msra.mxu0 0.0
    %4159 = vmatprep.subr.mxu0 0.0
    %4160 = vmatpush1.xpose.msra.mxu0 0.0
    %4161 = vmatprep.subr.mxu0 0.0
    %4162 = vmatpush1.xpose.msra.mxu0 0.0
    %4163 = vmatprep.subr.mxu0 0.0
    %4164 = vmatpush1.xpose.msra.mxu0 0.0
    %4165 = vmatprep.mubr.f32.mxu0 0.0
    %4166 = vmatmul.mubr.f32.gmra.mrb[0].mxu0 %v4095
    %v4167 = vpop.f32.mrb[0].mxu0
    %v4168 = vadd.f32 %v3399, %v4167
    %v4169 = vpop.f32.mrb[0].mxu0
    %4170 = vdwg.mxu0
    %4171 = vrot.lane.b32.xlu0 %v3251, 120
    %v4172 = vpop.permute.xlu0 %4171
    %4173 = vrot.lane.b32.xlu0 %v3369, 120
    %v4174 = vpop.permute.xlu0 %4173
    %4175 = vrot.lane.b32.xlu0 %v3374, 120
    %v4176 = vpop.permute.xlu0 %4175
    %v4177 = vsel %vm273, %v4172, 0
    %v4179 = vsel %vm273, %v4174, 0
    %v4181 = vsel %vm273, %v4176, 0
    %4183 = vmatprep.subr.mxu0 0.0
    %4184 = vmatpush1.xpose.msra.mxu0 %v4179
    %4185 = vmatprep.subr.mxu0 0.0
    %4186 = vmatpush1.xpose.msra.mxu0 %v4181
    %4187 = vmatprep.subr.mxu0 0.0
    %4188 = vmatpush1.xpose.msra.mxu0 0.0
    %4189 = vmatprep.subr.mxu0 0.0
    %4190 = vmatpush1.xpose.msra.mxu0 0.0
    %4191 = vmatprep.subr.mxu0 0.0
    %4192 = vmatpush1.xpose.msra.mxu0 0.0
    %4193 = vmatprep.subr.mxu0 0.0
    %4194 = vmatpush1.xpose.msra.mxu0 0.0
    %4195 = vmatprep.subr.mxu0 0.0
    %4196 = vmatpush1.xpose.msra.mxu0 0.0
    %4197 = vmatprep.subr.mxu0 0.0
    %4198 = vmatpush1.xpose.msra.mxu0 0.0
    %4199 = vmatprep.subr.mxu0 0.0
    %4200 = vmatpush1.xpose.msra.mxu0 0.0
    %4201 = vmatprep.subr.mxu0 0.0
    %4202 = vmatpush1.xpose.msra.mxu0 0.0
    %4203 = vmatprep.subr.mxu0 0.0
    %4204 = vmatpush1.xpose.msra.mxu0 0.0
    %4205 = vmatprep.subr.mxu0 0.0
    %4206 = vmatpush1.xpose.msra.mxu0 0.0
    %4207 = vmatprep.subr.mxu0 0.0
    %4208 = vmatpush1.xpose.msra.mxu0 0.0
    %4209 = vmatprep.subr.mxu0 0.0
    %4210 = vmatpush1.xpose.msra.mxu0 0.0
    %4211 = vmatprep.subr.mxu0 0.0
    %4212 = vmatpush1.xpose.msra.mxu0 0.0
    %4213 = vmatprep.subr.mxu0 0.0
    %4214 = vmatpush1.xpose.msra.mxu0 0.0
    %4215 = vmatprep.subr.mxu0 0.0
    %4216 = vmatpush1.xpose.msra.mxu0 0.0
    %4217 = vmatprep.subr.mxu0 0.0
    %4218 = vmatpush1.xpose.msra.mxu0 0.0
    %4219 = vmatprep.subr.mxu0 0.0
    %4220 = vmatpush1.xpose.msra.mxu0 0.0
    %4221 = vmatprep.subr.mxu0 0.0
    %4222 = vmatpush1.xpose.msra.mxu0 0.0
    %4223 = vmatprep.subr.mxu0 0.0
    %4224 = vmatpush1.xpose.msra.mxu0 0.0
    %4225 = vmatprep.subr.mxu0 0.0
    %4226 = vmatpush1.xpose.msra.mxu0 0.0
    %4227 = vmatprep.subr.mxu0 0.0
    %4228 = vmatpush1.xpose.msra.mxu0 0.0
    %4229 = vmatprep.subr.mxu0 0.0
    %4230 = vmatpush1.xpose.msra.mxu0 0.0
    %4231 = vmatprep.subr.mxu0 0.0
    %4232 = vmatpush1.xpose.msra.mxu0 0.0
    %4233 = vmatprep.subr.mxu0 0.0
    %4234 = vmatpush1.xpose.msra.mxu0 0.0
    %4235 = vmatprep.subr.mxu0 0.0
    %4236 = vmatpush1.xpose.msra.mxu0 0.0
    %4237 = vmatprep.subr.mxu0 0.0
    %4238 = vmatpush1.xpose.msra.mxu0 0.0
    %4239 = vmatprep.subr.mxu0 0.0
    %4240 = vmatpush1.xpose.msra.mxu0 0.0
    %4241 = vmatprep.subr.mxu0 0.0
    %4242 = vmatpush1.xpose.msra.mxu0 0.0
    %4243 = vmatprep.subr.mxu0 0.0
    %4244 = vmatpush1.xpose.msra.mxu0 0.0
    %4245 = vmatprep.subr.mxu0 0.0
    %4246 = vmatpush1.xpose.msra.mxu0 0.0
    %4247 = vmatprep.mubr.f32.mxu0 0.0
    %4248 = vmatmul.mubr.f32.gmra.mrb[0].mxu0 %v4177
    %v4249 = vpop.f32.mrb[0].mxu0
    %v4250 = vadd.f32 %v3482, %v4249
    %v4251 = vpop.f32.mrb[0].mxu0
    %4252 = vdwg.mxu0
    %4253 = vrot.lane.b32.xlu0 %v3256, 120
    %v4254 = vpop.permute.xlu0 %4253
    %4255 = vrot.lane.b32.xlu0 %v3379, 120
    %v4256 = vpop.permute.xlu0 %4255
    %4257 = vrot.lane.b32.xlu0 %v3384, 120
    %v4258 = vpop.permute.xlu0 %4257
    %v4259 = vsel %vm273, %v4254, 0
    %v4261 = vsel %vm273, %v4256, 0
    %v4263 = vsel %vm273, %v4258, 0
    %4265 = vmatprep.subr.mxu0 0.0
    %4266 = vmatpush1.xpose.msra.mxu0 %v4261
    %4267 = vmatprep.subr.mxu0 0.0
    %4268 = vmatpush1.xpose.msra.mxu0 %v4263
    %4269 = vmatprep.subr.mxu0 0.0
    %4270 = vmatpush1.xpose.msra.mxu0 0.0
    %4271 = vmatprep.subr.mxu0 0.0
    %4272 = vmatpush1.xpose.msra.mxu0 0.0
    %4273 = vmatprep.subr.mxu0 0.0
    %4274 = vmatpush1.xpose.msra.mxu0 0.0
    %4275 = vmatprep.subr.mxu0 0.0
    %4276 = vmatpush1.xpose.msra.mxu0 0.0
    %4277 = vmatprep.subr.mxu0 0.0
    %4278 = vmatpush1.xpose.msra.mxu0 0.0
    %4279 = vmatprep.subr.mxu0 0.0
    %4280 = vmatpush1.xpose.msra.mxu0 0.0
    %4281 = vmatprep.subr.mxu0 0.0
    %4282 = vmatpush1.xpose.msra.mxu0 0.0
    %4283 = vmatprep.subr.mxu0 0.0
    %4284 = vmatpush1.xpose.msra.mxu0 0.0
    %4285 = vmatprep.subr.mxu0 0.0
    %4286 = vmatpush1.xpose.msra.mxu0 0.0
    %4287 = vmatprep.subr.mxu0 0.0
    %4288 = vmatpush1.xpose.msra.mxu0 0.0
    %4289 = vmatprep.subr.mxu0 0.0
    %4290 = vmatpush1.xpose.msra.mxu0 0.0
    %4291 = vmatprep.subr.mxu0 0.0
    %4292 = vmatpush1.xpose.msra.mxu0 0.0
    %4293 = vmatprep.subr.mxu0 0.0
    %4294 = vmatpush1.xpose.msra.mxu0 0.0
    %4295 = vmatprep.subr.mxu0 0.0
    %4296 = vmatpush1.xpose.msra.mxu0 0.0
    %4297 = vmatprep.subr.mxu0 0.0
    %4298 = vmatpush1.xpose.msra.mxu0 0.0
    %4299 = vmatprep.subr.mxu0 0.0
    %4300 = vmatpush1.xpose.msra.mxu0 0.0
    %4301 = vmatprep.subr.mxu0 0.0
    %4302 = vmatpush1.xpose.msra.mxu0 0.0
    %4303 = vmatprep.subr.mxu0 0.0
    %4304 = vmatpush1.xpose.msra.mxu0 0.0
    %4305 = vmatprep.subr.mxu0 0.0
    %4306 = vmatpush1.xpose.msra.mxu0 0.0
    %4307 = vmatprep.subr.mxu0 0.0
    %4308 = vmatpush1.xpose.msra.mxu0 0.0
    %4309 = vmatprep.subr.mxu0 0.0
    %4310 = vmatpush1.xpose.msra.mxu0 0.0
    %4311 = vmatprep.subr.mxu0 0.0
    %4312 = vmatpush1.xpose.msra.mxu0 0.0
    %4313 = vmatprep.subr.mxu0 0.0
    %4314 = vmatpush1.xpose.msra.mxu0 0.0
    %4315 = vmatprep.subr.mxu0 0.0
    %4316 = vmatpush1.xpose.msra.mxu0 0.0
    %4317 = vmatprep.subr.mxu0 0.0
    %4318 = vmatpush1.xpose.msra.mxu0 0.0
    %4319 = vmatprep.subr.mxu0 0.0
    %4320 = vmatpush1.xpose.msra.mxu0 0.0
    %4321 = vmatprep.subr.mxu0 0.0
    %4322 = vmatpush1.xpose.msra.mxu0 0.0
    %4323 = vmatprep.subr.mxu0 0.0
    %4324 = vmatpush1.xpose.msra.mxu0 0.0
    %4325 = vmatprep.subr.mxu0 0.0
    %4326 = vmatpush1.xpose.msra.mxu0 0.0
    %4327 = vmatprep.subr.mxu0 0.0
    %4328 = vmatpush1.xpose.msra.mxu0 0.0
    %4329 = vmatprep.mubr.f32.mxu0 0.0
    %4330 = vmatmul.mubr.f32.gmra.mrb[0].mxu0 %v4259
    %v4331 = vpop.f32.mrb[0].mxu0
    %v4332 = vadd.f32 %v3565, %v4331
    %v4333 = vpop.f32.mrb[0].mxu0
    %4334 = vdwg.mxu0
    %4335 = vrot.lane.b32.xlu0 %v3261, 120
    %v4336 = vpop.permute.xlu0 %4335
    %4337 = vrot.lane.b32.xlu0 %v3389, 120
    %v4338 = vpop.permute.xlu0 %4337
    %4339 = vrot.lane.b32.xlu0 %v3394, 120
    %v4340 = vpop.permute.xlu0 %4339
    %v4341 = vsel %vm273, %v4336, 0
    %v4343 = vsel %vm273, %v4338, 0
    %v4345 = vsel %vm273, %v4340, 0
    %4347 = vmatprep.subr.mxu0 0.0
    %4348 = vmatpush1.xpose.msra.mxu0 %v4343
    %4349 = vmatprep.subr.mxu0 0.0
    %4350 = vmatpush1.xpose.msra.mxu0 %v4345
    %4351 = vmatprep.subr.mxu0 0.0
    %4352 = vmatpush1.xpose.msra.mxu0 0.0
    %4353 = vmatprep.subr.mxu0 0.0
    %4354 = vmatpush1.xpose.msra.mxu0 0.0
    %4355 = vmatprep.subr.mxu0 0.0
    %4356 = vmatpush1.xpose.msra.mxu0 0.0
    %4357 = vmatprep.subr.mxu0 0.0
    %4358 = vmatpush1.xpose.msra.mxu0 0.0
    %4359 = vmatprep.subr.mxu0 0.0
    %4360 = vmatpush1.xpose.msra.mxu0 0.0
    %4361 = vmatprep.subr.mxu0 0.0
    %4362 = vmatpush1.xpose.msra.mxu0 0.0
    %4363 = vmatprep.subr.mxu0 0.0
    %4364 = vmatpush1.xpose.msra.mxu0 0.0
    %4365 = vmatprep.subr.mxu0 0.0
    %4366 = vmatpush1.xpose.msra.mxu0 0.0
    %4367 = vmatprep.subr.mxu0 0.0
    %4368 = vmatpush1.xpose.msra.mxu0 0.0
    %4369 = vmatprep.subr.mxu0 0.0
    %4370 = vmatpush1.xpose.msra.mxu0 0.0
    %4371 = vmatprep.subr.mxu0 0.0
    %4372 = vmatpush1.xpose.msra.mxu0 0.0
    %4373 = vmatprep.subr.mxu0 0.0
    %4374 = vmatpush1.xpose.msra.mxu0 0.0
    %4375 = vmatprep.subr.mxu0 0.0
    %4376 = vmatpush1.xpose.msra.mxu0 0.0
    %4377 = vmatprep.subr.mxu0 0.0
    %4378 = vmatpush1.xpose.msra.mxu0 0.0
    %4379 = vmatprep.subr.mxu0 0.0
    %4380 = vmatpush1.xpose.msra.mxu0 0.0
    %4381 = vmatprep.subr.mxu0 0.0
    %4382 = vmatpush1.xpose.msra.mxu0 0.0
    %4383 = vmatprep.subr.mxu0 0.0
    %4384 = vmatpush1.xpose.msra.mxu0 0.0
    %4385 = vmatprep.subr.mxu0 0.0
    %4386 = vmatpush1.xpose.msra.mxu0 0.0
    %4387 = vmatprep.subr.mxu0 0.0
    %4388 = vmatpush1.xpose.msra.mxu0 0.0
    %4389 = vmatprep.subr.mxu0 0.0
    %4390 = vmatpush1.xpose.msra.mxu0 0.0
    %4391 = vmatprep.subr.mxu0 0.0
    %4392 = vmatpush1.xpose.msra.mxu0 0.0
    %4393 = vmatprep.subr.mxu0 0.0
    %4394 = vmatpush1.xpose.msra.mxu0 0.0
    %4395 = vmatprep.subr.mxu0 0.0
    %4396 = vmatpush1.xpose.msra.mxu0 0.0
    %4397 = vmatprep.subr.mxu0 0.0
    %4398 = vmatpush1.xpose.msra.mxu0 0.0
    %4399 = vmatprep.subr.mxu0 0.0
    %4400 = vmatpush1.xpose.msra.mxu0 0.0
    %4401 = vmatprep.subr.mxu0 0.0
    %4402 = vmatpush1.xpose.msra.mxu0 0.0
    %4403 = vmatprep.subr.mxu0 0.0
    %4404 = vmatpush1.xpose.msra.mxu0 0.0
    %4405 = vmatprep.subr.mxu0 0.0
    %4406 = vmatpush1.xpose.msra.mxu0 0.0
    %4407 = vmatprep.subr.mxu0 0.0
    %4408 = vmatpush1.xpose.msra.mxu0 0.0
    %4409 = vmatprep.subr.mxu0 0.0
    %4410 = vmatpush1.xpose.msra.mxu0 0.0
    %4411 = vmatprep.mubr.f32.mxu0 0.0
    %4412 = vmatmul.mubr.f32.gmra.mrb[0].mxu0 %v4341
    %v4413 = vpop.f32.mrb[0].mxu0
    %v4414 = vadd.f32 %v3648, %v4413
    %v4415 = vpop.f32.mrb[0].mxu0
    %4416 = vdwg.mxu0
    %v4417 = vsel %vm2959, %v4168, -inf
    %4418 = vmax.xlane.f32.xlu0 %v4417
    %v4419 = vpop.xlane.xlu0 %4418
    %v4420 = vsel %vm2959, %v4250, -inf
    %4421 = vmax.xlane.f32.xlu0 %v4420
    %v4422 = vpop.xlane.xlu0 %4421
    %v4423 = vsel %vm2959, %v4332, -inf
    %4424 = vmax.xlane.f32.xlu0 %v4423
    %v4425 = vpop.xlane.xlu0 %4424
    %v4426 = vsel %vm2959, %v4414, -inf
    %4427 = vmax.xlane.f32.xlu0 %v4426
    %v4428 = vpop.xlane.xlu0 %4427
    %v4429 = vsub.f32 %v4168, %v4419
    %v4430 = vsub.f32 %v4250, %v4422
    %v4431 = vsub.f32 %v4332, %v4425
    %v4432 = vsub.f32 %v4414, %v4428
    %v4433 = vmul.f32 %v4429, 1.442695
    %v4434 = vpow.pop %v4433
    %v4435 = vmul.f32 %v4430, 1.442695
    %v4436 = vpow.pop %v4435
    %v4437 = vmul.f32 %v4431, 1.442695
    %v4438 = vpow.pop %v4437
    %v4439 = vmul.f32 %v4432, 1.442695
    %v4440 = vpow.pop %v4439
    %v4441 = vsel %vm2959, %v4434, 0.0
    %4442 = vadd.xlane.f32.xlu0 %v4441
    %v4443 = vpop.xlane.xlu0 %4442
    %v4444 = vsel %vm2959, %v4436, 0.0
    %4445 = vadd.xlane.f32.xlu0 %v4444
    %v4446 = vpop.xlane.xlu0 %4445
    %v4447 = vsel %vm2959, %v4438, 0.0
    %4448 = vadd.xlane.f32.xlu0 %v4447
    %v4449 = vpop.xlane.xlu0 %4448
    %v4450 = vsel %vm2959, %v4440, 0.0
    %4451 = vadd.xlane.f32.xlu0 %v4450
    %v4452 = vpop.xlane.xlu0 %4451
    %v4453 = vrcp.pop %v4443
    %v4454 = vmul.f32 %v4434, %v4453
    %v4455 = vrcp.pop %v4446
    %v4456 = vmul.f32 %v4436, %v4455
    %v4457 = vrcp.pop %v4449
    %v4458 = vmul.f32 %v4438, %v4457
    %v4459 = vrcp.pop %v4452
    %v4460 = vmul.f32 %v4440, %v4459
    %4461 = vrot.lane.b32.xlu0 %v3359, 88
    %v4462 = vpop.permute.xlu0 %4461
    %4463 = vrot.lane.b32.xlu0 %v3364, 88
    %v4464 = vpop.permute.xlu0 %4463
    %v4468 = vsel %vm2959, %v4454, 0
    %4470 = vmatprep.subr.mxu0 0.0
    %4471 = vmatpush1.msra.mxu0 %v4462
    %4472 = vmatprep.subr.mxu0 0.0
    %4473 = vmatpush1.msra.mxu0 %v4464
    %4474 = vmatprep.subr.mxu0 0.0
    %4475 = vmatpush1.msra.mxu0 0.0
    %4476 = vmatprep.subr.mxu0 0.0
    %4477 = vmatpush1.msra.mxu0 0.0
    %4478 = vmatprep.subr.mxu0 0.0
    %4479 = vmatpush1.msra.mxu0 0.0
    %4480 = vmatprep.subr.mxu0 0.0
    %4481 = vmatpush1.msra.mxu0 0.0
    %4482 = vmatprep.subr.mxu0 0.0
    %4483 = vmatpush1.msra.mxu0 0.0
    %4484 = vmatprep.subr.mxu0 0.0
    %4485 = vmatpush1.msra.mxu0 0.0
    %4486 = vmatprep.subr.mxu0 0.0
    %4487 = vmatpush1.msra.mxu0 0.0
    %4488 = vmatprep.subr.mxu0 0.0
    %4489 = vmatpush1.msra.mxu0 0.0
    %4490 = vmatprep.subr.mxu0 0.0
    %4491 = vmatpush1.msra.mxu0 0.0
    %4492 = vmatprep.subr.mxu0 0.0
    %4493 = vmatpush1.msra.mxu0 0.0
    %4494 = vmatprep.subr.mxu0 0.0
    %4495 = vmatpush1.msra.mxu0 0.0
    %4496 = vmatprep.subr.mxu0 0.0
    %4497 = vmatpush1.msra.mxu0 0.0
    %4498 = vmatprep.subr.mxu0 0.0
    %4499 = vmatpush1.msra.mxu0 0.0
    %4500 = vmatprep.subr.mxu0 0.0
    %4501 = vmatpush1.msra.mxu0 0.0
    %4502 = vmatprep.subr.mxu0 0.0
    %4503 = vmatpush1.msra.mxu0 0.0
    %4504 = vmatprep.subr.mxu0 0.0
    %4505 = vmatpush1.msra.mxu0 0.0
    %4506 = vmatprep.subr.mxu0 0.0
    %4507 = vmatpush1.msra.mxu0 0.0
    %4508 = vmatprep.subr.mxu0 0.0
    %4509 = vmatpush1.msra.mxu0 0.0
    %4510 = vmatprep.subr.mxu0 0.0
    %4511 = vmatpush1.msra.mxu0 0.0
    %4512 = vmatprep.subr.mxu0 0.0
    %4513 = vmatpush1.msra.mxu0 0.0
    %4514 = vmatprep.subr.mxu0 0.0
    %4515 = vmatpush1.msra.mxu0 0.0
    %4516 = vmatprep.subr.mxu0 0.0
    %4517 = vmatpush1.msra.mxu0 0.0
    %4518 = vmatprep.subr.mxu0 0.0
    %4519 = vmatpush1.msra.mxu0 0.0
    %4520 = vmatprep.subr.mxu0 0.0
    %4521 = vmatpush1.msra.mxu0 0.0
    %4522 = vmatprep.subr.mxu0 0.0
    %4523 = vmatpush1.msra.mxu0 0.0
    %4524 = vmatprep.subr.mxu0 0.0
    %4525 = vmatpush1.msra.mxu0 0.0
    %4526 = vmatprep.subr.mxu0 0.0
    %4527 = vmatpush1.msra.mxu0 0.0
    %4528 = vmatprep.subr.mxu0 0.0
    %4529 = vmatpush1.msra.mxu0 0.0
    %4530 = vmatprep.subr.mxu0 0.0
    %4531 = vmatpush1.msra.mxu0 0.0
    %4532 = vmatprep.subr.mxu0 0.0
    %4533 = vmatpush1.msra.mxu0 0.0
    %4534 = vmatprep.mubr.f32.mxu0 0.0
    %4535 = vmatmul.mubr.f32.gmra.mrb[0].mxu0 %v4468
    %v4536 = vpop.f32.mrb[0].mxu0
    %v4537 = vadd.f32 0.0, %v4536
    %v4538 = vpop.f32.mrb[0].mxu0
    %4539 = vdwg.mxu0
    %4540 = vrot.lane.b32.xlu0 %v3369, 88
    %v4541 = vpop.permute.xlu0 %4540
    %4542 = vrot.lane.b32.xlu0 %v3374, 88
    %v4543 = vpop.permute.xlu0 %4542
    %v4547 = vsel %vm2959, %v4456, 0
    %4549 = vmatprep.subr.mxu0 0.0
    %4550 = vmatpush1.msra.mxu0 %v4541
    %4551 = vmatprep.subr.mxu0 0.0
    %4552 = vmatpush1.msra.mxu0 %v4543
    %4553 = vmatprep.subr.mxu0 0.0
    %4554 = vmatpush1.msra.mxu0 0.0
    %4555 = vmatprep.subr.mxu0 0.0
    %4556 = vmatpush1.msra.mxu0 0.0
    %4557 = vmatprep.subr.mxu0 0.0
    %4558 = vmatpush1.msra.mxu0 0.0
    %4559 = vmatprep.subr.mxu0 0.0
    %4560 = vmatpush1.msra.mxu0 0.0
    %4561 = vmatprep.subr.mxu0 0.0
    %4562 = vmatpush1.msra.mxu0 0.0
    %4563 = vmatprep.subr.mxu0 0.0
    %4564 = vmatpush1.msra.mxu0 0.0
    %4565 = vmatprep.subr.mxu0 0.0
    %4566 = vmatpush1.msra.mxu0 0.0
    %4567 = vmatprep.subr.mxu0 0.0
    %4568 = vmatpush1.msra.mxu0 0.0
    %4569 = vmatprep.subr.mxu0 0.0
    %4570 = vmatpush1.msra.mxu0 0.0
    %4571 = vmatprep.subr.mxu0 0.0
    %4572 = vmatpush1.msra.mxu0 0.0
    %4573 = vmatprep.subr.mxu0 0.0
    %4574 = vmatpush1.msra.mxu0 0.0
    %4575 = vmatprep.subr.mxu0 0.0
    %4576 = vmatpush1.msra.mxu0 0.0
    %4577 = vmatprep.subr.mxu0 0.0
    %4578 = vmatpush1.msra.mxu0 0.0
    %4579 = vmatprep.subr.mxu0 0.0
    %4580 = vmatpush1.msra.mxu0 0.0
    %4581 = vmatprep.subr.mxu0 0.0
    %4582 = vmatpush1.msra.mxu0 0.0
    %4583 = vmatprep.subr.mxu0 0.0
    %4584 = vmatpush1.msra.mxu0 0.0
    %4585 = vmatprep.subr.mxu0 0.0
    %4586 = vmatpush1.msra.mxu0 0.0
    %4587 = vmatprep.subr.mxu0 0.0
    %4588 = vmatpush1.msra.mxu0 0.0
    %4589 = vmatprep.subr.mxu0 0.0
    %4590 = vmatpush1.msra.mxu0 0.0
    %4591 = vmatprep.subr.mxu0 0.0
    %4592 = vmatpush1.msra.mxu0 0.0
    %4593 = vmatprep.subr.mxu0 0.0
    %4594 = vmatpush1.msra.mxu0 0.0
    %4595 = vmatprep.subr.mxu0 0.0
    %4596 = vmatpush1.msra.mxu0 0.0
    %4597 = vmatprep.subr.mxu0 0.0
    %4598 = vmatpush1.msra.mxu0 0.0
    %4599 = vmatprep.subr.mxu0 0.0
    %4600 = vmatpush1.msra.mxu0 0.0
    %4601 = vmatprep.subr.mxu0 0.0
    %4602 = vmatpush1.msra.mxu0 0.0
    %4603 = vmatprep.subr.mxu0 0.0
    %4604 = vmatpush1.msra.mxu0 0.0
    %4605 = vmatprep.subr.mxu0 0.0
    %4606 = vmatpush1.msra.mxu0 0.0
    %4607 = vmatprep.subr.mxu0 0.0
    %4608 = vmatpush1.msra.mxu0 0.0
    %4609 = vmatprep.subr.mxu0 0.0
    %4610 = vmatpush1.msra.mxu0 0.0
    %4611 = vmatprep.subr.mxu0 0.0
    %4612 = vmatpush1.msra.mxu0 0.0
    %4613 = vmatprep.mubr.f32.mxu0 0.0
    %4614 = vmatmul.mubr.f32.gmra.mrb[0].mxu0 %v4547
    %v4615 = vpop.f32.mrb[0].mxu0
    %v4616 = vadd.f32 0.0, %v4615
    %v4617 = vpop.f32.mrb[0].mxu0
    %4618 = vdwg.mxu0
    %4619 = vrot.lane.b32.xlu0 %v3379, 88
    %v4620 = vpop.permute.xlu0 %4619
    %4621 = vrot.lane.b32.xlu0 %v3384, 88
    %v4622 = vpop.permute.xlu0 %4621
    %v4626 = vsel %vm2959, %v4458, 0
    %4628 = vmatprep.subr.mxu0 0.0
    %4629 = vmatpush1.msra.mxu0 %v4620
    %4630 = vmatprep.subr.mxu0 0.0
    %4631 = vmatpush1.msra.mxu0 %v4622
    %4632 = vmatprep.subr.mxu0 0.0
    %4633 = vmatpush1.msra.mxu0 0.0
    %4634 = vmatprep.subr.mxu0 0.0
    %4635 = vmatpush1.msra.mxu0 0.0
    %4636 = vmatprep.subr.mxu0 0.0
    %4637 = vmatpush1.msra.mxu0 0.0
    %4638 = vmatprep.subr.mxu0 0.0
    %4639 = vmatpush1.msra.mxu0 0.0
    %4640 = vmatprep.subr.mxu0 0.0
    %4641 = vmatpush1.msra.mxu0 0.0
    %4642 = vmatprep.subr.mxu0 0.0
    %4643 = vmatpush1.msra.mxu0 0.0
    %4644 = vmatprep.subr.mxu0 0.0
    %4645 = vmatpush1.msra.mxu0 0.0
    %4646 = vmatprep.subr.mxu0 0.0
    %4647 = vmatpush1.msra.mxu0 0.0
    %4648 = vmatprep.subr.mxu0 0.0
    %4649 = vmatpush1.msra.mxu0 0.0
    %4650 = vmatprep.subr.mxu0 0.0
    %4651 = vmatpush1.msra.mxu0 0.0
    %4652 = vmatprep.subr.mxu0 0.0
    %4653 = vmatpush1.msra.mxu0 0.0
    %4654 = vmatprep.subr.mxu0 0.0
    %4655 = vmatpush1.msra.mxu0 0.0
    %4656 = vmatprep.subr.mxu0 0.0
    %4657 = vmatpush1.msra.mxu0 0.0
    %4658 = vmatprep.subr.mxu0 0.0
    %4659 = vmatpush1.msra.mxu0 0.0
    %4660 = vmatprep.subr.mxu0 0.0
    %4661 = vmatpush1.msra.mxu0 0.0
    %4662 = vmatprep.subr.mxu0 0.0
    %4663 = vmatpush1.msra.mxu0 0.0
    %4664 = vmatprep.subr.mxu0 0.0
    %4665 = vmatpush1.msra.mxu0 0.0
    %4666 = vmatprep.subr.mxu0 0.0
    %4667 = vmatpush1.msra.mxu0 0.0
    %4668 = vmatprep.subr.mxu0 0.0
    %4669 = vmatpush1.msra.mxu0 0.0
    %4670 = vmatprep.subr.mxu0 0.0
    %4671 = vmatpush1.msra.mxu0 0.0
    %4672 = vmatprep.subr.mxu0 0.0
    %4673 = vmatpush1.msra.mxu0 0.0
    %4674 = vmatprep.subr.mxu0 0.0
    %4675 = vmatpush1.msra.mxu0 0.0
    %4676 = vmatprep.subr.mxu0 0.0
    %4677 = vmatpush1.msra.mxu0 0.0
    %4678 = vmatprep.subr.mxu0 0.0
    %4679 = vmatpush1.msra.mxu0 0.0
    %4680 = vmatprep.subr.mxu0 0.0
    %4681 = vmatpush1.msra.mxu0 0.0
    %4682 = vmatprep.subr.mxu0 0.0
    %4683 = vmatpush1.msra.mxu0 0.0
    %4684 = vmatprep.subr.mxu0 0.0
    %4685 = vmatpush1.msra.mxu0 0.0
    %4686 = vmatprep.subr.mxu0 0.0
    %4687 = vmatpush1.msra.mxu0 0.0
    %4688 = vmatprep.subr.mxu0 0.0
    %4689 = vmatpush1.msra.mxu0 0.0
    %4690 = vmatprep.subr.mxu0 0.0
    %4691 = vmatpush1.msra.mxu0 0.0
    %4692 = vmatprep.mubr.f32.mxu0 0.0
    %4693 = vmatmul.mubr.f32.gmra.mrb[0].mxu0 %v4626
    %v4694 = vpop.f32.mrb[0].mxu0
    %v4695 = vadd.f32 0.0, %v4694
    %v4696 = vpop.f32.mrb[0].mxu0
    %4697 = vdwg.mxu0
    %4698 = vrot.lane.b32.xlu0 %v3389, 88
    %v4699 = vpop.permute.xlu0 %4698
    %4700 = vrot.lane.b32.xlu0 %v3394, 88
    %v4701 = vpop.permute.xlu0 %4700
    %v4705 = vsel %vm2959, %v4460, 0
    %4707 = vmatprep.subr.mxu0 0.0
    %4708 = vmatpush1.msra.mxu0 %v4699
    %4709 = vmatprep.subr.mxu0 0.0
    %4710 = vmatpush1.msra.mxu0 %v4701
    %4711 = vmatprep.subr.mxu0 0.0
    %4712 = vmatpush1.msra.mxu0 0.0
    %4713 = vmatprep.subr.mxu0 0.0
    %4714 = vmatpush1.msra.mxu0 0.0
    %4715 = vmatprep.subr.mxu0 0.0
    %4716 = vmatpush1.msra.mxu0 0.0
    %4717 = vmatprep.subr.mxu0 0.0
    %4718 = vmatpush1.msra.mxu0 0.0
    %4719 = vmatprep.subr.mxu0 0.0
    %4720 = vmatpush1.msra.mxu0 0.0
    %4721 = vmatprep.subr.mxu0 0.0
    %4722 = vmatpush1.msra.mxu0 0.0
    %4723 = vmatprep.subr.mxu0 0.0
    %4724 = vmatpush1.msra.mxu0 0.0
    %4725 = vmatprep.subr.mxu0 0.0
    %4726 = vmatpush1.msra.mxu0 0.0
    %4727 = vmatprep.subr.mxu0 0.0
    %4728 = vmatpush1.msra.mxu0 0.0
    %4729 = vmatprep.subr.mxu0 0.0
    %4730 = vmatpush1.msra.mxu0 0.0
    %4731 = vmatprep.subr.mxu0 0.0
    %4732 = vmatpush1.msra.mxu0 0.0
    %4733 = vmatprep.subr.mxu0 0.0
    %4734 = vmatpush1.msra.mxu0 0.0
    %4735 = vmatprep.subr.mxu0 0.0
    %4736 = vmatpush1.msra.mxu0 0.0
    %4737 = vmatprep.subr.mxu0 0.0
    %4738 = vmatpush1.msra.mxu0 0.0
    %4739 = vmatprep.subr.mxu0 0.0
    %4740 = vmatpush1.msra.mxu0 0.0
    %4741 = vmatprep.subr.mxu0 0.0
    %4742 = vmatpush1.msra.mxu0 0.0
    %4743 = vmatprep.subr.mxu0 0.0
    %4744 = vmatpush1.msra.mxu0 0.0
    %4745 = vmatprep.subr.mxu0 0.0
    %4746 = vmatpush1.msra.mxu0 0.0
    %4747 = vmatprep.subr.mxu0 0.0
    %4748 = vmatpush1.msra.mxu0 0.0
    %4749 = vmatprep.subr.mxu0 0.0
    %4750 = vmatpush1.msra.mxu0 0.0
    %4751 = vmatprep.subr.mxu0 0.0
    %4752 = vmatpush1.msra.mxu0 0.0
    %4753 = vmatprep.subr.mxu0 0.0
    %4754 = vmatpush1.msra.mxu0 0.0
    %4755 = vmatprep.subr.mxu0 0.0
    %4756 = vmatpush1.msra.mxu0 0.0
    %4757 = vmatprep.subr.mxu0 0.0
    %4758 = vmatpush1.msra.mxu0 0.0
    %4759 = vmatprep.subr.mxu0 0.0
    %4760 = vmatpush1.msra.mxu0 0.0
    %4761 = vmatprep.subr.mxu0 0.0
    %4762 = vmatpush1.msra.mxu0 0.0
    %4763 = vmatprep.subr.mxu0 0.0
    %4764 = vmatpush1.msra.mxu0 0.0
    %4765 = vmatprep.subr.mxu0 0.0
    %4766 = vmatpush1.msra.mxu0 0.0
    %4767 = vmatprep.subr.mxu0 0.0
    %4768 = vmatpush1.msra.mxu0 0.0
    %4769 = vmatprep.subr.mxu0 0.0
    %4770 = vmatpush1.msra.mxu0 0.0
    %4771 = vmatprep.mubr.f32.mxu0 0.0
    %4772 = vmatmul.mubr.f32.gmra.mrb[0].mxu0 %v4705
    %v4773 = vpop.f32.mrb[0].mxu0
    %v4774 = vadd.f32 0.0, %v4773
    %v4775 = vpop.f32.mrb[0].mxu0
    %4776 = vdwg.mxu0
    %4777 = vrot.lane.b32.xlu0 %v3246, 112
    %v4778 = vpop.permute.xlu0 %4777
    %4779 = vrot.lane.b32.xlu0 %v3359, 112
    %v4780 = vpop.permute.xlu0 %4779
    %4781 = vrot.lane.b32.xlu0 %v3364, 112
    %v4782 = vpop.permute.xlu0 %4781
    %v4783 = vsel %vm273, %v4778, 0
    %v4785 = vsel %vm273, %v4780, 0
    %v4787 = vsel %vm273, %v4782, 0
    %4789 = vmatprep.subr.mxu0 0.0
    %4790 = vmatpush1.xpose.msra.mxu0 %v4785
    %4791 = vmatprep.subr.mxu0 0.0
    %4792 = vmatpush1.xpose.msra.mxu0 %v4787
    %4793 = vmatprep.subr.mxu0 0.0
    %4794 = vmatpush1.xpose.msra.mxu0 0.0
    %4795 = vmatprep.subr.mxu0 0.0
    %4796 = vmatpush1.xpose.msra.mxu0 0.0
    %4797 = vmatprep.subr.mxu0 0.0
    %4798 = vmatpush1.xpose.msra.mxu0 0.0
    %4799 = vmatprep.subr.mxu0 0.0
    %4800 = vmatpush1.xpose.msra.mxu0 0.0
    %4801 = vmatprep.subr.mxu0 0.0
    %4802 = vmatpush1.xpose.msra.mxu0 0.0
    %4803 = vmatprep.subr.mxu0 0.0
    %4804 = vmatpush1.xpose.msra.mxu0 0.0
    %4805 = vmatprep.subr.mxu0 0.0
    %4806 = vmatpush1.xpose.msra.mxu0 0.0
    %4807 = vmatprep.subr.mxu0 0.0
    %4808 = vmatpush1.xpose.msra.mxu0 0.0
    %4809 = vmatprep.subr.mxu0 0.0
    %4810 = vmatpush1.xpose.msra.mxu0 0.0
    %4811 = vmatprep.subr.mxu0 0.0
    %4812 = vmatpush1.xpose.msra.mxu0 0.0
    %4813 = vmatprep.subr.mxu0 0.0
    %4814 = vmatpush1.xpose.msra.mxu0 0.0
    %4815 = vmatprep.subr.mxu0 0.0
    %4816 = vmatpush1.xpose.msra.mxu0 0.0
    %4817 = vmatprep.subr.mxu0 0.0
    %4818 = vmatpush1.xpose.msra.mxu0 0.0
    %4819 = vmatprep.subr.mxu0 0.0
    %4820 = vmatpush1.xpose.msra.mxu0 0.0
    %4821 = vmatprep.subr.mxu0 0.0
    %4822 = vmatpush1.xpose.msra.mxu0 0.0
    %4823 = vmatprep.subr.mxu0 0.0
    %4824 = vmatpush1.xpose.msra.mxu0 0.0
    %4825 = vmatprep.subr.mxu0 0.0
    %4826 = vmatpush1.xpose.msra.mxu0 0.0
    %4827 = vmatprep.subr.mxu0 0.0
    %4828 = vmatpush1.xpose.msra.mxu0 0.0
    %4829 = vmatprep.subr.mxu0 0.0
    %4830 = vmatpush1.xpose.msra.mxu0 0.0
    %4831 = vmatprep.subr.mxu0 0.0
    %4832 = vmatpush1.xpose.msra.mxu0 0.0
    %4833 = vmatprep.subr.mxu0 0.0
    %4834 = vmatpush1.xpose.msra.mxu0 0.0
    %4835 = vmatprep.subr.mxu0 0.0
    %4836 = vmatpush1.xpose.msra.mxu0 0.0
    %4837 = vmatprep.subr.mxu0 0.0
    %4838 = vmatpush1.xpose.msra.mxu0 0.0
    %4839 = vmatprep.subr.mxu0 0.0
    %4840 = vmatpush1.xpose.msra.mxu0 0.0
    %4841 = vmatprep.subr.mxu0 0.0
    %4842 = vmatpush1.xpose.msra.mxu0 0.0
    %4843 = vmatprep.subr.mxu0 0.0
    %4844 = vmatpush1.xpose.msra.mxu0 0.0
    %4845 = vmatprep.subr.mxu0 0.0
    %4846 = vmatpush1.xpose.msra.mxu0 0.0
    %4847 = vmatprep.subr.mxu0 0.0
    %4848 = vmatpush1.xpose.msra.mxu0 0.0
    %4849 = vmatprep.subr.mxu0 0.0
    %4850 = vmatpush1.xpose.msra.mxu0 0.0
    %4851 = vmatprep.subr.mxu0 0.0
    %4852 = vmatpush1.xpose.msra.mxu0 0.0
    %4853 = vmatprep.mubr.f32.mxu0 0.0
    %4854 = vmatmul.mubr.f32.gmra.mrb[0].mxu0 %v4783
    %v4855 = vpop.f32.mrb[0].mxu0
    %v4856 = vadd.f32 %v3399, %v4855
    %v4857 = vpop.f32.mrb[0].mxu0
    %4858 = vdwg.mxu0
    %4859 = vrot.lane.b32.xlu0 %v3251, 112
    %v4860 = vpop.permute.xlu0 %4859
    %4861 = vrot.lane.b32.xlu0 %v3369, 112
    %v4862 = vpop.permute.xlu0 %4861
    %4863 = vrot.lane.b32.xlu0 %v3374, 112
    %v4864 = vpop.permute.xlu0 %4863
    %v4865 = vsel %vm273, %v4860, 0
    %v4867 = vsel %vm273, %v4862, 0
    %v4869 = vsel %vm273, %v4864, 0
    %4871 = vmatprep.subr.mxu0 0.0
    %4872 = vmatpush1.xpose.msra.mxu0 %v4867
    %4873 = vmatprep.subr.mxu0 0.0
    %4874 = vmatpush1.xpose.msra.mxu0 %v4869
    %4875 = vmatprep.subr.mxu0 0.0
    %4876 = vmatpush1.xpose.msra.mxu0 0.0
    %4877 = vmatprep.subr.mxu0 0.0
    %4878 = vmatpush1.xpose.msra.mxu0 0.0
    %4879 = vmatprep.subr.mxu0 0.0
    %4880 = vmatpush1.xpose.msra.mxu0 0.0
    %4881 = vmatprep.subr.mxu0 0.0
    %4882 = vmatpush1.xpose.msra.mxu0 0.0
    %4883 = vmatprep.subr.mxu0 0.0
    %4884 = vmatpush1.xpose.msra.mxu0 0.0
    %4885 = vmatprep.subr.mxu0 0.0
    %4886 = vmatpush1.xpose.msra.mxu0 0.0
    %4887 = vmatprep.subr.mxu0 0.0
    %4888 = vmatpush1.xpose.msra.mxu0 0.0
    %4889 = vmatprep.subr.mxu0 0.0
    %4890 = vmatpush1.xpose.msra.mxu0 0.0
    %4891 = vmatprep.subr.mxu0 0.0
    %4892 = vmatpush1.xpose.msra.mxu0 0.0
    %4893 = vmatprep.subr.mxu0 0.0
    %4894 = vmatpush1.xpose.msra.mxu0 0.0
    %4895 = vmatprep.subr.mxu0 0.0
    %4896 = vmatpush1.xpose.msra.mxu0 0.0
    %4897 = vmatprep.subr.mxu0 0.0
    %4898 = vmatpush1.xpose.msra.mxu0 0.0
    %4899 = vmatprep.subr.mxu0 0.0
    %4900 = vmatpush1.xpose.msra.mxu0 0.0
    %4901 = vmatprep.subr.mxu0 0.0
    %4902 = vmatpush1.xpose.msra.mxu0 0.0
    %4903 = vmatprep.subr.mxu0 0.0
    %4904 = vmatpush1.xpose.msra.mxu0 0.0
    %4905 = vmatprep.subr.mxu0 0.0
    %4906 = vmatpush1.xpose.msra.mxu0 0.0
    %4907 = vmatprep.subr.mxu0 0.0
    %4908 = vmatpush1.xpose.msra.mxu0 0.0
    %4909 = vmatprep.subr.mxu0 0.0
    %4910 = vmatpush1.xpose.msra.mxu0 0.0
    %4911 = vmatprep.subr.mxu0 0.0
    %4912 = vmatpush1.xpose.msra.mxu0 0.0
    %4913 = vmatprep.subr.mxu0 0.0
    %4914 = vmatpush1.xpose.msra.mxu0 0.0
    %4915 = vmatprep.subr.mxu0 0.0
    %4916 = vmatpush1.xpose.msra.mxu0 0.0
    %4917 = vmatprep.subr.mxu0 0.0
    %4918 = vmatpush1.xpose.msra.mxu0 0.0
    %4919 = vmatprep.subr.mxu0 0.0
    %4920 = vmatpush1.xpose.msra.mxu0 0.0
    %4921 = vmatprep.subr.mxu0 0.0
    %4922 = vmatpush1.xpose.msra.mxu0 0.0
    %4923 = vmatprep.subr.mxu0 0.0
    %4924 = vmatpush1.xpose.msra.mxu0 0.0
    %4925 = vmatprep.subr.mxu0 0.0
    %4926 = vmatpush1.xpose.msra.mxu0 0.0
    %4927 = vmatprep.subr.mxu0 0.0
    %4928 = vmatpush1.xpose.msra.mxu0 0.0
    %4929 = vmatprep.subr.mxu0 0.0
    %4930 = vmatpush1.xpose.msra.mxu0 0.0
    %4931 = vmatprep.subr.mxu0 0.0
    %4932 = vmatpush1.xpose.msra.mxu0 0.0
    %4933 = vmatprep.subr.mxu0 0.0
    %4934 = vmatpush1.xpose.msra.mxu0 0.0
    %4935 = vmatprep.mubr.f32.mxu0 0.0
    %4936 = vmatmul.mubr.f32.gmra.mrb[0].mxu0 %v4865
    %v4937 = vpop.f32.mrb[0].mxu0
    %v4938 = vadd.f32 %v3482, %v4937
    %v4939 = vpop.f32.mrb[0].mxu0
    %4940 = vdwg.mxu0
    %4941 = vrot.lane.b32.xlu0 %v3256, 112
    %v4942 = vpop.permute.xlu0 %4941
    %4943 = vrot.lane.b32.xlu0 %v3379, 112
    %v4944 = vpop.permute.xlu0 %4943
    %4945 = vrot.lane.b32.xlu0 %v3384, 112
    %v4946 = vpop.permute.xlu0 %4945
    %v4947 = vsel %vm273, %v4942, 0
    %v4949 = vsel %vm273, %v4944, 0
    %v4951 = vsel %vm273, %v4946, 0
    %4953 = vmatprep.subr.mxu0 0.0
    %4954 = vmatpush1.xpose.msra.mxu0 %v4949
    %4955 = vmatprep.subr.mxu0 0.0
    %4956 = vmatpush1.xpose.msra.mxu0 %v4951
    %4957 = vmatprep.subr.mxu0 0.0
    %4958 = vmatpush1.xpose.msra.mxu0 0.0
    %4959 = vmatprep.subr.mxu0 0.0
    %4960 = vmatpush1.xpose.msra.mxu0 0.0
    %4961 = vmatprep.subr.mxu0 0.0
    %4962 = vmatpush1.xpose.msra.mxu0 0.0
    %4963 = vmatprep.subr.mxu0 0.0
    %4964 = vmatpush1.xpose.msra.mxu0 0.0
    %4965 = vmatprep.subr.mxu0 0.0
    %4966 = vmatpush1.xpose.msra.mxu0 0.0
    %4967 = vmatprep.subr.mxu0 0.0
    %4968 = vmatpush1.xpose.msra.mxu0 0.0
    %4969 = vmatprep.subr.mxu0 0.0
    %4970 = vmatpush1.xpose.msra.mxu0 0.0
    %4971 = vmatprep.subr.mxu0 0.0
    %4972 = vmatpush1.xpose.msra.mxu0 0.0
    %4973 = vmatprep.subr.mxu0 0.0
    %4974 = vmatpush1.xpose.msra.mxu0 0.0
    %4975 = vmatprep.subr.mxu0 0.0
    %4976 = vmatpush1.xpose.msra.mxu0 0.0
    %4977 = vmatprep.subr.mxu0 0.0
    %4978 = vmatpush1.xpose.msra.mxu0 0.0
    %4979 = vmatprep.subr.mxu0 0.0
    %4980 = vmatpush1.xpose.msra.mxu0 0.0
    %4981 = vmatprep.subr.mxu0 0.0
    %4982 = vmatpush1.xpose.msra.mxu0 0.0
    %4983 = vmatprep.subr.mxu0 0.0
    %4984 = vmatpush1.xpose.msra.mxu0 0.0
    %4985 = vmatprep.subr.mxu0 0.0
    %4986 = vmatpush1.xpose.msra.mxu0 0.0
    %4987 = vmatprep.subr.mxu0 0.0
    %4988 = vmatpush1.xpose.msra.mxu0 0.0
    %4989 = vmatprep.subr.mxu0 0.0
    %4990 = vmatpush1.xpose.msra.mxu0 0.0
    %4991 = vmatprep.subr.mxu0 0.0
    %4992 = vmatpush1.xpose.msra.mxu0 0.0
    %4993 = vmatprep.subr.mxu0 0.0
    %4994 = vmatpush1.xpose.msra.mxu0 0.0
    %4995 = vmatprep.subr.mxu0 0.0
    %4996 = vmatpush1.xpose.msra.mxu0 0.0
    %4997 = vmatprep.subr.mxu0 0.0
    %4998 = vmatpush1.xpose.msra.mxu0 0.0
    %4999 = vmatprep.subr.mxu0 0.0
    %5000 = vmatpush1.xpose.msra.mxu0 0.0
    %5001 = vmatprep.subr.mxu0 0.0
    %5002 = vmatpush1.xpose.msra.mxu0 0.0
    %5003 = vmatprep.subr.mxu0 0.0
    %5004 = vmatpush1.xpose.msra.mxu0 0.0
    %5005 = vmatprep.subr.mxu0 0.0
    %5006 = vmatpush1.xpose.msra.mxu0 0.0
    %5007 = vmatprep.subr.mxu0 0.0
    %5008 = vmatpush1.xpose.msra.mxu0 0.0
    %5009 = vmatprep.subr.mxu0 0.0
    %5010 = vmatpush1.xpose.msra.mxu0 0.0
    %5011 = vmatprep.subr.mxu0 0.0
    %5012 = vmatpush1.xpose.msra.mxu0 0.0
    %5013 = vmatprep.subr.mxu0 0.0
    %5014 = vmatpush1.xpose.msra.mxu0 0.0
    %5015 = vmatprep.subr.mxu0 0.0
    %5016 = vmatpush1.xpose.msra.mxu0 0.0
    %5017 = vmatprep.mubr.f32.mxu0 0.0
    %5018 = vmatmul.mubr.f32.gmra.mrb[0].mxu0 %v4947
    %v5019 = vpop.f32.mrb[0].mxu0
    %v5020 = vadd.f32 %v3565, %v5019
    %v5021 = vpop.f32.mrb[0].mxu0
    %5022 = vdwg.mxu0
    %5023 = vrot.lane.b32.xlu0 %v3261, 112
    %v5024 = vpop.permute.xlu0 %5023
    %5025 = vrot.lane.b32.xlu0 %v3389, 112
    %v5026 = vpop.permute.xlu0 %5025
    %5027 = vrot.lane.b32.xlu0 %v3394, 112
    %v5028 = vpop.permute.xlu0 %5027
    %v5029 = vsel %vm273, %v5024, 0
    %v5031 = vsel %vm273, %v5026, 0
    %v5033 = vsel %vm273, %v5028, 0
    %5035 = vmatprep.subr.mxu0 0.0
    %5036 = vmatpush1.xpose.msra.mxu0 %v5031
    %5037 = vmatprep.subr.mxu0 0.0
    %5038 = vmatpush1.xpose.msra.mxu0 %v5033
    %5039 = vmatprep.subr.mxu0 0.0
    %5040 = vmatpush1.xpose.msra.mxu0 0.0
    %5041 = vmatprep.subr.mxu0 0.0
    %5042 = vmatpush1.xpose.msra.mxu0 0.0
    %5043 = vmatprep.subr.mxu0 0.0
    %5044 = vmatpush1.xpose.msra.mxu0 0.0
    %5045 = vmatprep.subr.mxu0 0.0
    %5046 = vmatpush1.xpose.msra.mxu0 0.0
    %5047 = vmatprep.subr.mxu0 0.0
    %5048 = vmatpush1.xpose.msra.mxu0 0.0
    %5049 = vmatprep.subr.mxu0 0.0
    %5050 = vmatpush1.xpose.msra.mxu0 0.0
    %5051 = vmatprep.subr.mxu0 0.0
    %5052 = vmatpush1.xpose.msra.mxu0 0.0
    %5053 = vmatprep.subr.mxu0 0.0
    %5054 = vmatpush1.xpose.msra.mxu0 0.0
    %5055 = vmatprep.subr.mxu0 0.0
    %5056 = vmatpush1.xpose.msra.mxu0 0.0
    %5057 = vmatprep.subr.mxu0 0.0
    %5058 = vmatpush1.xpose.msra.mxu0 0.0
    %5059 = vmatprep.subr.mxu0 0.0
    %5060 = vmatpush1.xpose.msra.mxu0 0.0
    %5061 = vmatprep.subr.mxu0 0.0
    %5062 = vmatpush1.xpose.msra.mxu0 0.0
    %5063 = vmatprep.subr.mxu0 0.0
    %5064 = vmatpush1.xpose.msra.mxu0 0.0
    %5065 = vmatprep.subr.mxu0 0.0
    %5066 = vmatpush1.xpose.msra.mxu0 0.0
    %5067 = vmatprep.subr.mxu0 0.0
    %5068 = vmatpush1.xpose.msra.mxu0 0.0
    %5069 = vmatprep.subr.mxu0 0.0
    %5070 = vmatpush1.xpose.msra.mxu0 0.0
    %5071 = vmatprep.subr.mxu0 0.0
    %5072 = vmatpush1.xpose.msra.mxu0 0.0
    %5073 = vmatprep.subr.mxu0 0.0
    %5074 = vmatpush1.xpose.msra.mxu0 0.0
    %5075 = vmatprep.subr.mxu0 0.0
    %5076 = vmatpush1.xpose.msra.mxu0 0.0
    %5077 = vmatprep.subr.mxu0 0.0
    %5078 = vmatpush1.xpose.msra.mxu0 0.0
    %5079 = vmatprep.subr.mxu0 0.0
    %5080 = vmatpush1.xpose.msra.mxu0 0.0
    %5081 = vmatprep.subr.mxu0 0.0
    %5082 = vmatpush1.xpose.msra.mxu0 0.0
    %5083 = vmatprep.subr.mxu0 0.0
    %5084 = vmatpush1.xpose.msra.mxu0 0.0
    %5085 = vmatprep.subr.mxu0 0.0
    %5086 = vmatpush1.xpose.msra.mxu0 0.0
    %5087 = vmatprep.subr.mxu0 0.0
    %5088 = vmatpush1.xpose.msra.mxu0 0.0
    %5089 = vmatprep.subr.mxu0 0.0
    %5090 = vmatpush1.xpose.msra.mxu0 0.0
    %5091 = vmatprep.subr.mxu0 0.0
    %5092 = vmatpush1.xpose.msra.mxu0 0.0
    %5093 = vmatprep.subr.mxu0 0.0
    %5094 = vmatpush1.xpose.msra.mxu0 0.0
    %5095 = vmatprep.subr.mxu0 0.0
    %5096 = vmatpush1.xpose.msra.mxu0 0.0
    %5097 = vmatprep.subr.mxu0 0.0
    %5098 = vmatpush1.xpose.msra.mxu0 0.0
    %5099 = vmatprep.mubr.f32.mxu0 0.0
    %5100 = vmatmul.mubr.f32.gmra.mrb[0].mxu0 %v5029
    %v5101 = vpop.f32.mrb[0].mxu0
    %v5102 = vadd.f32 %v3648, %v5101
    %v5103 = vpop.f32.mrb[0].mxu0
    %5104 = vdwg.mxu0
    %v5105 = vsel %vm2959, %v4856, -inf
    %5106 = vmax.xlane.f32.xlu0 %v5105
    %v5107 = vpop.xlane.xlu0 %5106
    %v5108 = vsel %vm2959, %v4938, -inf
    %5109 = vmax.xlane.f32.xlu0 %v5108
    %v5110 = vpop.xlane.xlu0 %5109
    %v5111 = vsel %vm2959, %v5020, -inf
    %5112 = vmax.xlane.f32.xlu0 %v5111
    %v5113 = vpop.xlane.xlu0 %5112
    %v5114 = vsel %vm2959, %v5102, -inf
    %5115 = vmax.xlane.f32.xlu0 %v5114
    %v5116 = vpop.xlane.xlu0 %5115
    %v5117 = vsub.f32 %v4856, %v5107
    %v5118 = vsub.f32 %v4938, %v5110
    %v5119 = vsub.f32 %v5020, %v5113
    %v5120 = vsub.f32 %v5102, %v5116
    %v5121 = vmul.f32 %v5117, 1.442695
    %v5122 = vpow.pop %v5121
    %v5123 = vmul.f32 %v5118, 1.442695
    %v5124 = vpow.pop %v5123
    %v5125 = vmul.f32 %v5119, 1.442695
    %v5126 = vpow.pop %v5125
    %v5127 = vmul.f32 %v5120, 1.442695
    %v5128 = vpow.pop %v5127
    %v5129 = vsel %vm2959, %v5122, 0.0
    %5130 = vadd.xlane.f32.xlu0 %v5129
    %v5131 = vpop.xlane.xlu0 %5130
    %v5132 = vsel %vm2959, %v5124, 0.0
    %5133 = vadd.xlane.f32.xlu0 %v5132
    %v5134 = vpop.xlane.xlu0 %5133
    %v5135 = vsel %vm2959, %v5126, 0.0
    %5136 = vadd.xlane.f32.xlu0 %v5135
    %v5137 = vpop.xlane.xlu0 %5136
    %v5138 = vsel %vm2959, %v5128, 0.0
    %5139 = vadd.xlane.f32.xlu0 %v5138
    %v5140 = vpop.xlane.xlu0 %5139
    %v5141 = vrcp.pop %v5131
    %v5142 = vmul.f32 %v5122, %v5141
    %v5143 = vrcp.pop %v5134
    %v5144 = vmul.f32 %v5124, %v5143
    %v5145 = vrcp.pop %v5137
    %v5146 = vmul.f32 %v5126, %v5145
    %v5147 = vrcp.pop %v5140
    %v5148 = vmul.f32 %v5128, %v5147
    %5149 = vrot.lane.b32.xlu0 %v3359, 80
    %v5150 = vpop.permute.xlu0 %5149
    %5151 = vrot.lane.b32.xlu0 %v3364, 80
    %v5152 = vpop.permute.xlu0 %5151
    %v5156 = vsel %vm2959, %v5142, 0
    %5158 = vmatprep.subr.mxu0 0.0
    %5159 = vmatpush1.msra.mxu0 %v5150
    %5160 = vmatprep.subr.mxu0 0.0
    %5161 = vmatpush1.msra.mxu0 %v5152
    %5162 = vmatprep.subr.mxu0 0.0
    %5163 = vmatpush1.msra.mxu0 0.0
    %5164 = vmatprep.subr.mxu0 0.0
    %5165 = vmatpush1.msra.mxu0 0.0
    %5166 = vmatprep.subr.mxu0 0.0
    %5167 = vmatpush1.msra.mxu0 0.0
    %5168 = vmatprep.subr.mxu0 0.0
    %5169 = vmatpush1.msra.mxu0 0.0
    %5170 = vmatprep.subr.mxu0 0.0
    %5171 = vmatpush1.msra.mxu0 0.0
    %5172 = vmatprep.subr.mxu0 0.0
    %5173 = vmatpush1.msra.mxu0 0.0
    %5174 = vmatprep.subr.mxu0 0.0
    %5175 = vmatpush1.msra.mxu0 0.0
    %5176 = vmatprep.subr.mxu0 0.0
    %5177 = vmatpush1.msra.mxu0 0.0
    %5178 = vmatprep.subr.mxu0 0.0
    %5179 = vmatpush1.msra.mxu0 0.0
    %5180 = vmatprep.subr.mxu0 0.0
    %5181 = vmatpush1.msra.mxu0 0.0
    %5182 = vmatprep.subr.mxu0 0.0
    %5183 = vmatpush1.msra.mxu0 0.0
    %5184 = vmatprep.subr.mxu0 0.0
    %5185 = vmatpush1.msra.mxu0 0.0
    %5186 = vmatprep.subr.mxu0 0.0
    %5187 = vmatpush1.msra.mxu0 0.0
    %5188 = vmatprep.subr.mxu0 0.0
    %5189 = vmatpush1.msra.mxu0 0.0
    %5190 = vmatprep.subr.mxu0 0.0
    %5191 = vmatpush1.msra.mxu0 0.0
    %5192 = vmatprep.subr.mxu0 0.0
    %5193 = vmatpush1.msra.mxu0 0.0
    %5194 = vmatprep.subr.mxu0 0.0
    %5195 = vmatpush1.msra.mxu0 0.0
    %5196 = vmatprep.subr.mxu0 0.0
    %5197 = vmatpush1.msra.mxu0 0.0
    %5198 = vmatprep.subr.mxu0 0.0
    %5199 = vmatpush1.msra.mxu0 0.0
    %5200 = vmatprep.subr.mxu0 0.0
    %5201 = vmatpush1.msra.mxu0 0.0
    %5202 = vmatprep.subr.mxu0 0.0
    %5203 = vmatpush1.msra.mxu0 0.0
    %5204 = vmatprep.subr.mxu0 0.0
    %5205 = vmatpush1.msra.mxu0 0.0
    %5206 = vmatprep.subr.mxu0 0.0
    %5207 = vmatpush1.msra.mxu0 0.0
    %5208 = vmatprep.subr.mxu0 0.0
    %5209 = vmatpush1.msra.mxu0 0.0
    %5210 = vmatprep.subr.mxu0 0.0
    %5211 = vmatpush1.msra.mxu0 0.0
    %5212 = vmatprep.subr.mxu0 0.0
    %5213 = vmatpush1.msra.mxu0 0.0
    %5214 = vmatprep.subr.mxu0 0.0
    %5215 = vmatpush1.msra.mxu0 0.0
    %5216 = vmatprep.subr.mxu0 0.0
    %5217 = vmatpush1.msra.mxu0 0.0
    %5218 = vmatprep.subr.mxu0 0.0
    %5219 = vmatpush1.msra.mxu0 0.0
    %5220 = vmatprep.subr.mxu0 0.0
    %5221 = vmatpush1.msra.mxu0 0.0
    %5222 = vmatprep.mubr.f32.mxu0 0.0
    %5223 = vmatmul.mubr.f32.gmra.mrb[0].mxu0 %v5156
    %v5224 = vpop.f32.mrb[0].mxu0
    %v5225 = vadd.f32 0.0, %v5224
    %v5226 = vpop.f32.mrb[0].mxu0
    %5227 = vdwg.mxu0
    %5228 = vrot.lane.b32.xlu0 %v3369, 80
    %v5229 = vpop.permute.xlu0 %5228
    %5230 = vrot.lane.b32.xlu0 %v3374, 80
    %v5231 = vpop.permute.xlu0 %5230
    %v5235 = vsel %vm2959, %v5144, 0
    %5237 = vmatprep.subr.mxu0 0.0
    %5238 = vmatpush1.msra.mxu0 %v5229
    %5239 = vmatprep.subr.mxu0 0.0
    %5240 = vmatpush1.msra.mxu0 %v5231
    %5241 = vmatprep.subr.mxu0 0.0
    %5242 = vmatpush1.msra.mxu0 0.0
    %5243 = vmatprep.subr.mxu0 0.0
    %5244 = vmatpush1.msra.mxu0 0.0
    %5245 = vmatprep.subr.mxu0 0.0
    %5246 = vmatpush1.msra.mxu0 0.0
    %5247 = vmatprep.subr.mxu0 0.0
    %5248 = vmatpush1.msra.mxu0 0.0
    %5249 = vmatprep.subr.mxu0 0.0
    %5250 = vmatpush1.msra.mxu0 0.0
    %5251 = vmatprep.subr.mxu0 0.0
    %5252 = vmatpush1.msra.mxu0 0.0
    %5253 = vmatprep.subr.mxu0 0.0
    %5254 = vmatpush1.msra.mxu0 0.0
    %5255 = vmatprep.subr.mxu0 0.0
    %5256 = vmatpush1.msra.mxu0 0.0
    %5257 = vmatprep.subr.mxu0 0.0
    %5258 = vmatpush1.msra.mxu0 0.0
    %5259 = vmatprep.subr.mxu0 0.0
    %5260 = vmatpush1.msra.mxu0 0.0
    %5261 = vmatprep.subr.mxu0 0.0
    %5262 = vmatpush1.msra.mxu0 0.0
    %5263 = vmatprep.subr.mxu0 0.0
    %5264 = vmatpush1.msra.mxu0 0.0
    %5265 = vmatprep.subr.mxu0 0.0
    %5266 = vmatpush1.msra.mxu0 0.0
    %5267 = vmatprep.subr.mxu0 0.0
    %5268 = vmatpush1.msra.mxu0 0.0
    %5269 = vmatprep.subr.mxu0 0.0
    %5270 = vmatpush1.msra.mxu0 0.0
    %5271 = vmatprep.subr.mxu0 0.0
    %5272 = vmatpush1.msra.mxu0 0.0
    %5273 = vmatprep.subr.mxu0 0.0
    %5274 = vmatpush1.msra.mxu0 0.0
    %5275 = vmatprep.subr.mxu0 0.0
    %5276 = vmatpush1.msra.mxu0 0.0
    %5277 = vmatprep.subr.mxu0 0.0
    %5278 = vmatpush1.msra.mxu0 0.0
    %5279 = vmatprep.subr.mxu0 0.0
    %5280 = vmatpush1.msra.mxu0 0.0
    %5281 = vmatprep.subr.mxu0 0.0
    %5282 = vmatpush1.msra.mxu0 0.0
    %5283 = vmatprep.subr.mxu0 0.0
    %5284 = vmatpush1.msra.mxu0 0.0
    %5285 = vmatprep.subr.mxu0 0.0
    %5286 = vmatpush1.msra.mxu0 0.0
    %5287 = vmatprep.subr.mxu0 0.0
    %5288 = vmatpush1.msra.mxu0 0.0
    %5289 = vmatprep.subr.mxu0 0.0
    %5290 = vmatpush1.msra.mxu0 0.0
    %5291 = vmatprep.subr.mxu0 0.0
    %5292 = vmatpush1.msra.mxu0 0.0
    %5293 = vmatprep.subr.mxu0 0.0
    %5294 = vmatpush1.msra.mxu0 0.0
    %5295 = vmatprep.subr.mxu0 0.0
    %5296 = vmatpush1.msra.mxu0 0.0
    %5297 = vmatprep.subr.mxu0 0.0
    %5298 = vmatpush1.msra.mxu0 0.0
    %5299 = vmatprep.subr.mxu0 0.0
    %5300 = vmatpush1.msra.mxu0 0.0
    %5301 = vmatprep.mubr.f32.mxu0 0.0
    %5302 = vmatmul.mubr.f32.gmra.mrb[0].mxu0 %v5235
    %v5303 = vpop.f32.mrb[0].mxu0
    %v5304 = vadd.f32 0.0, %v5303
    %v5305 = vpop.f32.mrb[0].mxu0
    %5306 = vdwg.mxu0
    %5307 = vrot.lane.b32.xlu0 %v3379, 80
    %v5308 = vpop.permute.xlu0 %5307
    %5309 = vrot.lane.b32.xlu0 %v3384, 80
    %v5310 = vpop.permute.xlu0 %5309
    %v5314 = vsel %vm2959, %v5146, 0
    %5316 = vmatprep.subr.mxu0 0.0
    %5317 = vmatpush1.msra.mxu0 %v5308
    %5318 = vmatprep.subr.mxu0 0.0
    %5319 = vmatpush1.msra.mxu0 %v5310
    %5320 = vmatprep.subr.mxu0 0.0
    %5321 = vmatpush1.msra.mxu0 0.0
    %5322 = vmatprep.subr.mxu0 0.0
    %5323 = vmatpush1.msra.mxu0 0.0
    %5324 = vmatprep.subr.mxu0 0.0
    %5325 = vmatpush1.msra.mxu0 0.0
    %5326 = vmatprep.subr.mxu0 0.0
    %5327 = vmatpush1.msra.mxu0 0.0
    %5328 = vmatprep.subr.mxu0 0.0
    %5329 = vmatpush1.msra.mxu0 0.0
    %5330 = vmatprep.subr.mxu0 0.0
    %5331 = vmatpush1.msra.mxu0 0.0
    %5332 = vmatprep.subr.mxu0 0.0
    %5333 = vmatpush1.msra.mxu0 0.0
    %5334 = vmatprep.subr.mxu0 0.0
    %5335 = vmatpush1.msra.mxu0 0.0
    %5336 = vmatprep.subr.mxu0 0.0
    %5337 = vmatpush1.msra.mxu0 0.0
    %5338 = vmatprep.subr.mxu0 0.0
    %5339 = vmatpush1.msra.mxu0 0.0
    %5340 = vmatprep.subr.mxu0 0.0
    %5341 = vmatpush1.msra.mxu0 0.0
    %5342 = vmatprep.subr.mxu0 0.0
    %5343 = vmatpush1.msra.mxu0 0.0
    %5344 = vmatprep.subr.mxu0 0.0
    %5345 = vmatpush1.msra.mxu0 0.0
    %5346 = vmatprep.subr.mxu0 0.0
    %5347 = vmatpush1.msra.mxu0 0.0
    %5348 = vmatprep.subr.mxu0 0.0
    %5349 = vmatpush1.msra.mxu0 0.0
    %5350 = vmatprep.subr.mxu0 0.0
    %5351 = vmatpush1.msra.mxu0 0.0
    %5352 = vmatprep.subr.mxu0 0.0
    %5353 = vmatpush1.msra.mxu0 0.0
    %5354 = vmatprep.subr.mxu0 0.0
    %5355 = vmatpush1.msra.mxu0 0.0
    %5356 = vmatprep.subr.mxu0 0.0
    %5357 = vmatpush1.msra.mxu0 0.0
    %5358 = vmatprep.subr.mxu0 0.0
    %5359 = vmatpush1.msra.mxu0 0.0
    %5360 = vmatprep.subr.mxu0 0.0
    %5361 = vmatpush1.msra.mxu0 0.0
    %5362 = vmatprep.subr.mxu0 0.0
    %5363 = vmatpush1.msra.mxu0 0.0
    %5364 = vmatprep.subr.mxu0 0.0
    %5365 = vmatpush1.msra.mxu0 0.0
    %5366 = vmatprep.subr.mxu0 0.0
    %5367 = vmatpush1.msra.mxu0 0.0
    %5368 = vmatprep.subr.mxu0 0.0
    %5369 = vmatpush1.msra.mxu0 0.0
    %5370 = vmatprep.subr.mxu0 0.0
    %5371 = vmatpush1.msra.mxu0 0.0
    %5372 = vmatprep.subr.mxu0 0.0
    %5373 = vmatpush1.msra.mxu0 0.0
    %5374 = vmatprep.subr.mxu0 0.0
    %5375 = vmatpush1.msra.mxu0 0.0
    %5376 = vmatprep.subr.mxu0 0.0
    %5377 = vmatpush1.msra.mxu0 0.0
    %5378 = vmatprep.subr.mxu0 0.0
    %5379 = vmatpush1.msra.mxu0 0.0
    %5380 = vmatprep.mubr.f32.mxu0 0.0
    %5381 = vmatmul.mubr.f32.gmra.mrb[0].mxu0 %v5314
    %v5382 = vpop.f32.mrb[0].mxu0
    %v5383 = vadd.f32 0.0, %v5382
    %v5384 = vpop.f32.mrb[0].mxu0
    %5385 = vdwg.mxu0
    %5386 = vrot.lane.b32.xlu0 %v3389, 80
    %v5387 = vpop.permute.xlu0 %5386
    %5388 = vrot.lane.b32.xlu0 %v3394, 80
    %v5389 = vpop.permute.xlu0 %5388
    %v5393 = vsel %vm2959, %v5148, 0
    %5395 = vmatprep.subr.mxu0 0.0
    %5396 = vmatpush1.msra.mxu0 %v5387
    %5397 = vmatprep.subr.mxu0 0.0
    %5398 = vmatpush1.msra.mxu0 %v5389
    %5399 = vmatprep.subr.mxu0 0.0
    %5400 = vmatpush1.msra.mxu0 0.0
    %5401 = vmatprep.subr.mxu0 0.0
    %5402 = vmatpush1.msra.mxu0 0.0
    %5403 = vmatprep.subr.mxu0 0.0
    %5404 = vmatpush1.msra.mxu0 0.0
    %5405 = vmatprep.subr.mxu0 0.0
    %5406 = vmatpush1.msra.mxu0 0.0
    %5407 = vmatprep.subr.mxu0 0.0
    %5408 = vmatpush1.msra.mxu0 0.0
    %5409 = vmatprep.subr.mxu0 0.0
    %5410 = vmatpush1.msra.mxu0 0.0
    %5411 = vmatprep.subr.mxu0 0.0
    %5412 = vmatpush1.msra.mxu0 0.0
    %5413 = vmatprep.subr.mxu0 0.0
    %5414 = vmatpush1.msra.mxu0 0.0
    %5415 = vmatprep.subr.mxu0 0.0
    %5416 = vmatpush1.msra.mxu0 0.0
    %5417 = vmatprep.subr.mxu0 0.0
    %5418 = vmatpush1.msra.mxu0 0.0
    %5419 = vmatprep.subr.mxu0 0.0
    %5420 = vmatpush1.msra.mxu0 0.0
    %5421 = vmatprep.subr.mxu0 0.0
    %5422 = vmatpush1.msra.mxu0 0.0
    %5423 = vmatprep.subr.mxu0 0.0
    %5424 = vmatpush1.msra.mxu0 0.0
    %5425 = vmatprep.subr.mxu0 0.0
    %5426 = vmatpush1.msra.mxu0 0.0
    %5427 = vmatprep.subr.mxu0 0.0
    %5428 = vmatpush1.msra.mxu0 0.0
    %5429 = vmatprep.subr.mxu0 0.0
    %5430 = vmatpush1.msra.mxu0 0.0
    %5431 = vmatprep.subr.mxu0 0.0
    %5432 = vmatpush1.msra.mxu0 0.0
    %5433 = vmatprep.subr.mxu0 0.0
    %5434 = vmatpush1.msra.mxu0 0.0
    %5435 = vmatprep.subr.mxu0 0.0
    %5436 = vmatpush1.msra.mxu0 0.0
    %5437 = vmatprep.subr.mxu0 0.0
    %5438 = vmatpush1.msra.mxu0 0.0
    %5439 = vmatprep.subr.mxu0 0.0
    %5440 = vmatpush1.msra.mxu0 0.0
    %5441 = vmatprep.subr.mxu0 0.0
    %5442 = vmatpush1.msra.mxu0 0.0
    %5443 = vmatprep.subr.mxu0 0.0
    %5444 = vmatpush1.msra.mxu0 0.0
    %5445 = vmatprep.subr.mxu0 0.0
    %5446 = vmatpush1.msra.mxu0 0.0
    %5447 = vmatprep.subr.mxu0 0.0
    %5448 = vmatpush1.msra.mxu0 0.0
    %5449 = vmatprep.subr.mxu0 0.0
    %5450 = vmatpush1.msra.mxu0 0.0
    %5451 = vmatprep.subr.mxu0 0.0
    %5452 = vmatpush1.msra.mxu0 0.0
    %5453 = vmatprep.subr.mxu0 0.0
    %5454 = vmatpush1.msra.mxu0 0.0
    %5455 = vmatprep.subr.mxu0 0.0
    %5456 = vmatpush1.msra.mxu0 0.0
    %5457 = vmatprep.subr.mxu0 0.0
    %5458 = vmatpush1.msra.mxu0 0.0
    %5459 = vmatprep.mubr.f32.mxu0 0.0
    %5460 = vmatmul.mubr.f32.gmra.mrb[0].mxu0 %v5393
    %v5461 = vpop.f32.mrb[0].mxu0
    %v5462 = vadd.f32 0.0, %v5461
    %v5463 = vpop.f32.mrb[0].mxu0
    %5464 = vdwg.mxu0
    %5465 = vrot.lane.b32.xlu0 %v3246, 104
    %v5466 = vpop.permute.xlu0 %5465
    %5467 = vrot.lane.b32.xlu0 %v3359, 104
    %v5468 = vpop.permute.xlu0 %5467
    %5469 = vrot.lane.b32.xlu0 %v3364, 104
    %v5470 = vpop.permute.xlu0 %5469
    %v5471 = vsel %vm273, %v5466, 0
    %v5473 = vsel %vm273, %v5468, 0
    %v5475 = vsel %vm273, %v5470, 0
    %5477 = vmatprep.subr.mxu0 0.0
    %5478 = vmatpush1.xpose.msra.mxu0 %v5473
    %5479 = vmatprep.subr.mxu0 0.0
    %5480 = vmatpush1.xpose.msra.mxu0 %v5475
    %5481 = vmatprep.subr.mxu0 0.0
    %5482 = vmatpush1.xpose.msra.mxu0 0.0
    %5483 = vmatprep.subr.mxu0 0.0
    %5484 = vmatpush1.xpose.msra.mxu0 0.0
    %5485 = vmatprep.subr.mxu0 0.0
    %5486 = vmatpush1.xpose.msra.mxu0 0.0
    %5487 = vmatprep.subr.mxu0 0.0
    %5488 = vmatpush1.xpose.msra.mxu0 0.0
    %5489 = vmatprep.subr.mxu0 0.0
    %5490 = vmatpush1.xpose.msra.mxu0 0.0
    %5491 = vmatprep.subr.mxu0 0.0
    %5492 = vmatpush1.xpose.msra.mxu0 0.0
    %5493 = vmatprep.subr.mxu0 0.0
    %5494 = vmatpush1.xpose.msra.mxu0 0.0
    %5495 = vmatprep.subr.mxu0 0.0
    %5496 = vmatpush1.xpose.msra.mxu0 0.0
    %5497 = vmatprep.subr.mxu0 0.0
    %5498 = vmatpush1.xpose.msra.mxu0 0.0
    %5499 = vmatprep.subr.mxu0 0.0
    %5500 = vmatpush1.xpose.msra.mxu0 0.0
    %5501 = vmatprep.subr.mxu0 0.0
    %5502 = vmatpush1.xpose.msra.mxu0 0.0
    %5503 = vmatprep.subr.mxu0 0.0
    %5504 = vmatpush1.xpose.msra.mxu0 0.0
    %5505 = vmatprep.subr.mxu0 0.0
    %5506 = vmatpush1.xpose.msra.mxu0 0.0
    %5507 = vmatprep.subr.mxu0 0.0
    %5508 = vmatpush1.xpose.msra.mxu0 0.0
    %5509 = vmatprep.subr.mxu0 0.0
    %5510 = vmatpush1.xpose.msra.mxu0 0.0
    %5511 = vmatprep.subr.mxu0 0.0
    %5512 = vmatpush1.xpose.msra.mxu0 0.0
    %5513 = vmatprep.subr.mxu0 0.0
    %5514 = vmatpush1.xpose.msra.mxu0 0.0
    %5515 = vmatprep.subr.mxu0 0.0
    %5516 = vmatpush1.xpose.msra.mxu0 0.0
    %5517 = vmatprep.subr.mxu0 0.0
    %5518 = vmatpush1.xpose.msra.mxu0 0.0
    %5519 = vmatprep.subr.mxu0 0.0
    %5520 = vmatpush1.xpose.msra.mxu0 0.0
    %5521 = vmatprep.subr.mxu0 0.0
    %5522 = vmatpush1.xpose.msra.mxu0 0.0
    %5523 = vmatprep.subr.mxu0 0.0
    %5524 = vmatpush1.xpose.msra.mxu0 0.0
    %5525 = vmatprep.subr.mxu0 0.0
    %5526 = vmatpush1.xpose.msra.mxu0 0.0
    %5527 = vmatprep.subr.mxu0 0.0
    %5528 = vmatpush1.xpose.msra.mxu0 0.0
    %5529 = vmatprep.subr.mxu0 0.0
    %5530 = vmatpush1.xpose.msra.mxu0 0.0
    %5531 = vmatprep.subr.mxu0 0.0
    %5532 = vmatpush1.xpose.msra.mxu0 0.0
    %5533 = vmatprep.subr.mxu0 0.0
    %5534 = vmatpush1.xpose.msra.mxu0 0.0
    %5535 = vmatprep.subr.mxu0 0.0
    %5536 = vmatpush1.xpose.msra.mxu0 0.0
    %5537 = vmatprep.subr.mxu0 0.0
    %5538 = vmatpush1.xpose.msra.mxu0 0.0
    %5539 = vmatprep.subr.mxu0 0.0
    %5540 = vmatpush1.xpose.msra.mxu0 0.0
    %5541 = vmatprep.mubr.f32.mxu0 0.0
    %5542 = vmatmul.mubr.f32.gmra.mrb[0].mxu0 %v5471
    %v5543 = vpop.f32.mrb[0].mxu0
    %v5544 = vadd.f32 %v3399, %v5543
    %v5545 = vpop.f32.mrb[0].mxu0
    %5546 = vdwg.mxu0
    %5547 = vrot.lane.b32.xlu0 %v3251, 104
    %v5548 = vpop.permute.xlu0 %5547
    %5549 = vrot.lane.b32.xlu0 %v3369, 104
    %v5550 = vpop.permute.xlu0 %5549
    %5551 = vrot.lane.b32.xlu0 %v3374, 104
    %v5552 = vpop.permute.xlu0 %5551
    %v5553 = vsel %vm273, %v5548, 0
    %v5555 = vsel %vm273, %v5550, 0
    %v5557 = vsel %vm273, %v5552, 0
    %5559 = vmatprep.subr.mxu0 0.0
    %5560 = vmatpush1.xpose.msra.mxu0 %v5555
    %5561 = vmatprep.subr.mxu0 0.0
    %5562 = vmatpush1.xpose.msra.mxu0 %v5557
    %5563 = vmatprep.subr.mxu0 0.0
    %5564 = vmatpush1.xpose.msra.mxu0 0.0
    %5565 = vmatprep.subr.mxu0 0.0
    %5566 = vmatpush1.xpose.msra.mxu0 0.0
    %5567 = vmatprep.subr.mxu0 0.0
    %5568 = vmatpush1.xpose.msra.mxu0 0.0
    %5569 = vmatprep.subr.mxu0 0.0
    %5570 = vmatpush1.xpose.msra.mxu0 0.0
    %5571 = vmatprep.subr.mxu0 0.0
    %5572 = vmatpush1.xpose.msra.mxu0 0.0
    %5573 = vmatprep.subr.mxu0 0.0
    %5574 = vmatpush1.xpose.msra.mxu0 0.0
    %5575 = vmatprep.subr.mxu0 0.0
    %5576 = vmatpush1.xpose.msra.mxu0 0.0
    %5577 = vmatprep.subr.mxu0 0.0
    %5578 = vmatpush1.xpose.msra.mxu0 0.0
    %5579 = vmatprep.subr.mxu0 0.0
    %5580 = vmatpush1.xpose.msra.mxu0 0.0
    %5581 = vmatprep.subr.mxu0 0.0
    %5582 = vmatpush1.xpose.msra.mxu0 0.0
    %5583 = vmatprep.subr.mxu0 0.0
    %5584 = vmatpush1.xpose.msra.mxu0 0.0
    %5585 = vmatprep.subr.mxu0 0.0
    %5586 = vmatpush1.xpose.msra.mxu0 0.0
    %5587 = vmatprep.subr.mxu0 0.0
    %5588 = vmatpush1.xpose.msra.mxu0 0.0
    %5589 = vmatprep.subr.mxu0 0.0
    %5590 = vmatpush1.xpose.msra.mxu0 0.0
    %5591 = vmatprep.subr.mxu0 0.0
    %5592 = vmatpush1.xpose.msra.mxu0 0.0
    %5593 = vmatprep.subr.mxu0 0.0
    %5594 = vmatpush1.xpose.msra.mxu0 0.0
    %5595 = vmatprep.subr.mxu0 0.0
    %5596 = vmatpush1.xpose.msra.mxu0 0.0
    %5597 = vmatprep.subr.mxu0 0.0
    %5598 = vmatpush1.xpose.msra.mxu0 0.0
    %5599 = vmatprep.subr.mxu0 0.0
    %5600 = vmatpush1.xpose.msra.mxu0 0.0
    %5601 = vmatprep.subr.mxu0 0.0
    %5602 = vmatpush1.xpose.msra.mxu0 0.0
    %5603 = vmatprep.subr.mxu0 0.0
    %5604 = vmatpush1.xpose.msra.mxu0 0.0
    %5605 = vmatprep.subr.mxu0 0.0
    %5606 = vmatpush1.xpose.msra.mxu0 0.0
    %5607 = vmatprep.subr.mxu0 0.0
    %5608 = vmatpush1.xpose.msra.mxu0 0.0
    %5609 = vmatprep.subr.mxu0 0.0
    %5610 = vmatpush1.xpose.msra.mxu0 0.0
    %5611 = vmatprep.subr.mxu0 0.0
    %5612 = vmatpush1.xpose.msra.mxu0 0.0
    %5613 = vmatprep.subr.mxu0 0.0
    %5614 = vmatpush1.xpose.msra.mxu0 0.0
    %5615 = vmatprep.subr.mxu0 0.0
    %5616 = vmatpush1.xpose.msra.mxu0 0.0
    %5617 = vmatprep.subr.mxu0 0.0
    %5618 = vmatpush1.xpose.msra.mxu0 0.0
    %5619 = vmatprep.subr.mxu0 0.0
    %5620 = vmatpush1.xpose.msra.mxu0 0.0
    %5621 = vmatprep.subr.mxu0 0.0
    %5622 = vmatpush1.xpose.msra.mxu0 0.0
    %5623 = vmatprep.mubr.f32.mxu0 0.0
    %5624 = vmatmul.mubr.f32.gmra.mrb[0].mxu0 %v5553
    %v5625 = vpop.f32.mrb[0].mxu0
    %v5626 = vadd.f32 %v3482, %v5625
    %v5627 = vpop.f32.mrb[0].mxu0
    %5628 = vdwg.mxu0
    %5629 = vrot.lane.b32.xlu0 %v3256, 104
    %v5630 = vpop.permute.xlu0 %5629
    %5631 = vrot.lane.b32.xlu0 %v3379, 104
    %v5632 = vpop.permute.xlu0 %5631
    %5633 = vrot.lane.b32.xlu0 %v3384, 104
    %v5634 = vpop.permute.xlu0 %5633
    %v5635 = vsel %vm273, %v5630, 0
    %v5637 = vsel %vm273, %v5632, 0
    %v5639 = vsel %vm273, %v5634, 0
    %5641 = vmatprep.subr.mxu0 0.0
    %5642 = vmatpush1.xpose.msra.mxu0 %v5637
    %5643 = vmatprep.subr.mxu0 0.0
    %5644 = vmatpush1.xpose.msra.mxu0 %v5639
    %5645 = vmatprep.subr.mxu0 0.0
    %5646 = vmatpush1.xpose.msra.mxu0 0.0
    %5647 = vmatprep.subr.mxu0 0.0
    %5648 = vmatpush1.xpose.msra.mxu0 0.0
    %5649 = vmatprep.subr.mxu0 0.0
    %5650 = vmatpush1.xpose.msra.mxu0 0.0
    %5651 = vmatprep.subr.mxu0 0.0
    %5652 = vmatpush1.xpose.msra.mxu0 0.0
    %5653 = vmatprep.subr.mxu0 0.0
    %5654 = vmatpush1.xpose.msra.mxu0 0.0
    %5655 = vmatprep.subr.mxu0 0.0
    %5656 = vmatpush1.xpose.msra.mxu0 0.0
    %5657 = vmatprep.subr.mxu0 0.0
    %5658 = vmatpush1.xpose.msra.mxu0 0.0
    %5659 = vmatprep.subr.mxu0 0.0
    %5660 = vmatpush1.xpose.msra.mxu0 0.0
    %5661 = vmatprep.subr.mxu0 0.0
    %5662 = vmatpush1.xpose.msra.mxu0 0.0
    %5663 = vmatprep.subr.mxu0 0.0
    %5664 = vmatpush1.xpose.msra.mxu0 0.0
    %5665 = vmatprep.subr.mxu0 0.0
    %5666 = vmatpush1.xpose.msra.mxu0 0.0
    %5667 = vmatprep.subr.mxu0 0.0
    %5668 = vmatpush1.xpose.msra.mxu0 0.0
    %5669 = vmatprep.subr.mxu0 0.0
    %5670 = vmatpush1.xpose.msra.mxu0 0.0
    %5671 = vmatprep.subr.mxu0 0.0
    %5672 = vmatpush1.xpose.msra.mxu0 0.0
    %5673 = vmatprep.subr.mxu0 0.0
    %5674 = vmatpush1.xpose.msra.mxu0 0.0
    %5675 = vmatprep.subr.mxu0 0.0
    %5676 = vmatpush1.xpose.msra.mxu0 0.0
    %5677 = vmatprep.subr.mxu0 0.0
    %5678 = vmatpush1.xpose.msra.mxu0 0.0
    %5679 = vmatprep.subr.mxu0 0.0
    %5680 = vmatpush1.xpose.msra.mxu0 0.0
    %5681 = vmatprep.subr.mxu0 0.0
    %5682 = vmatpush1.xpose.msra.mxu0 0.0
    %5683 = vmatprep.subr.mxu0 0.0
    %5684 = vmatpush1.xpose.msra.mxu0 0.0
    %5685 = vmatprep.subr.mxu0 0.0
    %5686 = vmatpush1.xpose.msra.mxu0 0.0
    %5687 = vmatprep.subr.mxu0 0.0
    %5688 = vmatpush1.xpose.msra.mxu0 0.0
    %5689 = vmatprep.subr.mxu0 0.0
    %5690 = vmatpush1.xpose.msra.mxu0 0.0
    %5691 = vmatprep.subr.mxu0 0.0
    %5692 = vmatpush1.xpose.msra.mxu0 0.0
    %5693 = vmatprep.subr.mxu0 0.0
    %5694 = vmatpush1.xpose.msra.mxu0 0.0
    %5695 = vmatprep.subr.mxu0 0.0
    %5696 = vmatpush1.xpose.msra.mxu0 0.0
    %5697 = vmatprep.subr.mxu0 0.0
    %5698 = vmatpush1.xpose.msra.mxu0 0.0
    %5699 = vmatprep.subr.mxu0 0.0
    %5700 = vmatpush1.xpose.msra.mxu0 0.0
    %5701 = vmatprep.subr.mxu0 0.0
    %5702 = vmatpush1.xpose.msra.mxu0 0.0
    %5703 = vmatprep.subr.mxu0 0.0
    %5704 = vmatpush1.xpose.msra.mxu0 0.0
    %5705 = vmatprep.mubr.f32.mxu0 0.0
    %5706 = vmatmul.mubr.f32.gmra.mrb[0].mxu0 %v5635
    %v5707 = vpop.f32.mrb[0].mxu0
    %v5708 = vadd.f32 %v3565, %v5707
    %v5709 = vpop.f32.mrb[0].mxu0
    %5710 = vdwg.mxu0
    %5711 = vrot.lane.b32.xlu0 %v3261, 104
    %v5712 = vpop.permute.xlu0 %5711
    %5713 = vrot.lane.b32.xlu0 %v3389, 104
    %v5714 = vpop.permute.xlu0 %5713
    %5715 = vrot.lane.b32.xlu0 %v3394, 104
    %v5716 = vpop.permute.xlu0 %5715
    %v5717 = vsel %vm273, %v5712, 0
    %v5719 = vsel %vm273, %v5714, 0
    %v5721 = vsel %vm273, %v5716, 0
    %5723 = vmatprep.subr.mxu0 0.0
    %5724 = vmatpush1.xpose.msra.mxu0 %v5719
    %5725 = vmatprep.subr.mxu0 0.0
    %5726 = vmatpush1.xpose.msra.mxu0 %v5721
    %5727 = vmatprep.subr.mxu0 0.0
    %5728 = vmatpush1.xpose.msra.mxu0 0.0
    %5729 = vmatprep.subr.mxu0 0.0
    %5730 = vmatpush1.xpose.msra.mxu0 0.0
    %5731 = vmatprep.subr.mxu0 0.0
    %5732 = vmatpush1.xpose.msra.mxu0 0.0
    %5733 = vmatprep.subr.mxu0 0.0
    %5734 = vmatpush1.xpose.msra.mxu0 0.0
    %5735 = vmatprep.subr.mxu0 0.0
    %5736 = vmatpush1.xpose.msra.mxu0 0.0
    %5737 = vmatprep.subr.mxu0 0.0
    %5738 = vmatpush1.xpose.msra.mxu0 0.0
    %5739 = vmatprep.subr.mxu0 0.0
    %5740 = vmatpush1.xpose.msra.mxu0 0.0
    %5741 = vmatprep.subr.mxu0 0.0
    %5742 = vmatpush1.xpose.msra.mxu0 0.0
    %5743 = vmatprep.subr.mxu0 0.0
    %5744 = vmatpush1.xpose.msra.mxu0 0.0
    %5745 = vmatprep.subr.mxu0 0.0
    %5746 = vmatpush1.xpose.msra.mxu0 0.0
    %5747 = vmatprep.subr.mxu0 0.0
    %5748 = vmatpush1.xpose.msra.mxu0 0.0
    %5749 = vmatprep.subr.mxu0 0.0
    %5750 = vmatpush1.xpose.msra.mxu0 0.0
    %5751 = vmatprep.subr.mxu0 0.0
    %5752 = vmatpush1.xpose.msra.mxu0 0.0
    %5753 = vmatprep.subr.mxu0 0.0
    %5754 = vmatpush1.xpose.msra.mxu0 0.0
    %5755 = vmatprep.subr.mxu0 0.0
    %5756 = vmatpush1.xpose.msra.mxu0 0.0
    %5757 = vmatprep.subr.mxu0 0.0
    %5758 = vmatpush1.xpose.msra.mxu0 0.0
    %5759 = vmatprep.subr.mxu0 0.0
    %5760 = vmatpush1.xpose.msra.mxu0 0.0
    %5761 = vmatprep.subr.mxu0 0.0
    %5762 = vmatpush1.xpose.msra.mxu0 0.0
    %5763 = vmatprep.subr.mxu0 0.0
    %5764 = vmatpush1.xpose.msra.mxu0 0.0
    %5765 = vmatprep.subr.mxu0 0.0
    %5766 = vmatpush1.xpose.msra.mxu0 0.0
    %5767 = vmatprep.subr.mxu0 0.0
    %5768 = vmatpush1.xpose.msra.mxu0 0.0
    %5769 = vmatprep.subr.mxu0 0.0
    %5770 = vmatpush1.xpose.msra.mxu0 0.0
    %5771 = vmatprep.subr.mxu0 0.0
    %5772 = vmatpush1.xpose.msra.mxu0 0.0
    %5773 = vmatprep.subr.mxu0 0.0
    %5774 = vmatpush1.xpose.msra.mxu0 0.0
    %5775 = vmatprep.subr.mxu0 0.0
    %5776 = vmatpush1.xpose.msra.mxu0 0.0
    %5777 = vmatprep.subr.mxu0 0.0
    %5778 = vmatpush1.xpose.msra.mxu0 0.0
    %5779 = vmatprep.subr.mxu0 0.0
    %5780 = vmatpush1.xpose.msra.mxu0 0.0
    %5781 = vmatprep.subr.mxu0 0.0
    %5782 = vmatpush1.xpose.msra.mxu0 0.0
    %5783 = vmatprep.subr.mxu0 0.0
    %5784 = vmatpush1.xpose.msra.mxu0 0.0
    %5785 = vmatprep.subr.mxu0 0.0
    %5786 = vmatpush1.xpose.msra.mxu0 0.0
    %5787 = vmatprep.mubr.f32.mxu0 0.0
    %5788 = vmatmul.mubr.f32.gmra.mrb[0].mxu0 %v5717
    %v5789 = vpop.f32.mrb[0].mxu0
    %v5790 = vadd.f32 %v3648, %v5789
    %v5791 = vpop.f32.mrb[0].mxu0
    %5792 = vdwg.mxu0
    %v5793 = vsel %vm2959, %v5544, -inf
    %5794 = vmax.xlane.f32.xlu0 %v5793
    %v5795 = vpop.xlane.xlu0 %5794
    %v5796 = vsel %vm2959, %v5626, -inf
    %5797 = vmax.xlane.f32.xlu0 %v5796
    %v5798 = vpop.xlane.xlu0 %5797
    %v5799 = vsel %vm2959, %v5708, -inf
    %5800 = vmax.xlane.f32.xlu0 %v5799
    %v5801 = vpop.xlane.xlu0 %5800
    %v5802 = vsel %vm2959, %v5790, -inf
    %5803 = vmax.xlane.f32.xlu0 %v5802
    %v5804 = vpop.xlane.xlu0 %5803
    %v5805 = vsub.f32 %v5544, %v5795
    %v5806 = vsub.f32 %v5626, %v5798
    %v5807 = vsub.f32 %v5708, %v5801
    %v5808 = vsub.f32 %v5790, %v5804
    %v5809 = vmul.f32 %v5805, 1.442695
    %v5810 = vpow.pop %v5809
    %v5811 = vmul.f32 %v5806, 1.442695
    %v5812 = vpow.pop %v5811
    %v5813 = vmul.f32 %v5807, 1.442695
    %v5814 = vpow.pop %v5813
    %v5815 = vmul.f32 %v5808, 1.442695
    %v5816 = vpow.pop %v5815
    %v5817 = vsel %vm2959, %v5810, 0.0
    %5818 = vadd.xlane.f32.xlu0 %v5817
    %v5819 = vpop.xlane.xlu0 %5818
    %v5820 = vsel %vm2959, %v5812, 0.0
    %5821 = vadd.xlane.f32.xlu0 %v5820
    %v5822 = vpop.xlane.xlu0 %5821
    %v5823 = vsel %vm2959, %v5814, 0.0
    %5824 = vadd.xlane.f32.xlu0 %v5823
    %v5825 = vpop.xlane.xlu0 %5824
    %v5826 = vsel %vm2959, %v5816, 0.0
    %5827 = vadd.xlane.f32.xlu0 %v5826
    %v5828 = vpop.xlane.xlu0 %5827
    %v5829 = vrcp.pop %v5819
    %v5830 = vmul.f32 %v5810, %v5829
    %v5831 = vrcp.pop %v5822
    %v5832 = vmul.f32 %v5812, %v5831
    %v5833 = vrcp.pop %v5825
    %v5834 = vmul.f32 %v5814, %v5833
    %v5835 = vrcp.pop %v5828
    %v5836 = vmul.f32 %v5816, %v5835
    %5837 = vrot.lane.b32.xlu0 %v3359, 72
    %v5838 = vpop.permute.xlu0 %5837
    %5839 = vrot.lane.b32.xlu0 %v3364, 72
    %v5840 = vpop.permute.xlu0 %5839
    %v5844 = vsel %vm2959, %v5830, 0
    %5846 = vmatprep.subr.mxu0 0.0
    %5847 = vmatpush1.msra.mxu0 %v5838
    %5848 = vmatprep.subr.mxu0 0.0
    %5849 = vmatpush1.msra.mxu0 %v5840
    %5850 = vmatprep.subr.mxu0 0.0
    %5851 = vmatpush1.msra.mxu0 0.0
    %5852 = vmatprep.subr.mxu0 0.0
    %5853 = vmatpush1.msra.mxu0 0.0
    %5854 = vmatprep.subr.mxu0 0.0
    %5855 = vmatpush1.msra.mxu0 0.0
    %5856 = vmatprep.subr.mxu0 0.0
    %5857 = vmatpush1.msra.mxu0 0.0
    %5858 = vmatprep.subr.mxu0 0.0
    %5859 = vmatpush1.msra.mxu0 0.0
    %5860 = vmatprep.subr.mxu0 0.0
    %5861 = vmatpush1.msra.mxu0 0.0
    %5862 = vmatprep.subr.mxu0 0.0
    %5863 = vmatpush1.msra.mxu0 0.0
    %5864 = vmatprep.subr.mxu0 0.0
    %5865 = vmatpush1.msra.mxu0 0.0
    %5866 = vmatprep.subr.mxu0 0.0
    %5867 = vmatpush1.msra.mxu0 0.0
    %5868 = vmatprep.subr.mxu0 0.0
    %5869 = vmatpush1.msra.mxu0 0.0
    %5870 = vmatprep.subr.mxu0 0.0
    %5871 = vmatpush1.msra.mxu0 0.0
    %5872 = vmatprep.subr.mxu0 0.0
    %5873 = vmatpush1.msra.mxu0 0.0
    %5874 = vmatprep.subr.mxu0 0.0
    %5875 = vmatpush1.msra.mxu0 0.0
    %5876 = vmatprep.subr.mxu0 0.0
    %5877 = vmatpush1.msra.mxu0 0.0
    %5878 = vmatprep.subr.mxu0 0.0
    %5879 = vmatpush1.msra.mxu0 0.0
    %5880 = vmatprep.subr.mxu0 0.0
    %5881 = vmatpush1.msra.mxu0 0.0
    %5882 = vmatprep.subr.mxu0 0.0
    %5883 = vmatpush1.msra.mxu0 0.0
    %5884 = vmatprep.subr.mxu0 0.0
    %5885 = vmatpush1.msra.mxu0 0.0
    %5886 = vmatprep.subr.mxu0 0.0
    %5887 = vmatpush1.msra.mxu0 0.0
    %5888 = vmatprep.subr.mxu0 0.0
    %5889 = vmatpush1.msra.mxu0 0.0
    %5890 = vmatprep.subr.mxu0 0.0
    %5891 = vmatpush1.msra.mxu0 0.0
    %5892 = vmatprep.subr.mxu0 0.0
    %5893 = vmatpush1.msra.mxu0 0.0
    %5894 = vmatprep.subr.mxu0 0.0
    %5895 = vmatpush1.msra.mxu0 0.0
    %5896 = vmatprep.subr.mxu0 0.0
    %5897 = vmatpush1.msra.mxu0 0.0
    %5898 = vmatprep.subr.mxu0 0.0
    %5899 = vmatpush1.msra.mxu0 0.0
    %5900 = vmatprep.subr.mxu0 0.0
    %5901 = vmatpush1.msra.mxu0 0.0
    %5902 = vmatprep.subr.mxu0 0.0
    %5903 = vmatpush1.msra.mxu0 0.0
    %5904 = vmatprep.subr.mxu0 0.0
    %5905 = vmatpush1.msra.mxu0 0.0
    %5906 = vmatprep.subr.mxu0 0.0
    %5907 = vmatpush1.msra.mxu0 0.0
    %5908 = vmatprep.subr.mxu0 0.0
    %5909 = vmatpush1.msra.mxu0 0.0
    %5910 = vmatprep.mubr.f32.mxu0 0.0
    %5911 = vmatmul.mubr.f32.gmra.mrb[0].mxu0 %v5844
    %v5912 = vpop.f32.mrb[0].mxu0
    %v5913 = vadd.f32 0.0, %v5912
    %v5914 = vpop.f32.mrb[0].mxu0
    %5915 = vdwg.mxu0
    %5916 = vrot.lane.b32.xlu0 %v3369, 72
    %v5917 = vpop.permute.xlu0 %5916
    %5918 = vrot.lane.b32.xlu0 %v3374, 72
    %v5919 = vpop.permute.xlu0 %5918
    %v5923 = vsel %vm2959, %v5832, 0
    %5925 = vmatprep.subr.mxu0 0.0
    %5926 = vmatpush1.msra.mxu0 %v5917
    %5927 = vmatprep.subr.mxu0 0.0
    %5928 = vmatpush1.msra.mxu0 %v5919
    %5929 = vmatprep.subr.mxu0 0.0
    %5930 = vmatpush1.msra.mxu0 0.0
    %5931 = vmatprep.subr.mxu0 0.0
    %5932 = vmatpush1.msra.mxu0 0.0
    %5933 = vmatprep.subr.mxu0 0.0
    %5934 = vmatpush1.msra.mxu0 0.0
    %5935 = vmatprep.subr.mxu0 0.0
    %5936 = vmatpush1.msra.mxu0 0.0
    %5937 = vmatprep.subr.mxu0 0.0
    %5938 = vmatpush1.msra.mxu0 0.0
    %5939 = vmatprep.subr.mxu0 0.0
    %5940 = vmatpush1.msra.mxu0 0.0
    %5941 = vmatprep.subr.mxu0 0.0
    %5942 = vmatpush1.msra.mxu0 0.0
    %5943 = vmatprep.subr.mxu0 0.0
    %5944 = vmatpush1.msra.mxu0 0.0
    %5945 = vmatprep.subr.mxu0 0.0
    %5946 = vmatpush1.msra.mxu0 0.0
    %5947 = vmatprep.subr.mxu0 0.0
    %5948 = vmatpush1.msra.mxu0 0.0
    %5949 = vmatprep.subr.mxu0 0.0
    %5950 = vmatpush1.msra.mxu0 0.0
    %5951 = vmatprep.subr.mxu0 0.0
    %5952 = vmatpush1.msra.mxu0 0.0
    %5953 = vmatprep.subr.mxu0 0.0
    %5954 = vmatpush1.msra.mxu0 0.0
    %5955 = vmatprep.subr.mxu0 0.0
    %5956 = vmatpush1.msra.mxu0 0.0
    %5957 = vmatprep.subr.mxu0 0.0
    %5958 = vmatpush1.msra.mxu0 0.0
    %5959 = vmatprep.subr.mxu0 0.0
    %5960 = vmatpush1.msra.mxu0 0.0
    %5961 = vmatprep.subr.mxu0 0.0
    %5962 = vmatpush1.msra.mxu0 0.0
    %5963 = vmatprep.subr.mxu0 0.0
    %5964 = vmatpush1.msra.mxu0 0.0
    %5965 = vmatprep.subr.mxu0 0.0
    %5966 = vmatpush1.msra.mxu0 0.0
    %5967 = vmatprep.subr.mxu0 0.0
    %5968 = vmatpush1.msra.mxu0 0.0
    %5969 = vmatprep.subr.mxu0 0.0
    %5970 = vmatpush1.msra.mxu0 0.0
    %5971 = vmatprep.subr.mxu0 0.0
    %5972 = vmatpush1.msra.mxu0 0.0
    %5973 = vmatprep.subr.mxu0 0.0
    %5974 = vmatpush1.msra.mxu0 0.0
    %5975 = vmatprep.subr.mxu0 0.0
    %5976 = vmatpush1.msra.mxu0 0.0
    %5977 = vmatprep.subr.mxu0 0.0
    %5978 = vmatpush1.msra.mxu0 0.0
    %5979 = vmatprep.subr.mxu0 0.0
    %5980 = vmatpush1.msra.mxu0 0.0
    %5981 = vmatprep.subr.mxu0 0.0
    %5982 = vmatpush1.msra.mxu0 0.0
    %5983 = vmatprep.subr.mxu0 0.0
    %5984 = vmatpush1.msra.mxu0 0.0
    %5985 = vmatprep.subr.mxu0 0.0
    %5986 = vmatpush1.msra.mxu0 0.0
    %5987 = vmatprep.subr.mxu0 0.0
    %5988 = vmatpush1.msra.mxu0 0.0
    %5989 = vmatprep.mubr.f32.mxu0 0.0
    %5990 = vmatmul.mubr.f32.gmra.mrb[0].mxu0 %v5923
    %v5991 = vpop.f32.mrb[0].mxu0
    %v5992 = vadd.f32 0.0, %v5991
    %v5993 = vpop.f32.mrb[0].mxu0
    %5994 = vdwg.mxu0
    %5995 = vrot.lane.b32.xlu0 %v3379, 72
    %v5996 = vpop.permute.xlu0 %5995
    %5997 = vrot.lane.b32.xlu0 %v3384, 72
    %v5998 = vpop.permute.xlu0 %5997
    %v6002 = vsel %vm2959, %v5834, 0
    %6004 = vmatprep.subr.mxu0 0.0
    %6005 = vmatpush1.msra.mxu0 %v5996
    %6006 = vmatprep.subr.mxu0 0.0
    %6007 = vmatpush1.msra.mxu0 %v5998
    %6008 = vmatprep.subr.mxu0 0.0
    %6009 = vmatpush1.msra.mxu0 0.0
    %6010 = vmatprep.subr.mxu0 0.0
    %6011 = vmatpush1.msra.mxu0 0.0
    %6012 = vmatprep.subr.mxu0 0.0
    %6013 = vmatpush1.msra.mxu0 0.0
    %6014 = vmatprep.subr.mxu0 0.0
    %6015 = vmatpush1.msra.mxu0 0.0
    %6016 = vmatprep.subr.mxu0 0.0
    %6017 = vmatpush1.msra.mxu0 0.0
    %6018 = vmatprep.subr.mxu0 0.0
    %6019 = vmatpush1.msra.mxu0 0.0
    %6020 = vmatprep.subr.mxu0 0.0
    %6021 = vmatpush1.msra.mxu0 0.0
    %6022 = vmatprep.subr.mxu0 0.0
    %6023 = vmatpush1.msra.mxu0 0.0
    %6024 = vmatprep.subr.mxu0 0.0
    %6025 = vmatpush1.msra.mxu0 0.0
    %6026 = vmatprep.subr.mxu0 0.0
    %6027 = vmatpush1.msra.mxu0 0.0
    %6028 = vmatprep.subr.mxu0 0.0
    %6029 = vmatpush1.msra.mxu0 0.0
    %6030 = vmatprep.subr.mxu0 0.0
    %6031 = vmatpush1.msra.mxu0 0.0
    %6032 = vmatprep.subr.mxu0 0.0
    %6033 = vmatpush1.msra.mxu0 0.0
    %6034 = vmatprep.subr.mxu0 0.0
    %6035 = vmatpush1.msra.mxu0 0.0
    %6036 = vmatprep.subr.mxu0 0.0
    %6037 = vmatpush1.msra.mxu0 0.0
    %6038 = vmatprep.subr.mxu0 0.0
    %6039 = vmatpush1.msra.mxu0 0.0
    %6040 = vmatprep.subr.mxu0 0.0
    %6041 = vmatpush1.msra.mxu0 0.0
    %6042 = vmatprep.subr.mxu0 0.0
    %6043 = vmatpush1.msra.mxu0 0.0
    %6044 = vmatprep.subr.mxu0 0.0
    %6045 = vmatpush1.msra.mxu0 0.0
    %6046 = vmatprep.subr.mxu0 0.0
    %6047 = vmatpush1.msra.mxu0 0.0
    %6048 = vmatprep.subr.mxu0 0.0
    %6049 = vmatpush1.msra.mxu0 0.0
    %6050 = vmatprep.subr.mxu0 0.0
    %6051 = vmatpush1.msra.mxu0 0.0
    %6052 = vmatprep.subr.mxu0 0.0
    %6053 = vmatpush1.msra.mxu0 0.0
    %6054 = vmatprep.subr.mxu0 0.0
    %6055 = vmatpush1.msra.mxu0 0.0
    %6056 = vmatprep.subr.mxu0 0.0
    %6057 = vmatpush1.msra.mxu0 0.0
    %6058 = vmatprep.subr.mxu0 0.0
    %6059 = vmatpush1.msra.mxu0 0.0
    %6060 = vmatprep.subr.mxu0 0.0
    %6061 = vmatpush1.msra.mxu0 0.0
    %6062 = vmatprep.subr.mxu0 0.0
    %6063 = vmatpush1.msra.mxu0 0.0
    %6064 = vmatprep.subr.mxu0 0.0
    %6065 = vmatpush1.msra.mxu0 0.0
    %6066 = vmatprep.subr.mxu0 0.0
    %6067 = vmatpush1.msra.mxu0 0.0
    %6068 = vmatprep.mubr.f32.mxu0 0.0
    %6069 = vmatmul.mubr.f32.gmra.mrb[0].mxu0 %v6002
    %v6070 = vpop.f32.mrb[0].mxu0
    %v6071 = vadd.f32 0.0, %v6070
    %v6072 = vpop.f32.mrb[0].mxu0
    %6073 = vdwg.mxu0
    %6074 = vrot.lane.b32.xlu0 %v3389, 72
    %v6075 = vpop.permute.xlu0 %6074
    %6076 = vrot.lane.b32.xlu0 %v3394, 72
    %v6077 = vpop.permute.xlu0 %6076
    %v6081 = vsel %vm2959, %v5836, 0
    %6083 = vmatprep.subr.mxu0 0.0
    %6084 = vmatpush1.msra.mxu0 %v6075
    %6085 = vmatprep.subr.mxu0 0.0
    %6086 = vmatpush1.msra.mxu0 %v6077
    %6087 = vmatprep.subr.mxu0 0.0
    %6088 = vmatpush1.msra.mxu0 0.0
    %6089 = vmatprep.subr.mxu0 0.0
    %6090 = vmatpush1.msra.mxu0 0.0
    %6091 = vmatprep.subr.mxu0 0.0
    %6092 = vmatpush1.msra.mxu0 0.0
    %6093 = vmatprep.subr.mxu0 0.0
    %6094 = vmatpush1.msra.mxu0 0.0
    %6095 = vmatprep.subr.mxu0 0.0
    %6096 = vmatpush1.msra.mxu0 0.0
    %6097 = vmatprep.subr.mxu0 0.0
    %6098 = vmatpush1.msra.mxu0 0.0
    %6099 = vmatprep.subr.mxu0 0.0
    %6100 = vmatpush1.msra.mxu0 0.0
    %6101 = vmatprep.subr.mxu0 0.0
    %6102 = vmatpush1.msra.mxu0 0.0
    %6103 = vmatprep.subr.mxu0 0.0
    %6104 = vmatpush1.msra.mxu0 0.0
    %6105 = vmatprep.subr.mxu0 0.0
    %6106 = vmatpush1.msra.mxu0 0.0
    %6107 = vmatprep.subr.mxu0 0.0
    %6108 = vmatpush1.msra.mxu0 0.0
    %6109 = vmatprep.subr.mxu0 0.0
    %6110 = vmatpush1.msra.mxu0 0.0
    %6111 = vmatprep.subr.mxu0 0.0
    %6112 = vmatpush1.msra.mxu0 0.0
    %6113 = vmatprep.subr.mxu0 0.0
    %6114 = vmatpush1.msra.mxu0 0.0
    %6115 = vmatprep.subr.mxu0 0.0
    %6116 = vmatpush1.msra.mxu0 0.0
    %6117 = vmatprep.subr.mxu0 0.0
    %6118 = vmatpush1.msra.mxu0 0.0
    %6119 = vmatprep.subr.mxu0 0.0
    %6120 = vmatpush1.msra.mxu0 0.0
    %6121 = vmatprep.subr.mxu0 0.0
    %6122 = vmatpush1.msra.mxu0 0.0
    %6123 = vmatprep.subr.mxu0 0.0
    %6124 = vmatpush1.msra.mxu0 0.0
    %6125 = vmatprep.subr.mxu0 0.0
    %6126 = vmatpush1.msra.mxu0 0.0
    %6127 = vmatprep.subr.mxu0 0.0
    %6128 = vmatpush1.msra.mxu0 0.0
    %6129 = vmatprep.subr.mxu0 0.0
    %6130 = vmatpush1.msra.mxu0 0.0
    %6131 = vmatprep.subr.mxu0 0.0
    %6132 = vmatpush1.msra.mxu0 0.0
    %6133 = vmatprep.subr.mxu0 0.0
    %6134 = vmatpush1.msra.mxu0 0.0
    %6135 = vmatprep.subr.mxu0 0.0
    %6136 = vmatpush1.msra.mxu0 0.0
    %6137 = vmatprep.subr.mxu0 0.0
    %6138 = vmatpush1.msra.mxu0 0.0
    %6139 = vmatprep.subr.mxu0 0.0
    %6140 = vmatpush1.msra.mxu0 0.0
    %6141 = vmatprep.subr.mxu0 0.0
    %6142 = vmatpush1.msra.mxu0 0.0
    %6143 = vmatprep.subr.mxu0 0.0
    %6144 = vmatpush1.msra.mxu0 0.0
    %6145 = vmatprep.subr.mxu0 0.0
    %6146 = vmatpush1.msra.mxu0 0.0
    %6147 = vmatprep.mubr.f32.mxu0 0.0
    %6148 = vmatmul.mubr.f32.gmra.mrb[0].mxu0 %v6081
    %v6149 = vpop.f32.mrb[0].mxu0
    %v6150 = vadd.f32 0.0, %v6149
    %v6151 = vpop.f32.mrb[0].mxu0
    %6152 = vdwg.mxu0
    %6157 = vrot.lane.b32.xlu0 %v4537, 8
    %v6158 = vpop.permute.xlu0 %6157
    %6159 = vrot.lane.b32.xlu0 %v4616, 8
    %v6160 = vpop.permute.xlu0 %6159
    %6161 = vrot.lane.b32.xlu0 %v4695, 8
    %v6162 = vpop.permute.xlu0 %6161
    %6163 = vrot.lane.b32.xlu0 %v4774, 8
    %v6164 = vpop.permute.xlu0 %6163
    %6173 = vrot.lane.b32.xlu0 %v5225, 16
    %v6174 = vpop.permute.xlu0 %6173
    %6175 = vrot.lane.b32.xlu0 %v5304, 16
    %v6176 = vpop.permute.xlu0 %6175
    %6177 = vrot.lane.b32.xlu0 %v5383, 16
    %v6178 = vpop.permute.xlu0 %6177
    %6179 = vrot.lane.b32.xlu0 %v5462, 16
    %v6180 = vpop.permute.xlu0 %6179
    %6189 = vrot.lane.b32.xlu0 %v5913, 24
    %v6190 = vpop.permute.xlu0 %6189
    %6191 = vrot.lane.b32.xlu0 %v5992, 24
    %v6192 = vpop.permute.xlu0 %6191
    %6193 = vrot.lane.b32.xlu0 %v6071, 24
    %v6194 = vpop.permute.xlu0 %6193
    %6195 = vrot.lane.b32.xlu0 %v6150, 24
    %v6196 = vpop.permute.xlu0 %6195
    %v6201 = vsel %vm273, %v3849, %v6158
    %v6202 = vsel %vm273, %v3928, %v6160
    %v6203 = vsel %vm273, %v4007, %v6162
    %v6204 = vsel %vm273, %v4086, %v6164
    %v6205 = vsel %vm2959, %v6201, %v6174
    %v6206 = vsel %vm2959, %v6202, %v6176
    %v6207 = vsel %vm2959, %v6203, %v6178
    %v6208 = vsel %vm2959, %v6204, %v6180
    %v6209 = vsel %vm2964, %v6205, %v6190
    %v6210 = vsel %vm2964, %v6206, %v6192
    %v6211 = vsel %vm2964, %v6207, %v6194
    %v6212 = vsel %vm2964, %v6208, %v6196
    %v6213 = vlaneseq
    %v6214 = vshrl.u32 %v6213, 7
    %v6215 = vsub.s32 6, %v6214
    %v6216 = vrot.slane %v166, %v6215
    %v6218 = vsel %vm172, %v6209, 0
    %v6221 = vsel %vm172, %v6210, 0
    %v6224 = vsel %vm172, %v6211, 0
    %v6227 = vsel %vm172, %v6212, 0
    %6229 = vmatprep.subr.mxu0 0.0
    %6230 = vmatpush1.msra.mxu0 %v146
    %6231 = vmatprep.subr.mxu0 0.0
    %6232 = vmatpush1.msra.mxu0 %v147
    %6233 = vmatprep.subr.mxu0 0.0
    %6234 = vmatpush1.msra.mxu0 %v148
    %6235 = vmatprep.subr.mxu0 0.0
    %6236 = vmatpush1.msra.mxu0 %v149
    %6237 = vmatprep.subr.mxu0 0.0
    %6238 = vmatpush1.msra.mxu0 0.0
    %6239 = vmatprep.subr.mxu0 0.0
    %6240 = vmatpush1.msra.mxu0 0.0
    %6241 = vmatprep.subr.mxu0 0.0
    %6242 = vmatpush1.msra.mxu0 0.0
    %6243 = vmatprep.subr.mxu0 0.0
    %6244 = vmatpush1.msra.mxu0 0.0
    %6245 = vmatprep.subr.mxu0 0.0
    %6246 = vmatpush1.msra.mxu0 0.0
    %6247 = vmatprep.subr.mxu0 0.0
    %6248 = vmatpush1.msra.mxu0 0.0
    %6249 = vmatprep.subr.mxu0 0.0
    %6250 = vmatpush1.msra.mxu0 0.0
    %6251 = vmatprep.subr.mxu0 0.0
    %6252 = vmatpush1.msra.mxu0 0.0
    %6253 = vmatprep.subr.mxu0 0.0
    %6254 = vmatpush1.msra.mxu0 0.0
    %6255 = vmatprep.subr.mxu0 0.0
    %6256 = vmatpush1.msra.mxu0 0.0
    %6257 = vmatprep.subr.mxu0 0.0
    %6258 = vmatpush1.msra.mxu0 0.0
    %6259 = vmatprep.subr.mxu0 0.0
    %6260 = vmatpush1.msra.mxu0 0.0
    %6261 = vmatprep.subr.mxu0 0.0
    %6262 = vmatpush1.msra.mxu0 0.0
    %6263 = vmatprep.subr.mxu0 0.0
    %6264 = vmatpush1.msra.mxu0 0.0
    %6265 = vmatprep.subr.mxu0 0.0
    %6266 = vmatpush1.msra.mxu0 0.0
    %6267 = vmatprep.subr.mxu0 0.0
    %6268 = vmatpush1.msra.mxu0 0.0
    %6269 = vmatprep.subr.mxu0 0.0
    %6270 = vmatpush1.msra.mxu0 0.0
    %6271 = vmatprep.subr.mxu0 0.0
    %6272 = vmatpush1.msra.mxu0 0.0
    %6273 = vmatprep.subr.mxu0 0.0
    %6274 = vmatpush1.msra.mxu0 0.0
    %6275 = vmatprep.subr.mxu0 0.0
    %6276 = vmatpush1.msra.mxu0 0.0
    %6277 = vmatprep.subr.mxu0 0.0
    %6278 = vmatpush1.msra.mxu0 0.0
    %6279 = vmatprep.subr.mxu0 0.0
    %6280 = vmatpush1.msra.mxu0 0.0
    %6281 = vmatprep.subr.mxu0 0.0
    %6282 = vmatpush1.msra.mxu0 0.0
    %6283 = vmatprep.subr.mxu0 0.0
    %6284 = vmatpush1.msra.mxu0 0.0
    %6285 = vmatprep.subr.mxu0 0.0
    %6286 = vmatpush1.msra.mxu0 0.0
    %6287 = vmatprep.subr.mxu0 0.0
    %6288 = vmatpush1.msra.mxu0 0.0
    %6289 = vmatprep.subr.mxu0 0.0
    %6290 = vmatpush1.msra.mxu0 0.0
    %6291 = vmatprep.subr.mxu0 0.0
    %6292 = vmatpush1.msra.mxu0 0.0
    %6293 = vmatprep.mubr.f32.mxu0 0.0
    %6294 = vmatmul.mubr.f32.gmra.mrb[0].mxu0 %v6218
    %v6295 = vpop.f32.mrb[0].mxu0
    %v6296 = vadd.f32 %v6216, %v6295
    %v6297 = vpop.f32.mrb[0].mxu0
    %6298 = vmatprep.mubr.f32.mxu0 0.0
    %6299 = vmatmul.mubr.f32.gmra.mrb[0].mxu0 %v6221
    %v6300 = vpop.f32.mrb[0].mxu0
    %v6301 = vadd.f32 %v6216, %v6300
    %v6302 = vpop.f32.mrb[0].mxu0
    %6303 = vmatprep.mubr.f32.mxu0 0.0
    %6304 = vmatmul.mubr.f32.gmra.mrb[0].mxu0 %v6224
    %v6305 = vpop.f32.mrb[0].mxu0
    %v6306 = vadd.f32 %v6216, %v6305
    %v6307 = vpop.f32.mrb[0].mxu0
    %6308 = vmatprep.mubr.f32.mxu0 0.0
    %6309 = vmatmul.mubr.f32.gmra.mrb[0].mxu0 %v6227
    %v6310 = vpop.f32.mrb[0].mxu0
    %v6311 = vadd.f32 %v6216, %v6310
    %v6312 = vpop.f32.mrb[0].mxu0
    %6313 = vdwg.mxu0
    %v6314 = vadd.f32 %v3159, %v6296
    %v6315 = vadd.f32 %v3160, %v6301
    %v6316 = vadd.f32 %v3161, %v6306
    %v6317 = vadd.f32 %v3162, %v6311
    %v6318 = vsel %vm172, %v6314, 0.0
    %6319 = vadd.xlane.f32.xlu0 %v6318
    %v6320 = vpop.xlane.xlu0 %6319
    %v6321 = vsel %vm172, %v6315, 0.0
    %6322 = vadd.xlane.f32.xlu0 %v6321
    %v6323 = vpop.xlane.xlu0 %6322
    %v6324 = vsel %vm172, %v6316, 0.0
    %6325 = vadd.xlane.f32.xlu0 %v6324
    %v6326 = vpop.xlane.xlu0 %6325
    %v6327 = vsel %vm172, %v6317, 0.0
    %6328 = vadd.xlane.f32.xlu0 %v6327
    %v6329 = vpop.xlane.xlu0 %6328
    %v6330 = vmul.f32 %v6320, %v3086
    %v6331 = vmul.f32 %v6323, %v3086
    %v6332 = vmul.f32 %v6326, %v3086
    %v6333 = vmul.f32 %v6329, %v3086
    %v6334 = vsub.f32 %v6314, %v6330
    %v6335 = vsub.f32 %v6315, %v6331
    %v6336 = vsub.f32 %v6316, %v6332
    %v6337 = vsub.f32 %v6317, %v6333
    %v6338 = vmul.f32 %v6334, %v6334
    %v6339 = vmul.f32 %v6335, %v6335
    %v6340 = vmul.f32 %v6336, %v6336
    %v6341 = vmul.f32 %v6337, %v6337
    %v6342 = vsel %vm172, %v6338, 0.0
    %6343 = vadd.xlane.f32.xlu0 %v6342
    %v6344 = vpop.xlane.xlu0 %6343
    %v6345 = vsel %vm172, %v6339, 0.0
    %6346 = vadd.xlane.f32.xlu0 %v6345
    %v6347 = vpop.xlane.xlu0 %6346
    %v6348 = vsel %vm172, %v6340, 0.0
    %6349 = vadd.xlane.f32.xlu0 %v6348
    %v6350 = vpop.xlane.xlu0 %6349
    %v6351 = vsel %vm172, %v6341, 0.0
    %6352 = vadd.xlane.f32.xlu0 %v6351
    %v6353 = vpop.xlane.xlu0 %6352
    %v6354 = vmul.f32 %v6344, %v3086
    %v6355 = vmul.f32 %v6347, %v3086
    %v6356 = vmul.f32 %v6350, %v3086
    %v6357 = vmul.f32 %v6353, %v3086
    %v6358 = vadd.f32 %v6354, 1e-05
    %v6359 = vadd.f32 %v6355, 1e-05
    %v6360 = vadd.f32 %v6356, 1e-05
    %v6361 = vadd.f32 %v6357, 1e-05
    %v6362 = vrsqrt.pop %v6358
    %v6363 = vrsqrt.pop %v6359
    %v6364 = vrsqrt.pop %v6360
    %v6365 = vrsqrt.pop %v6361
    %v6366 = vmul.f32 %v6334, %v6362
    %v6367 = vmul.f32 %v6335, %v6363
    %v6368 = vmul.f32 %v6336, %v6364
    %v6369 = vmul.f32 %v6337, %v6365
    %v6370 = vlaneseq
    %v6371 = vshrl.u32 %v6370, 7
    %v6372 = vsub.s32 7, %v6371
    %v6373 = vrot.slane %v166, %v6372
    %v6374 = vmul.f32 %v6366, %v6373
    %v6375 = vmul.f32 %v6367, %v6373
    %v6376 = vmul.f32 %v6368, %v6373
    %v6377 = vmul.f32 %v6369, %v6373
    %v6378 = vlaneseq
    %v6379 = vshrl.u32 %v6378, 7
    %v6380 = vsub.s32 0, %v6379
    %v6381 = vrot.slane %v167, %v6380
    %v6382 = vadd.f32 %v6374, %v6381
    %v6383 = vadd.f32 %v6375, %v6381
    %v6384 = vadd.f32 %v6376, %v6381
    %v6385 = vadd.f32 %v6377, %v6381
    %v6386 = vmul.f32 %v6382, %v3145
    %v6387 = vmul.f32 %v6383, %v3149
    %v6388 = vmul.f32 %v6384, %v3153
    %v6389 = vmul.f32 %v6385, %v3157
    %6394 = vrot.lane.b32.xlu0 %v6386, 32
    %v6395 = vpop.permute.xlu0 %6394
    %6396 = vrot.lane.b32.xlu0 %v6387, 32
    %v6397 = vpop.permute.xlu0 %6396
    %6398 = vrot.lane.b32.xlu0 %v6388, 32
    %v6399 = vpop.permute.xlu0 %6398
    %6400 = vrot.lane.b32.xlu0 %v6389, 32
    %v6401 = vpop.permute.xlu0 %6400
    %v6406 = vsel %vm172, %v3159, %v6395
    %v6407 = vsel %vm172, %v3160, %v6397
    %v6408 = vsel %vm172, %v3161, %v6399
    %v6409 = vsel %vm172, %v3162, %v6401
    %v6410 = vlaneseq
    %v6411 = vshrl.u32 %v6410, 7
    %v6412 = vsub.s32 1, %v6411
    %v6413 = vrot.slane %v167, %v6412
    %vm6414 = vcmask 523264
    %v6416 = vsel %vm6414, %v6406, 0
    %v6419 = vsel %vm6414, %v6407, 0
    %v6422 = vsel %vm6414, %v6408, 0
    %v6425 = vsel %vm6414, %v6409, 0
    %6427 = vmatprep.subr.mxu0 0.0
    %6428 = vmatpush1.msra.mxu0 %v150
    %6429 = vmatprep.subr.mxu0 0.0
    %6430 = vmatpush1.msra.mxu0 %v151
    %6431 = vmatprep.subr.mxu0 0.0
    %6432 = vmatpush1.msra.mxu0 %v152
    %6433 = vmatprep.subr.mxu0 0.0
    %6434 = vmatpush1.msra.mxu0 %v153
    %6435 = vmatprep.subr.mxu0 0.0
    %6436 = vmatpush1.msra.mxu0 %v154
    %6437 = vmatprep.subr.mxu0 0.0
    %6438 = vmatpush1.msra.mxu0 %v155
    %6439 = vmatprep.subr.mxu0 0.0
    %6440 = vmatpush1.msra.mxu0 %v156
    %6441 = vmatprep.subr.mxu0 0.0
    %6442 = vmatpush1.msra.mxu0 %v157
    %6443 = vmatprep.subr.mxu0 0.0
    %6444 = vmatpush1.msra.mxu0 0.0
    %6445 = vmatprep.subr.mxu0 0.0
    %6446 = vmatpush1.msra.mxu0 0.0
    %6447 = vmatprep.subr.mxu0 0.0
    %6448 = vmatpush1.msra.mxu0 0.0
    %6449 = vmatprep.subr.mxu0 0.0
    %6450 = vmatpush1.msra.mxu0 0.0
    %6451 = vmatprep.subr.mxu0 0.0
    %6452 = vmatpush1.msra.mxu0 0.0
    %6453 = vmatprep.subr.mxu0 0.0
    %6454 = vmatpush1.msra.mxu0 0.0
    %6455 = vmatprep.subr.mxu0 0.0
    %6456 = vmatpush1.msra.mxu0 0.0
    %6457 = vmatprep.subr.mxu0 0.0
    %6458 = vmatpush1.msra.mxu0 0.0
    %6459 = vmatprep.subr.mxu0 0.0
    %6460 = vmatpush1.msra.mxu0 0.0
    %6461 = vmatprep.subr.mxu0 0.0
    %6462 = vmatpush1.msra.mxu0 0.0
    %6463 = vmatprep.subr.mxu0 0.0
    %6464 = vmatpush1.msra.mxu0 0.0
    %6465 = vmatprep.subr.mxu0 0.0
    %6466 = vmatpush1.msra.mxu0 0.0
    %6467 = vmatprep.subr.mxu0 0.0
    %6468 = vmatpush1.msra.mxu0 0.0
    %6469 = vmatprep.subr.mxu0 0.0
    %6470 = vmatpush1.msra.mxu0 0.0
    %6471 = vmatprep.subr.mxu0 0.0
    %6472 = vmatpush1.msra.mxu0 0.0
    %6473 = vmatprep.subr.mxu0 0.0
    %6474 = vmatpush1.msra.mxu0 0.0
    %6475 = vmatprep.subr.mxu0 0.0
    %6476 = vmatpush1.msra.mxu0 0.0
    %6477 = vmatprep.subr.mxu0 0.0
    %6478 = vmatpush1.msra.mxu0 0.0
    %6479 = vmatprep.subr.mxu0 0.0
    %6480 = vmatpush1.msra.mxu0 0.0
    %6481 = vmatprep.subr.mxu0 0.0
    %6482 = vmatpush1.msra.mxu0 0.0
    %6483 = vmatprep.subr.mxu0 0.0
    %6484 = vmatpush1.msra.mxu0 0.0
    %6485 = vmatprep.subr.mxu0 0.0
    %6486 = vmatpush1.msra.mxu0 0.0
    %6487 = vmatprep.subr.mxu0 0.0
    %6488 = vmatpush1.msra.mxu0 0.0
    %6489 = vmatprep.subr.mxu0 0.0
    %6490 = vmatpush1.msra.mxu0 0.0
    %6491 = vmatprep.mubr.f32.mxu0 0.0
    %6492 = vmatmul.mubr.f32.gmra.mrb[0].mxu0 %v6416
    %v6493 = vpop.f32.mrb[0].mxu0
    %v6494 = vadd.f32 %v6413, %v6493
    %v6495 = vpop.f32.mrb[0].mxu0
    %6496 = vmatprep.mubr.f32.mxu0 0.0
    %6497 = vmatmul.mubr.f32.gmra.mrb[0].mxu0 %v6419
    %v6498 = vpop.f32.mrb[0].mxu0
    %v6499 = vadd.f32 %v6413, %v6498
    %v6500 = vpop.f32.mrb[0].mxu0
    %6501 = vmatprep.mubr.f32.mxu0 0.0
    %6502 = vmatmul.mubr.f32.gmra.mrb[0].mxu0 %v6422
    %v6503 = vpop.f32.mrb[0].mxu0
    %v6504 = vadd.f32 %v6413, %v6503
    %v6505 = vpop.f32.mrb[0].mxu0
    %6506 = vmatprep.mubr.f32.mxu0 0.0
    %6507 = vmatmul.mubr.f32.gmra.mrb[0].mxu0 %v6425
    %v6508 = vpop.f32.mrb[0].mxu0
    %v6509 = vadd.f32 %v6413, %v6508
    %v6510 = vpop.f32.mrb[0].mxu0
    %6511 = vdwg.mxu0
    %v6512 = vxor.u32 %v6494, 2147483648
    %v6513 = vxor.u32 %v6499, 2147483648
    %v6514 = vxor.u32 %v6504, 2147483648
    %v6515 = vxor.u32 %v6509, 2147483648
    %v6516 = vmul.f32 %v6512, 1.442695
    %v6517 = vpow.pop %v6516
    %v6518 = vmul.f32 %v6513, 1.442695
    %v6519 = vpow.pop %v6518
    %v6520 = vmul.f32 %v6514, 1.442695
    %v6521 = vpow.pop %v6520
    %v6522 = vmul.f32 %v6515, 1.442695
    %v6523 = vpow.pop %v6522
    %v6524 = vadd.f32 %v6517, 1.0
    %v6525 = vadd.f32 %v6519, 1.0
    %v6526 = vadd.f32 %v6521, 1.0
    %v6527 = vadd.f32 %v6523, 1.0
    %v6528 = vrcp.pop %v6524
    %v6529 = vmul.f32 1.0, %v6528
    %v6530 = vrcp.pop %v6525
    %v6531 = vmul.f32 1.0, %v6530
    %v6532 = vrcp.pop %v6526
    %v6533 = vmul.f32 1.0, %v6532
    %v6534 = vrcp.pop %v6527
    %v6535 = vmul.f32 1.0, %v6534
    %v6536 = vmul.f32 %v6386, %v6529
    %v6537 = vmul.f32 %v6387, %v6531
    %v6538 = vmul.f32 %v6388, %v6533
    %v6539 = vmul.f32 %v6389, %v6535
    %v6540 = vmul.f32 %v6536, %v3145
    %v6541 = vmul.f32 %v6537, %v3149
    %v6542 = vmul.f32 %v6538, %v3153
    %v6543 = vmul.f32 %v6539, %v3157
    %v6544 = vlaneseq
    %v6545 = vshrl.u32 %v6544, 7
    %v6546 = vsub.s32 2, %v6545
    %v6547 = vrot.slane %v167, %v6546
    %v6549 = vsel %vm172, %v6540, 0
    %v6552 = vsel %vm172, %v6541, 0
    %v6555 = vsel %vm172, %v6542, 0
    %v6558 = vsel %vm172, %v6543, 0
    %6560 = vmatprep.subr.mxu0 0.0
    %6561 = vmatpush1.msra.mxu0 %v134
    %6562 = vmatprep.subr.mxu0 0.0
    %6563 = vmatpush1.msra.mxu0 %v135
    %6564 = vmatprep.subr.mxu0 0.0
    %6565 = vmatpush1.msra.mxu0 %v136
    %6566 = vmatprep.subr.mxu0 0.0
    %6567 = vmatpush1.msra.mxu0 %v137
    %6568 = vmatprep.subr.mxu0 0.0
    %6569 = vmatpush1.msra.mxu0 0.0
    %6570 = vmatprep.subr.mxu0 0.0
    %6571 = vmatpush1.msra.mxu0 0.0
    %6572 = vmatprep.subr.mxu0 0.0
    %6573 = vmatpush1.msra.mxu0 0.0
    %6574 = vmatprep.subr.mxu0 0.0
    %6575 = vmatpush1.msra.mxu0 0.0
    %6576 = vmatprep.subr.mxu0 0.0
    %6577 = vmatpush1.msra.mxu0 0.0
    %6578 = vmatprep.subr.mxu0 0.0
    %6579 = vmatpush1.msra.mxu0 0.0
    %6580 = vmatprep.subr.mxu0 0.0
    %6581 = vmatpush1.msra.mxu0 0.0
    %6582 = vmatprep.subr.mxu0 0.0
    %6583 = vmatpush1.msra.mxu0 0.0
    %6584 = vmatprep.subr.mxu0 0.0
    %6585 = vmatpush1.msra.mxu0 0.0
    %6586 = vmatprep.subr.mxu0 0.0
    %6587 = vmatpush1.msra.mxu0 0.0
    %6588 = vmatprep.subr.mxu0 0.0
    %6589 = vmatpush1.msra.mxu0 0.0
    %6590 = vmatprep.subr.mxu0 0.0
    %6591 = vmatpush1.msra.mxu0 0.0
    %6592 = vmatprep.subr.mxu0 0.0
    %6593 = vmatpush1.msra.mxu0 0.0
    %6594 = vmatprep.subr.mxu0 0.0
    %6595 = vmatpush1.msra.mxu0 0.0
    %6596 = vmatprep.subr.mxu0 0.0
    %6597 = vmatpush1.msra.mxu0 0.0
    %6598 = vmatprep.subr.mxu0 0.0
    %6599 = vmatpush1.msra.mxu0 0.0
    %6600 = vmatprep.subr.mxu0 0.0
    %6601 = vmatpush1.msra.mxu0 0.0
    %6602 = vmatprep.subr.mxu0 0.0
    %6603 = vmatpush1.msra.mxu0 0.0
    %6604 = vmatprep.subr.mxu0 0.0
    %6605 = vmatpush1.msra.mxu0 0.0
    %6606 = vmatprep.subr.mxu0 0.0
    %6607 = vmatpush1.msra.mxu0 0.0
    %6608 = vmatprep.subr.mxu0 0.0
    %6609 = vmatpush1.msra.mxu0 0.0
    %6610 = vmatprep.subr.mxu0 0.0
    %6611 = vmatpush1.msra.mxu0 0.0
    %6612 = vmatprep.subr.mxu0 0.0
    %6613 = vmatpush1.msra.mxu0 0.0
    %6614 = vmatprep.subr.mxu0 0.0
    %6615 = vmatpush1.msra.mxu0 0.0
    %6616 = vmatprep.subr.mxu0 0.0
    %6617 = vmatpush1.msra.mxu0 0.0
    %6618 = vmatprep.subr.mxu0 0.0
    %6619 = vmatpush1.msra.mxu0 0.0
    %6620 = vmatprep.subr.mxu0 0.0
    %6621 = vmatpush1.msra.mxu0 0.0
    %6622 = vmatprep.subr.mxu0 0.0
    %6623 = vmatpush1.msra.mxu0 0.0
    %6624 = vmatprep.mubr.f32.mxu0 0.0
    %6625 = vmatmul.mubr.f32.gmra.mrb[0].mxu0 %v6549
    %v6626 = vpop.f32.mrb[0].mxu0
    %v6627 = vadd.f32 %v6547, %v6626
    %v6628 = vpop.f32.mrb[0].mxu0
    %6629 = vmatprep.mubr.f32.mxu0 0.0
    %6630 = vmatmul.mubr.f32.gmra.mrb[0].mxu0 %v6552
    %v6631 = vpop.f32.mrb[0].mxu0
    %v6632 = vadd.f32 %v6547, %v6631
    %v6633 = vpop.f32.mrb[0].mxu0
    %6634 = vmatprep.mubr.f32.mxu0 0.0
    %6635 = vmatmul.mubr.f32.gmra.mrb[0].mxu0 %v6555
    %v6636 = vpop.f32.mrb[0].mxu0
    %v6637 = vadd.f32 %v6547, %v6636
    %v6638 = vpop.f32.mrb[0].mxu0
    %6639 = vmatprep.mubr.f32.mxu0 0.0
    %6640 = vmatmul.mubr.f32.gmra.mrb[0].mxu0 %v6558
    %v6641 = vpop.f32.mrb[0].mxu0
    %v6642 = vadd.f32 %v6547, %v6641
    %v6643 = vpop.f32.mrb[0].mxu0
    %6644 = vdwg.mxu0
    %v6645 = vmax.f32 %v6627, 0.0
    %v6646 = vmax.f32 %v6632, 0.0
    %v6647 = vmax.f32 %v6637, 0.0
    %v6648 = vmax.f32 %v6642, 0.0
    %v6649 = vlaneseq
    %v6650 = vshrl.u32 %v6649, 7
    %v6651 = vsub.s32 3, %v6650
    %v6652 = vrot.slane %v167, %v6651
    %v6654 = vsel %vm6414, %v6645, 0
    %v6657 = vsel %vm6414, %v6646, 0
    %v6660 = vsel %vm6414, %v6647, 0
    %v6663 = vsel %vm6414, %v6648, 0
    %6665 = vmatprep.subr.mxu0 0.0
    %6666 = vmatpush1.msra.mxu0 %v158
    %6667 = vmatprep.subr.mxu0 0.0
    %6668 = vmatpush1.msra.mxu0 %v159
    %6669 = vmatprep.subr.mxu0 0.0
    %6670 = vmatpush1.msra.mxu0 %v160
    %6671 = vmatprep.subr.mxu0 0.0
    %6672 = vmatpush1.msra.mxu0 %v161
    %6673 = vmatprep.subr.mxu0 0.0
    %6674 = vmatpush1.msra.mxu0 %v162
    %6675 = vmatprep.subr.mxu0 0.0
    %6676 = vmatpush1.msra.mxu0 %v163
    %6677 = vmatprep.subr.mxu0 0.0
    %6678 = vmatpush1.msra.mxu0 %v164
    %6679 = vmatprep.subr.mxu0 0.0
    %6680 = vmatpush1.msra.mxu0 %v165
    %6681 = vmatprep.subr.mxu0 0.0
    %6682 = vmatpush1.msra.mxu0 0.0
    %6683 = vmatprep.subr.mxu0 0.0
    %6684 = vmatpush1.msra.mxu0 0.0
    %6685 = vmatprep.subr.mxu0 0.0
    %6686 = vmatpush1.msra.mxu0 0.0
    %6687 = vmatprep.subr.mxu0 0.0
    %6688 = vmatpush1.msra.mxu0 0.0
    %6689 = vmatprep.subr.mxu0 0.0
    %6690 = vmatpush1.msra.mxu0 0.0
    %6691 = vmatprep.subr.mxu0 0.0
    %6692 = vmatpush1.msra.mxu0 0.0
    %6693 = vmatprep.subr.mxu0 0.0
    %6694 = vmatpush1.msra.mxu0 0.0
    %6695 = vmatprep.subr.mxu0 0.0
    %6696 = vmatpush1.msra.mxu0 0.0
    %6697 = vmatprep.subr.mxu0 0.0
    %6698 = vmatpush1.msra.mxu0 0.0
    %6699 = vmatprep.subr.mxu0 0.0
    %6700 = vmatpush1.msra.mxu0 0.0
    %6701 = vmatprep.subr.mxu0 0.0
    %6702 = vmatpush1.msra.mxu0 0.0
    %6703 = vmatprep.subr.mxu0 0.0
    %6704 = vmatpush1.msra.mxu0 0.0
    %6705 = vmatprep.subr.mxu0 0.0
    %6706 = vmatpush1.msra.mxu0 0.0
    %6707 = vmatprep.subr.mxu0 0.0
    %6708 = vmatpush1.msra.mxu0 0.0
    %6709 = vmatprep.subr.mxu0 0.0
    %6710 = vmatpush1.msra.mxu0 0.0
    %6711 = vmatprep.subr.mxu0 0.0
    %6712 = vmatpush1.msra.mxu0 0.0
    %6713 = vmatprep.subr.mxu0 0.0
    %6714 = vmatpush1.msra.mxu0 0.0
    %6715 = vmatprep.subr.mxu0 0.0
    %6716 = vmatpush1.msra.mxu0 0.0
    %6717 = vmatprep.subr.mxu0 0.0
    %6718 = vmatpush1.msra.mxu0 0.0
    %6719 = vmatprep.subr.mxu0 0.0
    %6720 = vmatpush1.msra.mxu0 0.0
    %6721 = vmatprep.subr.mxu0 0.0
    %6722 = vmatpush1.msra.mxu0 0.0
    %6723 = vmatprep.subr.mxu0 0.0
    %6724 = vmatpush1.msra.mxu0 0.0
    %6725 = vmatprep.subr.mxu0 0.0
    %6726 = vmatpush1.msra.mxu0 0.0
    %6727 = vmatprep.subr.mxu0 0.0
    %6728 = vmatpush1.msra.mxu0 0.0
    %6729 = vmatprep.mubr.f32.mxu0 0.0
    %6730 = vmatmul.mubr.f32.gmra.mrb[0].mxu0 %v6654
    %v6731 = vpop.f32.mrb[0].mxu0
    %v6732 = vadd.f32 %v6652, %v6731
    %v6733 = vpop.f32.mrb[0].mxu0
    %6734 = vmatprep.mubr.f32.mxu0 0.0
    %6735 = vmatmul.mubr.f32.gmra.mrb[0].mxu0 %v6657
    %v6736 = vpop.f32.mrb[0].mxu0
    %v6737 = vadd.f32 %v6652, %v6736
    %v6738 = vpop.f32.mrb[0].mxu0
    %6739 = vmatprep.mubr.f32.mxu0 0.0
    %6740 = vmatmul.mubr.f32.gmra.mrb[0].mxu0 %v6660
    %v6741 = vpop.f32.mrb[0].mxu0
    %v6742 = vadd.f32 %v6652, %v6741
    %v6743 = vpop.f32.mrb[0].mxu0
    %6744 = vmatprep.mubr.f32.mxu0 0.0
    %6745 = vmatmul.mubr.f32.gmra.mrb[0].mxu0 %v6663
    %v6746 = vpop.f32.mrb[0].mxu0
    %v6747 = vadd.f32 %v6652, %v6746
    %v6748 = vpop.f32.mrb[0].mxu0
    %6749 = vdwg.mxu0
    %v6750 = vadd.f32 %v6540, %v6732
    %v6751 = vadd.f32 %v6541, %v6737
    %v6752 = vadd.f32 %v6542, %v6742
    %v6753 = vadd.f32 %v6543, %v6747
    %v6754 = vsel %vm172, %v6750, 0.0
    %6755 = vadd.xlane.f32.xlu0 %v6754
    %v6756 = vpop.xlane.xlu0 %6755
    %v6757 = vsel %vm172, %v6751, 0.0
    %6758 = vadd.xlane.f32.xlu0 %v6757
    %v6759 = vpop.xlane.xlu0 %6758
    %v6760 = vsel %vm172, %v6752, 0.0
    %6761 = vadd.xlane.f32.xlu0 %v6760
    %v6762 = vpop.xlane.xlu0 %6761
    %v6763 = vsel %vm172, %v6753, 0.0
    %6764 = vadd.xlane.f32.xlu0 %v6763
    %v6765 = vpop.xlane.xlu0 %6764
    %v6766 = vmul.f32 %v6756, %v3086
    %v6767 = vmul.f32 %v6759, %v3086
    %v6768 = vmul.f32 %v6762, %v3086
    %v6769 = vmul.f32 %v6765, %v3086
    %v6770 = vsub.f32 %v6750, %v6766
    %v6771 = vsub.f32 %v6751, %v6767
    %v6772 = vsub.f32 %v6752, %v6768
    %v6773 = vsub.f32 %v6753, %v6769
    %v6774 = vmul.f32 %v6770, %v6770
    %v6775 = vmul.f32 %v6771, %v6771
    %v6776 = vmul.f32 %v6772, %v6772
    %v6777 = vmul.f32 %v6773, %v6773
    %v6778 = vsel %vm172, %v6774, 0.0
    %6779 = vadd.xlane.f32.xlu0 %v6778
    %v6780 = vpop.xlane.xlu0 %6779
    %v6781 = vsel %vm172, %v6775, 0.0
    %6782 = vadd.xlane.f32.xlu0 %v6781
    %v6783 = vpop.xlane.xlu0 %6782
    %v6784 = vsel %vm172, %v6776, 0.0
    %6785 = vadd.xlane.f32.xlu0 %v6784
    %v6786 = vpop.xlane.xlu0 %6785
    %v6787 = vsel %vm172, %v6777, 0.0
    %6788 = vadd.xlane.f32.xlu0 %v6787
    %v6789 = vpop.xlane.xlu0 %6788
    %v6790 = vmul.f32 %v6780, %v3086
    %v6791 = vmul.f32 %v6783, %v3086
    %v6792 = vmul.f32 %v6786, %v3086
    %v6793 = vmul.f32 %v6789, %v3086
    %v6794 = vadd.f32 %v6790, 1e-05
    %v6795 = vadd.f32 %v6791, 1e-05
    %v6796 = vadd.f32 %v6792, 1e-05
    %v6797 = vadd.f32 %v6793, 1e-05
    %v6798 = vrsqrt.pop %v6794
    %v6799 = vrsqrt.pop %v6795
    %v6800 = vrsqrt.pop %v6796
    %v6801 = vrsqrt.pop %v6797
    %v6802 = vmul.f32 %v6770, %v6798
    %v6803 = vmul.f32 %v6771, %v6799
    %v6804 = vmul.f32 %v6772, %v6800
    %v6805 = vmul.f32 %v6773, %v6801
    %v6806 = vlaneseq
    %v6807 = vshrl.u32 %v6806, 7
    %v6808 = vsub.s32 4, %v6807
    %v6809 = vrot.slane %v167, %v6808
    %v6810 = vmul.f32 %v6802, %v6809
    %v6811 = vmul.f32 %v6803, %v6809
    %v6812 = vmul.f32 %v6804, %v6809
    %v6813 = vmul.f32 %v6805, %v6809
    %v6814 = vlaneseq
    %v6815 = vshrl.u32 %v6814, 7
    %v6816 = vsub.s32 5, %v6815
    %v6817 = vrot.slane %v167, %v6816
    %v6818 = vadd.f32 %v6810, %v6817
    %v6819 = vadd.f32 %v6811, %v6817
    %v6820 = vadd.f32 %v6812, %v6817
    %v6821 = vadd.f32 %v6813, %v6817
    %v6822 = vmul.f32 %v6818, %v3145
    %v6823 = vmul.f32 %v6819, %v3149
    %v6824 = vmul.f32 %v6820, %v3153
    %v6825 = vmul.f32 %v6821, %v3157
    %v6826 = vsel %vm172, %v6822, 0.0
    %v6827 = vsel %vm172, %v6823, 0.0
    %v6828 = vsel %vm172, %v6824, 0.0
    %v6829 = vsel %vm172, %v6825, 0.0
    %6830 = vst [vmem:[#allocation13] sm:$0xff] %v6826
    %6831 = vst [vmem:[#allocation13 + $0x8] sm:$0xff] %v6827
    %6832 = vst [vmem:[#allocation13 + $0x10] sm:$0xff] %v6828
    %6833 = vst [vmem:[#allocation13 + $0x18] sm:$0xff] %v6829
    // Predicated region
    $region50: #{parallel_attention_layer.1} parent=1 // pred_check
      _
    $region51: #{parallel_attention_layer.1} parent=1 // pred_check_branch
      %6835 = sbr.rel (0) target = $region53
    $region52: #{parallel_attention_layer.1} parent=1 // pred_region
      %s6837 = ssub.s32 512, 512
      %6838 = vsyncadd [#allocation4], %s6837
      %s6839 = sshll.u32 [#allocation13], 4
      %s6840 = int_to_ptr.vmem [resolvable:$true] %s6839
      %6845 = dma.vmem_to_hbm [thread:$0]  %s6840, 512, %s6, [#allocation4], 128, 128, 8
    $region53: #{parallel_attention_layer.1} parent=1 // pred_fallthru
      _
    // Predicated region
    $region54: #{parallel_attention_layer.1} parent=1 // pred_check
      _
    $region55: #{parallel_attention_layer.1} parent=1 // pred_check_branch
      %6847 = sbr.rel (0) target = $region57
    $region56: #{parallel_attention_layer.1} parent=1 // pred_region
      %6848 = dma.done [#allocation4], 512
    $region57: #{parallel_attention_layer.1} parent=1 // pred_fallthru
      _
    %6849 = vsyncpa [#allocation3], 1
    %6850 = vsyncpa [#allocation6], 1
    %6851 = vsyncpa [#allocation9], 1
    %6852 = vsyncpa [#allocation12], 1
    %6853 = vsyncpa [#allocation4], 1

</llo_original>
